<compile_context>
chip_gen: v5e
topology: v5e:2x2
jax: 0.10.0
libtpu: 0.0.40
codegen_flags: <defaults>
</compile_context>

<pallas_src>
import jax
import jax.numpy as jnp
from jax import lax
from jax.experimental import pallas as pl
from jax.experimental.pallas import tpu as pltpu


def _round_up(n, m):
    return ((n + m - 1) // m) * m


def _pick_tile(n, preferred):
    """Largest clean tile: `preferred` if it divides n, else the full dim."""
    if preferred >= n:
        return n
    if n % preferred == 0:
        return preferred
    return n


def _vmem_limit_bytes():
    # ~3/4 of physical VMEM: ~96 MiB on v5e/v6e (128 MiB), ~48 MiB on v7x (64 MiB).
    try:
        info = pltpu.get_tpu_info()
        cap = getattr(info, "vmem_capacity_bytes", None)
        if cap:
            return int(min(cap * 3 // 4, 100 * 1024 * 1024))
    except Exception:
        pass
    return 48 * 1024 * 1024


# ---------------------------------------------------------------------------
# KG aggregation kernel
# grid = (phase, edge_tile):
#   phase 0: per-head segment max of the attention logits (masked scatter-max)
#   phase 1: exp(att - seg_max[head]), MXU one-hot scatter-add, finalize divide
# ---------------------------------------------------------------------------
def _kg_edge_kernel(head_ref, tail_ref, etype_ref,   # [TE, 1] int32 edge tiles
                    ent_ref, w_ref,                  # resident [N_E, D], [R, D]
                    out_ref,                         # resident [N_E, D]
                    segmax_ref, acc_ref, pay_ref):   # VMEM scratch
    phase = pl.program_id(0)
    i = pl.program_id(1)
    n_tiles = pl.num_programs(1)
    tile_e = head_ref.shape[0]
    n_e, d = ent_ref.shape
    n_r = w_ref.shape[0]

    @pl.when(jnp.logical_and(phase == 0, i == 0))
    def _init():
        segmax_ref[...] = jnp.full_like(segmax_ref, -1e30)
        acc_ref[...] = jnp.zeros_like(acc_ref)

    h = head_ref[...]                       # [TE, 1]; padded edges carry head = -1
    t = tail_ref[...]
    r = etype_ref[...] - 1                  # edge_type is 1-indexed

    ent_iota = lax.broadcasted_iota(jnp.int32, (tile_e, n_e), 1)
    rel_iota = lax.broadcasted_iota(jnp.int32, (tile_e, n_r), 1)
    oh_h_b = ent_iota == h                  # padded rows: all-False -> no-op everywhere
    oh_h = oh_h_b.astype(jnp.float32)
    oh_t = (ent_iota == t).astype(jnp.float32)
    oh_r = (rel_iota == r).astype(jnp.float32)

    # Vectorized gathers on the MXU: entity_emb[head], entity_emb[tail],
    # weight[edge_type - 1].
    eh = jnp.dot(oh_h, ent_ref[...], preferred_element_type=jnp.float32)
    et = jnp.dot(oh_t, ent_ref[...], preferred_element_type=jnp.float32)
    rel = jnp.dot(oh_r, w_ref[...], preferred_element_type=jnp.float32)

    hr = eh * rel
    neigh = et * rel
    # att = (||hr|| * ||neigh||)^2 == sum(hr^2) * sum(neigh^2)   (no sqrt / pow)
    att = (jnp.sum(hr * hr, axis=1, keepdims=True) *
           jnp.sum(neigh * neigh, axis=1, keepdims=True))         # [TE, 1]

    @pl.when(phase == 0)
    def _segment_max():
        masked = jnp.where(oh_h_b, att, -1e30)                    # [TE, N_E]
        segmax_ref[...] = jnp.maximum(segmax_ref[...],
                                      jnp.max(masked, axis=0, keepdims=True))

    @pl.when(phase == 1)
    def _scatter_add():
        # gather seg_max[head] through the same one-hot mask
        smax_h = jnp.max(jnp.where(oh_h_b, segmax_ref[...], -1e30),
                         axis=1, keepdims=True)                   # [TE, 1]
        valid = h >= 0
        p_w = jnp.exp(jnp.where(valid, att - smax_h, -1e30))      # [TE, 1]
        # fused payload: [ softmax-numerator-weighted neighbour | denominator ]
        pay_ref[:, :d] = p_w * neigh
        pay_ref[:, d:] = p_w
        # scatter-add = one_hot^T @ payload on the MXU (duplicates sum for free)
        acc_ref[...] += lax.dot_general(
            oh_h, pay_ref[...], (((0,), (0,)), ((), ())),
            preferred_element_type=jnp.float32)

    @pl.when(jnp.logical_and(phase == 1, i == n_tiles - 1))
    def _finalize():
        num = acc_ref[:, :d]                                      # [N_E, D]
        den = acc_ref[:, d:]                                      # [N_E, 1]
        out_ref[...] = jnp.where(den > 0.0, num / jnp.maximum(den, 1e-30), 0.0)


def _kg_aggregate(entity_emb, weight, head, tail, etype, *, tile_e=512):
    n_e, d = entity_emb.shape
    n_r = weight.shape[0]
    e = head.shape[0]

    tile_e = min(tile_e, _round_up(e, 8))
    e_pad = _round_up(e, tile_e)
    n_tiles = e_pad // tile_e
    pad = e_pad - e

    head_p = jnp.pad(head, (0, pad), constant_values=-1).reshape(e_pad, 1)
    tail_p = jnp.pad(tail, (0, pad), constant_values=0).reshape(e_pad, 1)
    etype_p = jnp.pad(etype, (0, pad), constant_values=1).reshape(e_pad, 1)

    grid_spec = pltpu.PrefetchScalarGridSpec(
        num_scalar_prefetch=0,
        grid=(2, n_tiles),                               # (phase, edge tile)
        in_specs=[
            pl.BlockSpec((tile_e, 1), lambda p, i: (i, 0)),   # head
            pl.BlockSpec((tile_e, 1), lambda p, i: (i, 0)),   # tail
            pl.BlockSpec((tile_e, 1), lambda p, i: (i, 0)),   # edge_type
            pl.BlockSpec((n_e, d), lambda p, i: (0, 0)),      # entity_emb resident
            pl.BlockSpec((n_r, d), lambda p, i: (0, 0)),      # weight resident
        ],
        out_specs=pl.BlockSpec((n_e, d), lambda p, i: (0, 0)),
        scratch_shapes=[
            pltpu.VMEM((1, n_e), jnp.float32),           # per-head segment max
            pltpu.VMEM((n_e, d + 1), jnp.float32),       # fused [num | den] accumulator
            pltpu.VMEM((tile_e, d + 1), jnp.float32),    # fused payload tile
        ],
    )
    cost = pl.CostEstimate(
        flops=int(2 * e_pad * (2 * n_e + n_r) * d * 2      # one-hot gathers (2 phases)
                  + e_pad * n_e * (d + 1) * 2              # one-hot scatter-add
                  + e_pad * (10 * d + 16)),                # elementwise
        transcendentals=int(e_pad),
        bytes_accessed=int(4 * (2 * 3 * e_pad + 2 * (n_e * d + n_r * d) + n_e * d)),
    )
    return pl.pallas_call(
        _kg_edge_kernel,
        out_shape=jax.ShapeDtypeStruct((n_e, d), jnp.float32),
        grid_spec=grid_spec,
        compiler_params=pltpu.CompilerParams(
            dimension_semantics=("arbitrary", "arbitrary"),   # sequential accumulation
            vmem_limit_bytes=_vmem_limit_bytes()),
        cost_estimate=cost,
    )(head_p, tail_p, etype_p, entity_emb, weight)


# ---------------------------------------------------------------------------
# User aggregation kernel (tiled matmul + relation-softmax projection)
# ---------------------------------------------------------------------------
def _user_agg_kernel(inter_ref, ent_ref, user_ref, w_ref, out_ref, acc_ref):
    k = pl.program_id(1)

    @pl.when(k == 0)
    def _init():
        acc_ref[...] = jnp.zeros_like(acc_ref)

    acc_ref[...] += jnp.dot(inter_ref[...].astype(jnp.float32), ent_ref[...],
                            preferred_element_type=jnp.float32)

    @pl.when(k == pl.num_programs(1) - 1)
    def _finalize():
        w = w_ref[...]                                                 # [R, D]
        logits = lax.dot_general(user_ref[...], w, (((1,), (1,)), ((), ())),
                                 preferred_element_type=jnp.float32)   # [TU, R]
        logits = logits - jnp.max(logits, axis=-1, keepdims=True)
        es = jnp.exp(logits)
        score = es / jnp.sum(es, axis=-1, keepdims=True)
        proj = jnp.dot(score, w, preferred_element_type=jnp.float32)   # [TU, D]
        ua = acc_ref[...]
        out_ref[...] = ua + proj * ua


def _user_aggregate(interact_mat, entity_emb, user_emb, weight, *,
                    tile_u=256, tile_ne=512):
    n_u, n_e = interact_mat.shape
    d = entity_emb.shape[1]
    n_r = weight.shape[0]
    tile_u = _pick_tile(n_u, tile_u)
    tile_ne = _pick_tile(n_e, tile_ne)
    grid = (n_u // tile_u, n_e // tile_ne)

    # 0/1 interaction matrix is exact in bf16: halves the HBM traffic of this
    # bandwidth-bound matmul.
    interact_bf16 = interact_mat.astype(jnp.bfloat16)

    grid_spec = pltpu.PrefetchScalarGridSpec(
        num_scalar_prefetch=0,
        grid=grid,
        in_specs=[
            pl.BlockSpec((tile_u, tile_ne), lambda u, k: (u, k)),   # interact_mat
            pl.BlockSpec((tile_ne, d), lambda u, k: (k, 0)),        # entity_emb
            pl.BlockSpec((tile_u, d), lambda u, k: (u, 0)),         # user_emb
            pl.BlockSpec((n_r, d), lambda u, k: (0, 0)),            # weight
        ],
        out_specs=pl.BlockSpec((tile_u, d), lambda u, k: (u, 0)),
        scratch_shapes=[pltpu.VMEM((tile_u, d), jnp.float32)],
    )
    cost = pl.CostEstimate(
        flops=int(2 * n_u * n_e * d + 4 * n_u * n_r * d + 6 * n_u * d),
        transcendentals=int(n_u * n_r),
        bytes_accessed=int(2 * n_u * n_e + 4 * (n_e * d + 2 * n_u * d + n_r * d)),
    )
    return pl.pallas_call(
        _user_agg_kernel,
        out_shape=jax.ShapeDtypeStruct((n_u, d), jnp.float32),
        grid_spec=grid_spec,
        compiler_params=pltpu.CompilerParams(
            dimension_semantics=("parallel", "arbitrary"),
            vmem_limit_bytes=_vmem_limit_bytes()),
        cost_estimate=cost,
    )(interact_bf16, entity_emb, user_emb, weight)


# ---------------------------------------------------------------------------
# Public wrapper mirroring Aggregator.forward (interact_mat densified)
# ---------------------------------------------------------------------------
def aggregator(entity_emb, user_emb, edge_index, edge_type, interact_mat, weight,
               *, tile_e=512, tile_u=256, tile_ne=512):
    entity_emb = entity_emb.astype(jnp.float32)
    user_emb = user_emb.astype(jnp.float32)
    weight = weight.astype(jnp.float32)
    interact_mat = interact_mat.astype(jnp.float32)
    head = edge_index[0].astype(jnp.int32)
    tail = edge_index[1].astype(jnp.int32)
    etype = edge_type.astype(jnp.int32)

    entity_agg = _kg_aggregate(entity_emb, weight, head, tail, etype,
                               tile_e=tile_e)
    user_agg = _user_aggregate(interact_mat, entity_emb, user_emb, weight,
                               tile_u=tile_u, tile_ne=tile_ne)
    return entity_agg, user_agg


# ---------------------------------------------------------------------------
# Pure-JAX reference matching the PyTorch forward semantics
# ---------------------------------------------------------------------------
def aggregator_reference(entity_emb, user_emb, edge_index, edge_type,
                         interact_mat, weight):
    n_entities = entity_emb.shape[0]
    head, tail = edge_index[0], edge_index[1]
    rel = weight[edge_type - 1]
    eh = entity_emb[head]
    et = entity_emb[tail]
    neigh = et * rel
    tn = jnp.linalg.norm(et * rel, axis=1, keepdims=True)
    hn = jnp.linalg.norm(eh * rel, axis=1, keepdims=True)
    att = (hn * tn) ** 2                                        # [E, 1]
    att = jnp.broadcast_to(att, neigh.shape)                    # expand
    seg_max = jax.ops.segment_max(att, head, num_segments=n_entities)
    e = jnp.exp(att - seg_max[head])
    seg_sum = jax.ops.segment_sum(e, head, num_segments=n_entities)
    soft_w = e / seg_sum[head]
    entity_agg = jax.ops.segment_sum(soft_w * neigh, head, num_segments=n_entities)
    user_agg = interact_mat @ entity_emb
    score = jax.nn.softmax(user_emb @ weight.T, axis=-1)
    user_agg = user_agg + (score @ weight) * user_agg
    return entity_agg, user_agg


if __name__ == "__main__":
    N_E, N_U, E, R, D = 256, 64, 500, 8, 32   # E not a tile multiple: tests padding

    key = jax.random.PRNGKey(0)
    k1, k2, k3, k4, k5, k6, k7 = jax.random.split(key, 7)

    entity_emb = 0.1 * jax.random.normal(k1, (N_E, D), dtype=jnp.float32)
    user_emb   = 0.1 * jax.random.normal(k2, (N_U, D), dtype=jnp.float32)
    weight     = 0.1 * jax.random.normal(k3, (R, D), dtype=jnp.float32)
    head       = jax.random.randint(k4, (E,), 0, N_E, dtype=jnp.int32)
    tail       = jax.random.randint(k5, (E,), 0, N_E, dtype=jnp.int32)
    edge_index = jnp.stack([head, tail], axis=0)                          # [2, E]
    edge_type  = jax.random.randint(k6, (E,), 1, R + 1, dtype=jnp.int32)  # 1-indexed
    # dense stand-in for the sparse user-entity interaction matrix
    interact_mat = (jax.random.uniform(k7, (N_U, N_E)) < 0.05).astype(jnp.float32)

    ent_agg, usr_agg = aggregator(entity_emb, user_emb, edge_index,
                                  edge_type, interact_mat, weight)
    jax.block_until_ready((ent_agg, usr_agg))

    ent_ref, usr_ref = aggregator_reference(entity_emb, user_emb, edge_index,
                                            edge_type, interact_mat, weight)
    assert jnp.allclose(ent_agg, ent_ref, atol=1e-4, rtol=1e-4), "entity_agg mismatch"
    assert jnp.allclose(usr_agg, usr_ref, atol=1e-4, rtol=1e-4), "user_agg mismatch"

    print("KERNEL_OK")
</pallas_src>

<mosaic_0001>
module attributes {stable_mosaic.version = 11 : i64} {
  func.func @_kg_edge_kernel(%arg0: i32, %arg1: i32, %arg2: memref<504x1xi32, #tpu.memory_space<vmem>>, %arg3: memref<504x1xi32, #tpu.memory_space<vmem>>, %arg4: memref<504x1xi32, #tpu.memory_space<vmem>>, %arg5: memref<256x32xf32, #tpu.memory_space<vmem>>, %arg6: memref<8x32xf32, #tpu.memory_space<vmem>>, %arg7: memref<256x32xf32, #tpu.memory_space<vmem>>, %arg8: memref<1x256xf32, #tpu.memory_space<vmem>>, %arg9: memref<256x33xf32, #tpu.memory_space<vmem>>, %arg10: memref<504x33xf32, #tpu.memory_space<vmem>>) attributes {dimension_semantics = [#tpu.dimension_semantics<arbitrary>, #tpu.dimension_semantics<arbitrary>], iteration_bounds = array<i64: 2, 1>, scalar_prefetch = 0 : i64, scratch_operands = 3 : i64, tpu.core_type = #tpu.core_type<tc>, window_params = [{transform_indices = @transform_0, window_bounds = array<i64: 504, 1>}, {transform_indices = @transform_1, window_bounds = array<i64: 504, 1>}, {transform_indices = @transform_2, window_bounds = array<i64: 504, 1>}, {pipeline_mode = #tpu.pipeline_mode<synchronous>, transform_indices = @transform_3, window_bounds = array<i64: 256, 32>}, {pipeline_mode = #tpu.pipeline_mode<synchronous>, transform_indices = @transform_4, window_bounds = array<i64: 8, 32>}, {pipeline_mode = #tpu.pipeline_mode<synchronous>, transform_indices = @transform_5, window_bounds = array<i64: 256, 32>}]} {
    %c0_i32 = arith.constant 0 : i32
    %0 = arith.cmpi eq, %arg0, %c0_i32 : i32
    %c0_i32_0 = arith.constant 0 : i32
    %1 = arith.cmpi eq, %arg1, %c0_i32_0 : i32
    %2 = arith.andi %0, %1 : i1
    %3 = arith.extui %2 : i1 to i32
    %c0_i32_1 = arith.constant 0 : i32
    %4 = arith.cmpi ne, %3, %c0_i32_1 : i32
    scf.if %4 {
      %cst_24 = arith.constant -1.000000e+30 : f32
      %50 = vector.broadcast %cst_24 : f32 to vector<1x256xf32>
      %c0_25 = arith.constant 0 : index
      %c0_26 = arith.constant 0 : index
      %51 = vector.load %arg8[%c0_25, %c0_26] : memref<1x256xf32, #tpu.memory_space<vmem>>, vector<1x256xf32>
      tpu.vector_store %arg8[%c0_25, %c0_26], %50 {strides = array<i32>} : memref<1x256xf32, #tpu.memory_space<vmem>>, vector<1x256xf32>,
      %cst_27 = arith.constant 0.000000e+00 : f32
      %52 = vector.broadcast %cst_27 : f32 to vector<256x33xf32>
      %c0_28 = arith.constant 0 : index
      %c0_29 = arith.constant 0 : index
      %53 = vector.load %arg9[%c0_28, %c0_29] : memref<256x33xf32, #tpu.memory_space<vmem>>, vector<256x33xf32>
      tpu.vector_store %arg9[%c0_28, %c0_29], %52 {strides = array<i32>} : memref<256x33xf32, #tpu.memory_space<vmem>>, vector<256x33xf32>,
    } else {
    }
    %c0 = arith.constant 0 : index
    %c0_2 = arith.constant 0 : index
    %5 = vector.load %arg2[%c0, %c0_2] : memref<504x1xi32, #tpu.memory_space<vmem>>, vector<504x1xi32>
    %c0_3 = arith.constant 0 : index
    %c0_4 = arith.constant 0 : index
    %6 = vector.load %arg3[%c0_3, %c0_4] : memref<504x1xi32, #tpu.memory_space<vmem>>, vector<504x1xi32>
    %c0_5 = arith.constant 0 : index
    %c0_6 = arith.constant 0 : index
    %7 = vector.load %arg4[%c0_5, %c0_6] : memref<504x1xi32, #tpu.memory_space<vmem>>, vector<504x1xi32>
    %c1_i32 = arith.constant 1 : i32
    %8 = vector.broadcast %c1_i32 : i32 to vector<504x1xi32>
    %9 = arith.subi %7, %8 : vector<504x1xi32>
    %10 = tpu.iota {dimensions = array<i32: 1>} : vector<504x256xi32>
    %11 = tpu.iota {dimensions = array<i32: 1>} : vector<504x8xi32>
    %12 = vector.broadcast %5 : vector<504x1xi32> to vector<504x256xi32>
    %13 = arith.cmpi eq, %10, %12 : vector<504x256xi32>
    %14 = arith.extui %13 : vector<504x256xi1> to vector<504x256xi32>
    %15 = arith.sitofp %14 : vector<504x256xi32> to vector<504x256xf32>
    %16 = vector.broadcast %6 : vector<504x1xi32> to vector<504x256xi32>
    %17 = arith.cmpi eq, %10, %16 : vector<504x256xi32>
    %18 = arith.extui %17 : vector<504x256xi1> to vector<504x256xi32>
    %19 = arith.sitofp %18 : vector<504x256xi32> to vector<504x256xf32>
    %20 = vector.broadcast %9 : vector<504x1xi32> to vector<504x8xi32>
    %21 = arith.cmpi eq, %11, %20 : vector<504x8xi32>
    %22 = arith.extui %21 : vector<504x8xi1> to vector<504x8xi32>
    %23 = arith.sitofp %22 : vector<504x8xi32> to vector<504x8xf32>
    %c0_7 = arith.constant 0 : index
    %c0_8 = arith.constant 0 : index
    %24 = vector.load %arg5[%c0_7, %c0_8] : memref<256x32xf32, #tpu.memory_space<vmem>>, vector<256x32xf32>
    %cst = arith.constant dense<0.000000e+00> : vector<504x32xf32>
    %25 = tpu.matmul %15, %24, %cst {dimension_numbers = #tpu.dot_dimension_numbers<[1], [0], [0], [1], [0, 0, 1, 1], [], []>} : vector<504x256xf32>, vector<256x32xf32>, vector<504x32xf32> -> vector<504x32xf32>
    %c0_9 = arith.constant 0 : index
    %c0_10 = arith.constant 0 : index
    %26 = vector.load %arg5[%c0_9, %c0_10] : memref<256x32xf32, #tpu.memory_space<vmem>>, vector<256x32xf32>
    %cst_11 = arith.constant dense<0.000000e+00> : vector<504x32xf32>
    %27 = tpu.matmul %19, %26, %cst_11 {dimension_numbers = #tpu.dot_dimension_numbers<[1], [0], [0], [1], [0, 0, 1, 1], [], []>} : vector<504x256xf32>, vector<256x32xf32>, vector<504x32xf32> -> vector<504x32xf32>
    %c0_12 = arith.constant 0 : index
    %c0_13 = arith.constant 0 : index
    %28 = vector.load %arg6[%c0_12, %c0_13] : memref<8x32xf32, #tpu.memory_space<vmem>>, vector<8x32xf32>
    %cst_14 = arith.constant dense<0.000000e+00> : vector<504x32xf32>
    %29 = tpu.matmul %23, %28, %cst_14 {dimension_numbers = #tpu.dot_dimension_numbers<[1], [0], [0], [1], [0, 0, 1, 1], [], []>} : vector<504x8xf32>, vector<8x32xf32>, vector<504x32xf32> -> vector<504x32xf32>
    %30 = arith.mulf %25, %29 : vector<504x32xf32>
    %31 = arith.mulf %27, %29 : vector<504x32xf32>
    %32 = arith.mulf %30, %30 : vector<504x32xf32>
    %cst_15 = arith.constant dense<0.000000e+00> : vector<504xf32>
    %33 = vector.multi_reduction <add>, %32, %cst_15 [1] : vector<504x32xf32> to vector<504xf32>
    %34 = vector.shape_cast %33 : vector<504xf32> to vector<504x1xf32>
    %35 = arith.mulf %31, %31 : vector<504x32xf32>
    %cst_16 = arith.constant dense<0.000000e+00> : vector<504xf32>
    %36 = vector.multi_reduction <add>, %35, %cst_16 [1] : vector<504x32xf32> to vector<504xf32>
    %37 = vector.shape_cast %36 : vector<504xf32> to vector<504x1xf32>
    %38 = arith.mulf %34, %37 : vector<504x1xf32>
    %c0_i32_17 = arith.constant 0 : i32
    %39 = arith.cmpi eq, %arg0, %c0_i32_17 : i32
    %40 = arith.extui %39 : i1 to i32
    %c0_i32_18 = arith.constant 0 : i32
    %41 = arith.cmpi ne, %40, %c0_i32_18 : i32
    scf.if %41 {
      %cst_24 = arith.constant -1.000000e+30 : f32
      %50 = vector.shape_cast %38 : vector<504x1xf32> to vector<504x1xf32>
      %51 = vector.broadcast %50 : vector<504x1xf32> to vector<504x256xf32>
      %52 = vector.broadcast %cst_24 : f32 to vector<504x256xf32>
      %53 = arith.select %13, %51, %52 : vector<504x256xi1>, vector<504x256xf32>
      %c0_25 = arith.constant 0 : index
      %c0_26 = arith.constant 0 : index
      %54 = vector.load %arg8[%c0_25, %c0_26] : memref<1x256xf32, #tpu.memory_space<vmem>>, vector<1x256xf32>
      %cst_27 = arith.constant dense<0xFF800000> : vector<256xf32>
      %55 = vector.multi_reduction <maximumf>, %53, %cst_27 [0] : vector<504x256xf32> to vector<256xf32>
      %56 = vector.shape_cast %55 : vector<256xf32> to vector<1x256xf32>
      %57 = arith.maximumf %54, %56 : vector<1x256xf32>
      %c0_28 = arith.constant 0 : index
      %c0_29 = arith.constant 0 : index
      %58 = vector.load %arg8[%c0_28, %c0_29] : memref<1x256xf32, #tpu.memory_space<vmem>>, vector<1x256xf32>
      tpu.vector_store %arg8[%c0_28, %c0_29], %57 {strides = array<i32>} : memref<1x256xf32, #tpu.memory_space<vmem>>, vector<1x256xf32>,
    } else {
    }
    %c1_i32_19 = arith.constant 1 : i32
    %42 = arith.cmpi eq, %arg0, %c1_i32_19 : i32
    %43 = arith.extui %42 : i1 to i32
    %c0_i32_20 = arith.constant 0 : i32
    %44 = arith.cmpi ne, %43, %c0_i32_20 : i32
    scf.if %44 {
      %c0_24 = arith.constant 0 : index
      %c0_25 = arith.constant 0 : index
      %50 = vector.load %arg8[%c0_24, %c0_25] : memref<1x256xf32, #tpu.memory_space<vmem>>, vector<1x256xf32>
      %cst_26 = arith.constant -1.000000e+30 : f32
      %51 = vector.shape_cast %50 : vector<1x256xf32> to vector<1x256xf32>
      %52 = vector.broadcast %51 : vector<1x256xf32> to vector<504x256xf32>
      %53 = vector.broadcast %cst_26 : f32 to vector<504x256xf32>
      %54 = arith.select %13, %52, %53 : vector<504x256xi1>, vector<504x256xf32>
      %cst_27 = arith.constant dense<0xFF800000> : vector<504xf32>
      %55 = vector.multi_reduction <maximumf>, %54, %cst_27 [1] : vector<504x256xf32> to vector<504xf32>
      %56 = vector.shape_cast %55 : vector<504xf32> to vector<504x1xf32>
      %c0_i32_28 = arith.constant 0 : i32
      %57 = vector.broadcast %c0_i32_28 : i32 to vector<504x1xi32>
      %58 = arith.cmpi sge, %5, %57 : vector<504x1xi32>
      %59 = arith.subf %38, %56 : vector<504x1xf32>
      %cst_29 = arith.constant -1.000000e+30 : f32
      %60 = vector.broadcast %cst_29 : f32 to vector<504x1xf32>
      %61 = arith.select %58, %59, %60 : vector<504x1xi1>, vector<504x1xf32>
      %62 = math.exp %61 : vector<504x1xf32>
      %63 = vector.broadcast %62 : vector<504x1xf32> to vector<504x32xf32>
      %64 = arith.mulf %63, %31 : vector<504x32xf32>
      %c0_30 = arith.constant 0 : index
      %c0_31 = arith.constant 0 : index
      %65 = vector.load %arg10[%c0_30, %c0_31] : memref<504x33xf32, #tpu.memory_space<vmem>>, vector<504x32xf32>
      tpu.vector_store %arg10[%c0_30, %c0_31], %64 {strides = array<i32>} : memref<504x33xf32, #tpu.memory_space<vmem>>, vector<504x32xf32>,
      %c0_32 = arith.constant 0 : index
      %c32 = arith.constant 32 : index
      %66 = vector.load %arg10[%c0_32, %c32] : memref<504x33xf32, #tpu.memory_space<vmem>>, vector<504x1xf32>
      tpu.vector_store %arg10[%c0_32, %c32], %62 {strides = array<i32>} : memref<504x33xf32, #tpu.memory_space<vmem>>, vector<504x1xf32>,
      %c0_33 = arith.constant 0 : index
      %c0_34 = arith.constant 0 : index
      %67 = vector.load %arg9[%c0_33, %c0_34] : memref<256x33xf32, #tpu.memory_space<vmem>>, vector<256x33xf32>
      %c0_35 = arith.constant 0 : index
      %c0_36 = arith.constant 0 : index
      %68 = vector.load %arg10[%c0_35, %c0_36] : memref<504x33xf32, #tpu.memory_space<vmem>>, vector<504x33xf32>
      %cst_37 = arith.constant dense<0.000000e+00> : vector<256x33xf32>
      %69 = tpu.matmul %15, %68, %cst_37 {dimension_numbers = #tpu.dot_dimension_numbers<[0], [0], [1], [1], [0, 1, 1, 1], [], []>} : vector<504x256xf32>, vector<504x33xf32>, vector<256x33xf32> -> vector<256x33xf32>
      %70 = arith.addf %67, %69 : vector<256x33xf32>
      %c0_38 = arith.constant 0 : index
      %c0_39 = arith.constant 0 : index
      %71 = vector.load %arg9[%c0_38, %c0_39] : memref<256x33xf32, #tpu.memory_space<vmem>>, vector<256x33xf32>
      tpu.vector_store %arg9[%c0_38, %c0_39], %70 {strides = array<i32>} : memref<256x33xf32, #tpu.memory_space<vmem>>, vector<256x33xf32>,
    } else {
    }
    %c1_i32_21 = arith.constant 1 : i32
    %45 = arith.cmpi eq, %arg0, %c1_i32_21 : i32
    %c0_i32_22 = arith.constant 0 : i32
    %46 = arith.cmpi eq, %arg1, %c0_i32_22 : i32
    %47 = arith.andi %45, %46 : i1
    %48 = arith.extui %47 : i1 to i32
    %c0_i32_23 = arith.constant 0 : i32
    %49 = arith.cmpi ne, %48, %c0_i32_23 : i32
    scf.if %49 {
      %c0_24 = arith.constant 0 : index
      %c0_25 = arith.constant 0 : index
      %50 = vector.load %arg9[%c0_24, %c0_25] : memref<256x33xf32, #tpu.memory_space<vmem>>, vector<256x32xf32>
      %c0_26 = arith.constant 0 : index
      %c32 = arith.constant 32 : index
      %51 = vector.load %arg9[%c0_26, %c32] : memref<256x33xf32, #tpu.memory_space<vmem>>, vector<256x1xf32>
      %cst_27 = arith.constant 0.000000e+00 : f32
      %52 = vector.broadcast %cst_27 : f32 to vector<256x1xf32>
      %53 = arith.cmpf ogt, %51, %52 : vector<256x1xf32>
      %cst_28 = arith.constant 1.000000e-30 : f32
      %54 = vector.broadcast %cst_28 : f32 to vector<256x1xf32>
      %55 = arith.maximumf %51, %54 : vector<256x1xf32>
      %56 = vector.broadcast %55 : vector<256x1xf32> to vector<256x32xf32>
      %57 = arith.divf %50, %56 : vector<256x32xf32>
      %cst_29 = arith.constant 0.000000e+00 : f32
      %58 = vector.shape_cast %53 : vector<256x1xi1> to vector<256x1xi1>
      %59 = vector.broadcast %58 : vector<256x1xi1> to vector<256x32xi1>
      %60 = vector.broadcast %cst_29 : f32 to vector<256x32xf32>
      %61 = arith.select %59, %57, %60 : vector<256x32xi1>, vector<256x32xf32>
      %c0_30 = arith.constant 0 : index
      %c0_31 = arith.constant 0 : index
      %62 = vector.load %arg7[%c0_30, %c0_31] : memref<256x32xf32, #tpu.memory_space<vmem>>, vector<256x32xf32>
      tpu.vector_store %arg7[%c0_30, %c0_31], %61 {strides = array<i32>} : memref<256x32xf32, #tpu.memory_space<vmem>>, vector<256x32xf32>,
    } else {
    }
    return
  }
  func.func @transform_0(%arg0: i32, %arg1: i32) -> (i32, i32) {
    %c0_i32 = arith.constant 0 : i32
    %c0_i32_0 = arith.constant 0 : i32
    return %arg1, %c0_i32 : i32, i32
  }
  func.func @transform_1(%arg0: i32, %arg1: i32) -> (i32, i32) {
    %c0_i32 = arith.constant 0 : i32
    %c0_i32_0 = arith.constant 0 : i32
    return %arg1, %c0_i32 : i32, i32
  }
  func.func @transform_2(%arg0: i32, %arg1: i32) -> (i32, i32) {
    %c0_i32 = arith.constant 0 : i32
    %c0_i32_0 = arith.constant 0 : i32
    return %arg1, %c0_i32 : i32, i32
  }
  func.func @transform_3(%arg0: i32, %arg1: i32) -> (i32, i32) {
    %c0_i32 = arith.constant 0 : i32
    %c0_i32_0 = arith.constant 0 : i32
    %c0_i32_1 = arith.constant 0 : i32
    return %c0_i32, %c0_i32_0 : i32, i32
  }
  func.func @transform_4(%arg0: i32, %arg1: i32) -> (i32, i32) {
    %c0_i32 = arith.constant 0 : i32
    %c0_i32_0 = arith.constant 0 : i32
    %c0_i32_1 = arith.constant 0 : i32
    return %c0_i32, %c0_i32_0 : i32, i32
  }
  func.func @transform_5(%arg0: i32, %arg1: i32) -> (i32, i32) {
    %c0_i32 = arith.constant 0 : i32
    %c0_i32_0 = arith.constant 0 : i32
    %c0_i32_1 = arith.constant 0 : i32
    return %c0_i32, %c0_i32_0 : i32, i32
  }
}

</mosaic_0001>

<llo_original>
// kernel: tpu_custom_call.1
$region0: #{tpu_custom_call.1}
  #allocation0 [shape = 'u32[]', space=smem, size = 0x4, offset = 0x4, fixed_abs, tag = 'smem constant byte address 0x4 - core index']
  #allocation1 [shape = 'u32[72,128]{1,0:T(1,128)}', space=vmem, size = 0x9000, scoped, tag = 'internal scratch']
  #allocation2 [shape = 'f32[1,256]{1,0:T(1,128)}', space=vmem, size = 0x400, scoped, tag = 'scratch operand']
  #allocation3 [shape = 'f32[256,33]{1,0:T(8,128)}', space=vmem, size = 0x20000, scoped, tag = 'scratch operand']
  #allocation4 [shape = 'f32[504,33]{1,0:T(8,128)}', space=vmem, size = 0x3f000, scoped, tag = 'scratch operand']
  %s0 = inlined_call_operand.vmem [shape: s32[504,1], index: 0, kind: input, shape index: {}]
  %s1 = inlined_call_operand.vmem [shape: s32[504,1], index: 1, kind: input, shape index: {}]
  %s2 = inlined_call_operand.vmem [shape: s32[504,1], index: 2, kind: input, shape index: {}]
  %s3 = inlined_call_operand.vmem [shape: f32[256,32], index: 3, kind: input, shape index: {}]
  %s4 = inlined_call_operand.vmem [shape: f32[8,32], index: 4, kind: input, shape index: {}]
  %s5 = inlined_call_operand.vmem [shape: f32[256,32], index: 5, kind: output, shape index: {}]
  %s6 = sld [smem:[#allocation0]]
  $region69: #{tpu_custom_call.1} parent=0
    _
  %s8 = ssub.s32 1, %s6
  %s9 = scalar_select 0, %s8, %s6
  loop: start=0, step=1, limit=4
  $region2: #{tpu_custom_call.1} parent=0 // loop_pre_header
    _
  $region3: #{tpu_custom_call.1} parent=0 // loop_header
    %s11 = sphi 0, %s15
    %p12 = scmp.ge.s32.totalorder %s11, 4
    %s18 = sphi 0, %s30
    %s19 = sphi 0, %s26
    %s20 = sphi 0, %s18
    %s21 = sphi 0, %s19
    %s22 = sphi 0, %s20
    %s23 = sphi 0, %s21
    %s33 = sphi 0, %s35
    %s36 = sphi 0, %s33
    %s37 = sphi 0, %s36
    %s53 = sphi 0, %s37
    %s59 = sphi 0, %s61
    %s62 = sphi 0, %s59
    %s63 = sphi 0, %s62
    %s79 = sphi 0, %s63
    %s85 = sphi 0, %s87
    %s88 = sphi 0, %s85
    %s89 = sphi 0, %s88
    %s105 = sphi 0, %s89
    %s109 = sphi 0, %s109
    %s111 = sphi 0, %s109
    %s112 = sphi 0, %s111
    %s126 = sphi 0, %s112
    %s130 = sphi 0, %s130
    %s132 = sphi 0, %s130
    %s133 = sphi 0, %s132
    %s147 = sphi 0, %s133
    %s151 = sphi 0, %s151
    %s153 = sphi 0, %s151
    %s154 = sphi 0, %s153
    %s168 = sphi 0, %s154
  $region4: #{tpu_custom_call.1} parent=0 // loop_header_branch
    %14 = sbr.rel (%p12) target = $region8
  $region5: #{tpu_custom_call.1} parent=0 // loop_body
    %s16 = ssub.s32 %s11, 1
    %s17 = ssub.s32 %s11, 2
    %s24 = sadd.s32 1, %s19
    %p25 = scmp.ge.s32.totalorder %s24, 1
    %s26 = scalar_select %p25, 0, %s24
    %s27 = sadd.s32 1, %s18
    %s28 = scalar_select %p25, %s27, %s18
    %p29 = scmp.ge.s32.totalorder %s28, 2
    %s30 = scalar_select %p29, 0, %s28
    %s31 = ssub.s32 %s19, %s26
    %p32 = scmp.eq.s32.totalorder %s31, 0
    %s34 = sadd.s32 %s33, 1
    %s35 = scalar_select %p32, %s33, %s34
    %p38 = pneg %p32
    %p39 = scmp.eq.s32.totalorder %s11, 1
    %p40 = por %p38, %p39
    %p41 = scmp.ne.s32.totalorder %s33, %s36
    %p42 = scmp.eq.s32.totalorder %s11, 0
    %p43 = por %p41, %p42
    %p44 = scmp.ne.s32.totalorder %s33, %s36
    %p45 = scmp.eq.s32.totalorder %s16, 1
    %p46 = por %p44, %p45
    %p47 = scmp.ne.s32.totalorder %s36, %s37
    %p48 = scmp.eq.s32.totalorder %s16, 0
    %p49 = por %p47, %p48
    %p50 = scmp.ne.s32.totalorder %s36, %s37
    %p51 = scmp.eq.s32.totalorder %s17, 1
    %p52 = por %p50, %p51
    %p54 = scmp.ne.s32.totalorder %s37, %s53
    %p55 = scmp.eq.s32.totalorder %s17, 0
    %p56 = por %p54, %p55
    %s57 = ssub.s32 %s19, %s26
    %p58 = scmp.eq.s32.totalorder %s57, 0
    %s60 = sadd.s32 %s59, 1
    %s61 = scalar_select %p58, %s59, %s60
    %p64 = pneg %p58
    %p65 = scmp.eq.s32.totalorder %s11, 1
    %p66 = por %p64, %p65
    %p67 = scmp.ne.s32.totalorder %s59, %s62
    %p68 = scmp.eq.s32.totalorder %s11, 0
    %p69 = por %p67, %p68
    %p70 = scmp.ne.s32.totalorder %s59, %s62
    %p71 = scmp.eq.s32.totalorder %s16, 1
    %p72 = por %p70, %p71
    %p73 = scmp.ne.s32.totalorder %s62, %s63
    %p74 = scmp.eq.s32.totalorder %s16, 0
    %p75 = por %p73, %p74
    %p76 = scmp.ne.s32.totalorder %s62, %s63
    %p77 = scmp.eq.s32.totalorder %s17, 1
    %p78 = por %p76, %p77
    %p80 = scmp.ne.s32.totalorder %s63, %s79
    %p81 = scmp.eq.s32.totalorder %s17, 0
    %p82 = por %p80, %p81
    %s83 = ssub.s32 %s19, %s26
    %p84 = scmp.eq.s32.totalorder %s83, 0
    %s86 = sadd.s32 %s85, 1
    %s87 = scalar_select %p84, %s85, %s86
    %p90 = pneg %p84
    %p91 = scmp.eq.s32.totalorder %s11, 1
    %p92 = por %p90, %p91
    %p93 = scmp.ne.s32.totalorder %s85, %s88
    %p94 = scmp.eq.s32.totalorder %s11, 0
    %p95 = por %p93, %p94
    %p96 = scmp.ne.s32.totalorder %s85, %s88
    %p97 = scmp.eq.s32.totalorder %s16, 1
    %p98 = por %p96, %p97
    %p99 = scmp.ne.s32.totalorder %s88, %s89
    %p100 = scmp.eq.s32.totalorder %s16, 0
    %p101 = por %p99, %p100
    %p102 = scmp.ne.s32.totalorder %s88, %s89
    %p103 = scmp.eq.s32.totalorder %s17, 1
    %p104 = por %p102, %p103
    %p106 = scmp.ne.s32.totalorder %s89, %s105
    %p107 = scmp.eq.s32.totalorder %s17, 0
    %p108 = por %p106, %p107
    %s110 = sadd.s32 %s109, 1
    %p113 = scmp.eq.s32.totalorder %s11, 1
    %p114 = scmp.ne.s32.totalorder %s109, %s111
    %p115 = scmp.eq.s32.totalorder %s11, 0
    %p116 = por %p114, %p115
    %p117 = scmp.ne.s32.totalorder %s109, %s111
    %p118 = scmp.eq.s32.totalorder %s16, 1
    %p119 = por %p117, %p118
    %p120 = scmp.ne.s32.totalorder %s111, %s112
    %p121 = scmp.eq.s32.totalorder %s16, 0
    %p122 = por %p120, %p121
    %p123 = scmp.ne.s32.totalorder %s111, %s112
    %p124 = scmp.eq.s32.totalorder %s17, 1
    %p125 = por %p123, %p124
    %p127 = scmp.ne.s32.totalorder %s112, %s126
    %p128 = scmp.eq.s32.totalorder %s17, 0
    %p129 = por %p127, %p128
    %s131 = sadd.s32 %s130, 1
    %p134 = scmp.eq.s32.totalorder %s11, 1
    %p135 = scmp.ne.s32.totalorder %s130, %s132
    %p136 = scmp.eq.s32.totalorder %s11, 0
    %p137 = por %p135, %p136
    %p138 = scmp.ne.s32.totalorder %s130, %s132
    %p139 = scmp.eq.s32.totalorder %s16, 1
    %p140 = por %p138, %p139
    %p141 = scmp.ne.s32.totalorder %s132, %s133
    %p142 = scmp.eq.s32.totalorder %s16, 0
    %p143 = por %p141, %p142
    %p144 = scmp.ne.s32.totalorder %s132, %s133
    %p145 = scmp.eq.s32.totalorder %s17, 1
    %p146 = por %p144, %p145
    %p148 = scmp.ne.s32.totalorder %s133, %s147
    %p149 = scmp.eq.s32.totalorder %s17, 0
    %p150 = por %p148, %p149
    %s152 = sadd.s32 %s151, 1
    %p155 = scmp.eq.s32.totalorder %s11, 1
    %p156 = scmp.ne.s32.totalorder %s151, %s153
    %p157 = scmp.eq.s32.totalorder %s11, 0
    %p158 = por %p156, %p157
    %p159 = scmp.ne.s32.totalorder %s151, %s153
    %p160 = scmp.eq.s32.totalorder %s16, 1
    %p161 = por %p159, %p160
    %p162 = scmp.ne.s32.totalorder %s153, %s154
    %p163 = scmp.eq.s32.totalorder %s16, 0
    %p164 = por %p162, %p163
    %p165 = scmp.ne.s32.totalorder %s153, %s154
    %p166 = scmp.eq.s32.totalorder %s17, 1
    %p167 = por %p165, %p166
    %p169 = scmp.ne.s32.totalorder %s154, %s168
    %p170 = scmp.eq.s32.totalorder %s17, 0
    %p171 = por %p169, %p170
    %p172 = scmp.le.s32.totalorder 1, %s11
    %p173 = scmp.lt.s32.totalorder %s11, 3
    %p174 = pnand %p172, %p173
    %p175 = pneg %p174
    // Predicated region
    $region9: #{tpu_custom_call.1} parent=5 // pred_check
      _
    $region10: #{tpu_custom_call.1} parent=5 // pred_check_branch
      %177 = sbr.rel (%p174) target = $region12
    $region11: #{tpu_custom_call.1} parent=5 // pred_region
      %s178 = ssub.s32 %s11, 1
      // Predicated region
      $region13: #{tpu_custom_call.1} parent=11 // pred_check
        %p179 = pneg %p49
      $region14: #{tpu_custom_call.1} parent=11 // pred_check_branch
        %181 = sbr.rel (%p179) target = $region16
      $region15: #{tpu_custom_call.1} parent=11 // pred_region
        %s182 = smul.u32 63, %s21
        %p183 = scmp.lt.s32.totalorder %s182, 62
        %s184 = scalar_select %p183, %s182, 62
        %s185 = smul.addr %s184, 8
        %s186 = scalar_lea.vmem %s0, %s185
        %s187 = smul.u32 63, %s21
      $region16: #{tpu_custom_call.1} parent=11 // pred_fallthru
        _
      // Predicated region
      $region17: #{tpu_custom_call.1} parent=11 // pred_check
        %p188 = pneg %p75
      $region18: #{tpu_custom_call.1} parent=11 // pred_check_branch
        %190 = sbr.rel (%p188) target = $region20
      $region19: #{tpu_custom_call.1} parent=11 // pred_region
        %s191 = smul.u32 63, %s21
        %p192 = scmp.lt.s32.totalorder %s191, 62
        %s193 = scalar_select %p192, %s191, 62
        %s194 = smul.addr %s193, 8
        %s195 = scalar_lea.vmem %s1, %s194
        %s196 = smul.u32 63, %s21
      $region20: #{tpu_custom_call.1} parent=11 // pred_fallthru
        _
      // Predicated region
      $region21: #{tpu_custom_call.1} parent=11 // pred_check
        %p197 = pneg %p101
      $region22: #{tpu_custom_call.1} parent=11 // pred_check_branch
        %199 = sbr.rel (%p197) target = $region24
      $region23: #{tpu_custom_call.1} parent=11 // pred_region
        %s200 = smul.u32 63, %s21
        %p201 = scmp.lt.s32.totalorder %s200, 62
        %s202 = scalar_select %p201, %s200, 62
        %s203 = smul.addr %s202, 8
        %s204 = scalar_lea.vmem %s2, %s203
        %s205 = smul.u32 63, %s21
      $region24: #{tpu_custom_call.1} parent=11 // pred_fallthru
        _
      // Predicated region
      $region25: #{tpu_custom_call.1} parent=11 // pred_check
        %p206 = pneg %p122
      $region26: #{tpu_custom_call.1} parent=11 // pred_check_branch
        %208 = sbr.rel (%p206) target = $region28
      $region27: #{tpu_custom_call.1} parent=11 // pred_region
        _
      $region28: #{tpu_custom_call.1} parent=11 // pred_fallthru
        _
      // Predicated region
      $region29: #{tpu_custom_call.1} parent=11 // pred_check
        %p209 = pneg %p143
      $region30: #{tpu_custom_call.1} parent=11 // pred_check_branch
        %211 = sbr.rel (%p209) target = $region32
      $region31: #{tpu_custom_call.1} parent=11 // pred_region
        _
      $region32: #{tpu_custom_call.1} parent=11 // pred_fallthru
        _
    $region12: #{tpu_custom_call.1} parent=5 // pred_fallthru
      _
    %p212 = scmp.lt.s32.totalorder %s11, 2
    // Predicated region
    $region33: #{tpu_custom_call.1} parent=5 // pred_check
      %p213 = pneg %p212
    $region34: #{tpu_custom_call.1} parent=5 // pred_check_branch
      %215 = sbr.rel (%p213) target = $region36
    $region35: #{tpu_custom_call.1} parent=5 // pred_region
      _
    $region36: #{tpu_custom_call.1} parent=5 // pred_fallthru
      _
    %p216 = scmp.le.s32.totalorder 1, %s11
    %p217 = scmp.lt.s32.totalorder %s11, 3
    %p218 = pnand %p216, %p217
    %p219 = pneg %p218
    // Predicated region
    $region37: #{tpu_custom_call.1} parent=5 // pred_check
      _
    $region38: #{tpu_custom_call.1} parent=5 // pred_check_branch
      %221 = sbr.rel (%p218) target = $region40
    $region39: #{tpu_custom_call.1} parent=5 // pred_region
      %s222 = ssub.s32 %s11, 1
      %s223 = smul.u32 63, %s21
      %p224 = scmp.lt.s32.totalorder %s223, 62
      %s225 = scalar_select %p224, %s223, 62
      %s226 = smul.addr %s225, 8
      %s227 = scalar_lea.vmem %s0, %s226
      %p228 = pneg %p49
      %p229 = pneg %p46
      %s230 = smul.u32 63, %s21
      %p231 = scmp.lt.s32.totalorder %s230, 62
      %s232 = scalar_select %p231, %s230, 62
      %s233 = smul.addr %s232, 8
      %s234 = scalar_lea.vmem %s1, %s233
      %p235 = pneg %p75
      %p236 = pneg %p72
      %s237 = smul.u32 63, %s21
      %p238 = scmp.lt.s32.totalorder %s237, 62
      %s239 = scalar_select %p238, %s237, 62
      %s240 = smul.addr %s239, 8
      %s241 = scalar_lea.vmem %s2, %s240
      %p242 = pneg %p101
      %p243 = pneg %p98
      %p244 = pneg %p122
      %p245 = pneg %p119
      %p246 = pneg %p143
      %p247 = pneg %p140
      %p248 = pneg %p164
      %p249 = pneg %p161
      %s250 = smul.u32 63, %s21
      %p251 = scmp.lt.s32.totalorder %s250, 62
      %s252 = scalar_select %p251, %s250, 62
      %s253 = smul.addr %s252, 8
      %s254 = scalar_lea.vmem %s0, %s253
      %s255 = smul.u32 63, %s21
      %s256 = smul.u32 63, %s21
      %p257 = scmp.lt.s32.totalorder %s256, 62
      %s258 = scalar_select %p257, %s256, 62
      %s259 = smul.addr %s258, 8
      %s260 = scalar_lea.vmem %s1, %s259
      %s261 = smul.u32 63, %s21
      %s262 = smul.u32 63, %s21
      %p263 = scmp.lt.s32.totalorder %s262, 62
      %s264 = scalar_select %p263, %s262, 62
      %s265 = smul.addr %s264, 8
      %s266 = scalar_lea.vmem %s2, %s265
      %s267 = smul.u32 63, %s21
      %p268 = scmp.eq.s32.totalorder %s20, 0
      %p269 = scmp.eq.s32.totalorder %s21, 0
      %p270 = pnand %p268, %p269
      %p271 = pneg %p270
      // Predicated region
      $region41: #{tpu_custom_call.1} parent=39 // pred_check
        _
      $region42: #{tpu_custom_call.1} parent=39 // pred_check_branch
        %273 = sbr.rel (%p270) target = $region44
      $region43: #{tpu_custom_call.1} parent=39 // pred_region
        %v274 = vlaneseq
        %vm275 = vcmp.ge.s32.totalorder %v274, 0
        %vm276 = vcmp.lt.s32.totalorder %v274, 256
        %vm277 = vmand %vm275, %vm276
        %278 = vst.msk [vmem:[#allocation2] sm:$0x3] %vm277, -1e+30
        %vm279 = vcmask 269312
        %280 = vst.msk [vmem:[#allocation3] sm:$0xff] %vm279, 0.0
        %281 = vst.msk [vmem:[#allocation3 + $0x8] sm:$0xff] %vm279, 0.0
        %282 = vst.msk [vmem:[#allocation3 + $0x10] sm:$0xff] %vm279, 0.0
        %283 = vst.msk [vmem:[#allocation3 + $0x18] sm:$0xff] %vm279, 0.0
        %284 = vst.msk [vmem:[#allocation3 + $0x20] sm:$0xff] %vm279, 0.0
        %285 = vst.msk [vmem:[#allocation3 + $0x28] sm:$0xff] %vm279, 0.0
        %286 = vst.msk [vmem:[#allocation3 + $0x30] sm:$0xff] %vm279, 0.0
        %287 = vst.msk [vmem:[#allocation3 + $0x38] sm:$0xff] %vm279, 0.0
        %288 = vst.msk [vmem:[#allocation3 + $0x40] sm:$0xff] %vm279, 0.0
        %289 = vst.msk [vmem:[#allocation3 + $0x48] sm:$0xff] %vm279, 0.0
        %290 = vst.msk [vmem:[#allocation3 + $0x50] sm:$0xff] %vm279, 0.0
        %291 = vst.msk [vmem:[#allocation3 + $0x58] sm:$0xff] %vm279, 0.0
        %292 = vst.msk [vmem:[#allocation3 + $0x60] sm:$0xff] %vm279, 0.0
        %293 = vst.msk [vmem:[#allocation3 + $0x68] sm:$0xff] %vm279, 0.0
        %294 = vst.msk [vmem:[#allocation3 + $0x70] sm:$0xff] %vm279, 0.0
        %295 = vst.msk [vmem:[#allocation3 + $0x78] sm:$0xff] %vm279, 0.0
        %296 = vst.msk [vmem:[#allocation3 + $0x80] sm:$0xff] %vm279, 0.0
        %297 = vst.msk [vmem:[#allocation3 + $0x88] sm:$0xff] %vm279, 0.0
        %298 = vst.msk [vmem:[#allocation3 + $0x90] sm:$0xff] %vm279, 0.0
        %299 = vst.msk [vmem:[#allocation3 + $0x98] sm:$0xff] %vm279, 0.0
        %300 = vst.msk [vmem:[#allocation3 + $0xa0] sm:$0xff] %vm279, 0.0
        %301 = vst.msk [vmem:[#allocation3 + $0xa8] sm:$0xff] %vm279, 0.0
        %302 = vst.msk [vmem:[#allocation3 + $0xb0] sm:$0xff] %vm279, 0.0
        %303 = vst.msk [vmem:[#allocation3 + $0xb8] sm:$0xff] %vm279, 0.0
        %304 = vst.msk [vmem:[#allocation3 + $0xc0] sm:$0xff] %vm279, 0.0
        %305 = vst.msk [vmem:[#allocation3 + $0xc8] sm:$0xff] %vm279, 0.0
        %306 = vst.msk [vmem:[#allocation3 + $0xd0] sm:$0xff] %vm279, 0.0
        %307 = vst.msk [vmem:[#allocation3 + $0xd8] sm:$0xff] %vm279, 0.0
        %308 = vst.msk [vmem:[#allocation3 + $0xe0] sm:$0xff] %vm279, 0.0
        %309 = vst.msk [vmem:[#allocation3 + $0xe8] sm:$0xff] %vm279, 0.0
        %310 = vst.msk [vmem:[#allocation3 + $0xf0] sm:$0xff] %vm279, 0.0
        %311 = vst.msk [vmem:[#allocation3 + $0xf8] sm:$0xff] %vm279, 0.0
      $region44: #{tpu_custom_call.1} parent=39 // pred_fallthru
        _
      %v312 = vld [vmem:[%s254] sm:$0xff]
      %v313 = vld [vmem:[%s254 + $0x8] sm:$0xff]
      %v314 = vld [vmem:[%s254 + $0x10] sm:$0xff]
      %v315 = vld [vmem:[%s254 + $0x18] sm:$0xff]
      %v316 = vld [vmem:[%s254 + $0x20] sm:$0xff]
      %v317 = vld [vmem:[%s254 + $0x28] sm:$0xff]
      %v318 = vld [vmem:[%s254 + $0x30] sm:$0xff]
      %v319 = vld [vmem:[%s254 + $0x38] sm:$0xff]
      %v320 = vld [vmem:[%s254 + $0x40] sm:$0xff]
      %v321 = vld [vmem:[%s254 + $0x48] sm:$0xff]
      %v322 = vld [vmem:[%s254 + $0x50] sm:$0xff]
      %v323 = vld [vmem:[%s254 + $0x58] sm:$0xff]
      %v324 = vld [vmem:[%s254 + $0x60] sm:$0xff]
      %v325 = vld [vmem:[%s254 + $0x68] sm:$0xff]
      %v326 = vld [vmem:[%s254 + $0x70] sm:$0xff]
      %v327 = vld [vmem:[%s254 + $0x78] sm:$0xff]
      %v328 = vld [vmem:[%s254 + $0x80] sm:$0xff]
      %v329 = vld [vmem:[%s254 + $0x88] sm:$0xff]
      %v330 = vld [vmem:[%s254 + $0x90] sm:$0xff]
      %v331 = vld [vmem:[%s254 + $0x98] sm:$0xff]
      %v332 = vld [vmem:[%s254 + $0xa0] sm:$0xff]
      %v333 = vld [vmem:[%s254 + $0xa8] sm:$0xff]
      %v334 = vld [vmem:[%s254 + $0xb0] sm:$0xff]
      %v335 = vld [vmem:[%s254 + $0xb8] sm:$0xff]
      %v336 = vld [vmem:[%s254 + $0xc0] sm:$0xff]
      %v337 = vld [vmem:[%s254 + $0xc8] sm:$0xff]
      %v338 = vld [vmem:[%s254 + $0xd0] sm:$0xff]
      %v339 = vld [vmem:[%s254 + $0xd8] sm:$0xff]
      %v340 = vld [vmem:[%s254 + $0xe0] sm:$0xff]
      %v341 = vld [vmem:[%s254 + $0xe8] sm:$0xff]
      %v342 = vld [vmem:[%s254 + $0xf0] sm:$0xff]
      %v343 = vld [vmem:[%s254 + $0xf8] sm:$0xff]
      %v344 = vld [vmem:[%s254 + $0x100] sm:$0xff]
      %v345 = vld [vmem:[%s254 + $0x108] sm:$0xff]
      %v346 = vld [vmem:[%s254 + $0x110] sm:$0xff]
      %v347 = vld [vmem:[%s254 + $0x118] sm:$0xff]
      %v348 = vld [vmem:[%s254 + $0x120] sm:$0xff]
      %v349 = vld [vmem:[%s254 + $0x128] sm:$0xff]
      %v350 = vld [vmem:[%s254 + $0x130] sm:$0xff]
      %v351 = vld [vmem:[%s254 + $0x138] sm:$0xff]
      %v352 = vld [vmem:[%s254 + $0x140] sm:$0xff]
      %v353 = vld [vmem:[%s254 + $0x148] sm:$0xff]
      %v354 = vld [vmem:[%s254 + $0x150] sm:$0xff]
      %v355 = vld [vmem:[%s254 + $0x158] sm:$0xff]
      %v356 = vld [vmem:[%s254 + $0x160] sm:$0xff]
      %v357 = vld [vmem:[%s254 + $0x168] sm:$0xff]
      %v358 = vld [vmem:[%s254 + $0x170] sm:$0xff]
      %v359 = vld [vmem:[%s254 + $0x178] sm:$0xff]
      %v360 = vld [vmem:[%s254 + $0x180] sm:$0xff]
      %v361 = vld [vmem:[%s254 + $0x188] sm:$0xff]
      %v362 = vld [vmem:[%s254 + $0x190] sm:$0xff]
      %v363 = vld [vmem:[%s254 + $0x198] sm:$0xff]
      %v364 = vld [vmem:[%s254 + $0x1a0] sm:$0xff]
      %v365 = vld [vmem:[%s254 + $0x1a8] sm:$0xff]
      %v366 = vld [vmem:[%s254 + $0x1b0] sm:$0xff]
      %v367 = vld [vmem:[%s254 + $0x1b8] sm:$0xff]
      %v368 = vld [vmem:[%s254 + $0x1c0] sm:$0xff]
      %v369 = vld [vmem:[%s254 + $0x1c8] sm:$0xff]
      %v370 = vld [vmem:[%s254 + $0x1d0] sm:$0xff]
      %v371 = vld [vmem:[%s254 + $0x1d8] sm:$0xff]
      %v372 = vld [vmem:[%s254 + $0x1e0] sm:$0xff]
      %v373 = vld [vmem:[%s254 + $0x1e8] sm:$0xff]
      %v374 = vld [vmem:[%s254 + $0x1f0] sm:$0xff]
      %v375 = vld [vmem:[%s260] sm:$0xff]
      %v376 = vld [vmem:[%s260 + $0x8] sm:$0xff]
      %v377 = vld [vmem:[%s260 + $0x10] sm:$0xff]
      %v378 = vld [vmem:[%s260 + $0x18] sm:$0xff]
      %v379 = vld [vmem:[%s260 + $0x20] sm:$0xff]
      %v380 = vld [vmem:[%s260 + $0x28] sm:$0xff]
      %v381 = vld [vmem:[%s260 + $0x30] sm:$0xff]
      %v382 = vld [vmem:[%s260 + $0x38] sm:$0xff]
      %v383 = vld [vmem:[%s260 + $0x40] sm:$0xff]
      %v384 = vld [vmem:[%s260 + $0x48] sm:$0xff]
      %v385 = vld [vmem:[%s260 + $0x50] sm:$0xff]
      %v386 = vld [vmem:[%s260 + $0x58] sm:$0xff]
      %v387 = vld [vmem:[%s260 + $0x60] sm:$0xff]
      %v388 = vld [vmem:[%s260 + $0x68] sm:$0xff]
      %v389 = vld [vmem:[%s260 + $0x70] sm:$0xff]
      %v390 = vld [vmem:[%s260 + $0x78] sm:$0xff]
      %v391 = vld [vmem:[%s260 + $0x80] sm:$0xff]
      %v392 = vld [vmem:[%s260 + $0x88] sm:$0xff]
      %v393 = vld [vmem:[%s260 + $0x90] sm:$0xff]
      %v394 = vld [vmem:[%s260 + $0x98] sm:$0xff]
      %v395 = vld [vmem:[%s260 + $0xa0] sm:$0xff]
      %v396 = vld [vmem:[%s260 + $0xa8] sm:$0xff]
      %v397 = vld [vmem:[%s260 + $0xb0] sm:$0xff]
      %v398 = vld [vmem:[%s260 + $0xb8] sm:$0xff]
      %v399 = vld [vmem:[%s260 + $0xc0] sm:$0xff]
      %v400 = vld [vmem:[%s260 + $0xc8] sm:$0xff]
      %v401 = vld [vmem:[%s260 + $0xd0] sm:$0xff]
      %v402 = vld [vmem:[%s260 + $0xd8] sm:$0xff]
      %v403 = vld [vmem:[%s260 + $0xe0] sm:$0xff]
      %v404 = vld [vmem:[%s260 + $0xe8] sm:$0xff]
      %v405 = vld [vmem:[%s260 + $0xf0] sm:$0xff]
      %v406 = vld [vmem:[%s260 + $0xf8] sm:$0xff]
      %v407 = vld [vmem:[%s260 + $0x100] sm:$0xff]
      %v408 = vld [vmem:[%s260 + $0x108] sm:$0xff]
      %v409 = vld [vmem:[%s260 + $0x110] sm:$0xff]
      %v410 = vld [vmem:[%s260 + $0x118] sm:$0xff]
      %v411 = vld [vmem:[%s260 + $0x120] sm:$0xff]
      %v412 = vld [vmem:[%s260 + $0x128] sm:$0xff]
      %v413 = vld [vmem:[%s260 + $0x130] sm:$0xff]
      %v414 = vld [vmem:[%s260 + $0x138] sm:$0xff]
      %v415 = vld [vmem:[%s260 + $0x140] sm:$0xff]
      %v416 = vld [vmem:[%s260 + $0x148] sm:$0xff]
      %v417 = vld [vmem:[%s260 + $0x150] sm:$0xff]
      %v418 = vld [vmem:[%s260 + $0x158] sm:$0xff]
      %v419 = vld [vmem:[%s260 + $0x160] sm:$0xff]
      %v420 = vld [vmem:[%s260 + $0x168] sm:$0xff]
      %v421 = vld [vmem:[%s260 + $0x170] sm:$0xff]
      %v422 = vld [vmem:[%s260 + $0x178] sm:$0xff]
      %v423 = vld [vmem:[%s260 + $0x180] sm:$0xff]
      %v424 = vld [vmem:[%s260 + $0x188] sm:$0xff]
      %v425 = vld [vmem:[%s260 + $0x190] sm:$0xff]
      %v426 = vld [vmem:[%s260 + $0x198] sm:$0xff]
      %v427 = vld [vmem:[%s260 + $0x1a0] sm:$0xff]
      %v428 = vld [vmem:[%s260 + $0x1a8] sm:$0xff]
      %v429 = vld [vmem:[%s260 + $0x1b0] sm:$0xff]
      %v430 = vld [vmem:[%s260 + $0x1b8] sm:$0xff]
      %v431 = vld [vmem:[%s260 + $0x1c0] sm:$0xff]
      %v432 = vld [vmem:[%s260 + $0x1c8] sm:$0xff]
      %v433 = vld [vmem:[%s260 + $0x1d0] sm:$0xff]
      %v434 = vld [vmem:[%s260 + $0x1d8] sm:$0xff]
      %v435 = vld [vmem:[%s260 + $0x1e0] sm:$0xff]
      %v436 = vld [vmem:[%s260 + $0x1e8] sm:$0xff]
      %v437 = vld [vmem:[%s260 + $0x1f0] sm:$0xff]
      %v438 = vld [vmem:[%s266] sm:$0xff]
      %v439 = vld [vmem:[%s266 + $0x8] sm:$0xff]
      %v440 = vld [vmem:[%s266 + $0x10] sm:$0xff]
      %v441 = vld [vmem:[%s266 + $0x18] sm:$0xff]
      %v442 = vld [vmem:[%s266 + $0x20] sm:$0xff]
      %v443 = vld [vmem:[%s266 + $0x28] sm:$0xff]
      %v444 = vld [vmem:[%s266 + $0x30] sm:$0xff]
      %v445 = vld [vmem:[%s266 + $0x38] sm:$0xff]
      %v446 = vld [vmem:[%s266 + $0x40] sm:$0xff]
      %v447 = vld [vmem:[%s266 + $0x48] sm:$0xff]
      %v448 = vld [vmem:[%s266 + $0x50] sm:$0xff]
      %v449 = vld [vmem:[%s266 + $0x58] sm:$0xff]
      %v450 = vld [vmem:[%s266 + $0x60] sm:$0xff]
      %v451 = vld [vmem:[%s266 + $0x68] sm:$0xff]
      %v452 = vld [vmem:[%s266 + $0x70] sm:$0xff]
      %v453 = vld [vmem:[%s266 + $0x78] sm:$0xff]
      %v454 = vld [vmem:[%s266 + $0x80] sm:$0xff]
      %v455 = vld [vmem:[%s266 + $0x88] sm:$0xff]
      %v456 = vld [vmem:[%s266 + $0x90] sm:$0xff]
      %v457 = vld [vmem:[%s266 + $0x98] sm:$0xff]
      %v458 = vld [vmem:[%s266 + $0xa0] sm:$0xff]
      %v459 = vld [vmem:[%s266 + $0xa8] sm:$0xff]
      %v460 = vld [vmem:[%s266 + $0xb0] sm:$0xff]
      %v461 = vld [vmem:[%s266 + $0xb8] sm:$0xff]
      %v462 = vld [vmem:[%s266 + $0xc0] sm:$0xff]
      %v463 = vld [vmem:[%s266 + $0xc8] sm:$0xff]
      %v464 = vld [vmem:[%s266 + $0xd0] sm:$0xff]
      %v465 = vld [vmem:[%s266 + $0xd8] sm:$0xff]
      %v466 = vld [vmem:[%s266 + $0xe0] sm:$0xff]
      %v467 = vld [vmem:[%s266 + $0xe8] sm:$0xff]
      %v468 = vld [vmem:[%s266 + $0xf0] sm:$0xff]
      %v469 = vld [vmem:[%s266 + $0xf8] sm:$0xff]
      %v470 = vld [vmem:[%s266 + $0x100] sm:$0xff]
      %v471 = vld [vmem:[%s266 + $0x108] sm:$0xff]
      %v472 = vld [vmem:[%s266 + $0x110] sm:$0xff]
      %v473 = vld [vmem:[%s266 + $0x118] sm:$0xff]
      %v474 = vld [vmem:[%s266 + $0x120] sm:$0xff]
      %v475 = vld [vmem:[%s266 + $0x128] sm:$0xff]
      %v476 = vld [vmem:[%s266 + $0x130] sm:$0xff]
      %v477 = vld [vmem:[%s266 + $0x138] sm:$0xff]
      %v478 = vld [vmem:[%s266 + $0x140] sm:$0xff]
      %v479 = vld [vmem:[%s266 + $0x148] sm:$0xff]
      %v480 = vld [vmem:[%s266 + $0x150] sm:$0xff]
      %v481 = vld [vmem:[%s266 + $0x158] sm:$0xff]
      %v482 = vld [vmem:[%s266 + $0x160] sm:$0xff]
      %v483 = vld [vmem:[%s266 + $0x168] sm:$0xff]
      %v484 = vld [vmem:[%s266 + $0x170] sm:$0xff]
      %v485 = vld [vmem:[%s266 + $0x178] sm:$0xff]
      %v486 = vld [vmem:[%s266 + $0x180] sm:$0xff]
      %v487 = vld [vmem:[%s266 + $0x188] sm:$0xff]
      %v488 = vld [vmem:[%s266 + $0x190] sm:$0xff]
      %v489 = vld [vmem:[%s266 + $0x198] sm:$0xff]
      %v490 = vld [vmem:[%s266 + $0x1a0] sm:$0xff]
      %v491 = vld [vmem:[%s266 + $0x1a8] sm:$0xff]
      %v492 = vld [vmem:[%s266 + $0x1b0] sm:$0xff]
      %v493 = vld [vmem:[%s266 + $0x1b8] sm:$0xff]
      %v494 = vld [vmem:[%s266 + $0x1c0] sm:$0xff]
      %v495 = vld [vmem:[%s266 + $0x1c8] sm:$0xff]
      %v496 = vld [vmem:[%s266 + $0x1d0] sm:$0xff]
      %v497 = vld [vmem:[%s266 + $0x1d8] sm:$0xff]
      %v498 = vld [vmem:[%s266 + $0x1e0] sm:$0xff]
      %v499 = vld [vmem:[%s266 + $0x1e8] sm:$0xff]
      %v500 = vld [vmem:[%s266 + $0x1f0] sm:$0xff]
      %v501 = vsub.s32 %v438, 1
      %v502 = vsub.s32 %v439, 1
      %v503 = vsub.s32 %v440, 1
      %v504 = vsub.s32 %v441, 1
      %v505 = vsub.s32 %v442, 1
      %v506 = vsub.s32 %v443, 1
      %v507 = vsub.s32 %v444, 1
      %v508 = vsub.s32 %v445, 1
      %v509 = vsub.s32 %v446, 1
      %v510 = vsub.s32 %v447, 1
      %v511 = vsub.s32 %v448, 1
      %v512 = vsub.s32 %v449, 1
      %v513 = vsub.s32 %v450, 1
      %v514 = vsub.s32 %v451, 1
      %v515 = vsub.s32 %v452, 1
      %v516 = vsub.s32 %v453, 1
      %v517 = vsub.s32 %v454, 1
      %v518 = vsub.s32 %v455, 1
      %v519 = vsub.s32 %v456, 1
      %v520 = vsub.s32 %v457, 1
      %v521 = vsub.s32 %v458, 1
      %v522 = vsub.s32 %v459, 1
      %v523 = vsub.s32 %v460, 1
      %v524 = vsub.s32 %v461, 1
      %v525 = vsub.s32 %v462, 1
      %v526 = vsub.s32 %v463, 1
      %v527 = vsub.s32 %v464, 1
      %v528 = vsub.s32 %v465, 1
      %v529 = vsub.s32 %v466, 1
      %v530 = vsub.s32 %v467, 1
      %v531 = vsub.s32 %v468, 1
      %v532 = vsub.s32 %v469, 1
      %v533 = vsub.s32 %v470, 1
      %v534 = vsub.s32 %v471, 1
      %v535 = vsub.s32 %v472, 1
      %v536 = vsub.s32 %v473, 1
      %v537 = vsub.s32 %v474, 1
      %v538 = vsub.s32 %v475, 1
      %v539 = vsub.s32 %v476, 1
      %v540 = vsub.s32 %v477, 1
      %v541 = vsub.s32 %v478, 1
      %v542 = vsub.s32 %v479, 1
      %v543 = vsub.s32 %v480, 1
      %v544 = vsub.s32 %v481, 1
      %v545 = vsub.s32 %v482, 1
      %v546 = vsub.s32 %v483, 1
      %v547 = vsub.s32 %v484, 1
      %v548 = vsub.s32 %v485, 1
      %v549 = vsub.s32 %v486, 1
      %v550 = vsub.s32 %v487, 1
      %v551 = vsub.s32 %v488, 1
      %v552 = vsub.s32 %v489, 1
      %v553 = vsub.s32 %v490, 1
      %v554 = vsub.s32 %v491, 1
      %v555 = vsub.s32 %v492, 1
      %v556 = vsub.s32 %v493, 1
      %v557 = vsub.s32 %v494, 1
      %v558 = vsub.s32 %v495, 1
      %v559 = vsub.s32 %v496, 1
      %v560 = vsub.s32 %v497, 1
      %v561 = vsub.s32 %v498, 1
      %v562 = vsub.s32 %v499, 1
      %v563 = vsub.s32 %v500, 1
      %v564 = vlaneseq
      %v565 = vand.u32 %v564, 127
      %v566 = vadd.s32 %v565, 128
      %567 = vset.pattern.permute.xlu0 0
      %568 = vperm.xlu0 %567, %v312
      %v569 = vpop.permute.xlu0 %568
      %570 = vset.pattern.permute.xlu0 0
      %571 = vperm.xlu0 %570, %v313
      %v572 = vpop.permute.xlu0 %571
      %573 = vset.pattern.permute.xlu0 0
      %574 = vperm.xlu0 %573, %v314
      %v575 = vpop.permute.xlu0 %574
      %576 = vset.pattern.permute.xlu0 0
      %577 = vperm.xlu0 %576, %v315
      %v578 = vpop.permute.xlu0 %577
      %579 = vset.pattern.permute.xlu0 0
      %580 = vperm.xlu0 %579, %v316
      %v581 = vpop.permute.xlu0 %580
      %582 = vset.pattern.permute.xlu0 0
      %583 = vperm.xlu0 %582, %v317
      %v584 = vpop.permute.xlu0 %583
      %585 = vset.pattern.permute.xlu0 0
      %586 = vperm.xlu0 %585, %v318
      %v587 = vpop.permute.xlu0 %586
      %588 = vset.pattern.permute.xlu0 0
      %589 = vperm.xlu0 %588, %v319
      %v590 = vpop.permute.xlu0 %589
      %591 = vset.pattern.permute.xlu0 0
      %592 = vperm.xlu0 %591, %v320
      %v593 = vpop.permute.xlu0 %592
      %594 = vset.pattern.permute.xlu0 0
      %595 = vperm.xlu0 %594, %v321
      %v596 = vpop.permute.xlu0 %595
      %597 = vset.pattern.permute.xlu0 0
      %598 = vperm.xlu0 %597, %v322
      %v599 = vpop.permute.xlu0 %598
      %600 = vset.pattern.permute.xlu0 0
      %601 = vperm.xlu0 %600, %v323
      %v602 = vpop.permute.xlu0 %601
      %603 = vset.pattern.permute.xlu0 0
      %604 = vperm.xlu0 %603, %v324
      %v605 = vpop.permute.xlu0 %604
      %606 = vset.pattern.permute.xlu0 0
      %607 = vperm.xlu0 %606, %v325
      %v608 = vpop.permute.xlu0 %607
      %609 = vset.pattern.permute.xlu0 0
      %610 = vperm.xlu0 %609, %v326
      %v611 = vpop.permute.xlu0 %610
      %612 = vset.pattern.permute.xlu0 0
      %613 = vperm.xlu0 %612, %v327
      %v614 = vpop.permute.xlu0 %613
      %615 = vset.pattern.permute.xlu0 0
      %616 = vperm.xlu0 %615, %v328
      %v617 = vpop.permute.xlu0 %616
      %618 = vset.pattern.permute.xlu0 0
      %619 = vperm.xlu0 %618, %v329
      %v620 = vpop.permute.xlu0 %619
      %621 = vset.pattern.permute.xlu0 0
      %622 = vperm.xlu0 %621, %v330
      %v623 = vpop.permute.xlu0 %622
      %624 = vset.pattern.permute.xlu0 0
      %625 = vperm.xlu0 %624, %v331
      %v626 = vpop.permute.xlu0 %625
      %627 = vset.pattern.permute.xlu0 0
      %628 = vperm.xlu0 %627, %v332
      %v629 = vpop.permute.xlu0 %628
      %630 = vset.pattern.permute.xlu0 0
      %631 = vperm.xlu0 %630, %v333
      %v632 = vpop.permute.xlu0 %631
      %633 = vset.pattern.permute.xlu0 0
      %634 = vperm.xlu0 %633, %v334
      %v635 = vpop.permute.xlu0 %634
      %636 = vset.pattern.permute.xlu0 0
      %637 = vperm.xlu0 %636, %v335
      %v638 = vpop.permute.xlu0 %637
      %639 = vset.pattern.permute.xlu0 0
      %640 = vperm.xlu0 %639, %v336
      %v641 = vpop.permute.xlu0 %640
      %642 = vset.pattern.permute.xlu0 0
      %643 = vperm.xlu0 %642, %v337
      %v644 = vpop.permute.xlu0 %643
      %645 = vset.pattern.permute.xlu0 0
      %646 = vperm.xlu0 %645, %v338
      %v647 = vpop.permute.xlu0 %646
      %648 = vset.pattern.permute.xlu0 0
      %649 = vperm.xlu0 %648, %v339
      %v650 = vpop.permute.xlu0 %649
      %651 = vset.pattern.permute.xlu0 0
      %652 = vperm.xlu0 %651, %v340
      %v653 = vpop.permute.xlu0 %652
      %654 = vset.pattern.permute.xlu0 0
      %655 = vperm.xlu0 %654, %v341
      %v656 = vpop.permute.xlu0 %655
      %657 = vset.pattern.permute.xlu0 0
      %658 = vperm.xlu0 %657, %v342
      %v659 = vpop.permute.xlu0 %658
      %660 = vset.pattern.permute.xlu0 0
      %661 = vperm.xlu0 %660, %v343
      %v662 = vpop.permute.xlu0 %661
      %663 = vset.pattern.permute.xlu0 0
      %664 = vperm.xlu0 %663, %v344
      %v665 = vpop.permute.xlu0 %664
      %666 = vset.pattern.permute.xlu0 0
      %667 = vperm.xlu0 %666, %v345
      %v668 = vpop.permute.xlu0 %667
      %669 = vset.pattern.permute.xlu0 0
      %670 = vperm.xlu0 %669, %v346
      %v671 = vpop.permute.xlu0 %670
      %672 = vset.pattern.permute.xlu0 0
      %673 = vperm.xlu0 %672, %v347
      %v674 = vpop.permute.xlu0 %673
      %675 = vset.pattern.permute.xlu0 0
      %676 = vperm.xlu0 %675, %v348
      %v677 = vpop.permute.xlu0 %676
      %678 = vset.pattern.permute.xlu0 0
      %679 = vperm.xlu0 %678, %v349
      %v680 = vpop.permute.xlu0 %679
      %681 = vset.pattern.permute.xlu0 0
      %682 = vperm.xlu0 %681, %v350
      %v683 = vpop.permute.xlu0 %682
      %684 = vset.pattern.permute.xlu0 0
      %685 = vperm.xlu0 %684, %v351
      %v686 = vpop.permute.xlu0 %685
      %687 = vset.pattern.permute.xlu0 0
      %688 = vperm.xlu0 %687, %v352
      %v689 = vpop.permute.xlu0 %688
      %690 = vset.pattern.permute.xlu0 0
      %691 = vperm.xlu0 %690, %v353
      %v692 = vpop.permute.xlu0 %691
      %693 = vset.pattern.permute.xlu0 0
      %694 = vperm.xlu0 %693, %v354
      %v695 = vpop.permute.xlu0 %694
      %696 = vset.pattern.permute.xlu0 0
      %697 = vperm.xlu0 %696, %v355
      %v698 = vpop.permute.xlu0 %697
      %699 = vset.pattern.permute.xlu0 0
      %700 = vperm.xlu0 %699, %v356
      %v701 = vpop.permute.xlu0 %700
      %702 = vset.pattern.permute.xlu0 0
      %703 = vperm.xlu0 %702, %v357
      %v704 = vpop.permute.xlu0 %703
      %705 = vset.pattern.permute.xlu0 0
      %706 = vperm.xlu0 %705, %v358
      %v707 = vpop.permute.xlu0 %706
      %708 = vset.pattern.permute.xlu0 0
      %709 = vperm.xlu0 %708, %v359
      %v710 = vpop.permute.xlu0 %709
      %711 = vset.pattern.permute.xlu0 0
      %712 = vperm.xlu0 %711, %v360
      %v713 = vpop.permute.xlu0 %712
      %714 = vset.pattern.permute.xlu0 0
      %715 = vperm.xlu0 %714, %v361
      %v716 = vpop.permute.xlu0 %715
      %717 = vset.pattern.permute.xlu0 0
      %718 = vperm.xlu0 %717, %v362
      %v719 = vpop.permute.xlu0 %718
      %720 = vset.pattern.permute.xlu0 0
      %721 = vperm.xlu0 %720, %v363
      %v722 = vpop.permute.xlu0 %721
      %723 = vset.pattern.permute.xlu0 0
      %724 = vperm.xlu0 %723, %v364
      %v725 = vpop.permute.xlu0 %724
      %726 = vset.pattern.permute.xlu0 0
      %727 = vperm.xlu0 %726, %v365
      %v728 = vpop.permute.xlu0 %727
      %729 = vset.pattern.permute.xlu0 0
      %730 = vperm.xlu0 %729, %v366
      %v731 = vpop.permute.xlu0 %730
      %732 = vset.pattern.permute.xlu0 0
      %733 = vperm.xlu0 %732, %v367
      %v734 = vpop.permute.xlu0 %733
      %735 = vset.pattern.permute.xlu0 0
      %736 = vperm.xlu0 %735, %v368
      %v737 = vpop.permute.xlu0 %736
      %738 = vset.pattern.permute.xlu0 0
      %739 = vperm.xlu0 %738, %v369
      %v740 = vpop.permute.xlu0 %739
      %741 = vset.pattern.permute.xlu0 0
      %742 = vperm.xlu0 %741, %v370
      %v743 = vpop.permute.xlu0 %742
      %744 = vset.pattern.permute.xlu0 0
      %745 = vperm.xlu0 %744, %v371
      %v746 = vpop.permute.xlu0 %745
      %747 = vset.pattern.permute.xlu0 0
      %748 = vperm.xlu0 %747, %v372
      %v749 = vpop.permute.xlu0 %748
      %750 = vset.pattern.permute.xlu0 0
      %751 = vperm.xlu0 %750, %v373
      %v752 = vpop.permute.xlu0 %751
      %753 = vset.pattern.permute.xlu0 0
      %754 = vperm.xlu0 %753, %v374
      %v755 = vpop.permute.xlu0 %754
      %vm756 = vcmp.eq.s32.totalorder %v565, %v569
      %vm757 = vcmp.eq.s32.totalorder %v566, %v569
      %vm758 = vcmp.eq.s32.totalorder %v565, %v572
      %vm759 = vcmp.eq.s32.totalorder %v566, %v572
      %vm760 = vcmp.eq.s32.totalorder %v565, %v575
      %vm761 = vcmp.eq.s32.totalorder %v566, %v575
      %vm762 = vcmp.eq.s32.totalorder %v565, %v578
      %vm763 = vcmp.eq.s32.totalorder %v566, %v578
      %vm764 = vcmp.eq.s32.totalorder %v565, %v581
      %vm765 = vcmp.eq.s32.totalorder %v566, %v581
      %vm766 = vcmp.eq.s32.totalorder %v565, %v584
      %vm767 = vcmp.eq.s32.totalorder %v566, %v584
      %vm768 = vcmp.eq.s32.totalorder %v565, %v587
      %vm769 = vcmp.eq.s32.totalorder %v566, %v587
      %vm770 = vcmp.eq.s32.totalorder %v565, %v590
      %vm771 = vcmp.eq.s32.totalorder %v566, %v590
      %vm772 = vcmp.eq.s32.totalorder %v565, %v593
      %vm773 = vcmp.eq.s32.totalorder %v566, %v593
      %vm774 = vcmp.eq.s32.totalorder %v565, %v596
      %vm775 = vcmp.eq.s32.totalorder %v566, %v596
      %vm776 = vcmp.eq.s32.totalorder %v565, %v599
      %vm777 = vcmp.eq.s32.totalorder %v566, %v599
      %vm778 = vcmp.eq.s32.totalorder %v565, %v602
      %vm779 = vcmp.eq.s32.totalorder %v566, %v602
      %vm780 = vcmp.eq.s32.totalorder %v565, %v605
      %vm781 = vcmp.eq.s32.totalorder %v566, %v605
      %vm782 = vcmp.eq.s32.totalorder %v565, %v608
      %vm783 = vcmp.eq.s32.totalorder %v566, %v608
      %vm784 = vcmp.eq.s32.totalorder %v565, %v611
      %vm785 = vcmp.eq.s32.totalorder %v566, %v611
      %vm786 = vcmp.eq.s32.totalorder %v565, %v614
      %vm787 = vcmp.eq.s32.totalorder %v566, %v614
      %vm788 = vcmp.eq.s32.totalorder %v565, %v617
      %vm789 = vcmp.eq.s32.totalorder %v566, %v617
      %vm790 = vcmp.eq.s32.totalorder %v565, %v620
      %vm791 = vcmp.eq.s32.totalorder %v566, %v620
      %vm792 = vcmp.eq.s32.totalorder %v565, %v623
      %vm793 = vcmp.eq.s32.totalorder %v566, %v623
      %vm794 = vcmp.eq.s32.totalorder %v565, %v626
      %vm795 = vcmp.eq.s32.totalorder %v566, %v626
      %vm796 = vcmp.eq.s32.totalorder %v565, %v629
      %vm797 = vcmp.eq.s32.totalorder %v566, %v629
      %vm798 = vcmp.eq.s32.totalorder %v565, %v632
      %vm799 = vcmp.eq.s32.totalorder %v566, %v632
      %vm800 = vcmp.eq.s32.totalorder %v565, %v635
      %vm801 = vcmp.eq.s32.totalorder %v566, %v635
      %vm802 = vcmp.eq.s32.totalorder %v565, %v638
      %vm803 = vcmp.eq.s32.totalorder %v566, %v638
      %vm804 = vcmp.eq.s32.totalorder %v565, %v641
      %vm805 = vcmp.eq.s32.totalorder %v566, %v641
      %vm806 = vcmp.eq.s32.totalorder %v565, %v644
      %vm807 = vcmp.eq.s32.totalorder %v566, %v644
      %vm808 = vcmp.eq.s32.totalorder %v565, %v647
      %vm809 = vcmp.eq.s32.totalorder %v566, %v647
      %vm810 = vcmp.eq.s32.totalorder %v565, %v650
      %vm811 = vcmp.eq.s32.totalorder %v566, %v650
      %vm812 = vcmp.eq.s32.totalorder %v565, %v653
      %vm813 = vcmp.eq.s32.totalorder %v566, %v653
      %vm814 = vcmp.eq.s32.totalorder %v565, %v656
      %vm815 = vcmp.eq.s32.totalorder %v566, %v656
      %vm816 = vcmp.eq.s32.totalorder %v565, %v659
      %vm817 = vcmp.eq.s32.totalorder %v566, %v659
      %vm818 = vcmp.eq.s32.totalorder %v565, %v662
      %vm819 = vcmp.eq.s32.totalorder %v566, %v662
      %vm820 = vcmp.eq.s32.totalorder %v565, %v665
      %vm821 = vcmp.eq.s32.totalorder %v566, %v665
      %vm822 = vcmp.eq.s32.totalorder %v565, %v668
      %vm823 = vcmp.eq.s32.totalorder %v566, %v668
      %vm824 = vcmp.eq.s32.totalorder %v565, %v671
      %vm825 = vcmp.eq.s32.totalorder %v566, %v671
      %vm826 = vcmp.eq.s32.totalorder %v565, %v674
      %vm827 = vcmp.eq.s32.totalorder %v566, %v674
      %vm828 = vcmp.eq.s32.totalorder %v565, %v677
      %vm829 = vcmp.eq.s32.totalorder %v566, %v677
      %vm830 = vcmp.eq.s32.totalorder %v565, %v680
      %vm831 = vcmp.eq.s32.totalorder %v566, %v680
      %vm832 = vcmp.eq.s32.totalorder %v565, %v683
      %vm833 = vcmp.eq.s32.totalorder %v566, %v683
      %vm834 = vcmp.eq.s32.totalorder %v565, %v686
      %vm835 = vcmp.eq.s32.totalorder %v566, %v686
      %vm836 = vcmp.eq.s32.totalorder %v565, %v689
      %vm837 = vcmp.eq.s32.totalorder %v566, %v689
      %vm838 = vcmp.eq.s32.totalorder %v565, %v692
      %vm839 = vcmp.eq.s32.totalorder %v566, %v692
      %vm840 = vcmp.eq.s32.totalorder %v565, %v695
      %vm841 = vcmp.eq.s32.totalorder %v566, %v695
      %vm842 = vcmp.eq.s32.totalorder %v565, %v698
      %vm843 = vcmp.eq.s32.totalorder %v566, %v698
      %vm844 = vcmp.eq.s32.totalorder %v565, %v701
      %vm845 = vcmp.eq.s32.totalorder %v566, %v701
      %vm846 = vcmp.eq.s32.totalorder %v565, %v704
      %vm847 = vcmp.eq.s32.totalorder %v566, %v704
      %vm848 = vcmp.eq.s32.totalorder %v565, %v707
      %vm849 = vcmp.eq.s32.totalorder %v566, %v707
      %vm850 = vcmp.eq.s32.totalorder %v565, %v710
      %vm851 = vcmp.eq.s32.totalorder %v566, %v710
      %vm852 = vcmp.eq.s32.totalorder %v565, %v713
      %vm853 = vcmp.eq.s32.totalorder %v566, %v713
      %vm854 = vcmp.eq.s32.totalorder %v565, %v716
      %vm855 = vcmp.eq.s32.totalorder %v566, %v716
      %vm856 = vcmp.eq.s32.totalorder %v565, %v719
      %vm857 = vcmp.eq.s32.totalorder %v566, %v719
      %vm858 = vcmp.eq.s32.totalorder %v565, %v722
      %vm859 = vcmp.eq.s32.totalorder %v566, %v722
      %vm860 = vcmp.eq.s32.totalorder %v565, %v725
      %vm861 = vcmp.eq.s32.totalorder %v566, %v725
      %vm862 = vcmp.eq.s32.totalorder %v565, %v728
      %vm863 = vcmp.eq.s32.totalorder %v566, %v728
      %vm864 = vcmp.eq.s32.totalorder %v565, %v731
      %vm865 = vcmp.eq.s32.totalorder %v566, %v731
      %vm866 = vcmp.eq.s32.totalorder %v565, %v734
      %vm867 = vcmp.eq.s32.totalorder %v566, %v734
      %vm868 = vcmp.eq.s32.totalorder %v565, %v737
      %vm869 = vcmp.eq.s32.totalorder %v566, %v737
      %vm870 = vcmp.eq.s32.totalorder %v565, %v740
      %vm871 = vcmp.eq.s32.totalorder %v566, %v740
      %vm872 = vcmp.eq.s32.totalorder %v565, %v743
      %vm873 = vcmp.eq.s32.totalorder %v566, %v743
      %vm874 = vcmp.eq.s32.totalorder %v565, %v746
      %vm875 = vcmp.eq.s32.totalorder %v566, %v746
      %vm876 = vcmp.eq.s32.totalorder %v565, %v749
      %vm877 = vcmp.eq.s32.totalorder %v566, %v749
      %vm878 = vcmp.eq.s32.totalorder %v565, %v752
      %vm879 = vcmp.eq.s32.totalorder %v566, %v752
      %vm880 = vcmp.eq.s32.totalorder %v565, %v755
      %vm881 = vcmp.eq.s32.totalorder %v566, %v755
      %v882 = vsel %vm756, 1, 0
      %v883 = vsel %vm757, 1, 0
      %v884 = vsel %vm758, 1, 0
      %v885 = vsel %vm759, 1, 0
      %v886 = vsel %vm760, 1, 0
      %v887 = vsel %vm761, 1, 0
      %v888 = vsel %vm762, 1, 0
      %v889 = vsel %vm763, 1, 0
      %v890 = vsel %vm764, 1, 0
      %v891 = vsel %vm765, 1, 0
      %v892 = vsel %vm766, 1, 0
      %v893 = vsel %vm767, 1, 0
      %v894 = vsel %vm768, 1, 0
      %v895 = vsel %vm769, 1, 0
      %v896 = vsel %vm770, 1, 0
      %v897 = vsel %vm771, 1, 0
      %v898 = vsel %vm772, 1, 0
      %v899 = vsel %vm773, 1, 0
      %v900 = vsel %vm774, 1, 0
      %v901 = vsel %vm775, 1, 0
      %v902 = vsel %vm776, 1, 0
      %v903 = vsel %vm777, 1, 0
      %v904 = vsel %vm778, 1, 0
      %v905 = vsel %vm779, 1, 0
      %v906 = vsel %vm780, 1, 0
      %v907 = vsel %vm781, 1, 0
      %v908 = vsel %vm782, 1, 0
      %v909 = vsel %vm783, 1, 0
      %v910 = vsel %vm784, 1, 0
      %v911 = vsel %vm785, 1, 0
      %v912 = vsel %vm786, 1, 0
      %v913 = vsel %vm787, 1, 0
      %v914 = vsel %vm788, 1, 0
      %v915 = vsel %vm789, 1, 0
      %v916 = vsel %vm790, 1, 0
      %v917 = vsel %vm791, 1, 0
      %v918 = vsel %vm792, 1, 0
      %v919 = vsel %vm793, 1, 0
      %v920 = vsel %vm794, 1, 0
      %v921 = vsel %vm795, 1, 0
      %v922 = vsel %vm796, 1, 0
      %v923 = vsel %vm797, 1, 0
      %v924 = vsel %vm798, 1, 0
      %v925 = vsel %vm799, 1, 0
      %v926 = vsel %vm800, 1, 0
      %v927 = vsel %vm801, 1, 0
      %v928 = vsel %vm802, 1, 0
      %v929 = vsel %vm803, 1, 0
      %v930 = vsel %vm804, 1, 0
      %v931 = vsel %vm805, 1, 0
      %v932 = vsel %vm806, 1, 0
      %v933 = vsel %vm807, 1, 0
      %v934 = vsel %vm808, 1, 0
      %v935 = vsel %vm809, 1, 0
      %v936 = vsel %vm810, 1, 0
      %v937 = vsel %vm811, 1, 0
      %v938 = vsel %vm812, 1, 0
      %v939 = vsel %vm813, 1, 0
      %v940 = vsel %vm814, 1, 0
      %v941 = vsel %vm815, 1, 0
      %v942 = vsel %vm816, 1, 0
      %v943 = vsel %vm817, 1, 0
      %v944 = vsel %vm818, 1, 0
      %v945 = vsel %vm819, 1, 0
      %v946 = vsel %vm820, 1, 0
      %v947 = vsel %vm821, 1, 0
      %v948 = vsel %vm822, 1, 0
      %v949 = vsel %vm823, 1, 0
      %v950 = vsel %vm824, 1, 0
      %v951 = vsel %vm825, 1, 0
      %v952 = vsel %vm826, 1, 0
      %v953 = vsel %vm827, 1, 0
      %v954 = vsel %vm828, 1, 0
      %v955 = vsel %vm829, 1, 0
      %v956 = vsel %vm830, 1, 0
      %v957 = vsel %vm831, 1, 0
      %v958 = vsel %vm832, 1, 0
      %v959 = vsel %vm833, 1, 0
      %v960 = vsel %vm834, 1, 0
      %v961 = vsel %vm835, 1, 0
      %v962 = vsel %vm836, 1, 0
      %v963 = vsel %vm837, 1, 0
      %v964 = vsel %vm838, 1, 0
      %v965 = vsel %vm839, 1, 0
      %v966 = vsel %vm840, 1, 0
      %v967 = vsel %vm841, 1, 0
      %v968 = vsel %vm842, 1, 0
      %v969 = vsel %vm843, 1, 0
      %v970 = vsel %vm844, 1, 0
      %v971 = vsel %vm845, 1, 0
      %v972 = vsel %vm846, 1, 0
      %v973 = vsel %vm847, 1, 0
      %v974 = vsel %vm848, 1, 0
      %v975 = vsel %vm849, 1, 0
      %v976 = vsel %vm850, 1, 0
      %v977 = vsel %vm851, 1, 0
      %v978 = vsel %vm852, 1, 0
      %v979 = vsel %vm853, 1, 0
      %v980 = vsel %vm854, 1, 0
      %v981 = vsel %vm855, 1, 0
      %v982 = vsel %vm856, 1, 0
      %v983 = vsel %vm857, 1, 0
      %v984 = vsel %vm858, 1, 0
      %v985 = vsel %vm859, 1, 0
      %v986 = vsel %vm860, 1, 0
      %v987 = vsel %vm861, 1, 0
      %v988 = vsel %vm862, 1, 0
      %v989 = vsel %vm863, 1, 0
      %v990 = vsel %vm864, 1, 0
      %v991 = vsel %vm865, 1, 0
      %v992 = vsel %vm866, 1, 0
      %v993 = vsel %vm867, 1, 0
      %v994 = vsel %vm868, 1, 0
      %v995 = vsel %vm869, 1, 0
      %v996 = vsel %vm870, 1, 0
      %v997 = vsel %vm871, 1, 0
      %v998 = vsel %vm872, 1, 0
      %v999 = vsel %vm873, 1, 0
      %v1000 = vsel %vm874, 1, 0
      %v1001 = vsel %vm875, 1, 0
      %v1002 = vsel %vm876, 1, 0
      %v1003 = vsel %vm877, 1, 0
      %v1004 = vsel %vm878, 1, 0
      %v1005 = vsel %vm879, 1, 0
      %v1006 = vsel %vm880, 1, 0
      %v1007 = vsel %vm881, 1, 0
      %v1008 = vcvt.s32.f32 %v882
      %v1009 = vcvt.s32.f32 %v883
      %v1010 = vcvt.s32.f32 %v884
      %v1011 = vcvt.s32.f32 %v885
      %v1012 = vcvt.s32.f32 %v886
      %v1013 = vcvt.s32.f32 %v887
      %v1014 = vcvt.s32.f32 %v888
      %v1015 = vcvt.s32.f32 %v889
      %v1016 = vcvt.s32.f32 %v890
      %v1017 = vcvt.s32.f32 %v891
      %v1018 = vcvt.s32.f32 %v892
      %v1019 = vcvt.s32.f32 %v893
      %v1020 = vcvt.s32.f32 %v894
      %v1021 = vcvt.s32.f32 %v895
      %v1022 = vcvt.s32.f32 %v896
      %v1023 = vcvt.s32.f32 %v897
      %v1024 = vcvt.s32.f32 %v898
      %v1025 = vcvt.s32.f32 %v899
      %v1026 = vcvt.s32.f32 %v900
      %v1027 = vcvt.s32.f32 %v901
      %v1028 = vcvt.s32.f32 %v902
      %v1029 = vcvt.s32.f32 %v903
      %v1030 = vcvt.s32.f32 %v904
      %v1031 = vcvt.s32.f32 %v905
      %v1032 = vcvt.s32.f32 %v906
      %v1033 = vcvt.s32.f32 %v907
      %v1034 = vcvt.s32.f32 %v908
      %v1035 = vcvt.s32.f32 %v909
      %v1036 = vcvt.s32.f32 %v910
      %v1037 = vcvt.s32.f32 %v911
      %v1038 = vcvt.s32.f32 %v912
      %v1039 = vcvt.s32.f32 %v913
      %v1040 = vcvt.s32.f32 %v914
      %v1041 = vcvt.s32.f32 %v915
      %v1042 = vcvt.s32.f32 %v916
      %v1043 = vcvt.s32.f32 %v917
      %v1044 = vcvt.s32.f32 %v918
      %v1045 = vcvt.s32.f32 %v919
      %v1046 = vcvt.s32.f32 %v920
      %v1047 = vcvt.s32.f32 %v921
      %v1048 = vcvt.s32.f32 %v922
      %v1049 = vcvt.s32.f32 %v923
      %v1050 = vcvt.s32.f32 %v924
      %v1051 = vcvt.s32.f32 %v925
      %v1052 = vcvt.s32.f32 %v926
      %v1053 = vcvt.s32.f32 %v927
      %v1054 = vcvt.s32.f32 %v928
      %v1055 = vcvt.s32.f32 %v929
      %v1056 = vcvt.s32.f32 %v930
      %v1057 = vcvt.s32.f32 %v931
      %v1058 = vcvt.s32.f32 %v932
      %v1059 = vcvt.s32.f32 %v933
      %v1060 = vcvt.s32.f32 %v934
      %v1061 = vcvt.s32.f32 %v935
      %v1062 = vcvt.s32.f32 %v936
      %v1063 = vcvt.s32.f32 %v937
      %v1064 = vcvt.s32.f32 %v938
      %v1065 = vcvt.s32.f32 %v939
      %v1066 = vcvt.s32.f32 %v940
      %v1067 = vcvt.s32.f32 %v941
      %v1068 = vcvt.s32.f32 %v942
      %v1069 = vcvt.s32.f32 %v943
      %v1070 = vcvt.s32.f32 %v944
      %v1071 = vcvt.s32.f32 %v945
      %v1072 = vcvt.s32.f32 %v946
      %v1073 = vcvt.s32.f32 %v947
      %v1074 = vcvt.s32.f32 %v948
      %v1075 = vcvt.s32.f32 %v949
      %v1076 = vcvt.s32.f32 %v950
      %v1077 = vcvt.s32.f32 %v951
      %v1078 = vcvt.s32.f32 %v952
      %v1079 = vcvt.s32.f32 %v953
      %v1080 = vcvt.s32.f32 %v954
      %v1081 = vcvt.s32.f32 %v955
      %v1082 = vcvt.s32.f32 %v956
      %v1083 = vcvt.s32.f32 %v957
      %v1084 = vcvt.s32.f32 %v958
      %v1085 = vcvt.s32.f32 %v959
      %v1086 = vcvt.s32.f32 %v960
      %v1087 = vcvt.s32.f32 %v961
      %v1088 = vcvt.s32.f32 %v962
      %v1089 = vcvt.s32.f32 %v963
      %v1090 = vcvt.s32.f32 %v964
      %v1091 = vcvt.s32.f32 %v965
      %v1092 = vcvt.s32.f32 %v966
      %v1093 = vcvt.s32.f32 %v967
      %v1094 = vcvt.s32.f32 %v968
      %v1095 = vcvt.s32.f32 %v969
      %v1096 = vcvt.s32.f32 %v970
      %v1097 = vcvt.s32.f32 %v971
      %v1098 = vcvt.s32.f32 %v972
      %v1099 = vcvt.s32.f32 %v973
      %v1100 = vcvt.s32.f32 %v974
      %v1101 = vcvt.s32.f32 %v975
      %v1102 = vcvt.s32.f32 %v976
      %v1103 = vcvt.s32.f32 %v977
      %v1104 = vcvt.s32.f32 %v978
      %v1105 = vcvt.s32.f32 %v979
      %v1106 = vcvt.s32.f32 %v980
      %v1107 = vcvt.s32.f32 %v981
      %v1108 = vcvt.s32.f32 %v982
      %v1109 = vcvt.s32.f32 %v983
      %v1110 = vcvt.s32.f32 %v984
      %v1111 = vcvt.s32.f32 %v985
      %v1112 = vcvt.s32.f32 %v986
      %v1113 = vcvt.s32.f32 %v987
      %v1114 = vcvt.s32.f32 %v988
      %v1115 = vcvt.s32.f32 %v989
      %v1116 = vcvt.s32.f32 %v990
      %v1117 = vcvt.s32.f32 %v991
      %v1118 = vcvt.s32.f32 %v992
      %v1119 = vcvt.s32.f32 %v993
      %v1120 = vcvt.s32.f32 %v994
      %v1121 = vcvt.s32.f32 %v995
      %v1122 = vcvt.s32.f32 %v996
      %v1123 = vcvt.s32.f32 %v997
      %v1124 = vcvt.s32.f32 %v998
      %v1125 = vcvt.s32.f32 %v999
      %v1126 = vcvt.s32.f32 %v1000
      %v1127 = vcvt.s32.f32 %v1001
      %v1128 = vcvt.s32.f32 %v1002
      %v1129 = vcvt.s32.f32 %v1003
      %v1130 = vcvt.s32.f32 %v1004
      %v1131 = vcvt.s32.f32 %v1005
      %v1132 = vcvt.s32.f32 %v1006
      %v1133 = vcvt.s32.f32 %v1007
      %1134 = vset.pattern.permute.xlu0 0
      %1135 = vperm.xlu0 %1134, %v375
      %v1136 = vpop.permute.xlu0 %1135
      %1137 = vset.pattern.permute.xlu0 0
      %1138 = vperm.xlu0 %1137, %v376
      %v1139 = vpop.permute.xlu0 %1138
      %1140 = vset.pattern.permute.xlu0 0
      %1141 = vperm.xlu0 %1140, %v377
      %v1142 = vpop.permute.xlu0 %1141
      %1143 = vset.pattern.permute.xlu0 0
      %1144 = vperm.xlu0 %1143, %v378
      %v1145 = vpop.permute.xlu0 %1144
      %1146 = vset.pattern.permute.xlu0 0
      %1147 = vperm.xlu0 %1146, %v379
      %v1148 = vpop.permute.xlu0 %1147
      %1149 = vset.pattern.permute.xlu0 0
      %1150 = vperm.xlu0 %1149, %v380
      %v1151 = vpop.permute.xlu0 %1150
      %1152 = vset.pattern.permute.xlu0 0
      %1153 = vperm.xlu0 %1152, %v381
      %v1154 = vpop.permute.xlu0 %1153
      %1155 = vset.pattern.permute.xlu0 0
      %1156 = vperm.xlu0 %1155, %v382
      %v1157 = vpop.permute.xlu0 %1156
      %1158 = vset.pattern.permute.xlu0 0
      %1159 = vperm.xlu0 %1158, %v383
      %v1160 = vpop.permute.xlu0 %1159
      %1161 = vset.pattern.permute.xlu0 0
      %1162 = vperm.xlu0 %1161, %v384
      %v1163 = vpop.permute.xlu0 %1162
      %1164 = vset.pattern.permute.xlu0 0
      %1165 = vperm.xlu0 %1164, %v385
      %v1166 = vpop.permute.xlu0 %1165
      %1167 = vset.pattern.permute.xlu0 0
      %1168 = vperm.xlu0 %1167, %v386
      %v1169 = vpop.permute.xlu0 %1168
      %1170 = vset.pattern.permute.xlu0 0
      %1171 = vperm.xlu0 %1170, %v387
      %v1172 = vpop.permute.xlu0 %1171
      %1173 = vset.pattern.permute.xlu0 0
      %1174 = vperm.xlu0 %1173, %v388
      %v1175 = vpop.permute.xlu0 %1174
      %1176 = vset.pattern.permute.xlu0 0
      %1177 = vperm.xlu0 %1176, %v389
      %v1178 = vpop.permute.xlu0 %1177
      %1179 = vset.pattern.permute.xlu0 0
      %1180 = vperm.xlu0 %1179, %v390
      %v1181 = vpop.permute.xlu0 %1180
      %1182 = vset.pattern.permute.xlu0 0
      %1183 = vperm.xlu0 %1182, %v391
      %v1184 = vpop.permute.xlu0 %1183
      %1185 = vset.pattern.permute.xlu0 0
      %1186 = vperm.xlu0 %1185, %v392
      %v1187 = vpop.permute.xlu0 %1186
      %1188 = vset.pattern.permute.xlu0 0
      %1189 = vperm.xlu0 %1188, %v393
      %v1190 = vpop.permute.xlu0 %1189
      %1191 = vset.pattern.permute.xlu0 0
      %1192 = vperm.xlu0 %1191, %v394
      %v1193 = vpop.permute.xlu0 %1192
      %1194 = vset.pattern.permute.xlu0 0
      %1195 = vperm.xlu0 %1194, %v395
      %v1196 = vpop.permute.xlu0 %1195
      %1197 = vset.pattern.permute.xlu0 0
      %1198 = vperm.xlu0 %1197, %v396
      %v1199 = vpop.permute.xlu0 %1198
      %1200 = vset.pattern.permute.xlu0 0
      %1201 = vperm.xlu0 %1200, %v397
      %v1202 = vpop.permute.xlu0 %1201
      %1203 = vset.pattern.permute.xlu0 0
      %1204 = vperm.xlu0 %1203, %v398
      %v1205 = vpop.permute.xlu0 %1204
      %1206 = vset.pattern.permute.xlu0 0
      %1207 = vperm.xlu0 %1206, %v399
      %v1208 = vpop.permute.xlu0 %1207
      %1209 = vset.pattern.permute.xlu0 0
      %1210 = vperm.xlu0 %1209, %v400
      %v1211 = vpop.permute.xlu0 %1210
      %1212 = vset.pattern.permute.xlu0 0
      %1213 = vperm.xlu0 %1212, %v401
      %v1214 = vpop.permute.xlu0 %1213
      %1215 = vset.pattern.permute.xlu0 0
      %1216 = vperm.xlu0 %1215, %v402
      %v1217 = vpop.permute.xlu0 %1216
      %1218 = vset.pattern.permute.xlu0 0
      %1219 = vperm.xlu0 %1218, %v403
      %v1220 = vpop.permute.xlu0 %1219
      %1221 = vset.pattern.permute.xlu0 0
      %1222 = vperm.xlu0 %1221, %v404
      %v1223 = vpop.permute.xlu0 %1222
      %1224 = vset.pattern.permute.xlu0 0
      %1225 = vperm.xlu0 %1224, %v405
      %v1226 = vpop.permute.xlu0 %1225
      %1227 = vset.pattern.permute.xlu0 0
      %1228 = vperm.xlu0 %1227, %v406
      %v1229 = vpop.permute.xlu0 %1228
      %1230 = vset.pattern.permute.xlu0 0
      %1231 = vperm.xlu0 %1230, %v407
      %v1232 = vpop.permute.xlu0 %1231
      %1233 = vset.pattern.permute.xlu0 0
      %1234 = vperm.xlu0 %1233, %v408
      %v1235 = vpop.permute.xlu0 %1234
      %1236 = vset.pattern.permute.xlu0 0
      %1237 = vperm.xlu0 %1236, %v409
      %v1238 = vpop.permute.xlu0 %1237
      %1239 = vset.pattern.permute.xlu0 0
      %1240 = vperm.xlu0 %1239, %v410
      %v1241 = vpop.permute.xlu0 %1240
      %1242 = vset.pattern.permute.xlu0 0
      %1243 = vperm.xlu0 %1242, %v411
      %v1244 = vpop.permute.xlu0 %1243
      %1245 = vset.pattern.permute.xlu0 0
      %1246 = vperm.xlu0 %1245, %v412
      %v1247 = vpop.permute.xlu0 %1246
      %1248 = vset.pattern.permute.xlu0 0
      %1249 = vperm.xlu0 %1248, %v413
      %v1250 = vpop.permute.xlu0 %1249
      %1251 = vset.pattern.permute.xlu0 0
      %1252 = vperm.xlu0 %1251, %v414
      %v1253 = vpop.permute.xlu0 %1252
      %1254 = vset.pattern.permute.xlu0 0
      %1255 = vperm.xlu0 %1254, %v415
      %v1256 = vpop.permute.xlu0 %1255
      %1257 = vset.pattern.permute.xlu0 0
      %1258 = vperm.xlu0 %1257, %v416
      %v1259 = vpop.permute.xlu0 %1258
      %1260 = vset.pattern.permute.xlu0 0
      %1261 = vperm.xlu0 %1260, %v417
      %v1262 = vpop.permute.xlu0 %1261
      %1263 = vset.pattern.permute.xlu0 0
      %1264 = vperm.xlu0 %1263, %v418
      %v1265 = vpop.permute.xlu0 %1264
      %1266 = vset.pattern.permute.xlu0 0
      %1267 = vperm.xlu0 %1266, %v419
      %v1268 = vpop.permute.xlu0 %1267
      %1269 = vset.pattern.permute.xlu0 0
      %1270 = vperm.xlu0 %1269, %v420
      %v1271 = vpop.permute.xlu0 %1270
      %1272 = vset.pattern.permute.xlu0 0
      %1273 = vperm.xlu0 %1272, %v421
      %v1274 = vpop.permute.xlu0 %1273
      %1275 = vset.pattern.permute.xlu0 0
      %1276 = vperm.xlu0 %1275, %v422
      %v1277 = vpop.permute.xlu0 %1276
      %1278 = vset.pattern.permute.xlu0 0
      %1279 = vperm.xlu0 %1278, %v423
      %v1280 = vpop.permute.xlu0 %1279
      %1281 = vset.pattern.permute.xlu0 0
      %1282 = vperm.xlu0 %1281, %v424
      %v1283 = vpop.permute.xlu0 %1282
      %1284 = vset.pattern.permute.xlu0 0
      %1285 = vperm.xlu0 %1284, %v425
      %v1286 = vpop.permute.xlu0 %1285
      %1287 = vset.pattern.permute.xlu0 0
      %1288 = vperm.xlu0 %1287, %v426
      %v1289 = vpop.permute.xlu0 %1288
      %1290 = vset.pattern.permute.xlu0 0
      %1291 = vperm.xlu0 %1290, %v427
      %v1292 = vpop.permute.xlu0 %1291
      %1293 = vset.pattern.permute.xlu0 0
      %1294 = vperm.xlu0 %1293, %v428
      %v1295 = vpop.permute.xlu0 %1294
      %1296 = vset.pattern.permute.xlu0 0
      %1297 = vperm.xlu0 %1296, %v429
      %v1298 = vpop.permute.xlu0 %1297
      %1299 = vset.pattern.permute.xlu0 0
      %1300 = vperm.xlu0 %1299, %v430
      %v1301 = vpop.permute.xlu0 %1300
      %1302 = vset.pattern.permute.xlu0 0
      %1303 = vperm.xlu0 %1302, %v431
      %v1304 = vpop.permute.xlu0 %1303
      %1305 = vset.pattern.permute.xlu0 0
      %1306 = vperm.xlu0 %1305, %v432
      %v1307 = vpop.permute.xlu0 %1306
      %1308 = vset.pattern.permute.xlu0 0
      %1309 = vperm.xlu0 %1308, %v433
      %v1310 = vpop.permute.xlu0 %1309
      %1311 = vset.pattern.permute.xlu0 0
      %1312 = vperm.xlu0 %1311, %v434
      %v1313 = vpop.permute.xlu0 %1312
      %1314 = vset.pattern.permute.xlu0 0
      %1315 = vperm.xlu0 %1314, %v435
      %v1316 = vpop.permute.xlu0 %1315
      %1317 = vset.pattern.permute.xlu0 0
      %1318 = vperm.xlu0 %1317, %v436
      %v1319 = vpop.permute.xlu0 %1318
      %1320 = vset.pattern.permute.xlu0 0
      %1321 = vperm.xlu0 %1320, %v437
      %v1322 = vpop.permute.xlu0 %1321
      %vm1323 = vcmp.eq.s32.totalorder %v565, %v1136
      %vm1324 = vcmp.eq.s32.totalorder %v566, %v1136
      %vm1325 = vcmp.eq.s32.totalorder %v565, %v1139
      %vm1326 = vcmp.eq.s32.totalorder %v566, %v1139
      %vm1327 = vcmp.eq.s32.totalorder %v565, %v1142
      %vm1328 = vcmp.eq.s32.totalorder %v566, %v1142
      %vm1329 = vcmp.eq.s32.totalorder %v565, %v1145
      %vm1330 = vcmp.eq.s32.totalorder %v566, %v1145
      %vm1331 = vcmp.eq.s32.totalorder %v565, %v1148
      %vm1332 = vcmp.eq.s32.totalorder %v566, %v1148
      %vm1333 = vcmp.eq.s32.totalorder %v565, %v1151
      %vm1334 = vcmp.eq.s32.totalorder %v566, %v1151
      %vm1335 = vcmp.eq.s32.totalorder %v565, %v1154
      %vm1336 = vcmp.eq.s32.totalorder %v566, %v1154
      %vm1337 = vcmp.eq.s32.totalorder %v565, %v1157
      %vm1338 = vcmp.eq.s32.totalorder %v566, %v1157
      %vm1339 = vcmp.eq.s32.totalorder %v565, %v1160
      %vm1340 = vcmp.eq.s32.totalorder %v566, %v1160
      %vm1341 = vcmp.eq.s32.totalorder %v565, %v1163
      %vm1342 = vcmp.eq.s32.totalorder %v566, %v1163
      %vm1343 = vcmp.eq.s32.totalorder %v565, %v1166
      %vm1344 = vcmp.eq.s32.totalorder %v566, %v1166
      %vm1345 = vcmp.eq.s32.totalorder %v565, %v1169
      %vm1346 = vcmp.eq.s32.totalorder %v566, %v1169
      %vm1347 = vcmp.eq.s32.totalorder %v565, %v1172
      %vm1348 = vcmp.eq.s32.totalorder %v566, %v1172
      %vm1349 = vcmp.eq.s32.totalorder %v565, %v1175
      %vm1350 = vcmp.eq.s32.totalorder %v566, %v1175
      %vm1351 = vcmp.eq.s32.totalorder %v565, %v1178
      %vm1352 = vcmp.eq.s32.totalorder %v566, %v1178
      %vm1353 = vcmp.eq.s32.totalorder %v565, %v1181
      %vm1354 = vcmp.eq.s32.totalorder %v566, %v1181
      %vm1355 = vcmp.eq.s32.totalorder %v565, %v1184
      %vm1356 = vcmp.eq.s32.totalorder %v566, %v1184
      %vm1357 = vcmp.eq.s32.totalorder %v565, %v1187
      %vm1358 = vcmp.eq.s32.totalorder %v566, %v1187
      %vm1359 = vcmp.eq.s32.totalorder %v565, %v1190
      %vm1360 = vcmp.eq.s32.totalorder %v566, %v1190
      %vm1361 = vcmp.eq.s32.totalorder %v565, %v1193
      %vm1362 = vcmp.eq.s32.totalorder %v566, %v1193
      %vm1363 = vcmp.eq.s32.totalorder %v565, %v1196
      %vm1364 = vcmp.eq.s32.totalorder %v566, %v1196
      %vm1365 = vcmp.eq.s32.totalorder %v565, %v1199
      %vm1366 = vcmp.eq.s32.totalorder %v566, %v1199
      %vm1367 = vcmp.eq.s32.totalorder %v565, %v1202
      %vm1368 = vcmp.eq.s32.totalorder %v566, %v1202
      %vm1369 = vcmp.eq.s32.totalorder %v565, %v1205
      %vm1370 = vcmp.eq.s32.totalorder %v566, %v1205
      %vm1371 = vcmp.eq.s32.totalorder %v565, %v1208
      %vm1372 = vcmp.eq.s32.totalorder %v566, %v1208
      %vm1373 = vcmp.eq.s32.totalorder %v565, %v1211
      %vm1374 = vcmp.eq.s32.totalorder %v566, %v1211
      %vm1375 = vcmp.eq.s32.totalorder %v565, %v1214
      %vm1376 = vcmp.eq.s32.totalorder %v566, %v1214
      %vm1377 = vcmp.eq.s32.totalorder %v565, %v1217
      %vm1378 = vcmp.eq.s32.totalorder %v566, %v1217
      %vm1379 = vcmp.eq.s32.totalorder %v565, %v1220
      %vm1380 = vcmp.eq.s32.totalorder %v566, %v1220
      %vm1381 = vcmp.eq.s32.totalorder %v565, %v1223
      %vm1382 = vcmp.eq.s32.totalorder %v566, %v1223
      %vm1383 = vcmp.eq.s32.totalorder %v565, %v1226
      %vm1384 = vcmp.eq.s32.totalorder %v566, %v1226
      %vm1385 = vcmp.eq.s32.totalorder %v565, %v1229
      %vm1386 = vcmp.eq.s32.totalorder %v566, %v1229
      %vm1387 = vcmp.eq.s32.totalorder %v565, %v1232
      %vm1388 = vcmp.eq.s32.totalorder %v566, %v1232
      %vm1389 = vcmp.eq.s32.totalorder %v565, %v1235
      %vm1390 = vcmp.eq.s32.totalorder %v566, %v1235
      %vm1391 = vcmp.eq.s32.totalorder %v565, %v1238
      %vm1392 = vcmp.eq.s32.totalorder %v566, %v1238
      %vm1393 = vcmp.eq.s32.totalorder %v565, %v1241
      %vm1394 = vcmp.eq.s32.totalorder %v566, %v1241
      %vm1395 = vcmp.eq.s32.totalorder %v565, %v1244
      %vm1396 = vcmp.eq.s32.totalorder %v566, %v1244
      %vm1397 = vcmp.eq.s32.totalorder %v565, %v1247
      %vm1398 = vcmp.eq.s32.totalorder %v566, %v1247
      %vm1399 = vcmp.eq.s32.totalorder %v565, %v1250
      %vm1400 = vcmp.eq.s32.totalorder %v566, %v1250
      %vm1401 = vcmp.eq.s32.totalorder %v565, %v1253
      %vm1402 = vcmp.eq.s32.totalorder %v566, %v1253
      %vm1403 = vcmp.eq.s32.totalorder %v565, %v1256
      %vm1404 = vcmp.eq.s32.totalorder %v566, %v1256
      %vm1405 = vcmp.eq.s32.totalorder %v565, %v1259
      %vm1406 = vcmp.eq.s32.totalorder %v566, %v1259
      %vm1407 = vcmp.eq.s32.totalorder %v565, %v1262
      %vm1408 = vcmp.eq.s32.totalorder %v566, %v1262
      %vm1409 = vcmp.eq.s32.totalorder %v565, %v1265
      %vm1410 = vcmp.eq.s32.totalorder %v566, %v1265
      %vm1411 = vcmp.eq.s32.totalorder %v565, %v1268
      %vm1412 = vcmp.eq.s32.totalorder %v566, %v1268
      %vm1413 = vcmp.eq.s32.totalorder %v565, %v1271
      %vm1414 = vcmp.eq.s32.totalorder %v566, %v1271
      %vm1415 = vcmp.eq.s32.totalorder %v565, %v1274
      %vm1416 = vcmp.eq.s32.totalorder %v566, %v1274
      %vm1417 = vcmp.eq.s32.totalorder %v565, %v1277
      %vm1418 = vcmp.eq.s32.totalorder %v566, %v1277
      %vm1419 = vcmp.eq.s32.totalorder %v565, %v1280
      %vm1420 = vcmp.eq.s32.totalorder %v566, %v1280
      %vm1421 = vcmp.eq.s32.totalorder %v565, %v1283
      %vm1422 = vcmp.eq.s32.totalorder %v566, %v1283
      %vm1423 = vcmp.eq.s32.totalorder %v565, %v1286
      %vm1424 = vcmp.eq.s32.totalorder %v566, %v1286
      %vm1425 = vcmp.eq.s32.totalorder %v565, %v1289
      %vm1426 = vcmp.eq.s32.totalorder %v566, %v1289
      %vm1427 = vcmp.eq.s32.totalorder %v565, %v1292
      %vm1428 = vcmp.eq.s32.totalorder %v566, %v1292
      %vm1429 = vcmp.eq.s32.totalorder %v565, %v1295
      %vm1430 = vcmp.eq.s32.totalorder %v566, %v1295
      %vm1431 = vcmp.eq.s32.totalorder %v565, %v1298
      %vm1432 = vcmp.eq.s32.totalorder %v566, %v1298
      %vm1433 = vcmp.eq.s32.totalorder %v565, %v1301
      %vm1434 = vcmp.eq.s32.totalorder %v566, %v1301
      %vm1435 = vcmp.eq.s32.totalorder %v565, %v1304
      %vm1436 = vcmp.eq.s32.totalorder %v566, %v1304
      %vm1437 = vcmp.eq.s32.totalorder %v565, %v1307
      %vm1438 = vcmp.eq.s32.totalorder %v566, %v1307
      %vm1439 = vcmp.eq.s32.totalorder %v565, %v1310
      %vm1440 = vcmp.eq.s32.totalorder %v566, %v1310
      %vm1441 = vcmp.eq.s32.totalorder %v565, %v1313
      %vm1442 = vcmp.eq.s32.totalorder %v566, %v1313
      %vm1443 = vcmp.eq.s32.totalorder %v565, %v1316
      %vm1444 = vcmp.eq.s32.totalorder %v566, %v1316
      %vm1445 = vcmp.eq.s32.totalorder %v565, %v1319
      %vm1446 = vcmp.eq.s32.totalorder %v566, %v1319
      %vm1447 = vcmp.eq.s32.totalorder %v565, %v1322
      %vm1448 = vcmp.eq.s32.totalorder %v566, %v1322
      %v1449 = vsel %vm1323, 1, 0
      %v1450 = vsel %vm1324, 1, 0
      %v1451 = vsel %vm1325, 1, 0
      %v1452 = vsel %vm1326, 1, 0
      %v1453 = vsel %vm1327, 1, 0
      %v1454 = vsel %vm1328, 1, 0
      %v1455 = vsel %vm1329, 1, 0
      %v1456 = vsel %vm1330, 1, 0
      %v1457 = vsel %vm1331, 1, 0
      %v1458 = vsel %vm1332, 1, 0
      %v1459 = vsel %vm1333, 1, 0
      %v1460 = vsel %vm1334, 1, 0
      %v1461 = vsel %vm1335, 1, 0
      %v1462 = vsel %vm1336, 1, 0
      %v1463 = vsel %vm1337, 1, 0
      %v1464 = vsel %vm1338, 1, 0
      %v1465 = vsel %vm1339, 1, 0
      %v1466 = vsel %vm1340, 1, 0
      %v1467 = vsel %vm1341, 1, 0
      %v1468 = vsel %vm1342, 1, 0
      %v1469 = vsel %vm1343, 1, 0
      %v1470 = vsel %vm1344, 1, 0
      %v1471 = vsel %vm1345, 1, 0
      %v1472 = vsel %vm1346, 1, 0
      %v1473 = vsel %vm1347, 1, 0
      %v1474 = vsel %vm1348, 1, 0
      %v1475 = vsel %vm1349, 1, 0
      %v1476 = vsel %vm1350, 1, 0
      %v1477 = vsel %vm1351, 1, 0
      %v1478 = vsel %vm1352, 1, 0
      %v1479 = vsel %vm1353, 1, 0
      %v1480 = vsel %vm1354, 1, 0
      %v1481 = vsel %vm1355, 1, 0
      %v1482 = vsel %vm1356, 1, 0
      %v1483 = vsel %vm1357, 1, 0
      %v1484 = vsel %vm1358, 1, 0
      %v1485 = vsel %vm1359, 1, 0
      %v1486 = vsel %vm1360, 1, 0
      %v1487 = vsel %vm1361, 1, 0
      %v1488 = vsel %vm1362, 1, 0
      %v1489 = vsel %vm1363, 1, 0
      %v1490 = vsel %vm1364, 1, 0
      %v1491 = vsel %vm1365, 1, 0
      %v1492 = vsel %vm1366, 1, 0
      %v1493 = vsel %vm1367, 1, 0
      %v1494 = vsel %vm1368, 1, 0
      %v1495 = vsel %vm1369, 1, 0
      %v1496 = vsel %vm1370, 1, 0
      %v1497 = vsel %vm1371, 1, 0
      %v1498 = vsel %vm1372, 1, 0
      %v1499 = vsel %vm1373, 1, 0
      %v1500 = vsel %vm1374, 1, 0
      %v1501 = vsel %vm1375, 1, 0
      %v1502 = vsel %vm1376, 1, 0
      %v1503 = vsel %vm1377, 1, 0
      %v1504 = vsel %vm1378, 1, 0
      %v1505 = vsel %vm1379, 1, 0
      %v1506 = vsel %vm1380, 1, 0
      %v1507 = vsel %vm1381, 1, 0
      %v1508 = vsel %vm1382, 1, 0
      %v1509 = vsel %vm1383, 1, 0
      %v1510 = vsel %vm1384, 1, 0
      %v1511 = vsel %vm1385, 1, 0
      %v1512 = vsel %vm1386, 1, 0
      %v1513 = vsel %vm1387, 1, 0
      %v1514 = vsel %vm1388, 1, 0
      %v1515 = vsel %vm1389, 1, 0
      %v1516 = vsel %vm1390, 1, 0
      %v1517 = vsel %vm1391, 1, 0
      %v1518 = vsel %vm1392, 1, 0
      %v1519 = vsel %vm1393, 1, 0
      %v1520 = vsel %vm1394, 1, 0
      %v1521 = vsel %vm1395, 1, 0
      %v1522 = vsel %vm1396, 1, 0
      %v1523 = vsel %vm1397, 1, 0
      %v1524 = vsel %vm1398, 1, 0
      %v1525 = vsel %vm1399, 1, 0
      %v1526 = vsel %vm1400, 1, 0
      %v1527 = vsel %vm1401, 1, 0
      %v1528 = vsel %vm1402, 1, 0
      %v1529 = vsel %vm1403, 1, 0
      %v1530 = vsel %vm1404, 1, 0
      %v1531 = vsel %vm1405, 1, 0
      %v1532 = vsel %vm1406, 1, 0
      %v1533 = vsel %vm1407, 1, 0
      %v1534 = vsel %vm1408, 1, 0
      %v1535 = vsel %vm1409, 1, 0
      %v1536 = vsel %vm1410, 1, 0
      %v1537 = vsel %vm1411, 1, 0
      %v1538 = vsel %vm1412, 1, 0
      %v1539 = vsel %vm1413, 1, 0
      %v1540 = vsel %vm1414, 1, 0
      %v1541 = vsel %vm1415, 1, 0
      %v1542 = vsel %vm1416, 1, 0
      %v1543 = vsel %vm1417, 1, 0
      %v1544 = vsel %vm1418, 1, 0
      %v1545 = vsel %vm1419, 1, 0
      %v1546 = vsel %vm1420, 1, 0
      %v1547 = vsel %vm1421, 1, 0
      %v1548 = vsel %vm1422, 1, 0
      %v1549 = vsel %vm1423, 1, 0
      %v1550 = vsel %vm1424, 1, 0
      %v1551 = vsel %vm1425, 1, 0
      %v1552 = vsel %vm1426, 1, 0
      %v1553 = vsel %vm1427, 1, 0
      %v1554 = vsel %vm1428, 1, 0
      %v1555 = vsel %vm1429, 1, 0
      %v1556 = vsel %vm1430, 1, 0
      %v1557 = vsel %vm1431, 1, 0
      %v1558 = vsel %vm1432, 1, 0
      %v1559 = vsel %vm1433, 1, 0
      %v1560 = vsel %vm1434, 1, 0
      %v1561 = vsel %vm1435, 1, 0
      %v1562 = vsel %vm1436, 1, 0
      %v1563 = vsel %vm1437, 1, 0
      %v1564 = vsel %vm1438, 1, 0
      %v1565 = vsel %vm1439, 1, 0
      %v1566 = vsel %vm1440, 1, 0
      %v1567 = vsel %vm1441, 1, 0
      %v1568 = vsel %vm1442, 1, 0
      %v1569 = vsel %vm1443, 1, 0
      %v1570 = vsel %vm1444, 1, 0
      %v1571 = vsel %vm1445, 1, 0
      %v1572 = vsel %vm1446, 1, 0
      %v1573 = vsel %vm1447, 1, 0
      %v1574 = vsel %vm1448, 1, 0
      %v1575 = vcvt.s32.f32 %v1449
      %v1576 = vcvt.s32.f32 %v1450
      %v1577 = vcvt.s32.f32 %v1451
      %v1578 = vcvt.s32.f32 %v1452
      %v1579 = vcvt.s32.f32 %v1453
      %v1580 = vcvt.s32.f32 %v1454
      %v1581 = vcvt.s32.f32 %v1455
      %v1582 = vcvt.s32.f32 %v1456
      %v1583 = vcvt.s32.f32 %v1457
      %v1584 = vcvt.s32.f32 %v1458
      %v1585 = vcvt.s32.f32 %v1459
      %v1586 = vcvt.s32.f32 %v1460
      %v1587 = vcvt.s32.f32 %v1461
      %v1588 = vcvt.s32.f32 %v1462
      %v1589 = vcvt.s32.f32 %v1463
      %v1590 = vcvt.s32.f32 %v1464
      %v1591 = vcvt.s32.f32 %v1465
      %v1592 = vcvt.s32.f32 %v1466
      %v1593 = vcvt.s32.f32 %v1467
      %v1594 = vcvt.s32.f32 %v1468
      %v1595 = vcvt.s32.f32 %v1469
      %v1596 = vcvt.s32.f32 %v1470
      %v1597 = vcvt.s32.f32 %v1471
      %v1598 = vcvt.s32.f32 %v1472
      %v1599 = vcvt.s32.f32 %v1473
      %v1600 = vcvt.s32.f32 %v1474
      %v1601 = vcvt.s32.f32 %v1475
      %v1602 = vcvt.s32.f32 %v1476
      %v1603 = vcvt.s32.f32 %v1477
      %v1604 = vcvt.s32.f32 %v1478
      %v1605 = vcvt.s32.f32 %v1479
      %v1606 = vcvt.s32.f32 %v1480
      %v1607 = vcvt.s32.f32 %v1481
      %v1608 = vcvt.s32.f32 %v1482
      %v1609 = vcvt.s32.f32 %v1483
      %v1610 = vcvt.s32.f32 %v1484
      %v1611 = vcvt.s32.f32 %v1485
      %v1612 = vcvt.s32.f32 %v1486
      %v1613 = vcvt.s32.f32 %v1487
      %v1614 = vcvt.s32.f32 %v1488
      %v1615 = vcvt.s32.f32 %v1489
      %v1616 = vcvt.s32.f32 %v1490
      %v1617 = vcvt.s32.f32 %v1491
      %v1618 = vcvt.s32.f32 %v1492
      %v1619 = vcvt.s32.f32 %v1493
      %v1620 = vcvt.s32.f32 %v1494
      %v1621 = vcvt.s32.f32 %v1495
      %v1622 = vcvt.s32.f32 %v1496
      %v1623 = vcvt.s32.f32 %v1497
      %v1624 = vcvt.s32.f32 %v1498
      %v1625 = vcvt.s32.f32 %v1499
      %v1626 = vcvt.s32.f32 %v1500
      %v1627 = vcvt.s32.f32 %v1501
      %v1628 = vcvt.s32.f32 %v1502
      %v1629 = vcvt.s32.f32 %v1503
      %v1630 = vcvt.s32.f32 %v1504
      %v1631 = vcvt.s32.f32 %v1505
      %v1632 = vcvt.s32.f32 %v1506
      %v1633 = vcvt.s32.f32 %v1507
      %v1634 = vcvt.s32.f32 %v1508
      %v1635 = vcvt.s32.f32 %v1509
      %v1636 = vcvt.s32.f32 %v1510
      %v1637 = vcvt.s32.f32 %v1511
      %v1638 = vcvt.s32.f32 %v1512
      %v1639 = vcvt.s32.f32 %v1513
      %v1640 = vcvt.s32.f32 %v1514
      %v1641 = vcvt.s32.f32 %v1515
      %v1642 = vcvt.s32.f32 %v1516
      %v1643 = vcvt.s32.f32 %v1517
      %v1644 = vcvt.s32.f32 %v1518
      %v1645 = vcvt.s32.f32 %v1519
      %v1646 = vcvt.s32.f32 %v1520
      %v1647 = vcvt.s32.f32 %v1521
      %v1648 = vcvt.s32.f32 %v1522
      %v1649 = vcvt.s32.f32 %v1523
      %v1650 = vcvt.s32.f32 %v1524
      %v1651 = vcvt.s32.f32 %v1525
      %v1652 = vcvt.s32.f32 %v1526
      %v1653 = vcvt.s32.f32 %v1527
      %v1654 = vcvt.s32.f32 %v1528
      %v1655 = vcvt.s32.f32 %v1529
      %v1656 = vcvt.s32.f32 %v1530
      %v1657 = vcvt.s32.f32 %v1531
      %v1658 = vcvt.s32.f32 %v1532
      %v1659 = vcvt.s32.f32 %v1533
      %v1660 = vcvt.s32.f32 %v1534
      %v1661 = vcvt.s32.f32 %v1535
      %v1662 = vcvt.s32.f32 %v1536
      %v1663 = vcvt.s32.f32 %v1537
      %v1664 = vcvt.s32.f32 %v1538
      %v1665 = vcvt.s32.f32 %v1539
      %v1666 = vcvt.s32.f32 %v1540
      %v1667 = vcvt.s32.f32 %v1541
      %v1668 = vcvt.s32.f32 %v1542
      %v1669 = vcvt.s32.f32 %v1543
      %v1670 = vcvt.s32.f32 %v1544
      %v1671 = vcvt.s32.f32 %v1545
      %v1672 = vcvt.s32.f32 %v1546
      %v1673 = vcvt.s32.f32 %v1547
      %v1674 = vcvt.s32.f32 %v1548
      %v1675 = vcvt.s32.f32 %v1549
      %v1676 = vcvt.s32.f32 %v1550
      %v1677 = vcvt.s32.f32 %v1551
      %v1678 = vcvt.s32.f32 %v1552
      %v1679 = vcvt.s32.f32 %v1553
      %v1680 = vcvt.s32.f32 %v1554
      %v1681 = vcvt.s32.f32 %v1555
      %v1682 = vcvt.s32.f32 %v1556
      %v1683 = vcvt.s32.f32 %v1557
      %v1684 = vcvt.s32.f32 %v1558
      %v1685 = vcvt.s32.f32 %v1559
      %v1686 = vcvt.s32.f32 %v1560
      %v1687 = vcvt.s32.f32 %v1561
      %v1688 = vcvt.s32.f32 %v1562
      %v1689 = vcvt.s32.f32 %v1563
      %v1690 = vcvt.s32.f32 %v1564
      %v1691 = vcvt.s32.f32 %v1565
      %v1692 = vcvt.s32.f32 %v1566
      %v1693 = vcvt.s32.f32 %v1567
      %v1694 = vcvt.s32.f32 %v1568
      %v1695 = vcvt.s32.f32 %v1569
      %v1696 = vcvt.s32.f32 %v1570
      %v1697 = vcvt.s32.f32 %v1571
      %v1698 = vcvt.s32.f32 %v1572
      %v1699 = vcvt.s32.f32 %v1573
      %v1700 = vcvt.s32.f32 %v1574
      %1701 = vset.pattern.permute.xlu0 0
      %1702 = vperm.xlu0 %1701, %v501
      %v1703 = vpop.permute.xlu0 %1702
      %1704 = vset.pattern.permute.xlu0 0
      %1705 = vperm.xlu0 %1704, %v502
      %v1706 = vpop.permute.xlu0 %1705
      %1707 = vset.pattern.permute.xlu0 0
      %1708 = vperm.xlu0 %1707, %v503
      %v1709 = vpop.permute.xlu0 %1708
      %1710 = vset.pattern.permute.xlu0 0
      %1711 = vperm.xlu0 %1710, %v504
      %v1712 = vpop.permute.xlu0 %1711
      %1713 = vset.pattern.permute.xlu0 0
      %1714 = vperm.xlu0 %1713, %v505
      %v1715 = vpop.permute.xlu0 %1714
      %1716 = vset.pattern.permute.xlu0 0
      %1717 = vperm.xlu0 %1716, %v506
      %v1718 = vpop.permute.xlu0 %1717
      %1719 = vset.pattern.permute.xlu0 0
      %1720 = vperm.xlu0 %1719, %v507
      %v1721 = vpop.permute.xlu0 %1720
      %1722 = vset.pattern.permute.xlu0 0
      %1723 = vperm.xlu0 %1722, %v508
      %v1724 = vpop.permute.xlu0 %1723
      %1725 = vset.pattern.permute.xlu0 0
      %1726 = vperm.xlu0 %1725, %v509
      %v1727 = vpop.permute.xlu0 %1726
      %1728 = vset.pattern.permute.xlu0 0
      %1729 = vperm.xlu0 %1728, %v510
      %v1730 = vpop.permute.xlu0 %1729
      %1731 = vset.pattern.permute.xlu0 0
      %1732 = vperm.xlu0 %1731, %v511
      %v1733 = vpop.permute.xlu0 %1732
      %1734 = vset.pattern.permute.xlu0 0
      %1735 = vperm.xlu0 %1734, %v512
      %v1736 = vpop.permute.xlu0 %1735
      %1737 = vset.pattern.permute.xlu0 0
      %1738 = vperm.xlu0 %1737, %v513
      %v1739 = vpop.permute.xlu0 %1738
      %1740 = vset.pattern.permute.xlu0 0
      %1741 = vperm.xlu0 %1740, %v514
      %v1742 = vpop.permute.xlu0 %1741
      %1743 = vset.pattern.permute.xlu0 0
      %1744 = vperm.xlu0 %1743, %v515
      %v1745 = vpop.permute.xlu0 %1744
      %1746 = vset.pattern.permute.xlu0 0
      %1747 = vperm.xlu0 %1746, %v516
      %v1748 = vpop.permute.xlu0 %1747
      %1749 = vset.pattern.permute.xlu0 0
      %1750 = vperm.xlu0 %1749, %v517
      %v1751 = vpop.permute.xlu0 %1750
      %1752 = vset.pattern.permute.xlu0 0
      %1753 = vperm.xlu0 %1752, %v518
      %v1754 = vpop.permute.xlu0 %1753
      %1755 = vset.pattern.permute.xlu0 0
      %1756 = vperm.xlu0 %1755, %v519
      %v1757 = vpop.permute.xlu0 %1756
      %1758 = vset.pattern.permute.xlu0 0
      %1759 = vperm.xlu0 %1758, %v520
      %v1760 = vpop.permute.xlu0 %1759
      %1761 = vset.pattern.permute.xlu0 0
      %1762 = vperm.xlu0 %1761, %v521
      %v1763 = vpop.permute.xlu0 %1762
      %1764 = vset.pattern.permute.xlu0 0
      %1765 = vperm.xlu0 %1764, %v522
      %v1766 = vpop.permute.xlu0 %1765
      %1767 = vset.pattern.permute.xlu0 0
      %1768 = vperm.xlu0 %1767, %v523
      %v1769 = vpop.permute.xlu0 %1768
      %1770 = vset.pattern.permute.xlu0 0
      %1771 = vperm.xlu0 %1770, %v524
      %v1772 = vpop.permute.xlu0 %1771
      %1773 = vset.pattern.permute.xlu0 0
      %1774 = vperm.xlu0 %1773, %v525
      %v1775 = vpop.permute.xlu0 %1774
      %1776 = vset.pattern.permute.xlu0 0
      %1777 = vperm.xlu0 %1776, %v526
      %v1778 = vpop.permute.xlu0 %1777
      %1779 = vset.pattern.permute.xlu0 0
      %1780 = vperm.xlu0 %1779, %v527
      %v1781 = vpop.permute.xlu0 %1780
      %1782 = vset.pattern.permute.xlu0 0
      %1783 = vperm.xlu0 %1782, %v528
      %v1784 = vpop.permute.xlu0 %1783
      %1785 = vset.pattern.permute.xlu0 0
      %1786 = vperm.xlu0 %1785, %v529
      %v1787 = vpop.permute.xlu0 %1786
      %1788 = vset.pattern.permute.xlu0 0
      %1789 = vperm.xlu0 %1788, %v530
      %v1790 = vpop.permute.xlu0 %1789
      %1791 = vset.pattern.permute.xlu0 0
      %1792 = vperm.xlu0 %1791, %v531
      %v1793 = vpop.permute.xlu0 %1792
      %1794 = vset.pattern.permute.xlu0 0
      %1795 = vperm.xlu0 %1794, %v532
      %v1796 = vpop.permute.xlu0 %1795
      %1797 = vset.pattern.permute.xlu0 0
      %1798 = vperm.xlu0 %1797, %v533
      %v1799 = vpop.permute.xlu0 %1798
      %1800 = vset.pattern.permute.xlu0 0
      %1801 = vperm.xlu0 %1800, %v534
      %v1802 = vpop.permute.xlu0 %1801
      %1803 = vset.pattern.permute.xlu0 0
      %1804 = vperm.xlu0 %1803, %v535
      %v1805 = vpop.permute.xlu0 %1804
      %1806 = vset.pattern.permute.xlu0 0
      %1807 = vperm.xlu0 %1806, %v536
      %v1808 = vpop.permute.xlu0 %1807
      %1809 = vset.pattern.permute.xlu0 0
      %1810 = vperm.xlu0 %1809, %v537
      %v1811 = vpop.permute.xlu0 %1810
      %1812 = vset.pattern.permute.xlu0 0
      %1813 = vperm.xlu0 %1812, %v538
      %v1814 = vpop.permute.xlu0 %1813
      %1815 = vset.pattern.permute.xlu0 0
      %1816 = vperm.xlu0 %1815, %v539
      %v1817 = vpop.permute.xlu0 %1816
      %1818 = vset.pattern.permute.xlu0 0
      %1819 = vperm.xlu0 %1818, %v540
      %v1820 = vpop.permute.xlu0 %1819
      %1821 = vset.pattern.permute.xlu0 0
      %1822 = vperm.xlu0 %1821, %v541
      %v1823 = vpop.permute.xlu0 %1822
      %1824 = vset.pattern.permute.xlu0 0
      %1825 = vperm.xlu0 %1824, %v542
      %v1826 = vpop.permute.xlu0 %1825
      %1827 = vset.pattern.permute.xlu0 0
      %1828 = vperm.xlu0 %1827, %v543
      %v1829 = vpop.permute.xlu0 %1828
      %1830 = vset.pattern.permute.xlu0 0
      %1831 = vperm.xlu0 %1830, %v544
      %v1832 = vpop.permute.xlu0 %1831
      %1833 = vset.pattern.permute.xlu0 0
      %1834 = vperm.xlu0 %1833, %v545
      %v1835 = vpop.permute.xlu0 %1834
      %1836 = vset.pattern.permute.xlu0 0
      %1837 = vperm.xlu0 %1836, %v546
      %v1838 = vpop.permute.xlu0 %1837
      %1839 = vset.pattern.permute.xlu0 0
      %1840 = vperm.xlu0 %1839, %v547
      %v1841 = vpop.permute.xlu0 %1840
      %1842 = vset.pattern.permute.xlu0 0
      %1843 = vperm.xlu0 %1842, %v548
      %v1844 = vpop.permute.xlu0 %1843
      %1845 = vset.pattern.permute.xlu0 0
      %1846 = vperm.xlu0 %1845, %v549
      %v1847 = vpop.permute.xlu0 %1846
      %1848 = vset.pattern.permute.xlu0 0
      %1849 = vperm.xlu0 %1848, %v550
      %v1850 = vpop.permute.xlu0 %1849
      %1851 = vset.pattern.permute.xlu0 0
      %1852 = vperm.xlu0 %1851, %v551
      %v1853 = vpop.permute.xlu0 %1852
      %1854 = vset.pattern.permute.xlu0 0
      %1855 = vperm.xlu0 %1854, %v552
      %v1856 = vpop.permute.xlu0 %1855
      %1857 = vset.pattern.permute.xlu0 0
      %1858 = vperm.xlu0 %1857, %v553
      %v1859 = vpop.permute.xlu0 %1858
      %1860 = vset.pattern.permute.xlu0 0
      %1861 = vperm.xlu0 %1860, %v554
      %v1862 = vpop.permute.xlu0 %1861
      %1863 = vset.pattern.permute.xlu0 0
      %1864 = vperm.xlu0 %1863, %v555
      %v1865 = vpop.permute.xlu0 %1864
      %1866 = vset.pattern.permute.xlu0 0
      %1867 = vperm.xlu0 %1866, %v556
      %v1868 = vpop.permute.xlu0 %1867
      %1869 = vset.pattern.permute.xlu0 0
      %1870 = vperm.xlu0 %1869, %v557
      %v1871 = vpop.permute.xlu0 %1870
      %1872 = vset.pattern.permute.xlu0 0
      %1873 = vperm.xlu0 %1872, %v558
      %v1874 = vpop.permute.xlu0 %1873
      %1875 = vset.pattern.permute.xlu0 0
      %1876 = vperm.xlu0 %1875, %v559
      %v1877 = vpop.permute.xlu0 %1876
      %1878 = vset.pattern.permute.xlu0 0
      %1879 = vperm.xlu0 %1878, %v560
      %v1880 = vpop.permute.xlu0 %1879
      %1881 = vset.pattern.permute.xlu0 0
      %1882 = vperm.xlu0 %1881, %v561
      %v1883 = vpop.permute.xlu0 %1882
      %1884 = vset.pattern.permute.xlu0 0
      %1885 = vperm.xlu0 %1884, %v562
      %v1886 = vpop.permute.xlu0 %1885
      %1887 = vset.pattern.permute.xlu0 0
      %1888 = vperm.xlu0 %1887, %v563
      %v1889 = vpop.permute.xlu0 %1888
      %vm1890 = vcmp.eq.s32.totalorder %v565, %v1703
      %vm1891 = vcmp.eq.s32.totalorder %v565, %v1706
      %vm1892 = vcmp.eq.s32.totalorder %v565, %v1709
      %vm1893 = vcmp.eq.s32.totalorder %v565, %v1712
      %vm1894 = vcmp.eq.s32.totalorder %v565, %v1715
      %vm1895 = vcmp.eq.s32.totalorder %v565, %v1718
      %vm1896 = vcmp.eq.s32.totalorder %v565, %v1721
      %vm1897 = vcmp.eq.s32.totalorder %v565, %v1724
      %vm1898 = vcmp.eq.s32.totalorder %v565, %v1727
      %vm1899 = vcmp.eq.s32.totalorder %v565, %v1730
      %vm1900 = vcmp.eq.s32.totalorder %v565, %v1733
      %vm1901 = vcmp.eq.s32.totalorder %v565, %v1736
      %vm1902 = vcmp.eq.s32.totalorder %v565, %v1739
      %vm1903 = vcmp.eq.s32.totalorder %v565, %v1742
      %vm1904 = vcmp.eq.s32.totalorder %v565, %v1745
      %vm1905 = vcmp.eq.s32.totalorder %v565, %v1748
      %vm1906 = vcmp.eq.s32.totalorder %v565, %v1751
      %vm1907 = vcmp.eq.s32.totalorder %v565, %v1754
      %vm1908 = vcmp.eq.s32.totalorder %v565, %v1757
      %vm1909 = vcmp.eq.s32.totalorder %v565, %v1760
      %vm1910 = vcmp.eq.s32.totalorder %v565, %v1763
      %vm1911 = vcmp.eq.s32.totalorder %v565, %v1766
      %vm1912 = vcmp.eq.s32.totalorder %v565, %v1769
      %vm1913 = vcmp.eq.s32.totalorder %v565, %v1772
      %vm1914 = vcmp.eq.s32.totalorder %v565, %v1775
      %vm1915 = vcmp.eq.s32.totalorder %v565, %v1778
      %vm1916 = vcmp.eq.s32.totalorder %v565, %v1781
      %vm1917 = vcmp.eq.s32.totalorder %v565, %v1784
      %vm1918 = vcmp.eq.s32.totalorder %v565, %v1787
      %vm1919 = vcmp.eq.s32.totalorder %v565, %v1790
      %vm1920 = vcmp.eq.s32.totalorder %v565, %v1793
      %vm1921 = vcmp.eq.s32.totalorder %v565, %v1796
      %vm1922 = vcmp.eq.s32.totalorder %v565, %v1799
      %vm1923 = vcmp.eq.s32.totalorder %v565, %v1802
      %vm1924 = vcmp.eq.s32.totalorder %v565, %v1805
      %vm1925 = vcmp.eq.s32.totalorder %v565, %v1808
      %vm1926 = vcmp.eq.s32.totalorder %v565, %v1811
      %vm1927 = vcmp.eq.s32.totalorder %v565, %v1814
      %vm1928 = vcmp.eq.s32.totalorder %v565, %v1817
      %vm1929 = vcmp.eq.s32.totalorder %v565, %v1820
      %vm1930 = vcmp.eq.s32.totalorder %v565, %v1823
      %vm1931 = vcmp.eq.s32.totalorder %v565, %v1826
      %vm1932 = vcmp.eq.s32.totalorder %v565, %v1829
      %vm1933 = vcmp.eq.s32.totalorder %v565, %v1832
      %vm1934 = vcmp.eq.s32.totalorder %v565, %v1835
      %vm1935 = vcmp.eq.s32.totalorder %v565, %v1838
      %vm1936 = vcmp.eq.s32.totalorder %v565, %v1841
      %vm1937 = vcmp.eq.s32.totalorder %v565, %v1844
      %vm1938 = vcmp.eq.s32.totalorder %v565, %v1847
      %vm1939 = vcmp.eq.s32.totalorder %v565, %v1850
      %vm1940 = vcmp.eq.s32.totalorder %v565, %v1853
      %vm1941 = vcmp.eq.s32.totalorder %v565, %v1856
      %vm1942 = vcmp.eq.s32.totalorder %v565, %v1859
      %vm1943 = vcmp.eq.s32.totalorder %v565, %v1862
      %vm1944 = vcmp.eq.s32.totalorder %v565, %v1865
      %vm1945 = vcmp.eq.s32.totalorder %v565, %v1868
      %vm1946 = vcmp.eq.s32.totalorder %v565, %v1871
      %vm1947 = vcmp.eq.s32.totalorder %v565, %v1874
      %vm1948 = vcmp.eq.s32.totalorder %v565, %v1877
      %vm1949 = vcmp.eq.s32.totalorder %v565, %v1880
      %vm1950 = vcmp.eq.s32.totalorder %v565, %v1883
      %vm1951 = vcmp.eq.s32.totalorder %v565, %v1886
      %vm1952 = vcmp.eq.s32.totalorder %v565, %v1889
      %v1953 = vsel %vm1890, 1, 0
      %v1954 = vsel %vm1891, 1, 0
      %v1955 = vsel %vm1892, 1, 0
      %v1956 = vsel %vm1893, 1, 0
      %v1957 = vsel %vm1894, 1, 0
      %v1958 = vsel %vm1895, 1, 0
      %v1959 = vsel %vm1896, 1, 0
      %v1960 = vsel %vm1897, 1, 0
      %v1961 = vsel %vm1898, 1, 0
      %v1962 = vsel %vm1899, 1, 0
      %v1963 = vsel %vm1900, 1, 0
      %v1964 = vsel %vm1901, 1, 0
      %v1965 = vsel %vm1902, 1, 0
      %v1966 = vsel %vm1903, 1, 0
      %v1967 = vsel %vm1904, 1, 0
      %v1968 = vsel %vm1905, 1, 0
      %v1969 = vsel %vm1906, 1, 0
      %v1970 = vsel %vm1907, 1, 0
      %v1971 = vsel %vm1908, 1, 0
      %v1972 = vsel %vm1909, 1, 0
      %v1973 = vsel %vm1910, 1, 0
      %v1974 = vsel %vm1911, 1, 0
      %v1975 = vsel %vm1912, 1, 0
      %v1976 = vsel %vm1913, 1, 0
      %v1977 = vsel %vm1914, 1, 0
      %v1978 = vsel %vm1915, 1, 0
      %v1979 = vsel %vm1916, 1, 0
      %v1980 = vsel %vm1917, 1, 0
      %v1981 = vsel %vm1918, 1, 0
      %v1982 = vsel %vm1919, 1, 0
      %v1983 = vsel %vm1920, 1, 0
      %v1984 = vsel %vm1921, 1, 0
      %v1985 = vsel %vm1922, 1, 0
      %v1986 = vsel %vm1923, 1, 0
      %v1987 = vsel %vm1924, 1, 0
      %v1988 = vsel %vm1925, 1, 0
      %v1989 = vsel %vm1926, 1, 0
      %v1990 = vsel %vm1927, 1, 0
      %v1991 = vsel %vm1928, 1, 0
      %v1992 = vsel %vm1929, 1, 0
      %v1993 = vsel %vm1930, 1, 0
      %v1994 = vsel %vm1931, 1, 0
      %v1995 = vsel %vm1932, 1, 0
      %v1996 = vsel %vm1933, 1, 0
      %v1997 = vsel %vm1934, 1, 0
      %v1998 = vsel %vm1935, 1, 0
      %v1999 = vsel %vm1936, 1, 0
      %v2000 = vsel %vm1937, 1, 0
      %v2001 = vsel %vm1938, 1, 0
      %v2002 = vsel %vm1939, 1, 0
      %v2003 = vsel %vm1940, 1, 0
      %v2004 = vsel %vm1941, 1, 0
      %v2005 = vsel %vm1942, 1, 0
      %v2006 = vsel %vm1943, 1, 0
      %v2007 = vsel %vm1944, 1, 0
      %v2008 = vsel %vm1945, 1, 0
      %v2009 = vsel %vm1946, 1, 0
      %v2010 = vsel %vm1947, 1, 0
      %v2011 = vsel %vm1948, 1, 0
      %v2012 = vsel %vm1949, 1, 0
      %v2013 = vsel %vm1950, 1, 0
      %v2014 = vsel %vm1951, 1, 0
      %v2015 = vsel %vm1952, 1, 0
      %v2016 = vcvt.s32.f32 %v1953
      %v2017 = vcvt.s32.f32 %v1954
      %v2018 = vcvt.s32.f32 %v1955
      %v2019 = vcvt.s32.f32 %v1956
      %v2020 = vcvt.s32.f32 %v1957
      %v2021 = vcvt.s32.f32 %v1958
      %v2022 = vcvt.s32.f32 %v1959
      %v2023 = vcvt.s32.f32 %v1960
      %v2024 = vcvt.s32.f32 %v1961
      %v2025 = vcvt.s32.f32 %v1962
      %v2026 = vcvt.s32.f32 %v1963
      %v2027 = vcvt.s32.f32 %v1964
      %v2028 = vcvt.s32.f32 %v1965
      %v2029 = vcvt.s32.f32 %v1966
      %v2030 = vcvt.s32.f32 %v1967
      %v2031 = vcvt.s32.f32 %v1968
      %v2032 = vcvt.s32.f32 %v1969
      %v2033 = vcvt.s32.f32 %v1970
      %v2034 = vcvt.s32.f32 %v1971
      %v2035 = vcvt.s32.f32 %v1972
      %v2036 = vcvt.s32.f32 %v1973
      %v2037 = vcvt.s32.f32 %v1974
      %v2038 = vcvt.s32.f32 %v1975
      %v2039 = vcvt.s32.f32 %v1976
      %v2040 = vcvt.s32.f32 %v1977
      %v2041 = vcvt.s32.f32 %v1978
      %v2042 = vcvt.s32.f32 %v1979
      %v2043 = vcvt.s32.f32 %v1980
      %v2044 = vcvt.s32.f32 %v1981
      %v2045 = vcvt.s32.f32 %v1982
      %v2046 = vcvt.s32.f32 %v1983
      %v2047 = vcvt.s32.f32 %v1984
      %v2048 = vcvt.s32.f32 %v1985
      %v2049 = vcvt.s32.f32 %v1986
      %v2050 = vcvt.s32.f32 %v1987
      %v2051 = vcvt.s32.f32 %v1988
      %v2052 = vcvt.s32.f32 %v1989
      %v2053 = vcvt.s32.f32 %v1990
      %v2054 = vcvt.s32.f32 %v1991
      %v2055 = vcvt.s32.f32 %v1992
      %v2056 = vcvt.s32.f32 %v1993
      %v2057 = vcvt.s32.f32 %v1994
      %v2058 = vcvt.s32.f32 %v1995
      %v2059 = vcvt.s32.f32 %v1996
      %v2060 = vcvt.s32.f32 %v1997
      %v2061 = vcvt.s32.f32 %v1998
      %v2062 = vcvt.s32.f32 %v1999
      %v2063 = vcvt.s32.f32 %v2000
      %v2064 = vcvt.s32.f32 %v2001
      %v2065 = vcvt.s32.f32 %v2002
      %v2066 = vcvt.s32.f32 %v2003
      %v2067 = vcvt.s32.f32 %v2004
      %v2068 = vcvt.s32.f32 %v2005
      %v2069 = vcvt.s32.f32 %v2006
      %v2070 = vcvt.s32.f32 %v2007
      %v2071 = vcvt.s32.f32 %v2008
      %v2072 = vcvt.s32.f32 %v2009
      %v2073 = vcvt.s32.f32 %v2010
      %v2074 = vcvt.s32.f32 %v2011
      %v2075 = vcvt.s32.f32 %v2012
      %v2076 = vcvt.s32.f32 %v2013
      %v2077 = vcvt.s32.f32 %v2014
      %v2078 = vcvt.s32.f32 %v2015
      %v2079 = vld [vmem:[%s3] sm:$0xff]
      %v2080 = vld [vmem:[%s3 + $0x8] sm:$0xff]
      %v2081 = vld [vmem:[%s3 + $0x10] sm:$0xff]
      %v2082 = vld [vmem:[%s3 + $0x18] sm:$0xff]
      %v2083 = vld [vmem:[%s3 + $0x20] sm:$0xff]
      %v2084 = vld [vmem:[%s3 + $0x28] sm:$0xff]
      %v2085 = vld [vmem:[%s3 + $0x30] sm:$0xff]
      %v2086 = vld [vmem:[%s3 + $0x38] sm:$0xff]
      %v2087 = vld [vmem:[%s3 + $0x40] sm:$0xff]
      %v2088 = vld [vmem:[%s3 + $0x48] sm:$0xff]
      %v2089 = vld [vmem:[%s3 + $0x50] sm:$0xff]
      %v2090 = vld [vmem:[%s3 + $0x58] sm:$0xff]
      %v2091 = vld [vmem:[%s3 + $0x60] sm:$0xff]
      %v2092 = vld [vmem:[%s3 + $0x68] sm:$0xff]
      %v2093 = vld [vmem:[%s3 + $0x70] sm:$0xff]
      %v2094 = vld [vmem:[%s3 + $0x78] sm:$0xff]
      %v2095 = vld [vmem:[%s3 + $0x80] sm:$0xff]
      %v2096 = vld [vmem:[%s3 + $0x88] sm:$0xff]
      %v2097 = vld [vmem:[%s3 + $0x90] sm:$0xff]
      %v2098 = vld [vmem:[%s3 + $0x98] sm:$0xff]
      %v2099 = vld [vmem:[%s3 + $0xa0] sm:$0xff]
      %v2100 = vld [vmem:[%s3 + $0xa8] sm:$0xff]
      %v2101 = vld [vmem:[%s3 + $0xb0] sm:$0xff]
      %v2102 = vld [vmem:[%s3 + $0xb8] sm:$0xff]
      %v2103 = vld [vmem:[%s3 + $0xc0] sm:$0xff]
      %v2104 = vld [vmem:[%s3 + $0xc8] sm:$0xff]
      %v2105 = vld [vmem:[%s3 + $0xd0] sm:$0xff]
      %v2106 = vld [vmem:[%s3 + $0xd8] sm:$0xff]
      %v2107 = vld [vmem:[%s3 + $0xe0] sm:$0xff]
      %v2108 = vld [vmem:[%s3 + $0xe8] sm:$0xff]
      %v2109 = vld [vmem:[%s3 + $0xf0] sm:$0xff]
      %v2110 = vld [vmem:[%s3 + $0xf8] sm:$0xff]
      %2111 = vmatpush.msra.mxu0 %v2094
      %2112 = vmatpush.msra.mxu0 %v2093
      %2113 = vmatpush.msra.mxu0 %v2092
      %2114 = vmatpush.msra.mxu0 %v2091
      %2115 = vmatpush.msra.mxu0 %v2090
      %2116 = vmatpush.msra.mxu0 %v2089
      %2117 = vmatpush.msra.mxu0 %v2088
      %2118 = vmatpush.msra.mxu0 %v2087
      %2119 = vmatpush.msra.mxu0 %v2086
      %2120 = vmatpush.msra.mxu0 %v2085
      %2121 = vmatpush.msra.mxu0 %v2084
      %2122 = vmatpush.msra.mxu0 %v2083
      %2123 = vmatpush.msra.mxu0 %v2082
      %2124 = vmatpush.msra.mxu0 %v2081
      %2125 = vmatpush.msra.mxu0 %v2080
      %2126 = vmatpush.msra.mxu0 %v2079
      %2127 = vmatmul.f32.gmra.mxu0 %v1008
      %v2128 = vpop.f32.mrf.mxu0
      %v2129 = vadd.f32 0.0, %v2128
      %2130 = vmatmul.f32.gmra.mxu0 %v1010
      %v2131 = vpop.f32.mrf.mxu0
      %v2132 = vadd.f32 0.0, %v2131
      %2133 = vmatmul.f32.gmra.mxu0 %v1012
      %v2134 = vpop.f32.mrf.mxu0
      %v2135 = vadd.f32 0.0, %v2134
      %2136 = vmatmul.f32.gmra.mxu0 %v1014
      %v2137 = vpop.f32.mrf.mxu0
      %v2138 = vadd.f32 0.0, %v2137
      %2139 = vmatmul.f32.gmra.mxu0 %v1016
      %v2140 = vpop.f32.mrf.mxu0
      %v2141 = vadd.f32 0.0, %v2140
      %2142 = vmatmul.f32.gmra.mxu0 %v1018
      %v2143 = vpop.f32.mrf.mxu0
      %v2144 = vadd.f32 0.0, %v2143
      %2145 = vmatmul.f32.gmra.mxu0 %v1020
      %v2146 = vpop.f32.mrf.mxu0
      %v2147 = vadd.f32 0.0, %v2146
      %2148 = vmatmul.f32.gmra.mxu0 %v1022
      %v2149 = vpop.f32.mrf.mxu0
      %v2150 = vadd.f32 0.0, %v2149
      %2151 = vmatmul.f32.gmra.mxu0 %v1024
      %v2152 = vpop.f32.mrf.mxu0
      %v2153 = vadd.f32 0.0, %v2152
      %2154 = vmatmul.f32.gmra.mxu0 %v1026
      %v2155 = vpop.f32.mrf.mxu0
      %v2156 = vadd.f32 0.0, %v2155
      %2157 = vmatmul.f32.gmra.mxu0 %v1028
      %v2158 = vpop.f32.mrf.mxu0
      %v2159 = vadd.f32 0.0, %v2158
      %2160 = vmatmul.f32.gmra.mxu0 %v1030
      %v2161 = vpop.f32.mrf.mxu0
      %v2162 = vadd.f32 0.0, %v2161
      %2163 = vmatmul.f32.gmra.mxu0 %v1032
      %v2164 = vpop.f32.mrf.mxu0
      %v2165 = vadd.f32 0.0, %v2164
      %2166 = vmatmul.f32.gmra.mxu0 %v1034
      %v2167 = vpop.f32.mrf.mxu0
      %v2168 = vadd.f32 0.0, %v2167
      %2169 = vmatmul.f32.gmra.mxu0 %v1036
      %v2170 = vpop.f32.mrf.mxu0
      %v2171 = vadd.f32 0.0, %v2170
      %2172 = vmatmul.f32.gmra.mxu0 %v1038
      %v2173 = vpop.f32.mrf.mxu0
      %v2174 = vadd.f32 0.0, %v2173
      %2175 = vmatmul.f32.gmra.mxu0 %v1040
      %v2176 = vpop.f32.mrf.mxu0
      %v2177 = vadd.f32 0.0, %v2176
      %2178 = vmatmul.f32.gmra.mxu0 %v1042
      %v2179 = vpop.f32.mrf.mxu0
      %v2180 = vadd.f32 0.0, %v2179
      %2181 = vmatmul.f32.gmra.mxu0 %v1044
      %v2182 = vpop.f32.mrf.mxu0
      %v2183 = vadd.f32 0.0, %v2182
      %2184 = vmatmul.f32.gmra.mxu0 %v1046
      %v2185 = vpop.f32.mrf.mxu0
      %v2186 = vadd.f32 0.0, %v2185
      %2187 = vmatmul.f32.gmra.mxu0 %v1048
      %v2188 = vpop.f32.mrf.mxu0
      %v2189 = vadd.f32 0.0, %v2188
      %2190 = vmatmul.f32.gmra.mxu0 %v1050
      %v2191 = vpop.f32.mrf.mxu0
      %v2192 = vadd.f32 0.0, %v2191
      %2193 = vmatmul.f32.gmra.mxu0 %v1052
      %v2194 = vpop.f32.mrf.mxu0
      %v2195 = vadd.f32 0.0, %v2194
      %2196 = vmatmul.f32.gmra.mxu0 %v1054
      %v2197 = vpop.f32.mrf.mxu0
      %v2198 = vadd.f32 0.0, %v2197
      %2199 = vmatmul.f32.gmra.mxu0 %v1056
      %v2200 = vpop.f32.mrf.mxu0
      %v2201 = vadd.f32 0.0, %v2200
      %2202 = vmatmul.f32.gmra.mxu0 %v1058
      %v2203 = vpop.f32.mrf.mxu0
      %v2204 = vadd.f32 0.0, %v2203
      %2205 = vmatmul.f32.gmra.mxu0 %v1060
      %v2206 = vpop.f32.mrf.mxu0
      %v2207 = vadd.f32 0.0, %v2206
      %2208 = vmatmul.f32.gmra.mxu0 %v1062
      %v2209 = vpop.f32.mrf.mxu0
      %v2210 = vadd.f32 0.0, %v2209
      %2211 = vmatmul.f32.gmra.mxu0 %v1064
      %v2212 = vpop.f32.mrf.mxu0
      %v2213 = vadd.f32 0.0, %v2212
      %2214 = vmatmul.f32.gmra.mxu0 %v1066
      %v2215 = vpop.f32.mrf.mxu0
      %v2216 = vadd.f32 0.0, %v2215
      %2217 = vmatmul.f32.gmra.mxu0 %v1068
      %v2218 = vpop.f32.mrf.mxu0
      %v2219 = vadd.f32 0.0, %v2218
      %2220 = vmatmul.f32.gmra.mxu0 %v1070
      %v2221 = vpop.f32.mrf.mxu0
      %v2222 = vadd.f32 0.0, %v2221
      %2223 = vmatmul.f32.gmra.mxu0 %v1072
      %v2224 = vpop.f32.mrf.mxu0
      %v2225 = vadd.f32 0.0, %v2224
      %2226 = vmatmul.f32.gmra.mxu0 %v1074
      %v2227 = vpop.f32.mrf.mxu0
      %v2228 = vadd.f32 0.0, %v2227
      %2229 = vmatmul.f32.gmra.mxu0 %v1076
      %v2230 = vpop.f32.mrf.mxu0
      %v2231 = vadd.f32 0.0, %v2230
      %2232 = vmatmul.f32.gmra.mxu0 %v1078
      %v2233 = vpop.f32.mrf.mxu0
      %v2234 = vadd.f32 0.0, %v2233
      %2235 = vmatmul.f32.gmra.mxu0 %v1080
      %v2236 = vpop.f32.mrf.mxu0
      %v2237 = vadd.f32 0.0, %v2236
      %2238 = vmatmul.f32.gmra.mxu0 %v1082
      %v2239 = vpop.f32.mrf.mxu0
      %v2240 = vadd.f32 0.0, %v2239
      %2241 = vmatmul.f32.gmra.mxu0 %v1084
      %v2242 = vpop.f32.mrf.mxu0
      %v2243 = vadd.f32 0.0, %v2242
      %2244 = vmatmul.f32.gmra.mxu0 %v1086
      %v2245 = vpop.f32.mrf.mxu0
      %v2246 = vadd.f32 0.0, %v2245
      %2247 = vmatmul.f32.gmra.mxu0 %v1088
      %v2248 = vpop.f32.mrf.mxu0
      %v2249 = vadd.f32 0.0, %v2248
      %2250 = vmatmul.f32.gmra.mxu0 %v1090
      %v2251 = vpop.f32.mrf.mxu0
      %v2252 = vadd.f32 0.0, %v2251
      %2253 = vmatmul.f32.gmra.mxu0 %v1092
      %v2254 = vpop.f32.mrf.mxu0
      %v2255 = vadd.f32 0.0, %v2254
      %2256 = vmatmul.f32.gmra.mxu0 %v1094
      %v2257 = vpop.f32.mrf.mxu0
      %v2258 = vadd.f32 0.0, %v2257
      %2259 = vmatmul.f32.gmra.mxu0 %v1096
      %v2260 = vpop.f32.mrf.mxu0
      %v2261 = vadd.f32 0.0, %v2260
      %2262 = vmatmul.f32.gmra.mxu0 %v1098
      %v2263 = vpop.f32.mrf.mxu0
      %v2264 = vadd.f32 0.0, %v2263
      %2265 = vmatmul.f32.gmra.mxu0 %v1100
      %v2266 = vpop.f32.mrf.mxu0
      %v2267 = vadd.f32 0.0, %v2266
      %2268 = vmatmul.f32.gmra.mxu0 %v1102
      %v2269 = vpop.f32.mrf.mxu0
      %v2270 = vadd.f32 0.0, %v2269
      %2271 = vmatmul.f32.gmra.mxu0 %v1104
      %v2272 = vpop.f32.mrf.mxu0
      %v2273 = vadd.f32 0.0, %v2272
      %2274 = vmatmul.f32.gmra.mxu0 %v1106
      %v2275 = vpop.f32.mrf.mxu0
      %v2276 = vadd.f32 0.0, %v2275
      %2277 = vmatmul.f32.gmra.mxu0 %v1108
      %v2278 = vpop.f32.mrf.mxu0
      %v2279 = vadd.f32 0.0, %v2278
      %2280 = vmatmul.f32.gmra.mxu0 %v1110
      %v2281 = vpop.f32.mrf.mxu0
      %v2282 = vadd.f32 0.0, %v2281
      %2283 = vmatmul.f32.gmra.mxu0 %v1112
      %v2284 = vpop.f32.mrf.mxu0
      %v2285 = vadd.f32 0.0, %v2284
      %2286 = vmatmul.f32.gmra.mxu0 %v1114
      %v2287 = vpop.f32.mrf.mxu0
      %v2288 = vadd.f32 0.0, %v2287
      %2289 = vmatmul.f32.gmra.mxu0 %v1116
      %v2290 = vpop.f32.mrf.mxu0
      %v2291 = vadd.f32 0.0, %v2290
      %2292 = vmatmul.f32.gmra.mxu0 %v1118
      %v2293 = vpop.f32.mrf.mxu0
      %v2294 = vadd.f32 0.0, %v2293
      %2295 = vmatmul.f32.gmra.mxu0 %v1120
      %v2296 = vpop.f32.mrf.mxu0
      %v2297 = vadd.f32 0.0, %v2296
      %2298 = vmatmul.f32.gmra.mxu0 %v1122
      %v2299 = vpop.f32.mrf.mxu0
      %v2300 = vadd.f32 0.0, %v2299
      %2301 = vmatmul.f32.gmra.mxu0 %v1124
      %v2302 = vpop.f32.mrf.mxu0
      %v2303 = vadd.f32 0.0, %v2302
      %2304 = vmatmul.f32.gmra.mxu0 %v1126
      %v2305 = vpop.f32.mrf.mxu0
      %v2306 = vadd.f32 0.0, %v2305
      %2307 = vmatmul.f32.gmra.mxu0 %v1128
      %v2308 = vpop.f32.mrf.mxu0
      %v2309 = vadd.f32 0.0, %v2308
      %2310 = vmatmul.f32.gmra.mxu0 %v1130
      %v2311 = vpop.f32.mrf.mxu0
      %v2312 = vadd.f32 0.0, %v2311
      %2313 = vmatmul.f32.gmra.mxu0 %v1132
      %v2314 = vpop.f32.mrf.mxu0
      %v2315 = vadd.f32 0.0, %v2314
      %2316 = vdwg.mxu0
      %2317 = vmatpush.msra.mxu0 %v2110
      %2318 = vmatpush.msra.mxu0 %v2109
      %2319 = vmatpush.msra.mxu0 %v2108
      %2320 = vmatpush.msra.mxu0 %v2107
      %2321 = vmatpush.msra.mxu0 %v2106
      %2322 = vmatpush.msra.mxu0 %v2105
      %2323 = vmatpush.msra.mxu0 %v2104
      %2324 = vmatpush.msra.mxu0 %v2103
      %2325 = vmatpush.msra.mxu0 %v2102
      %2326 = vmatpush.msra.mxu0 %v2101
      %2327 = vmatpush.msra.mxu0 %v2100
      %2328 = vmatpush.msra.mxu0 %v2099
      %2329 = vmatpush.msra.mxu0 %v2098
      %2330 = vmatpush.msra.mxu0 %v2097
      %2331 = vmatpush.msra.mxu0 %v2096
      %2332 = vmatpush.msra.mxu0 %v2095
      %2333 = vmatmul.f32.gmra.mxu0 %v1009
      %v2334 = vpop.f32.mrf.mxu0
      %v2335 = vadd.f32 %v2129, %v2334
      %2336 = vmatmul.f32.gmra.mxu0 %v1011
      %v2337 = vpop.f32.mrf.mxu0
      %v2338 = vadd.f32 %v2132, %v2337
      %2339 = vmatmul.f32.gmra.mxu0 %v1013
      %v2340 = vpop.f32.mrf.mxu0
      %v2341 = vadd.f32 %v2135, %v2340
      %2342 = vmatmul.f32.gmra.mxu0 %v1015
      %v2343 = vpop.f32.mrf.mxu0
      %v2344 = vadd.f32 %v2138, %v2343
      %2345 = vmatmul.f32.gmra.mxu0 %v1017
      %v2346 = vpop.f32.mrf.mxu0
      %v2347 = vadd.f32 %v2141, %v2346
      %2348 = vmatmul.f32.gmra.mxu0 %v1019
      %v2349 = vpop.f32.mrf.mxu0
      %v2350 = vadd.f32 %v2144, %v2349
      %2351 = vmatmul.f32.gmra.mxu0 %v1021
      %v2352 = vpop.f32.mrf.mxu0
      %v2353 = vadd.f32 %v2147, %v2352
      %2354 = vmatmul.f32.gmra.mxu0 %v1023
      %v2355 = vpop.f32.mrf.mxu0
      %v2356 = vadd.f32 %v2150, %v2355
      %2357 = vmatmul.f32.gmra.mxu0 %v1025
      %v2358 = vpop.f32.mrf.mxu0
      %v2359 = vadd.f32 %v2153, %v2358
      %2360 = vmatmul.f32.gmra.mxu0 %v1027
      %v2361 = vpop.f32.mrf.mxu0
      %v2362 = vadd.f32 %v2156, %v2361
      %2363 = vmatmul.f32.gmra.mxu0 %v1029
      %v2364 = vpop.f32.mrf.mxu0
      %v2365 = vadd.f32 %v2159, %v2364
      %2366 = vmatmul.f32.gmra.mxu0 %v1031
      %v2367 = vpop.f32.mrf.mxu0
      %v2368 = vadd.f32 %v2162, %v2367
      %2369 = vmatmul.f32.gmra.mxu0 %v1033
      %v2370 = vpop.f32.mrf.mxu0
      %v2371 = vadd.f32 %v2165, %v2370
      %2372 = vmatmul.f32.gmra.mxu0 %v1035
      %v2373 = vpop.f32.mrf.mxu0
      %v2374 = vadd.f32 %v2168, %v2373
      %2375 = vmatmul.f32.gmra.mxu0 %v1037
      %v2376 = vpop.f32.mrf.mxu0
      %v2377 = vadd.f32 %v2171, %v2376
      %2378 = vmatmul.f32.gmra.mxu0 %v1039
      %v2379 = vpop.f32.mrf.mxu0
      %v2380 = vadd.f32 %v2174, %v2379
      %2381 = vmatmul.f32.gmra.mxu0 %v1041
      %v2382 = vpop.f32.mrf.mxu0
      %v2383 = vadd.f32 %v2177, %v2382
      %2384 = vmatmul.f32.gmra.mxu0 %v1043
      %v2385 = vpop.f32.mrf.mxu0
      %v2386 = vadd.f32 %v2180, %v2385
      %2387 = vmatmul.f32.gmra.mxu0 %v1045
      %v2388 = vpop.f32.mrf.mxu0
      %v2389 = vadd.f32 %v2183, %v2388
      %2390 = vmatmul.f32.gmra.mxu0 %v1047
      %v2391 = vpop.f32.mrf.mxu0
      %v2392 = vadd.f32 %v2186, %v2391
      %2393 = vmatmul.f32.gmra.mxu0 %v1049
      %v2394 = vpop.f32.mrf.mxu0
      %v2395 = vadd.f32 %v2189, %v2394
      %2396 = vmatmul.f32.gmra.mxu0 %v1051
      %v2397 = vpop.f32.mrf.mxu0
      %v2398 = vadd.f32 %v2192, %v2397
      %2399 = vmatmul.f32.gmra.mxu0 %v1053
      %v2400 = vpop.f32.mrf.mxu0
      %v2401 = vadd.f32 %v2195, %v2400
      %2402 = vmatmul.f32.gmra.mxu0 %v1055
      %v2403 = vpop.f32.mrf.mxu0
      %v2404 = vadd.f32 %v2198, %v2403
      %2405 = vmatmul.f32.gmra.mxu0 %v1057
      %v2406 = vpop.f32.mrf.mxu0
      %v2407 = vadd.f32 %v2201, %v2406
      %2408 = vmatmul.f32.gmra.mxu0 %v1059
      %v2409 = vpop.f32.mrf.mxu0
      %v2410 = vadd.f32 %v2204, %v2409
      %2411 = vmatmul.f32.gmra.mxu0 %v1061
      %v2412 = vpop.f32.mrf.mxu0
      %v2413 = vadd.f32 %v2207, %v2412
      %2414 = vmatmul.f32.gmra.mxu0 %v1063
      %v2415 = vpop.f32.mrf.mxu0
      %v2416 = vadd.f32 %v2210, %v2415
      %2417 = vmatmul.f32.gmra.mxu0 %v1065
      %v2418 = vpop.f32.mrf.mxu0
      %v2419 = vadd.f32 %v2213, %v2418
      %2420 = vmatmul.f32.gmra.mxu0 %v1067
      %v2421 = vpop.f32.mrf.mxu0
      %v2422 = vadd.f32 %v2216, %v2421
      %2423 = vmatmul.f32.gmra.mxu0 %v1069
      %v2424 = vpop.f32.mrf.mxu0
      %v2425 = vadd.f32 %v2219, %v2424
      %2426 = vmatmul.f32.gmra.mxu0 %v1071
      %v2427 = vpop.f32.mrf.mxu0
      %v2428 = vadd.f32 %v2222, %v2427
      %2429 = vmatmul.f32.gmra.mxu0 %v1073
      %v2430 = vpop.f32.mrf.mxu0
      %v2431 = vadd.f32 %v2225, %v2430
      %2432 = vmatmul.f32.gmra.mxu0 %v1075
      %v2433 = vpop.f32.mrf.mxu0
      %v2434 = vadd.f32 %v2228, %v2433
      %2435 = vmatmul.f32.gmra.mxu0 %v1077
      %v2436 = vpop.f32.mrf.mxu0
      %v2437 = vadd.f32 %v2231, %v2436
      %2438 = vmatmul.f32.gmra.mxu0 %v1079
      %v2439 = vpop.f32.mrf.mxu0
      %v2440 = vadd.f32 %v2234, %v2439
      %2441 = vmatmul.f32.gmra.mxu0 %v1081
      %v2442 = vpop.f32.mrf.mxu0
      %v2443 = vadd.f32 %v2237, %v2442
      %2444 = vmatmul.f32.gmra.mxu0 %v1083
      %v2445 = vpop.f32.mrf.mxu0
      %v2446 = vadd.f32 %v2240, %v2445
      %2447 = vmatmul.f32.gmra.mxu0 %v1085
      %v2448 = vpop.f32.mrf.mxu0
      %v2449 = vadd.f32 %v2243, %v2448
      %2450 = vmatmul.f32.gmra.mxu0 %v1087
      %v2451 = vpop.f32.mrf.mxu0
      %v2452 = vadd.f32 %v2246, %v2451
      %2453 = vmatmul.f32.gmra.mxu0 %v1089
      %v2454 = vpop.f32.mrf.mxu0
      %v2455 = vadd.f32 %v2249, %v2454
      %2456 = vmatmul.f32.gmra.mxu0 %v1091
      %v2457 = vpop.f32.mrf.mxu0
      %v2458 = vadd.f32 %v2252, %v2457
      %2459 = vmatmul.f32.gmra.mxu0 %v1093
      %v2460 = vpop.f32.mrf.mxu0
      %v2461 = vadd.f32 %v2255, %v2460
      %2462 = vmatmul.f32.gmra.mxu0 %v1095
      %v2463 = vpop.f32.mrf.mxu0
      %v2464 = vadd.f32 %v2258, %v2463
      %2465 = vmatmul.f32.gmra.mxu0 %v1097
      %v2466 = vpop.f32.mrf.mxu0
      %v2467 = vadd.f32 %v2261, %v2466
      %2468 = vmatmul.f32.gmra.mxu0 %v1099
      %v2469 = vpop.f32.mrf.mxu0
      %v2470 = vadd.f32 %v2264, %v2469
      %2471 = vmatmul.f32.gmra.mxu0 %v1101
      %v2472 = vpop.f32.mrf.mxu0
      %v2473 = vadd.f32 %v2267, %v2472
      %2474 = vmatmul.f32.gmra.mxu0 %v1103
      %v2475 = vpop.f32.mrf.mxu0
      %v2476 = vadd.f32 %v2270, %v2475
      %2477 = vmatmul.f32.gmra.mxu0 %v1105
      %v2478 = vpop.f32.mrf.mxu0
      %v2479 = vadd.f32 %v2273, %v2478
      %2480 = vmatmul.f32.gmra.mxu0 %v1107
      %v2481 = vpop.f32.mrf.mxu0
      %v2482 = vadd.f32 %v2276, %v2481
      %2483 = vmatmul.f32.gmra.mxu0 %v1109
      %v2484 = vpop.f32.mrf.mxu0
      %v2485 = vadd.f32 %v2279, %v2484
      %2486 = vmatmul.f32.gmra.mxu0 %v1111
      %v2487 = vpop.f32.mrf.mxu0
      %v2488 = vadd.f32 %v2282, %v2487
      %2489 = vmatmul.f32.gmra.mxu0 %v1113
      %v2490 = vpop.f32.mrf.mxu0
      %v2491 = vadd.f32 %v2285, %v2490
      %2492 = vmatmul.f32.gmra.mxu0 %v1115
      %v2493 = vpop.f32.mrf.mxu0
      %v2494 = vadd.f32 %v2288, %v2493
      %2495 = vmatmul.f32.gmra.mxu0 %v1117
      %v2496 = vpop.f32.mrf.mxu0
      %v2497 = vadd.f32 %v2291, %v2496
      %2498 = vmatmul.f32.gmra.mxu0 %v1119
      %v2499 = vpop.f32.mrf.mxu0
      %v2500 = vadd.f32 %v2294, %v2499
      %2501 = vmatmul.f32.gmra.mxu0 %v1121
      %v2502 = vpop.f32.mrf.mxu0
      %v2503 = vadd.f32 %v2297, %v2502
      %2504 = vmatmul.f32.gmra.mxu0 %v1123
      %v2505 = vpop.f32.mrf.mxu0
      %v2506 = vadd.f32 %v2300, %v2505
      %2507 = vmatmul.f32.gmra.mxu0 %v1125
      %v2508 = vpop.f32.mrf.mxu0
      %v2509 = vadd.f32 %v2303, %v2508
      %2510 = vmatmul.f32.gmra.mxu0 %v1127
      %v2511 = vpop.f32.mrf.mxu0
      %v2512 = vadd.f32 %v2306, %v2511
      %2513 = vmatmul.f32.gmra.mxu0 %v1129
      %v2514 = vpop.f32.mrf.mxu0
      %v2515 = vadd.f32 %v2309, %v2514
      %2516 = vmatmul.f32.gmra.mxu0 %v1131
      %v2517 = vpop.f32.mrf.mxu0
      %v2518 = vadd.f32 %v2312, %v2517
      %2519 = vmatmul.f32.gmra.mxu0 %v1133
      %v2520 = vpop.f32.mrf.mxu0
      %v2521 = vadd.f32 %v2315, %v2520
      %2522 = vdwg.mxu0
      %2523 = vmatpush.msra.mxu0 %v2094
      %2524 = vmatpush.msra.mxu0 %v2093
      %2525 = vmatpush.msra.mxu0 %v2092
      %2526 = vmatpush.msra.mxu0 %v2091
      %2527 = vmatpush.msra.mxu0 %v2090
      %2528 = vmatpush.msra.mxu0 %v2089
      %2529 = vmatpush.msra.mxu0 %v2088
      %2530 = vmatpush.msra.mxu0 %v2087
      %2531 = vmatpush.msra.mxu0 %v2086
      %2532 = vmatpush.msra.mxu0 %v2085
      %2533 = vmatpush.msra.mxu0 %v2084
      %2534 = vmatpush.msra.mxu0 %v2083
      %2535 = vmatpush.msra.mxu0 %v2082
      %2536 = vmatpush.msra.mxu0 %v2081
      %2537 = vmatpush.msra.mxu0 %v2080
      %2538 = vmatpush.msra.mxu0 %v2079
      %2539 = vmatmul.f32.gmra.mxu0 %v1575
      %v2540 = vpop.f32.mrf.mxu0
      %v2541 = vadd.f32 0.0, %v2540
      %2542 = vmatmul.f32.gmra.mxu0 %v1577
      %v2543 = vpop.f32.mrf.mxu0
      %v2544 = vadd.f32 0.0, %v2543
      %2545 = vmatmul.f32.gmra.mxu0 %v1579
      %v2546 = vpop.f32.mrf.mxu0
      %v2547 = vadd.f32 0.0, %v2546
      %2548 = vmatmul.f32.gmra.mxu0 %v1581
      %v2549 = vpop.f32.mrf.mxu0
      %v2550 = vadd.f32 0.0, %v2549
      %2551 = vmatmul.f32.gmra.mxu0 %v1583
      %v2552 = vpop.f32.mrf.mxu0
      %v2553 = vadd.f32 0.0, %v2552
      %2554 = vmatmul.f32.gmra.mxu0 %v1585
      %v2555 = vpop.f32.mrf.mxu0
      %v2556 = vadd.f32 0.0, %v2555
      %2557 = vmatmul.f32.gmra.mxu0 %v1587
      %v2558 = vpop.f32.mrf.mxu0
      %v2559 = vadd.f32 0.0, %v2558
      %2560 = vmatmul.f32.gmra.mxu0 %v1589
      %v2561 = vpop.f32.mrf.mxu0
      %v2562 = vadd.f32 0.0, %v2561
      %2563 = vmatmul.f32.gmra.mxu0 %v1591
      %v2564 = vpop.f32.mrf.mxu0
      %v2565 = vadd.f32 0.0, %v2564
      %2566 = vmatmul.f32.gmra.mxu0 %v1593
      %v2567 = vpop.f32.mrf.mxu0
      %v2568 = vadd.f32 0.0, %v2567
      %2569 = vmatmul.f32.gmra.mxu0 %v1595
      %v2570 = vpop.f32.mrf.mxu0
      %v2571 = vadd.f32 0.0, %v2570
      %2572 = vmatmul.f32.gmra.mxu0 %v1597
      %v2573 = vpop.f32.mrf.mxu0
      %v2574 = vadd.f32 0.0, %v2573
      %2575 = vmatmul.f32.gmra.mxu0 %v1599
      %v2576 = vpop.f32.mrf.mxu0
      %v2577 = vadd.f32 0.0, %v2576
      %2578 = vmatmul.f32.gmra.mxu0 %v1601
      %v2579 = vpop.f32.mrf.mxu0
      %v2580 = vadd.f32 0.0, %v2579
      %2581 = vmatmul.f32.gmra.mxu0 %v1603
      %v2582 = vpop.f32.mrf.mxu0
      %v2583 = vadd.f32 0.0, %v2582
      %2584 = vmatmul.f32.gmra.mxu0 %v1605
      %v2585 = vpop.f32.mrf.mxu0
      %v2586 = vadd.f32 0.0, %v2585
      %2587 = vmatmul.f32.gmra.mxu0 %v1607
      %v2588 = vpop.f32.mrf.mxu0
      %v2589 = vadd.f32 0.0, %v2588
      %2590 = vmatmul.f32.gmra.mxu0 %v1609
      %v2591 = vpop.f32.mrf.mxu0
      %v2592 = vadd.f32 0.0, %v2591
      %2593 = vmatmul.f32.gmra.mxu0 %v1611
      %v2594 = vpop.f32.mrf.mxu0
      %v2595 = vadd.f32 0.0, %v2594
      %2596 = vmatmul.f32.gmra.mxu0 %v1613
      %v2597 = vpop.f32.mrf.mxu0
      %v2598 = vadd.f32 0.0, %v2597
      %2599 = vmatmul.f32.gmra.mxu0 %v1615
      %v2600 = vpop.f32.mrf.mxu0
      %v2601 = vadd.f32 0.0, %v2600
      %2602 = vmatmul.f32.gmra.mxu0 %v1617
      %v2603 = vpop.f32.mrf.mxu0
      %v2604 = vadd.f32 0.0, %v2603
      %2605 = vmatmul.f32.gmra.mxu0 %v1619
      %v2606 = vpop.f32.mrf.mxu0
      %v2607 = vadd.f32 0.0, %v2606
      %2608 = vmatmul.f32.gmra.mxu0 %v1621
      %v2609 = vpop.f32.mrf.mxu0
      %v2610 = vadd.f32 0.0, %v2609
      %2611 = vmatmul.f32.gmra.mxu0 %v1623
      %v2612 = vpop.f32.mrf.mxu0
      %v2613 = vadd.f32 0.0, %v2612
      %2614 = vmatmul.f32.gmra.mxu0 %v1625
      %v2615 = vpop.f32.mrf.mxu0
      %v2616 = vadd.f32 0.0, %v2615
      %2617 = vmatmul.f32.gmra.mxu0 %v1627
      %v2618 = vpop.f32.mrf.mxu0
      %v2619 = vadd.f32 0.0, %v2618
      %2620 = vmatmul.f32.gmra.mxu0 %v1629
      %v2621 = vpop.f32.mrf.mxu0
      %v2622 = vadd.f32 0.0, %v2621
      %2623 = vmatmul.f32.gmra.mxu0 %v1631
      %v2624 = vpop.f32.mrf.mxu0
      %v2625 = vadd.f32 0.0, %v2624
      %2626 = vmatmul.f32.gmra.mxu0 %v1633
      %v2627 = vpop.f32.mrf.mxu0
      %v2628 = vadd.f32 0.0, %v2627
      %2629 = vmatmul.f32.gmra.mxu0 %v1635
      %v2630 = vpop.f32.mrf.mxu0
      %v2631 = vadd.f32 0.0, %v2630
      %2632 = vmatmul.f32.gmra.mxu0 %v1637
      %v2633 = vpop.f32.mrf.mxu0
      %v2634 = vadd.f32 0.0, %v2633
      %2635 = vmatmul.f32.gmra.mxu0 %v1639
      %v2636 = vpop.f32.mrf.mxu0
      %v2637 = vadd.f32 0.0, %v2636
      %2638 = vmatmul.f32.gmra.mxu0 %v1641
      %v2639 = vpop.f32.mrf.mxu0
      %v2640 = vadd.f32 0.0, %v2639
      %2641 = vmatmul.f32.gmra.mxu0 %v1643
      %v2642 = vpop.f32.mrf.mxu0
      %v2643 = vadd.f32 0.0, %v2642
      %2644 = vmatmul.f32.gmra.mxu0 %v1645
      %v2645 = vpop.f32.mrf.mxu0
      %v2646 = vadd.f32 0.0, %v2645
      %2647 = vmatmul.f32.gmra.mxu0 %v1647
      %v2648 = vpop.f32.mrf.mxu0
      %v2649 = vadd.f32 0.0, %v2648
      %2650 = vmatmul.f32.gmra.mxu0 %v1649
      %v2651 = vpop.f32.mrf.mxu0
      %v2652 = vadd.f32 0.0, %v2651
      %2653 = vmatmul.f32.gmra.mxu0 %v1651
      %v2654 = vpop.f32.mrf.mxu0
      %v2655 = vadd.f32 0.0, %v2654
      %2656 = vmatmul.f32.gmra.mxu0 %v1653
      %v2657 = vpop.f32.mrf.mxu0
      %v2658 = vadd.f32 0.0, %v2657
      %2659 = vmatmul.f32.gmra.mxu0 %v1655
      %v2660 = vpop.f32.mrf.mxu0
      %v2661 = vadd.f32 0.0, %v2660
      %2662 = vmatmul.f32.gmra.mxu0 %v1657
      %v2663 = vpop.f32.mrf.mxu0
      %v2664 = vadd.f32 0.0, %v2663
      %2665 = vmatmul.f32.gmra.mxu0 %v1659
      %v2666 = vpop.f32.mrf.mxu0
      %v2667 = vadd.f32 0.0, %v2666
      %2668 = vmatmul.f32.gmra.mxu0 %v1661
      %v2669 = vpop.f32.mrf.mxu0
      %v2670 = vadd.f32 0.0, %v2669
      %2671 = vmatmul.f32.gmra.mxu0 %v1663
      %v2672 = vpop.f32.mrf.mxu0
      %v2673 = vadd.f32 0.0, %v2672
      %2674 = vmatmul.f32.gmra.mxu0 %v1665
      %v2675 = vpop.f32.mrf.mxu0
      %v2676 = vadd.f32 0.0, %v2675
      %2677 = vmatmul.f32.gmra.mxu0 %v1667
      %v2678 = vpop.f32.mrf.mxu0
      %v2679 = vadd.f32 0.0, %v2678
      %2680 = vmatmul.f32.gmra.mxu0 %v1669
      %v2681 = vpop.f32.mrf.mxu0
      %v2682 = vadd.f32 0.0, %v2681
      %2683 = vmatmul.f32.gmra.mxu0 %v1671
      %v2684 = vpop.f32.mrf.mxu0
      %v2685 = vadd.f32 0.0, %v2684
      %2686 = vmatmul.f32.gmra.mxu0 %v1673
      %v2687 = vpop.f32.mrf.mxu0
      %v2688 = vadd.f32 0.0, %v2687
      %2689 = vmatmul.f32.gmra.mxu0 %v1675
      %v2690 = vpop.f32.mrf.mxu0
      %v2691 = vadd.f32 0.0, %v2690
      %2692 = vmatmul.f32.gmra.mxu0 %v1677
      %v2693 = vpop.f32.mrf.mxu0
      %v2694 = vadd.f32 0.0, %v2693
      %2695 = vmatmul.f32.gmra.mxu0 %v1679
      %v2696 = vpop.f32.mrf.mxu0
      %v2697 = vadd.f32 0.0, %v2696
      %2698 = vmatmul.f32.gmra.mxu0 %v1681
      %v2699 = vpop.f32.mrf.mxu0
      %v2700 = vadd.f32 0.0, %v2699
      %2701 = vmatmul.f32.gmra.mxu0 %v1683
      %v2702 = vpop.f32.mrf.mxu0
      %v2703 = vadd.f32 0.0, %v2702
      %2704 = vmatmul.f32.gmra.mxu0 %v1685
      %v2705 = vpop.f32.mrf.mxu0
      %v2706 = vadd.f32 0.0, %v2705
      %2707 = vmatmul.f32.gmra.mxu0 %v1687
      %v2708 = vpop.f32.mrf.mxu0
      %v2709 = vadd.f32 0.0, %v2708
      %2710 = vmatmul.f32.gmra.mxu0 %v1689
      %v2711 = vpop.f32.mrf.mxu0
      %v2712 = vadd.f32 0.0, %v2711
      %2713 = vmatmul.f32.gmra.mxu0 %v1691
      %v2714 = vpop.f32.mrf.mxu0
      %v2715 = vadd.f32 0.0, %v2714
      %2716 = vmatmul.f32.gmra.mxu0 %v1693
      %v2717 = vpop.f32.mrf.mxu0
      %v2718 = vadd.f32 0.0, %v2717
      %2719 = vmatmul.f32.gmra.mxu0 %v1695
      %v2720 = vpop.f32.mrf.mxu0
      %v2721 = vadd.f32 0.0, %v2720
      %2722 = vmatmul.f32.gmra.mxu0 %v1697
      %v2723 = vpop.f32.mrf.mxu0
      %v2724 = vadd.f32 0.0, %v2723
      %2725 = vmatmul.f32.gmra.mxu0 %v1699
      %v2726 = vpop.f32.mrf.mxu0
      %v2727 = vadd.f32 0.0, %v2726
      %2728 = vdwg.mxu0
      %2729 = vmatpush.msra.mxu0 %v2110
      %2730 = vmatpush.msra.mxu0 %v2109
      %2731 = vmatpush.msra.mxu0 %v2108
      %2732 = vmatpush.msra.mxu0 %v2107
      %2733 = vmatpush.msra.mxu0 %v2106
      %2734 = vmatpush.msra.mxu0 %v2105
      %2735 = vmatpush.msra.mxu0 %v2104
      %2736 = vmatpush.msra.mxu0 %v2103
      %2737 = vmatpush.msra.mxu0 %v2102
      %2738 = vmatpush.msra.mxu0 %v2101
      %2739 = vmatpush.msra.mxu0 %v2100
      %2740 = vmatpush.msra.mxu0 %v2099
      %2741 = vmatpush.msra.mxu0 %v2098
      %2742 = vmatpush.msra.mxu0 %v2097
      %2743 = vmatpush.msra.mxu0 %v2096
      %2744 = vmatpush.msra.mxu0 %v2095
      %2745 = vmatmul.f32.gmra.mxu0 %v1576
      %v2746 = vpop.f32.mrf.mxu0
      %v2747 = vadd.f32 %v2541, %v2746
      %2748 = vmatmul.f32.gmra.mxu0 %v1578
      %v2749 = vpop.f32.mrf.mxu0
      %v2750 = vadd.f32 %v2544, %v2749
      %2751 = vmatmul.f32.gmra.mxu0 %v1580
      %v2752 = vpop.f32.mrf.mxu0
      %v2753 = vadd.f32 %v2547, %v2752
      %2754 = vmatmul.f32.gmra.mxu0 %v1582
      %v2755 = vpop.f32.mrf.mxu0
      %v2756 = vadd.f32 %v2550, %v2755
      %2757 = vmatmul.f32.gmra.mxu0 %v1584
      %v2758 = vpop.f32.mrf.mxu0
      %v2759 = vadd.f32 %v2553, %v2758
      %2760 = vmatmul.f32.gmra.mxu0 %v1586
      %v2761 = vpop.f32.mrf.mxu0
      %v2762 = vadd.f32 %v2556, %v2761
      %2763 = vmatmul.f32.gmra.mxu0 %v1588
      %v2764 = vpop.f32.mrf.mxu0
      %v2765 = vadd.f32 %v2559, %v2764
      %2766 = vmatmul.f32.gmra.mxu0 %v1590
      %v2767 = vpop.f32.mrf.mxu0
      %v2768 = vadd.f32 %v2562, %v2767
      %2769 = vmatmul.f32.gmra.mxu0 %v1592
      %v2770 = vpop.f32.mrf.mxu0
      %v2771 = vadd.f32 %v2565, %v2770
      %2772 = vmatmul.f32.gmra.mxu0 %v1594
      %v2773 = vpop.f32.mrf.mxu0
      %v2774 = vadd.f32 %v2568, %v2773
      %2775 = vmatmul.f32.gmra.mxu0 %v1596
      %v2776 = vpop.f32.mrf.mxu0
      %v2777 = vadd.f32 %v2571, %v2776
      %2778 = vmatmul.f32.gmra.mxu0 %v1598
      %v2779 = vpop.f32.mrf.mxu0
      %v2780 = vadd.f32 %v2574, %v2779
      %2781 = vmatmul.f32.gmra.mxu0 %v1600
      %v2782 = vpop.f32.mrf.mxu0
      %v2783 = vadd.f32 %v2577, %v2782
      %2784 = vmatmul.f32.gmra.mxu0 %v1602
      %v2785 = vpop.f32.mrf.mxu0
      %v2786 = vadd.f32 %v2580, %v2785
      %2787 = vmatmul.f32.gmra.mxu0 %v1604
      %v2788 = vpop.f32.mrf.mxu0
      %v2789 = vadd.f32 %v2583, %v2788
      %2790 = vmatmul.f32.gmra.mxu0 %v1606
      %v2791 = vpop.f32.mrf.mxu0
      %v2792 = vadd.f32 %v2586, %v2791
      %2793 = vmatmul.f32.gmra.mxu0 %v1608
      %v2794 = vpop.f32.mrf.mxu0
      %v2795 = vadd.f32 %v2589, %v2794
      %2796 = vmatmul.f32.gmra.mxu0 %v1610
      %v2797 = vpop.f32.mrf.mxu0
      %v2798 = vadd.f32 %v2592, %v2797
      %2799 = vmatmul.f32.gmra.mxu0 %v1612
      %v2800 = vpop.f32.mrf.mxu0
      %v2801 = vadd.f32 %v2595, %v2800
      %2802 = vmatmul.f32.gmra.mxu0 %v1614
      %v2803 = vpop.f32.mrf.mxu0
      %v2804 = vadd.f32 %v2598, %v2803
      %2805 = vmatmul.f32.gmra.mxu0 %v1616
      %v2806 = vpop.f32.mrf.mxu0
      %v2807 = vadd.f32 %v2601, %v2806
      %2808 = vmatmul.f32.gmra.mxu0 %v1618
      %v2809 = vpop.f32.mrf.mxu0
      %v2810 = vadd.f32 %v2604, %v2809
      %2811 = vmatmul.f32.gmra.mxu0 %v1620
      %v2812 = vpop.f32.mrf.mxu0
      %v2813 = vadd.f32 %v2607, %v2812
      %2814 = vmatmul.f32.gmra.mxu0 %v1622
      %v2815 = vpop.f32.mrf.mxu0
      %v2816 = vadd.f32 %v2610, %v2815
      %2817 = vmatmul.f32.gmra.mxu0 %v1624
      %v2818 = vpop.f32.mrf.mxu0
      %v2819 = vadd.f32 %v2613, %v2818
      %2820 = vmatmul.f32.gmra.mxu0 %v1626
      %v2821 = vpop.f32.mrf.mxu0
      %v2822 = vadd.f32 %v2616, %v2821
      %2823 = vmatmul.f32.gmra.mxu0 %v1628
      %v2824 = vpop.f32.mrf.mxu0
      %v2825 = vadd.f32 %v2619, %v2824
      %2826 = vmatmul.f32.gmra.mxu0 %v1630
      %v2827 = vpop.f32.mrf.mxu0
      %v2828 = vadd.f32 %v2622, %v2827
      %2829 = vmatmul.f32.gmra.mxu0 %v1632
      %v2830 = vpop.f32.mrf.mxu0
      %v2831 = vadd.f32 %v2625, %v2830
      %2832 = vmatmul.f32.gmra.mxu0 %v1634
      %v2833 = vpop.f32.mrf.mxu0
      %v2834 = vadd.f32 %v2628, %v2833
      %2835 = vmatmul.f32.gmra.mxu0 %v1636
      %v2836 = vpop.f32.mrf.mxu0
      %v2837 = vadd.f32 %v2631, %v2836
      %2838 = vmatmul.f32.gmra.mxu0 %v1638
      %v2839 = vpop.f32.mrf.mxu0
      %v2840 = vadd.f32 %v2634, %v2839
      %2841 = vmatmul.f32.gmra.mxu0 %v1640
      %v2842 = vpop.f32.mrf.mxu0
      %v2843 = vadd.f32 %v2637, %v2842
      %2844 = vmatmul.f32.gmra.mxu0 %v1642
      %v2845 = vpop.f32.mrf.mxu0
      %v2846 = vadd.f32 %v2640, %v2845
      %2847 = vmatmul.f32.gmra.mxu0 %v1644
      %v2848 = vpop.f32.mrf.mxu0
      %v2849 = vadd.f32 %v2643, %v2848
      %2850 = vmatmul.f32.gmra.mxu0 %v1646
      %v2851 = vpop.f32.mrf.mxu0
      %v2852 = vadd.f32 %v2646, %v2851
      %2853 = vmatmul.f32.gmra.mxu0 %v1648
      %v2854 = vpop.f32.mrf.mxu0
      %v2855 = vadd.f32 %v2649, %v2854
      %2856 = vmatmul.f32.gmra.mxu0 %v1650
      %v2857 = vpop.f32.mrf.mxu0
      %v2858 = vadd.f32 %v2652, %v2857
      %2859 = vmatmul.f32.gmra.mxu0 %v1652
      %v2860 = vpop.f32.mrf.mxu0
      %v2861 = vadd.f32 %v2655, %v2860
      %2862 = vmatmul.f32.gmra.mxu0 %v1654
      %v2863 = vpop.f32.mrf.mxu0
      %v2864 = vadd.f32 %v2658, %v2863
      %2865 = vmatmul.f32.gmra.mxu0 %v1656
      %v2866 = vpop.f32.mrf.mxu0
      %v2867 = vadd.f32 %v2661, %v2866
      %2868 = vmatmul.f32.gmra.mxu0 %v1658
      %v2869 = vpop.f32.mrf.mxu0
      %v2870 = vadd.f32 %v2664, %v2869
      %2871 = vmatmul.f32.gmra.mxu0 %v1660
      %v2872 = vpop.f32.mrf.mxu0
      %v2873 = vadd.f32 %v2667, %v2872
      %2874 = vmatmul.f32.gmra.mxu0 %v1662
      %v2875 = vpop.f32.mrf.mxu0
      %v2876 = vadd.f32 %v2670, %v2875
      %2877 = vmatmul.f32.gmra.mxu0 %v1664
      %v2878 = vpop.f32.mrf.mxu0
      %v2879 = vadd.f32 %v2673, %v2878
      %2880 = vmatmul.f32.gmra.mxu0 %v1666
      %v2881 = vpop.f32.mrf.mxu0
      %v2882 = vadd.f32 %v2676, %v2881
      %2883 = vmatmul.f32.gmra.mxu0 %v1668
      %v2884 = vpop.f32.mrf.mxu0
      %v2885 = vadd.f32 %v2679, %v2884
      %2886 = vmatmul.f32.gmra.mxu0 %v1670
      %v2887 = vpop.f32.mrf.mxu0
      %v2888 = vadd.f32 %v2682, %v2887
      %2889 = vmatmul.f32.gmra.mxu0 %v1672
      %v2890 = vpop.f32.mrf.mxu0
      %v2891 = vadd.f32 %v2685, %v2890
      %2892 = vmatmul.f32.gmra.mxu0 %v1674
      %v2893 = vpop.f32.mrf.mxu0
      %v2894 = vadd.f32 %v2688, %v2893
      %2895 = vmatmul.f32.gmra.mxu0 %v1676
      %v2896 = vpop.f32.mrf.mxu0
      %v2897 = vadd.f32 %v2691, %v2896
      %2898 = vmatmul.f32.gmra.mxu0 %v1678
      %v2899 = vpop.f32.mrf.mxu0
      %v2900 = vadd.f32 %v2694, %v2899
      %2901 = vmatmul.f32.gmra.mxu0 %v1680
      %v2902 = vpop.f32.mrf.mxu0
      %v2903 = vadd.f32 %v2697, %v2902
      %2904 = vmatmul.f32.gmra.mxu0 %v1682
      %v2905 = vpop.f32.mrf.mxu0
      %v2906 = vadd.f32 %v2700, %v2905
      %2907 = vmatmul.f32.gmra.mxu0 %v1684
      %v2908 = vpop.f32.mrf.mxu0
      %v2909 = vadd.f32 %v2703, %v2908
      %2910 = vmatmul.f32.gmra.mxu0 %v1686
      %v2911 = vpop.f32.mrf.mxu0
      %v2912 = vadd.f32 %v2706, %v2911
      %2913 = vmatmul.f32.gmra.mxu0 %v1688
      %v2914 = vpop.f32.mrf.mxu0
      %v2915 = vadd.f32 %v2709, %v2914
      %2916 = vmatmul.f32.gmra.mxu0 %v1690
      %v2917 = vpop.f32.mrf.mxu0
      %v2918 = vadd.f32 %v2712, %v2917
      %2919 = vmatmul.f32.gmra.mxu0 %v1692
      %v2920 = vpop.f32.mrf.mxu0
      %v2921 = vadd.f32 %v2715, %v2920
      %2922 = vmatmul.f32.gmra.mxu0 %v1694
      %v2923 = vpop.f32.mrf.mxu0
      %v2924 = vadd.f32 %v2718, %v2923
      %2925 = vmatmul.f32.gmra.mxu0 %v1696
      %v2926 = vpop.f32.mrf.mxu0
      %v2927 = vadd.f32 %v2721, %v2926
      %2928 = vmatmul.f32.gmra.mxu0 %v1698
      %v2929 = vpop.f32.mrf.mxu0
      %v2930 = vadd.f32 %v2724, %v2929
      %2931 = vmatmul.f32.gmra.mxu0 %v1700
      %v2932 = vpop.f32.mrf.mxu0
      %v2933 = vadd.f32 %v2727, %v2932
      %2934 = vdwg.mxu0
      %v2935 = vld [vmem:[%s4] sm:$0xff]
      %vm2936 = vcmask 64512
      %v2938 = vsel %vm2936, %v2016, 0
      %v2941 = vsel %vm2936, %v2017, 0
      %v2944 = vsel %vm2936, %v2018, 0
      %v2947 = vsel %vm2936, %v2019, 0
      %v2950 = vsel %vm2936, %v2020, 0
      %v2953 = vsel %vm2936, %v2021, 0
      %v2956 = vsel %vm2936, %v2022, 0
      %v2959 = vsel %vm2936, %v2023, 0
      %v2962 = vsel %vm2936, %v2024, 0
      %v2965 = vsel %vm2936, %v2025, 0
      %v2968 = vsel %vm2936, %v2026, 0
      %v2971 = vsel %vm2936, %v2027, 0
      %v2974 = vsel %vm2936, %v2028, 0
      %v2977 = vsel %vm2936, %v2029, 0
      %v2980 = vsel %vm2936, %v2030, 0
      %v2983 = vsel %vm2936, %v2031, 0
      %v2986 = vsel %vm2936, %v2032, 0
      %v2989 = vsel %vm2936, %v2033, 0
      %v2992 = vsel %vm2936, %v2034, 0
      %v2995 = vsel %vm2936, %v2035, 0
      %v2998 = vsel %vm2936, %v2036, 0
      %v3001 = vsel %vm2936, %v2037, 0
      %v3004 = vsel %vm2936, %v2038, 0
      %v3007 = vsel %vm2936, %v2039, 0
      %v3010 = vsel %vm2936, %v2040, 0
      %v3013 = vsel %vm2936, %v2041, 0
      %v3016 = vsel %vm2936, %v2042, 0
      %v3019 = vsel %vm2936, %v2043, 0
      %v3022 = vsel %vm2936, %v2044, 0
      %v3025 = vsel %vm2936, %v2045, 0
      %v3028 = vsel %vm2936, %v2046, 0
      %v3031 = vsel %vm2936, %v2047, 0
      %v3034 = vsel %vm2936, %v2048, 0
      %v3037 = vsel %vm2936, %v2049, 0
      %v3040 = vsel %vm2936, %v2050, 0
      %v3043 = vsel %vm2936, %v2051, 0
      %v3046 = vsel %vm2936, %v2052, 0
      %v3049 = vsel %vm2936, %v2053, 0
      %v3052 = vsel %vm2936, %v2054, 0
      %v3055 = vsel %vm2936, %v2055, 0
      %v3058 = vsel %vm2936, %v2056, 0
      %v3061 = vsel %vm2936, %v2057, 0
      %v3064 = vsel %vm2936, %v2058, 0
      %v3067 = vsel %vm2936, %v2059, 0
      %v3070 = vsel %vm2936, %v2060, 0
      %v3073 = vsel %vm2936, %v2061, 0
      %v3076 = vsel %vm2936, %v2062, 0
      %v3079 = vsel %vm2936, %v2063, 0
      %v3082 = vsel %vm2936, %v2064, 0
      %v3085 = vsel %vm2936, %v2065, 0
      %v3088 = vsel %vm2936, %v2066, 0
      %v3091 = vsel %vm2936, %v2067, 0
      %v3094 = vsel %vm2936, %v2068, 0
      %v3097 = vsel %vm2936, %v2069, 0
      %v3100 = vsel %vm2936, %v2070, 0
      %v3103 = vsel %vm2936, %v2071, 0
      %v3106 = vsel %vm2936, %v2072, 0
      %v3109 = vsel %vm2936, %v2073, 0
      %v3112 = vsel %vm2936, %v2074, 0
      %v3115 = vsel %vm2936, %v2075, 0
      %v3118 = vsel %vm2936, %v2076, 0
      %v3121 = vsel %vm2936, %v2077, 0
      %v3124 = vsel %vm2936, %v2078, 0
      %3126 = vmatpush.msra.mxu0 0.0
      %3127 = vmatpush.msra.mxu0 0.0
      %3128 = vmatpush.msra.mxu0 0.0
      %3129 = vmatpush.msra.mxu0 0.0
      %3130 = vmatpush.msra.mxu0 0.0
      %3131 = vmatpush.msra.mxu0 0.0
      %3132 = vmatpush.msra.mxu0 0.0
      %3133 = vmatpush.msra.mxu0 0.0
      %3134 = vmatpush.msra.mxu0 0.0
      %3135 = vmatpush.msra.mxu0 0.0
      %3136 = vmatpush.msra.mxu0 0.0
      %3137 = vmatpush.msra.mxu0 0.0
      %3138 = vmatpush.msra.mxu0 0.0
      %3139 = vmatpush.msra.mxu0 0.0
      %3140 = vmatpush.msra.mxu0 0.0
      %3141 = vmatpush.msra.mxu0 %v2935
      %3142 = vmatmul.f32.gmra.mxu0 %v2938
      %v3143 = vpop.f32.mrf.mxu0
      %v3144 = vadd.f32 0.0, %v3143
      %3145 = vmatmul.f32.gmra.mxu0 %v2941
      %v3146 = vpop.f32.mrf.mxu0
      %v3147 = vadd.f32 0.0, %v3146
      %3148 = vmatmul.f32.gmra.mxu0 %v2944
      %v3149 = vpop.f32.mrf.mxu0
      %v3150 = vadd.f32 0.0, %v3149
      %3151 = vmatmul.f32.gmra.mxu0 %v2947
      %v3152 = vpop.f32.mrf.mxu0
      %v3153 = vadd.f32 0.0, %v3152
      %3154 = vmatmul.f32.gmra.mxu0 %v2950
      %v3155 = vpop.f32.mrf.mxu0
      %v3156 = vadd.f32 0.0, %v3155
      %3157 = vmatmul.f32.gmra.mxu0 %v2953
      %v3158 = vpop.f32.mrf.mxu0
      %v3159 = vadd.f32 0.0, %v3158
      %3160 = vmatmul.f32.gmra.mxu0 %v2956
      %v3161 = vpop.f32.mrf.mxu0
      %v3162 = vadd.f32 0.0, %v3161
      %3163 = vmatmul.f32.gmra.mxu0 %v2959
      %v3164 = vpop.f32.mrf.mxu0
      %v3165 = vadd.f32 0.0, %v3164
      %3166 = vmatmul.f32.gmra.mxu0 %v2962
      %v3167 = vpop.f32.mrf.mxu0
      %v3168 = vadd.f32 0.0, %v3167
      %3169 = vmatmul.f32.gmra.mxu0 %v2965
      %v3170 = vpop.f32.mrf.mxu0
      %v3171 = vadd.f32 0.0, %v3170
      %3172 = vmatmul.f32.gmra.mxu0 %v2968
      %v3173 = vpop.f32.mrf.mxu0
      %v3174 = vadd.f32 0.0, %v3173
      %3175 = vmatmul.f32.gmra.mxu0 %v2971
      %v3176 = vpop.f32.mrf.mxu0
      %v3177 = vadd.f32 0.0, %v3176
      %3178 = vmatmul.f32.gmra.mxu0 %v2974
      %v3179 = vpop.f32.mrf.mxu0
      %v3180 = vadd.f32 0.0, %v3179
      %3181 = vmatmul.f32.gmra.mxu0 %v2977
      %v3182 = vpop.f32.mrf.mxu0
      %v3183 = vadd.f32 0.0, %v3182
      %3184 = vmatmul.f32.gmra.mxu0 %v2980
      %v3185 = vpop.f32.mrf.mxu0
      %v3186 = vadd.f32 0.0, %v3185
      %3187 = vmatmul.f32.gmra.mxu0 %v2983
      %v3188 = vpop.f32.mrf.mxu0
      %v3189 = vadd.f32 0.0, %v3188
      %3190 = vmatmul.f32.gmra.mxu0 %v2986
      %v3191 = vpop.f32.mrf.mxu0
      %v3192 = vadd.f32 0.0, %v3191
      %3193 = vmatmul.f32.gmra.mxu0 %v2989
      %v3194 = vpop.f32.mrf.mxu0
      %v3195 = vadd.f32 0.0, %v3194
      %3196 = vmatmul.f32.gmra.mxu0 %v2992
      %v3197 = vpop.f32.mrf.mxu0
      %v3198 = vadd.f32 0.0, %v3197
      %3199 = vmatmul.f32.gmra.mxu0 %v2995
      %v3200 = vpop.f32.mrf.mxu0
      %v3201 = vadd.f32 0.0, %v3200
      %3202 = vmatmul.f32.gmra.mxu0 %v2998
      %v3203 = vpop.f32.mrf.mxu0
      %v3204 = vadd.f32 0.0, %v3203
      %3205 = vmatmul.f32.gmra.mxu0 %v3001
      %v3206 = vpop.f32.mrf.mxu0
      %v3207 = vadd.f32 0.0, %v3206
      %3208 = vmatmul.f32.gmra.mxu0 %v3004
      %v3209 = vpop.f32.mrf.mxu0
      %v3210 = vadd.f32 0.0, %v3209
      %3211 = vmatmul.f32.gmra.mxu0 %v3007
      %v3212 = vpop.f32.mrf.mxu0
      %v3213 = vadd.f32 0.0, %v3212
      %3214 = vmatmul.f32.gmra.mxu0 %v3010
      %v3215 = vpop.f32.mrf.mxu0
      %v3216 = vadd.f32 0.0, %v3215
      %3217 = vmatmul.f32.gmra.mxu0 %v3013
      %v3218 = vpop.f32.mrf.mxu0
      %v3219 = vadd.f32 0.0, %v3218
      %3220 = vmatmul.f32.gmra.mxu0 %v3016
      %v3221 = vpop.f32.mrf.mxu0
      %v3222 = vadd.f32 0.0, %v3221
      %3223 = vmatmul.f32.gmra.mxu0 %v3019
      %v3224 = vpop.f32.mrf.mxu0
      %v3225 = vadd.f32 0.0, %v3224
      %3226 = vmatmul.f32.gmra.mxu0 %v3022
      %v3227 = vpop.f32.mrf.mxu0
      %v3228 = vadd.f32 0.0, %v3227
      %3229 = vmatmul.f32.gmra.mxu0 %v3025
      %v3230 = vpop.f32.mrf.mxu0
      %v3231 = vadd.f32 0.0, %v3230
      %3232 = vmatmul.f32.gmra.mxu0 %v3028
      %v3233 = vpop.f32.mrf.mxu0
      %v3234 = vadd.f32 0.0, %v3233
      %3235 = vmatmul.f32.gmra.mxu0 %v3031
      %v3236 = vpop.f32.mrf.mxu0
      %v3237 = vadd.f32 0.0, %v3236
      %3238 = vmatmul.f32.gmra.mxu0 %v3034
      %v3239 = vpop.f32.mrf.mxu0
      %v3240 = vadd.f32 0.0, %v3239
      %3241 = vmatmul.f32.gmra.mxu0 %v3037
      %v3242 = vpop.f32.mrf.mxu0
      %v3243 = vadd.f32 0.0, %v3242
      %3244 = vmatmul.f32.gmra.mxu0 %v3040
      %v3245 = vpop.f32.mrf.mxu0
      %v3246 = vadd.f32 0.0, %v3245
      %3247 = vmatmul.f32.gmra.mxu0 %v3043
      %v3248 = vpop.f32.mrf.mxu0
      %v3249 = vadd.f32 0.0, %v3248
      %3250 = vmatmul.f32.gmra.mxu0 %v3046
      %v3251 = vpop.f32.mrf.mxu0
      %v3252 = vadd.f32 0.0, %v3251
      %3253 = vmatmul.f32.gmra.mxu0 %v3049
      %v3254 = vpop.f32.mrf.mxu0
      %v3255 = vadd.f32 0.0, %v3254
      %3256 = vmatmul.f32.gmra.mxu0 %v3052
      %v3257 = vpop.f32.mrf.mxu0
      %v3258 = vadd.f32 0.0, %v3257
      %3259 = vmatmul.f32.gmra.mxu0 %v3055
      %v3260 = vpop.f32.mrf.mxu0
      %v3261 = vadd.f32 0.0, %v3260
      %3262 = vmatmul.f32.gmra.mxu0 %v3058
      %v3263 = vpop.f32.mrf.mxu0
      %v3264 = vadd.f32 0.0, %v3263
      %3265 = vmatmul.f32.gmra.mxu0 %v3061
      %v3266 = vpop.f32.mrf.mxu0
      %v3267 = vadd.f32 0.0, %v3266
      %3268 = vmatmul.f32.gmra.mxu0 %v3064
      %v3269 = vpop.f32.mrf.mxu0
      %v3270 = vadd.f32 0.0, %v3269
      %3271 = vmatmul.f32.gmra.mxu0 %v3067
      %v3272 = vpop.f32.mrf.mxu0
      %v3273 = vadd.f32 0.0, %v3272
      %3274 = vmatmul.f32.gmra.mxu0 %v3070
      %v3275 = vpop.f32.mrf.mxu0
      %v3276 = vadd.f32 0.0, %v3275
      %3277 = vmatmul.f32.gmra.mxu0 %v3073
      %v3278 = vpop.f32.mrf.mxu0
      %v3279 = vadd.f32 0.0, %v3278
      %3280 = vmatmul.f32.gmra.mxu0 %v3076
      %v3281 = vpop.f32.mrf.mxu0
      %v3282 = vadd.f32 0.0, %v3281
      %3283 = vmatmul.f32.gmra.mxu0 %v3079
      %v3284 = vpop.f32.mrf.mxu0
      %v3285 = vadd.f32 0.0, %v3284
      %3286 = vmatmul.f32.gmra.mxu0 %v3082
      %v3287 = vpop.f32.mrf.mxu0
      %v3288 = vadd.f32 0.0, %v3287
      %3289 = vmatmul.f32.gmra.mxu0 %v3085
      %v3290 = vpop.f32.mrf.mxu0
      %v3291 = vadd.f32 0.0, %v3290
      %3292 = vmatmul.f32.gmra.mxu0 %v3088
      %v3293 = vpop.f32.mrf.mxu0
      %v3294 = vadd.f32 0.0, %v3293
      %3295 = vmatmul.f32.gmra.mxu0 %v3091
      %v3296 = vpop.f32.mrf.mxu0
      %v3297 = vadd.f32 0.0, %v3296
      %3298 = vmatmul.f32.gmra.mxu0 %v3094
      %v3299 = vpop.f32.mrf.mxu0
      %v3300 = vadd.f32 0.0, %v3299
      %3301 = vmatmul.f32.gmra.mxu0 %v3097
      %v3302 = vpop.f32.mrf.mxu0
      %v3303 = vadd.f32 0.0, %v3302
      %3304 = vmatmul.f32.gmra.mxu0 %v3100
      %v3305 = vpop.f32.mrf.mxu0
      %v3306 = vadd.f32 0.0, %v3305
      %3307 = vmatmul.f32.gmra.mxu0 %v3103
      %v3308 = vpop.f32.mrf.mxu0
      %v3309 = vadd.f32 0.0, %v3308
      %3310 = vmatmul.f32.gmra.mxu0 %v3106
      %v3311 = vpop.f32.mrf.mxu0
      %v3312 = vadd.f32 0.0, %v3311
      %3313 = vmatmul.f32.gmra.mxu0 %v3109
      %v3314 = vpop.f32.mrf.mxu0
      %v3315 = vadd.f32 0.0, %v3314
      %3316 = vmatmul.f32.gmra.mxu0 %v3112
      %v3317 = vpop.f32.mrf.mxu0
      %v3318 = vadd.f32 0.0, %v3317
      %3319 = vmatmul.f32.gmra.mxu0 %v3115
      %v3320 = vpop.f32.mrf.mxu0
      %v3321 = vadd.f32 0.0, %v3320
      %3322 = vmatmul.f32.gmra.mxu0 %v3118
      %v3323 = vpop.f32.mrf.mxu0
      %v3324 = vadd.f32 0.0, %v3323
      %3325 = vmatmul.f32.gmra.mxu0 %v3121
      %v3326 = vpop.f32.mrf.mxu0
      %v3327 = vadd.f32 0.0, %v3326
      %3328 = vmatmul.f32.gmra.mxu0 %v3124
      %v3329 = vpop.f32.mrf.mxu0
      %v3330 = vadd.f32 0.0, %v3329
      %3331 = vdwg.mxu0
      %v3332 = vmul.f32 %v2335, %v3144
      %v3333 = vmul.f32 %v2338, %v3147
      %v3334 = vmul.f32 %v2341, %v3150
      %v3335 = vmul.f32 %v2344, %v3153
      %v3336 = vmul.f32 %v2347, %v3156
      %v3337 = vmul.f32 %v2350, %v3159
      %v3338 = vmul.f32 %v2353, %v3162
      %v3339 = vmul.f32 %v2356, %v3165
      %v3340 = vmul.f32 %v2359, %v3168
      %v3341 = vmul.f32 %v2362, %v3171
      %v3342 = vmul.f32 %v2365, %v3174
      %v3343 = vmul.f32 %v2368, %v3177
      %v3344 = vmul.f32 %v2371, %v3180
      %v3345 = vmul.f32 %v2374, %v3183
      %v3346 = vmul.f32 %v2377, %v3186
      %v3347 = vmul.f32 %v2380, %v3189
      %v3348 = vmul.f32 %v2383, %v3192
      %v3349 = vmul.f32 %v2386, %v3195
      %v3350 = vmul.f32 %v2389, %v3198
      %v3351 = vmul.f32 %v2392, %v3201
      %v3352 = vmul.f32 %v2395, %v3204
      %v3353 = vmul.f32 %v2398, %v3207
      %v3354 = vmul.f32 %v2401, %v3210
      %v3355 = vmul.f32 %v2404, %v3213
      %v3356 = vmul.f32 %v2407, %v3216
      %v3357 = vmul.f32 %v2410, %v3219
      %v3358 = vmul.f32 %v2413, %v3222
      %v3359 = vmul.f32 %v2416, %v3225
      %v3360 = vmul.f32 %v2419, %v3228
      %v3361 = vmul.f32 %v2422, %v3231
      %v3362 = vmul.f32 %v2425, %v3234
      %v3363 = vmul.f32 %v2428, %v3237
      %v3364 = vmul.f32 %v2431, %v3240
      %v3365 = vmul.f32 %v2434, %v3243
      %v3366 = vmul.f32 %v2437, %v3246
      %v3367 = vmul.f32 %v2440, %v3249
      %v3368 = vmul.f32 %v2443, %v3252
      %v3369 = vmul.f32 %v2446, %v3255
      %v3370 = vmul.f32 %v2449, %v3258
      %v3371 = vmul.f32 %v2452, %v3261
      %v3372 = vmul.f32 %v2455, %v3264
      %v3373 = vmul.f32 %v2458, %v3267
      %v3374 = vmul.f32 %v2461, %v3270
      %v3375 = vmul.f32 %v2464, %v3273
      %v3376 = vmul.f32 %v2467, %v3276
      %v3377 = vmul.f32 %v2470, %v3279
      %v3378 = vmul.f32 %v2473, %v3282
      %v3379 = vmul.f32 %v2476, %v3285
      %v3380 = vmul.f32 %v2479, %v3288
      %v3381 = vmul.f32 %v2482, %v3291
      %v3382 = vmul.f32 %v2485, %v3294
      %v3383 = vmul.f32 %v2488, %v3297
      %v3384 = vmul.f32 %v2491, %v3300
      %v3385 = vmul.f32 %v2494, %v3303
      %v3386 = vmul.f32 %v2497, %v3306
      %v3387 = vmul.f32 %v2500, %v3309
      %v3388 = vmul.f32 %v2503, %v3312
      %v3389 = vmul.f32 %v2506, %v3315
      %v3390 = vmul.f32 %v2509, %v3318
      %v3391 = vmul.f32 %v2512, %v3321
      %v3392 = vmul.f32 %v2515, %v3324
      %v3393 = vmul.f32 %v2518, %v3327
      %v3394 = vmul.f32 %v2521, %v3330
      %v3395 = vmul.f32 %v2747, %v3144
      %v3396 = vmul.f32 %v2750, %v3147
      %v3397 = vmul.f32 %v2753, %v3150
      %v3398 = vmul.f32 %v2756, %v3153
      %v3399 = vmul.f32 %v2759, %v3156
      %v3400 = vmul.f32 %v2762, %v3159
      %v3401 = vmul.f32 %v2765, %v3162
      %v3402 = vmul.f32 %v2768, %v3165
      %v3403 = vmul.f32 %v2771, %v3168
      %v3404 = vmul.f32 %v2774, %v3171
      %v3405 = vmul.f32 %v2777, %v3174
      %v3406 = vmul.f32 %v2780, %v3177
      %v3407 = vmul.f32 %v2783, %v3180
      %v3408 = vmul.f32 %v2786, %v3183
      %v3409 = vmul.f32 %v2789, %v3186
      %v3410 = vmul.f32 %v2792, %v3189
      %v3411 = vmul.f32 %v2795, %v3192
      %v3412 = vmul.f32 %v2798, %v3195
      %v3413 = vmul.f32 %v2801, %v3198
      %v3414 = vmul.f32 %v2804, %v3201
      %v3415 = vmul.f32 %v2807, %v3204
      %v3416 = vmul.f32 %v2810, %v3207
      %v3417 = vmul.f32 %v2813, %v3210
      %v3418 = vmul.f32 %v2816, %v3213
      %v3419 = vmul.f32 %v2819, %v3216
      %v3420 = vmul.f32 %v2822, %v3219
      %v3421 = vmul.f32 %v2825, %v3222
      %v3422 = vmul.f32 %v2828, %v3225
      %v3423 = vmul.f32 %v2831, %v3228
      %v3424 = vmul.f32 %v2834, %v3231
      %v3425 = vmul.f32 %v2837, %v3234
      %v3426 = vmul.f32 %v2840, %v3237
      %v3427 = vmul.f32 %v2843, %v3240
      %v3428 = vmul.f32 %v2846, %v3243
      %v3429 = vmul.f32 %v2849, %v3246
      %v3430 = vmul.f32 %v2852, %v3249
      %v3431 = vmul.f32 %v2855, %v3252
      %v3432 = vmul.f32 %v2858, %v3255
      %v3433 = vmul.f32 %v2861, %v3258
      %v3434 = vmul.f32 %v2864, %v3261
      %v3435 = vmul.f32 %v2867, %v3264
      %v3436 = vmul.f32 %v2870, %v3267
      %v3437 = vmul.f32 %v2873, %v3270
      %v3438 = vmul.f32 %v2876, %v3273
      %v3439 = vmul.f32 %v2879, %v3276
      %v3440 = vmul.f32 %v2882, %v3279
      %v3441 = vmul.f32 %v2885, %v3282
      %v3442 = vmul.f32 %v2888, %v3285
      %v3443 = vmul.f32 %v2891, %v3288
      %v3444 = vmul.f32 %v2894, %v3291
      %v3445 = vmul.f32 %v2897, %v3294
      %v3446 = vmul.f32 %v2900, %v3297
      %v3447 = vmul.f32 %v2903, %v3300
      %v3448 = vmul.f32 %v2906, %v3303
      %v3449 = vmul.f32 %v2909, %v3306
      %v3450 = vmul.f32 %v2912, %v3309
      %v3451 = vmul.f32 %v2915, %v3312
      %v3452 = vmul.f32 %v2918, %v3315
      %v3453 = vmul.f32 %v2921, %v3318
      %v3454 = vmul.f32 %v2924, %v3321
      %v3455 = vmul.f32 %v2927, %v3324
      %v3456 = vmul.f32 %v2930, %v3327
      %v3457 = vmul.f32 %v2933, %v3330
      %v3458 = vmul.f32 %v3332, %v3332
      %v3459 = vmul.f32 %v3333, %v3333
      %v3460 = vmul.f32 %v3334, %v3334
      %v3461 = vmul.f32 %v3335, %v3335
      %v3462 = vmul.f32 %v3336, %v3336
      %v3463 = vmul.f32 %v3337, %v3337
      %v3464 = vmul.f32 %v3338, %v3338
      %v3465 = vmul.f32 %v3339, %v3339
      %v3466 = vmul.f32 %v3340, %v3340
      %v3467 = vmul.f32 %v3341, %v3341
      %v3468 = vmul.f32 %v3342, %v3342
      %v3469 = vmul.f32 %v3343, %v3343
      %v3470 = vmul.f32 %v3344, %v3344
      %v3471 = vmul.f32 %v3345, %v3345
      %v3472 = vmul.f32 %v3346, %v3346
      %v3473 = vmul.f32 %v3347, %v3347
      %v3474 = vmul.f32 %v3348, %v3348
      %v3475 = vmul.f32 %v3349, %v3349
      %v3476 = vmul.f32 %v3350, %v3350
      %v3477 = vmul.f32 %v3351, %v3351
      %v3478 = vmul.f32 %v3352, %v3352
      %v3479 = vmul.f32 %v3353, %v3353
      %v3480 = vmul.f32 %v3354, %v3354
      %v3481 = vmul.f32 %v3355, %v3355
      %v3482 = vmul.f32 %v3356, %v3356
      %v3483 = vmul.f32 %v3357, %v3357
      %v3484 = vmul.f32 %v3358, %v3358
      %v3485 = vmul.f32 %v3359, %v3359
      %v3486 = vmul.f32 %v3360, %v3360
      %v3487 = vmul.f32 %v3361, %v3361
      %v3488 = vmul.f32 %v3362, %v3362
      %v3489 = vmul.f32 %v3363, %v3363
      %v3490 = vmul.f32 %v3364, %v3364
      %v3491 = vmul.f32 %v3365, %v3365
      %v3492 = vmul.f32 %v3366, %v3366
      %v3493 = vmul.f32 %v3367, %v3367
      %v3494 = vmul.f32 %v3368, %v3368
      %v3495 = vmul.f32 %v3369, %v3369
      %v3496 = vmul.f32 %v3370, %v3370
      %v3497 = vmul.f32 %v3371, %v3371
      %v3498 = vmul.f32 %v3372, %v3372
      %v3499 = vmul.f32 %v3373, %v3373
      %v3500 = vmul.f32 %v3374, %v3374
      %v3501 = vmul.f32 %v3375, %v3375
      %v3502 = vmul.f32 %v3376, %v3376
      %v3503 = vmul.f32 %v3377, %v3377
      %v3504 = vmul.f32 %v3378, %v3378
      %v3505 = vmul.f32 %v3379, %v3379
      %v3506 = vmul.f32 %v3380, %v3380
      %v3507 = vmul.f32 %v3381, %v3381
      %v3508 = vmul.f32 %v3382, %v3382
      %v3509 = vmul.f32 %v3383, %v3383
      %v3510 = vmul.f32 %v3384, %v3384
      %v3511 = vmul.f32 %v3385, %v3385
      %v3512 = vmul.f32 %v3386, %v3386
      %v3513 = vmul.f32 %v3387, %v3387
      %v3514 = vmul.f32 %v3388, %v3388
      %v3515 = vmul.f32 %v3389, %v3389
      %v3516 = vmul.f32 %v3390, %v3390
      %v3517 = vmul.f32 %v3391, %v3391
      %v3518 = vmul.f32 %v3392, %v3392
      %v3519 = vmul.f32 %v3393, %v3393
      %v3520 = vmul.f32 %v3394, %v3394
      %vm3521 = vcmask 261120
      %v3522 = vsel %vm3521, %v3458, 0.0
      %3523 = vadd.xlane.f32.xlu0 %v3522
      %v3524 = vpop.xlane.xlu0 %3523
      %v3525 = vsel %vm3521, %v3459, 0.0
      %3526 = vadd.xlane.f32.xlu0 %v3525
      %v3527 = vpop.xlane.xlu0 %3526
      %v3528 = vsel %vm3521, %v3460, 0.0
      %3529 = vadd.xlane.f32.xlu0 %v3528
      %v3530 = vpop.xlane.xlu0 %3529
      %v3531 = vsel %vm3521, %v3461, 0.0
      %3532 = vadd.xlane.f32.xlu0 %v3531
      %v3533 = vpop.xlane.xlu0 %3532
      %v3534 = vsel %vm3521, %v3462, 0.0
      %3535 = vadd.xlane.f32.xlu0 %v3534
      %v3536 = vpop.xlane.xlu0 %3535
      %v3537 = vsel %vm3521, %v3463, 0.0
      %3538 = vadd.xlane.f32.xlu0 %v3537
      %v3539 = vpop.xlane.xlu0 %3538
      %v3540 = vsel %vm3521, %v3464, 0.0
      %3541 = vadd.xlane.f32.xlu0 %v3540
      %v3542 = vpop.xlane.xlu0 %3541
      %v3543 = vsel %vm3521, %v3465, 0.0
      %3544 = vadd.xlane.f32.xlu0 %v3543
      %v3545 = vpop.xlane.xlu0 %3544
      %v3546 = vsel %vm3521, %v3466, 0.0
      %3547 = vadd.xlane.f32.xlu0 %v3546
      %v3548 = vpop.xlane.xlu0 %3547
      %v3549 = vsel %vm3521, %v3467, 0.0
      %3550 = vadd.xlane.f32.xlu0 %v3549
      %v3551 = vpop.xlane.xlu0 %3550
      %v3552 = vsel %vm3521, %v3468, 0.0
      %3553 = vadd.xlane.f32.xlu0 %v3552
      %v3554 = vpop.xlane.xlu0 %3553
      %v3555 = vsel %vm3521, %v3469, 0.0
      %3556 = vadd.xlane.f32.xlu0 %v3555
      %v3557 = vpop.xlane.xlu0 %3556
      %v3558 = vsel %vm3521, %v3470, 0.0
      %3559 = vadd.xlane.f32.xlu0 %v3558
      %v3560 = vpop.xlane.xlu0 %3559
      %v3561 = vsel %vm3521, %v3471, 0.0
      %3562 = vadd.xlane.f32.xlu0 %v3561
      %v3563 = vpop.xlane.xlu0 %3562
      %v3564 = vsel %vm3521, %v3472, 0.0
      %3565 = vadd.xlane.f32.xlu0 %v3564
      %v3566 = vpop.xlane.xlu0 %3565
      %v3567 = vsel %vm3521, %v3473, 0.0
      %3568 = vadd.xlane.f32.xlu0 %v3567
      %v3569 = vpop.xlane.xlu0 %3568
      %v3570 = vsel %vm3521, %v3474, 0.0
      %3571 = vadd.xlane.f32.xlu0 %v3570
      %v3572 = vpop.xlane.xlu0 %3571
      %v3573 = vsel %vm3521, %v3475, 0.0
      %3574 = vadd.xlane.f32.xlu0 %v3573
      %v3575 = vpop.xlane.xlu0 %3574
      %v3576 = vsel %vm3521, %v3476, 0.0
      %3577 = vadd.xlane.f32.xlu0 %v3576
      %v3578 = vpop.xlane.xlu0 %3577
      %v3579 = vsel %vm3521, %v3477, 0.0
      %3580 = vadd.xlane.f32.xlu0 %v3579
      %v3581 = vpop.xlane.xlu0 %3580
      %v3582 = vsel %vm3521, %v3478, 0.0
      %3583 = vadd.xlane.f32.xlu0 %v3582
      %v3584 = vpop.xlane.xlu0 %3583
      %v3585 = vsel %vm3521, %v3479, 0.0
      %3586 = vadd.xlane.f32.xlu0 %v3585
      %v3587 = vpop.xlane.xlu0 %3586
      %v3588 = vsel %vm3521, %v3480, 0.0
      %3589 = vadd.xlane.f32.xlu0 %v3588
      %v3590 = vpop.xlane.xlu0 %3589
      %v3591 = vsel %vm3521, %v3481, 0.0
      %3592 = vadd.xlane.f32.xlu0 %v3591
      %v3593 = vpop.xlane.xlu0 %3592
      %v3594 = vsel %vm3521, %v3482, 0.0
      %3595 = vadd.xlane.f32.xlu0 %v3594
      %v3596 = vpop.xlane.xlu0 %3595
      %v3597 = vsel %vm3521, %v3483, 0.0
      %3598 = vadd.xlane.f32.xlu0 %v3597
      %v3599 = vpop.xlane.xlu0 %3598
      %v3600 = vsel %vm3521, %v3484, 0.0
      %3601 = vadd.xlane.f32.xlu0 %v3600
      %v3602 = vpop.xlane.xlu0 %3601
      %v3603 = vsel %vm3521, %v3485, 0.0
      %3604 = vadd.xlane.f32.xlu0 %v3603
      %v3605 = vpop.xlane.xlu0 %3604
      %v3606 = vsel %vm3521, %v3486, 0.0
      %3607 = vadd.xlane.f32.xlu0 %v3606
      %v3608 = vpop.xlane.xlu0 %3607
      %v3609 = vsel %vm3521, %v3487, 0.0
      %3610 = vadd.xlane.f32.xlu0 %v3609
      %v3611 = vpop.xlane.xlu0 %3610
      %v3612 = vsel %vm3521, %v3488, 0.0
      %3613 = vadd.xlane.f32.xlu0 %v3612
      %v3614 = vpop.xlane.xlu0 %3613
      %v3615 = vsel %vm3521, %v3489, 0.0
      %3616 = vadd.xlane.f32.xlu0 %v3615
      %v3617 = vpop.xlane.xlu0 %3616
      %v3618 = vsel %vm3521, %v3490, 0.0
      %3619 = vadd.xlane.f32.xlu0 %v3618
      %v3620 = vpop.xlane.xlu0 %3619
      %v3621 = vsel %vm3521, %v3491, 0.0
      %3622 = vadd.xlane.f32.xlu0 %v3621
      %v3623 = vpop.xlane.xlu0 %3622
      %v3624 = vsel %vm3521, %v3492, 0.0
      %3625 = vadd.xlane.f32.xlu0 %v3624
      %v3626 = vpop.xlane.xlu0 %3625
      %v3627 = vsel %vm3521, %v3493, 0.0
      %3628 = vadd.xlane.f32.xlu0 %v3627
      %v3629 = vpop.xlane.xlu0 %3628
      %v3630 = vsel %vm3521, %v3494, 0.0
      %3631 = vadd.xlane.f32.xlu0 %v3630
      %v3632 = vpop.xlane.xlu0 %3631
      %v3633 = vsel %vm3521, %v3495, 0.0
      %3634 = vadd.xlane.f32.xlu0 %v3633
      %v3635 = vpop.xlane.xlu0 %3634
      %v3636 = vsel %vm3521, %v3496, 0.0
      %3637 = vadd.xlane.f32.xlu0 %v3636
      %v3638 = vpop.xlane.xlu0 %3637
      %v3639 = vsel %vm3521, %v3497, 0.0
      %3640 = vadd.xlane.f32.xlu0 %v3639
      %v3641 = vpop.xlane.xlu0 %3640
      %v3642 = vsel %vm3521, %v3498, 0.0
      %3643 = vadd.xlane.f32.xlu0 %v3642
      %v3644 = vpop.xlane.xlu0 %3643
      %v3645 = vsel %vm3521, %v3499, 0.0
      %3646 = vadd.xlane.f32.xlu0 %v3645
      %v3647 = vpop.xlane.xlu0 %3646
      %v3648 = vsel %vm3521, %v3500, 0.0
      %3649 = vadd.xlane.f32.xlu0 %v3648
      %v3650 = vpop.xlane.xlu0 %3649
      %v3651 = vsel %vm3521, %v3501, 0.0
      %3652 = vadd.xlane.f32.xlu0 %v3651
      %v3653 = vpop.xlane.xlu0 %3652
      %v3654 = vsel %vm3521, %v3502, 0.0
      %3655 = vadd.xlane.f32.xlu0 %v3654
      %v3656 = vpop.xlane.xlu0 %3655
      %v3657 = vsel %vm3521, %v3503, 0.0
      %3658 = vadd.xlane.f32.xlu0 %v3657
      %v3659 = vpop.xlane.xlu0 %3658
      %v3660 = vsel %vm3521, %v3504, 0.0
      %3661 = vadd.xlane.f32.xlu0 %v3660
      %v3662 = vpop.xlane.xlu0 %3661
      %v3663 = vsel %vm3521, %v3505, 0.0
      %3664 = vadd.xlane.f32.xlu0 %v3663
      %v3665 = vpop.xlane.xlu0 %3664
      %v3666 = vsel %vm3521, %v3506, 0.0
      %3667 = vadd.xlane.f32.xlu0 %v3666
      %v3668 = vpop.xlane.xlu0 %3667
      %v3669 = vsel %vm3521, %v3507, 0.0
      %3670 = vadd.xlane.f32.xlu0 %v3669
      %v3671 = vpop.xlane.xlu0 %3670
      %v3672 = vsel %vm3521, %v3508, 0.0
      %3673 = vadd.xlane.f32.xlu0 %v3672
      %v3674 = vpop.xlane.xlu0 %3673
      %v3675 = vsel %vm3521, %v3509, 0.0
      %3676 = vadd.xlane.f32.xlu0 %v3675
      %v3677 = vpop.xlane.xlu0 %3676
      %v3678 = vsel %vm3521, %v3510, 0.0
      %3679 = vadd.xlane.f32.xlu0 %v3678
      %v3680 = vpop.xlane.xlu0 %3679
      %v3681 = vsel %vm3521, %v3511, 0.0
      %3682 = vadd.xlane.f32.xlu0 %v3681
      %v3683 = vpop.xlane.xlu0 %3682
      %v3684 = vsel %vm3521, %v3512, 0.0
      %3685 = vadd.xlane.f32.xlu0 %v3684
      %v3686 = vpop.xlane.xlu0 %3685
      %v3687 = vsel %vm3521, %v3513, 0.0
      %3688 = vadd.xlane.f32.xlu0 %v3687
      %v3689 = vpop.xlane.xlu0 %3688
      %v3690 = vsel %vm3521, %v3514, 0.0
      %3691 = vadd.xlane.f32.xlu0 %v3690
      %v3692 = vpop.xlane.xlu0 %3691
      %v3693 = vsel %vm3521, %v3515, 0.0
      %3694 = vadd.xlane.f32.xlu0 %v3693
      %v3695 = vpop.xlane.xlu0 %3694
      %v3696 = vsel %vm3521, %v3516, 0.0
      %3697 = vadd.xlane.f32.xlu0 %v3696
      %v3698 = vpop.xlane.xlu0 %3697
      %v3699 = vsel %vm3521, %v3517, 0.0
      %3700 = vadd.xlane.f32.xlu0 %v3699
      %v3701 = vpop.xlane.xlu0 %3700
      %v3702 = vsel %vm3521, %v3518, 0.0
      %3703 = vadd.xlane.f32.xlu0 %v3702
      %v3704 = vpop.xlane.xlu0 %3703
      %v3705 = vsel %vm3521, %v3519, 0.0
      %3706 = vadd.xlane.f32.xlu0 %v3705
      %v3707 = vpop.xlane.xlu0 %3706
      %v3708 = vsel %vm3521, %v3520, 0.0
      %3709 = vadd.xlane.f32.xlu0 %v3708
      %v3710 = vpop.xlane.xlu0 %3709
      %v3711 = vmul.f32 %v3395, %v3395
      %v3712 = vmul.f32 %v3396, %v3396
      %v3713 = vmul.f32 %v3397, %v3397
      %v3714 = vmul.f32 %v3398, %v3398
      %v3715 = vmul.f32 %v3399, %v3399
      %v3716 = vmul.f32 %v3400, %v3400
      %v3717 = vmul.f32 %v3401, %v3401
      %v3718 = vmul.f32 %v3402, %v3402
      %v3719 = vmul.f32 %v3403, %v3403
      %v3720 = vmul.f32 %v3404, %v3404
      %v3721 = vmul.f32 %v3405, %v3405
      %v3722 = vmul.f32 %v3406, %v3406
      %v3723 = vmul.f32 %v3407, %v3407
      %v3724 = vmul.f32 %v3408, %v3408
      %v3725 = vmul.f32 %v3409, %v3409
      %v3726 = vmul.f32 %v3410, %v3410
      %v3727 = vmul.f32 %v3411, %v3411
      %v3728 = vmul.f32 %v3412, %v3412
      %v3729 = vmul.f32 %v3413, %v3413
      %v3730 = vmul.f32 %v3414, %v3414
      %v3731 = vmul.f32 %v3415, %v3415
      %v3732 = vmul.f32 %v3416, %v3416
      %v3733 = vmul.f32 %v3417, %v3417
      %v3734 = vmul.f32 %v3418, %v3418
      %v3735 = vmul.f32 %v3419, %v3419
      %v3736 = vmul.f32 %v3420, %v3420
      %v3737 = vmul.f32 %v3421, %v3421
      %v3738 = vmul.f32 %v3422, %v3422
      %v3739 = vmul.f32 %v3423, %v3423
      %v3740 = vmul.f32 %v3424, %v3424
      %v3741 = vmul.f32 %v3425, %v3425
      %v3742 = vmul.f32 %v3426, %v3426
      %v3743 = vmul.f32 %v3427, %v3427
      %v3744 = vmul.f32 %v3428, %v3428
      %v3745 = vmul.f32 %v3429, %v3429
      %v3746 = vmul.f32 %v3430, %v3430
      %v3747 = vmul.f32 %v3431, %v3431
      %v3748 = vmul.f32 %v3432, %v3432
      %v3749 = vmul.f32 %v3433, %v3433
      %v3750 = vmul.f32 %v3434, %v3434
      %v3751 = vmul.f32 %v3435, %v3435
      %v3752 = vmul.f32 %v3436, %v3436
      %v3753 = vmul.f32 %v3437, %v3437
      %v3754 = vmul.f32 %v3438, %v3438
      %v3755 = vmul.f32 %v3439, %v3439
      %v3756 = vmul.f32 %v3440, %v3440
      %v3757 = vmul.f32 %v3441, %v3441
      %v3758 = vmul.f32 %v3442, %v3442
      %v3759 = vmul.f32 %v3443, %v3443
      %v3760 = vmul.f32 %v3444, %v3444
      %v3761 = vmul.f32 %v3445, %v3445
      %v3762 = vmul.f32 %v3446, %v3446
      %v3763 = vmul.f32 %v3447, %v3447
      %v3764 = vmul.f32 %v3448, %v3448
      %v3765 = vmul.f32 %v3449, %v3449
      %v3766 = vmul.f32 %v3450, %v3450
      %v3767 = vmul.f32 %v3451, %v3451
      %v3768 = vmul.f32 %v3452, %v3452
      %v3769 = vmul.f32 %v3453, %v3453
      %v3770 = vmul.f32 %v3454, %v3454
      %v3771 = vmul.f32 %v3455, %v3455
      %v3772 = vmul.f32 %v3456, %v3456
      %v3773 = vmul.f32 %v3457, %v3457
      %v3774 = vsel %vm3521, %v3711, 0.0
      %3775 = vadd.xlane.f32.xlu0 %v3774
      %v3776 = vpop.xlane.xlu0 %3775
      %v3777 = vsel %vm3521, %v3712, 0.0
      %3778 = vadd.xlane.f32.xlu0 %v3777
      %v3779 = vpop.xlane.xlu0 %3778
      %v3780 = vsel %vm3521, %v3713, 0.0
      %3781 = vadd.xlane.f32.xlu0 %v3780
      %v3782 = vpop.xlane.xlu0 %3781
      %v3783 = vsel %vm3521, %v3714, 0.0
      %3784 = vadd.xlane.f32.xlu0 %v3783
      %v3785 = vpop.xlane.xlu0 %3784
      %v3786 = vsel %vm3521, %v3715, 0.0
      %3787 = vadd.xlane.f32.xlu0 %v3786
      %v3788 = vpop.xlane.xlu0 %3787
      %v3789 = vsel %vm3521, %v3716, 0.0
      %3790 = vadd.xlane.f32.xlu0 %v3789
      %v3791 = vpop.xlane.xlu0 %3790
      %v3792 = vsel %vm3521, %v3717, 0.0
      %3793 = vadd.xlane.f32.xlu0 %v3792
      %v3794 = vpop.xlane.xlu0 %3793
      %v3795 = vsel %vm3521, %v3718, 0.0
      %3796 = vadd.xlane.f32.xlu0 %v3795
      %v3797 = vpop.xlane.xlu0 %3796
      %v3798 = vsel %vm3521, %v3719, 0.0
      %3799 = vadd.xlane.f32.xlu0 %v3798
      %v3800 = vpop.xlane.xlu0 %3799
      %v3801 = vsel %vm3521, %v3720, 0.0
      %3802 = vadd.xlane.f32.xlu0 %v3801
      %v3803 = vpop.xlane.xlu0 %3802
      %v3804 = vsel %vm3521, %v3721, 0.0
      %3805 = vadd.xlane.f32.xlu0 %v3804
      %v3806 = vpop.xlane.xlu0 %3805
      %v3807 = vsel %vm3521, %v3722, 0.0
      %3808 = vadd.xlane.f32.xlu0 %v3807
      %v3809 = vpop.xlane.xlu0 %3808
      %v3810 = vsel %vm3521, %v3723, 0.0
      %3811 = vadd.xlane.f32.xlu0 %v3810
      %v3812 = vpop.xlane.xlu0 %3811
      %v3813 = vsel %vm3521, %v3724, 0.0
      %3814 = vadd.xlane.f32.xlu0 %v3813
      %v3815 = vpop.xlane.xlu0 %3814
      %v3816 = vsel %vm3521, %v3725, 0.0
      %3817 = vadd.xlane.f32.xlu0 %v3816
      %v3818 = vpop.xlane.xlu0 %3817
      %v3819 = vsel %vm3521, %v3726, 0.0
      %3820 = vadd.xlane.f32.xlu0 %v3819
      %v3821 = vpop.xlane.xlu0 %3820
      %v3822 = vsel %vm3521, %v3727, 0.0
      %3823 = vadd.xlane.f32.xlu0 %v3822
      %v3824 = vpop.xlane.xlu0 %3823
      %v3825 = vsel %vm3521, %v3728, 0.0
      %3826 = vadd.xlane.f32.xlu0 %v3825
      %v3827 = vpop.xlane.xlu0 %3826
      %v3828 = vsel %vm3521, %v3729, 0.0
      %3829 = vadd.xlane.f32.xlu0 %v3828
      %v3830 = vpop.xlane.xlu0 %3829
      %v3831 = vsel %vm3521, %v3730, 0.0
      %3832 = vadd.xlane.f32.xlu0 %v3831
      %v3833 = vpop.xlane.xlu0 %3832
      %v3834 = vsel %vm3521, %v3731, 0.0
      %3835 = vadd.xlane.f32.xlu0 %v3834
      %v3836 = vpop.xlane.xlu0 %3835
      %v3837 = vsel %vm3521, %v3732, 0.0
      %3838 = vadd.xlane.f32.xlu0 %v3837
      %v3839 = vpop.xlane.xlu0 %3838
      %v3840 = vsel %vm3521, %v3733, 0.0
      %3841 = vadd.xlane.f32.xlu0 %v3840
      %v3842 = vpop.xlane.xlu0 %3841
      %v3843 = vsel %vm3521, %v3734, 0.0
      %3844 = vadd.xlane.f32.xlu0 %v3843
      %v3845 = vpop.xlane.xlu0 %3844
      %v3846 = vsel %vm3521, %v3735, 0.0
      %3847 = vadd.xlane.f32.xlu0 %v3846
      %v3848 = vpop.xlane.xlu0 %3847
      %v3849 = vsel %vm3521, %v3736, 0.0
      %3850 = vadd.xlane.f32.xlu0 %v3849
      %v3851 = vpop.xlane.xlu0 %3850
      %v3852 = vsel %vm3521, %v3737, 0.0
      %3853 = vadd.xlane.f32.xlu0 %v3852
      %v3854 = vpop.xlane.xlu0 %3853
      %v3855 = vsel %vm3521, %v3738, 0.0
      %3856 = vadd.xlane.f32.xlu0 %v3855
      %v3857 = vpop.xlane.xlu0 %3856
      %v3858 = vsel %vm3521, %v3739, 0.0
      %3859 = vadd.xlane.f32.xlu0 %v3858
      %v3860 = vpop.xlane.xlu0 %3859
      %v3861 = vsel %vm3521, %v3740, 0.0
      %3862 = vadd.xlane.f32.xlu0 %v3861
      %v3863 = vpop.xlane.xlu0 %3862
      %v3864 = vsel %vm3521, %v3741, 0.0
      %3865 = vadd.xlane.f32.xlu0 %v3864
      %v3866 = vpop.xlane.xlu0 %3865
      %v3867 = vsel %vm3521, %v3742, 0.0
      %3868 = vadd.xlane.f32.xlu0 %v3867
      %v3869 = vpop.xlane.xlu0 %3868
      %v3870 = vsel %vm3521, %v3743, 0.0
      %3871 = vadd.xlane.f32.xlu0 %v3870
      %v3872 = vpop.xlane.xlu0 %3871
      %v3873 = vsel %vm3521, %v3744, 0.0
      %3874 = vadd.xlane.f32.xlu0 %v3873
      %v3875 = vpop.xlane.xlu0 %3874
      %v3876 = vsel %vm3521, %v3745, 0.0
      %3877 = vadd.xlane.f32.xlu0 %v3876
      %v3878 = vpop.xlane.xlu0 %3877
      %v3879 = vsel %vm3521, %v3746, 0.0
      %3880 = vadd.xlane.f32.xlu0 %v3879
      %v3881 = vpop.xlane.xlu0 %3880
      %v3882 = vsel %vm3521, %v3747, 0.0
      %3883 = vadd.xlane.f32.xlu0 %v3882
      %v3884 = vpop.xlane.xlu0 %3883
      %v3885 = vsel %vm3521, %v3748, 0.0
      %3886 = vadd.xlane.f32.xlu0 %v3885
      %v3887 = vpop.xlane.xlu0 %3886
      %v3888 = vsel %vm3521, %v3749, 0.0
      %3889 = vadd.xlane.f32.xlu0 %v3888
      %v3890 = vpop.xlane.xlu0 %3889
      %v3891 = vsel %vm3521, %v3750, 0.0
      %3892 = vadd.xlane.f32.xlu0 %v3891
      %v3893 = vpop.xlane.xlu0 %3892
      %v3894 = vsel %vm3521, %v3751, 0.0
      %3895 = vadd.xlane.f32.xlu0 %v3894
      %v3896 = vpop.xlane.xlu0 %3895
      %v3897 = vsel %vm3521, %v3752, 0.0
      %3898 = vadd.xlane.f32.xlu0 %v3897
      %v3899 = vpop.xlane.xlu0 %3898
      %v3900 = vsel %vm3521, %v3753, 0.0
      %3901 = vadd.xlane.f32.xlu0 %v3900
      %v3902 = vpop.xlane.xlu0 %3901
      %v3903 = vsel %vm3521, %v3754, 0.0
      %3904 = vadd.xlane.f32.xlu0 %v3903
      %v3905 = vpop.xlane.xlu0 %3904
      %v3906 = vsel %vm3521, %v3755, 0.0
      %3907 = vadd.xlane.f32.xlu0 %v3906
      %v3908 = vpop.xlane.xlu0 %3907
      %v3909 = vsel %vm3521, %v3756, 0.0
      %3910 = vadd.xlane.f32.xlu0 %v3909
      %v3911 = vpop.xlane.xlu0 %3910
      %v3912 = vsel %vm3521, %v3757, 0.0
      %3913 = vadd.xlane.f32.xlu0 %v3912
      %v3914 = vpop.xlane.xlu0 %3913
      %v3915 = vsel %vm3521, %v3758, 0.0
      %3916 = vadd.xlane.f32.xlu0 %v3915
      %v3917 = vpop.xlane.xlu0 %3916
      %v3918 = vsel %vm3521, %v3759, 0.0
      %3919 = vadd.xlane.f32.xlu0 %v3918
      %v3920 = vpop.xlane.xlu0 %3919
      %v3921 = vsel %vm3521, %v3760, 0.0
      %3922 = vadd.xlane.f32.xlu0 %v3921
      %v3923 = vpop.xlane.xlu0 %3922
      %v3924 = vsel %vm3521, %v3761, 0.0
      %3925 = vadd.xlane.f32.xlu0 %v3924
      %v3926 = vpop.xlane.xlu0 %3925
      %v3927 = vsel %vm3521, %v3762, 0.0
      %3928 = vadd.xlane.f32.xlu0 %v3927
      %v3929 = vpop.xlane.xlu0 %3928
      %v3930 = vsel %vm3521, %v3763, 0.0
      %3931 = vadd.xlane.f32.xlu0 %v3930
      %v3932 = vpop.xlane.xlu0 %3931
      %v3933 = vsel %vm3521, %v3764, 0.0
      %3934 = vadd.xlane.f32.xlu0 %v3933
      %v3935 = vpop.xlane.xlu0 %3934
      %v3936 = vsel %vm3521, %v3765, 0.0
      %3937 = vadd.xlane.f32.xlu0 %v3936
      %v3938 = vpop.xlane.xlu0 %3937
      %v3939 = vsel %vm3521, %v3766, 0.0
      %3940 = vadd.xlane.f32.xlu0 %v3939
      %v3941 = vpop.xlane.xlu0 %3940
      %v3942 = vsel %vm3521, %v3767, 0.0
      %3943 = vadd.xlane.f32.xlu0 %v3942
      %v3944 = vpop.xlane.xlu0 %3943
      %v3945 = vsel %vm3521, %v3768, 0.0
      %3946 = vadd.xlane.f32.xlu0 %v3945
      %v3947 = vpop.xlane.xlu0 %3946
      %v3948 = vsel %vm3521, %v3769, 0.0
      %3949 = vadd.xlane.f32.xlu0 %v3948
      %v3950 = vpop.xlane.xlu0 %3949
      %v3951 = vsel %vm3521, %v3770, 0.0
      %3952 = vadd.xlane.f32.xlu0 %v3951
      %v3953 = vpop.xlane.xlu0 %3952
      %v3954 = vsel %vm3521, %v3771, 0.0
      %3955 = vadd.xlane.f32.xlu0 %v3954
      %v3956 = vpop.xlane.xlu0 %3955
      %v3957 = vsel %vm3521, %v3772, 0.0
      %3958 = vadd.xlane.f32.xlu0 %v3957
      %v3959 = vpop.xlane.xlu0 %3958
      %v3960 = vsel %vm3521, %v3773, 0.0
      %3961 = vadd.xlane.f32.xlu0 %v3960
      %v3962 = vpop.xlane.xlu0 %3961
      %v3963 = vmul.f32 %v3524, %v3776
      %v3964 = vmul.f32 %v3527, %v3779
      %v3965 = vmul.f32 %v3530, %v3782
      %v3966 = vmul.f32 %v3533, %v3785
      %v3967 = vmul.f32 %v3536, %v3788
      %v3968 = vmul.f32 %v3539, %v3791
      %v3969 = vmul.f32 %v3542, %v3794
      %v3970 = vmul.f32 %v3545, %v3797
      %v3971 = vmul.f32 %v3548, %v3800
      %v3972 = vmul.f32 %v3551, %v3803
      %v3973 = vmul.f32 %v3554, %v3806
      %v3974 = vmul.f32 %v3557, %v3809
      %v3975 = vmul.f32 %v3560, %v3812
      %v3976 = vmul.f32 %v3563, %v3815
      %v3977 = vmul.f32 %v3566, %v3818
      %v3978 = vmul.f32 %v3569, %v3821
      %v3979 = vmul.f32 %v3572, %v3824
      %v3980 = vmul.f32 %v3575, %v3827
      %v3981 = vmul.f32 %v3578, %v3830
      %v3982 = vmul.f32 %v3581, %v3833
      %v3983 = vmul.f32 %v3584, %v3836
      %v3984 = vmul.f32 %v3587, %v3839
      %v3985 = vmul.f32 %v3590, %v3842
      %v3986 = vmul.f32 %v3593, %v3845
      %v3987 = vmul.f32 %v3596, %v3848
      %v3988 = vmul.f32 %v3599, %v3851
      %v3989 = vmul.f32 %v3602, %v3854
      %v3990 = vmul.f32 %v3605, %v3857
      %v3991 = vmul.f32 %v3608, %v3860
      %v3992 = vmul.f32 %v3611, %v3863
      %v3993 = vmul.f32 %v3614, %v3866
      %v3994 = vmul.f32 %v3617, %v3869
      %v3995 = vmul.f32 %v3620, %v3872
      %v3996 = vmul.f32 %v3623, %v3875
      %v3997 = vmul.f32 %v3626, %v3878
      %v3998 = vmul.f32 %v3629, %v3881
      %v3999 = vmul.f32 %v3632, %v3884
      %v4000 = vmul.f32 %v3635, %v3887
      %v4001 = vmul.f32 %v3638, %v3890
      %v4002 = vmul.f32 %v3641, %v3893
      %v4003 = vmul.f32 %v3644, %v3896
      %v4004 = vmul.f32 %v3647, %v3899
      %v4005 = vmul.f32 %v3650, %v3902
      %v4006 = vmul.f32 %v3653, %v3905
      %v4007 = vmul.f32 %v3656, %v3908
      %v4008 = vmul.f32 %v3659, %v3911
      %v4009 = vmul.f32 %v3662, %v3914
      %v4010 = vmul.f32 %v3665, %v3917
      %v4011 = vmul.f32 %v3668, %v3920
      %v4012 = vmul.f32 %v3671, %v3923
      %v4013 = vmul.f32 %v3674, %v3926
      %v4014 = vmul.f32 %v3677, %v3929
      %v4015 = vmul.f32 %v3680, %v3932
      %v4016 = vmul.f32 %v3683, %v3935
      %v4017 = vmul.f32 %v3686, %v3938
      %v4018 = vmul.f32 %v3689, %v3941
      %v4019 = vmul.f32 %v3692, %v3944
      %v4020 = vmul.f32 %v3695, %v3947
      %v4021 = vmul.f32 %v3698, %v3950
      %v4022 = vmul.f32 %v3701, %v3953
      %v4023 = vmul.f32 %v3704, %v3956
      %v4024 = vmul.f32 %v3707, %v3959
      %v4025 = vmul.f32 %v3710, %v3962
      // Predicated region
      $region45: #{tpu_custom_call.1} parent=39 // pred_check
        %p4026 = pneg %p268
      $region46: #{tpu_custom_call.1} parent=39 // pred_check_branch
        %4028 = sbr.rel (%p4026) target = $region48
      $region47: #{tpu_custom_call.1} parent=39 // pred_region
        %v4029 = vsel %vm756, %v3963, -1e+30
        %v4030 = vsel %vm757, %v3963, -1e+30
        %v4031 = vsel %vm758, %v3964, -1e+30
        %v4032 = vsel %vm759, %v3964, -1e+30
        %v4033 = vsel %vm760, %v3965, -1e+30
        %v4034 = vsel %vm761, %v3965, -1e+30
        %v4035 = vsel %vm762, %v3966, -1e+30
        %v4036 = vsel %vm763, %v3966, -1e+30
        %v4037 = vsel %vm764, %v3967, -1e+30
        %v4038 = vsel %vm765, %v3967, -1e+30
        %v4039 = vsel %vm766, %v3968, -1e+30
        %v4040 = vsel %vm767, %v3968, -1e+30
        %v4041 = vsel %vm768, %v3969, -1e+30
        %v4042 = vsel %vm769, %v3969, -1e+30
        %v4043 = vsel %vm770, %v3970, -1e+30
        %v4044 = vsel %vm771, %v3970, -1e+30
        %v4045 = vsel %vm772, %v3971, -1e+30
        %v4046 = vsel %vm773, %v3971, -1e+30
        %v4047 = vsel %vm774, %v3972, -1e+30
        %v4048 = vsel %vm775, %v3972, -1e+30
        %v4049 = vsel %vm776, %v3973, -1e+30
        %v4050 = vsel %vm777, %v3973, -1e+30
        %v4051 = vsel %vm778, %v3974, -1e+30
        %v4052 = vsel %vm779, %v3974, -1e+30
        %v4053 = vsel %vm780, %v3975, -1e+30
        %v4054 = vsel %vm781, %v3975, -1e+30
        %v4055 = vsel %vm782, %v3976, -1e+30
        %v4056 = vsel %vm783, %v3976, -1e+30
        %v4057 = vsel %vm784, %v3977, -1e+30
        %v4058 = vsel %vm785, %v3977, -1e+30
        %v4059 = vsel %vm786, %v3978, -1e+30
        %v4060 = vsel %vm787, %v3978, -1e+30
        %v4061 = vsel %vm788, %v3979, -1e+30
        %v4062 = vsel %vm789, %v3979, -1e+30
        %v4063 = vsel %vm790, %v3980, -1e+30
        %v4064 = vsel %vm791, %v3980, -1e+30
        %v4065 = vsel %vm792, %v3981, -1e+30
        %v4066 = vsel %vm793, %v3981, -1e+30
        %v4067 = vsel %vm794, %v3982, -1e+30
        %v4068 = vsel %vm795, %v3982, -1e+30
        %v4069 = vsel %vm796, %v3983, -1e+30
        %v4070 = vsel %vm797, %v3983, -1e+30
        %v4071 = vsel %vm798, %v3984, -1e+30
        %v4072 = vsel %vm799, %v3984, -1e+30
        %v4073 = vsel %vm800, %v3985, -1e+30
        %v4074 = vsel %vm801, %v3985, -1e+30
        %v4075 = vsel %vm802, %v3986, -1e+30
        %v4076 = vsel %vm803, %v3986, -1e+30
        %v4077 = vsel %vm804, %v3987, -1e+30
        %v4078 = vsel %vm805, %v3987, -1e+30
        %v4079 = vsel %vm806, %v3988, -1e+30
        %v4080 = vsel %vm807, %v3988, -1e+30
        %v4081 = vsel %vm808, %v3989, -1e+30
        %v4082 = vsel %vm809, %v3989, -1e+30
        %v4083 = vsel %vm810, %v3990, -1e+30
        %v4084 = vsel %vm811, %v3990, -1e+30
        %v4085 = vsel %vm812, %v3991, -1e+30
        %v4086 = vsel %vm813, %v3991, -1e+30
        %v4087 = vsel %vm814, %v3992, -1e+30
        %v4088 = vsel %vm815, %v3992, -1e+30
        %v4089 = vsel %vm816, %v3993, -1e+30
        %v4090 = vsel %vm817, %v3993, -1e+30
        %v4091 = vsel %vm818, %v3994, -1e+30
        %v4092 = vsel %vm819, %v3994, -1e+30
        %v4093 = vsel %vm820, %v3995, -1e+30
        %v4094 = vsel %vm821, %v3995, -1e+30
        %v4095 = vsel %vm822, %v3996, -1e+30
        %v4096 = vsel %vm823, %v3996, -1e+30
        %v4097 = vsel %vm824, %v3997, -1e+30
        %v4098 = vsel %vm825, %v3997, -1e+30
        %v4099 = vsel %vm826, %v3998, -1e+30
        %v4100 = vsel %vm827, %v3998, -1e+30
        %v4101 = vsel %vm828, %v3999, -1e+30
        %v4102 = vsel %vm829, %v3999, -1e+30
        %v4103 = vsel %vm830, %v4000, -1e+30
        %v4104 = vsel %vm831, %v4000, -1e+30
        %v4105 = vsel %vm832, %v4001, -1e+30
        %v4106 = vsel %vm833, %v4001, -1e+30
        %v4107 = vsel %vm834, %v4002, -1e+30
        %v4108 = vsel %vm835, %v4002, -1e+30
        %v4109 = vsel %vm836, %v4003, -1e+30
        %v4110 = vsel %vm837, %v4003, -1e+30
        %v4111 = vsel %vm838, %v4004, -1e+30
        %v4112 = vsel %vm839, %v4004, -1e+30
        %v4113 = vsel %vm840, %v4005, -1e+30
        %v4114 = vsel %vm841, %v4005, -1e+30
        %v4115 = vsel %vm842, %v4006, -1e+30
        %v4116 = vsel %vm843, %v4006, -1e+30
        %v4117 = vsel %vm844, %v4007, -1e+30
        %v4118 = vsel %vm845, %v4007, -1e+30
        %v4119 = vsel %vm846, %v4008, -1e+30
        %v4120 = vsel %vm847, %v4008, -1e+30
        %v4121 = vsel %vm848, %v4009, -1e+30
        %v4122 = vsel %vm849, %v4009, -1e+30
        %v4123 = vsel %vm850, %v4010, -1e+30
        %v4124 = vsel %vm851, %v4010, -1e+30
        %v4125 = vsel %vm852, %v4011, -1e+30
        %v4126 = vsel %vm853, %v4011, -1e+30
        %v4127 = vsel %vm854, %v4012, -1e+30
        %v4128 = vsel %vm855, %v4012, -1e+30
        %v4129 = vsel %vm856, %v4013, -1e+30
        %v4130 = vsel %vm857, %v4013, -1e+30
        %v4131 = vsel %vm858, %v4014, -1e+30
        %v4132 = vsel %vm859, %v4014, -1e+30
        %v4133 = vsel %vm860, %v4015, -1e+30
        %v4134 = vsel %vm861, %v4015, -1e+30
        %v4135 = vsel %vm862, %v4016, -1e+30
        %v4136 = vsel %vm863, %v4016, -1e+30
        %v4137 = vsel %vm864, %v4017, -1e+30
        %v4138 = vsel %vm865, %v4017, -1e+30
        %v4139 = vsel %vm866, %v4018, -1e+30
        %v4140 = vsel %vm867, %v4018, -1e+30
        %v4141 = vsel %vm868, %v4019, -1e+30
        %v4142 = vsel %vm869, %v4019, -1e+30
        %v4143 = vsel %vm870, %v4020, -1e+30
        %v4144 = vsel %vm871, %v4020, -1e+30
        %v4145 = vsel %vm872, %v4021, -1e+30
        %v4146 = vsel %vm873, %v4021, -1e+30
        %v4147 = vsel %vm874, %v4022, -1e+30
        %v4148 = vsel %vm875, %v4022, -1e+30
        %v4149 = vsel %vm876, %v4023, -1e+30
        %v4150 = vsel %vm877, %v4023, -1e+30
        %v4151 = vsel %vm878, %v4024, -1e+30
        %v4152 = vsel %vm879, %v4024, -1e+30
        %v4153 = vsel %vm880, %v4025, -1e+30
        %v4154 = vsel %vm881, %v4025, -1e+30
        %v4155 = vld [vmem:[#allocation2] sm:$0x3]
        %v4156 = vmax.f32 %v4029, %v4033
        %v4157 = vmax.f32 %v4031, %v4035
        %v4158 = vmax.f32 %v4156, %v4037
        %v4159 = vmax.f32 %v4157, %v4039
        %v4160 = vmax.f32 %v4158, %v4041
        %v4161 = vmax.f32 %v4159, %v4043
        %v4162 = vmax.f32 %v4160, %v4045
        %v4163 = vmax.f32 %v4161, %v4047
        %v4164 = vmax.f32 %v4162, %v4049
        %v4165 = vmax.f32 %v4163, %v4051
        %v4166 = vmax.f32 %v4164, %v4053
        %v4167 = vmax.f32 %v4165, %v4055
        %v4168 = vmax.f32 %v4166, %v4057
        %v4169 = vmax.f32 %v4167, %v4059
        %v4170 = vmax.f32 %v4168, %v4061
        %v4171 = vmax.f32 %v4169, %v4063
        %v4172 = vmax.f32 %v4170, %v4065
        %v4173 = vmax.f32 %v4171, %v4067
        %v4174 = vmax.f32 %v4172, %v4069
        %v4175 = vmax.f32 %v4173, %v4071
        %v4176 = vmax.f32 %v4174, %v4073
        %v4177 = vmax.f32 %v4175, %v4075
        %v4178 = vmax.f32 %v4176, %v4077
        %v4179 = vmax.f32 %v4177, %v4079
        %v4180 = vmax.f32 %v4178, %v4081
        %v4181 = vmax.f32 %v4179, %v4083
        %v4182 = vmax.f32 %v4180, %v4085
        %v4183 = vmax.f32 %v4181, %v4087
        %v4184 = vmax.f32 %v4182, %v4089
        %v4185 = vmax.f32 %v4183, %v4091
        %v4186 = vmax.f32 %v4184, %v4093
        %v4187 = vmax.f32 %v4185, %v4095
        %v4188 = vmax.f32 %v4186, %v4097
        %v4189 = vmax.f32 %v4187, %v4099
        %v4190 = vmax.f32 %v4188, %v4101
        %v4191 = vmax.f32 %v4189, %v4103
        %v4192 = vmax.f32 %v4190, %v4105
        %v4193 = vmax.f32 %v4191, %v4107
        %v4194 = vmax.f32 %v4192, %v4109
        %v4195 = vmax.f32 %v4193, %v4111
        %v4196 = vmax.f32 %v4194, %v4113
        %v4197 = vmax.f32 %v4195, %v4115
        %v4198 = vmax.f32 %v4196, %v4117
        %v4199 = vmax.f32 %v4197, %v4119
        %v4200 = vmax.f32 %v4198, %v4121
        %v4201 = vmax.f32 %v4199, %v4123
        %v4202 = vmax.f32 %v4200, %v4125
        %v4203 = vmax.f32 %v4201, %v4127
        %v4204 = vmax.f32 %v4202, %v4129
        %v4205 = vmax.f32 %v4203, %v4131
        %v4206 = vmax.f32 %v4204, %v4133
        %v4207 = vmax.f32 %v4205, %v4135
        %v4208 = vmax.f32 %v4206, %v4137
        %v4209 = vmax.f32 %v4207, %v4139
        %v4210 = vmax.f32 %v4208, %v4141
        %v4211 = vmax.f32 %v4209, %v4143
        %v4212 = vmax.f32 %v4210, %v4145
        %v4213 = vmax.f32 %v4211, %v4147
        %v4214 = vmax.f32 %v4212, %v4149
        %v4215 = vmax.f32 %v4213, %v4151
        %v4216 = vmax.f32 %v4214, %v4153
        %v4217 = vmax.f32 %v4216, %v4215
        %v4218 = vrot.slane %v4217, 4
        %v4219 = vmax.f32 %v4217, %v4218
        %v4220 = vrot.slane %v4219, 2
        %v4221 = vmax.f32 %v4219, %v4220
        %v4222 = vrot.slane %v4221, 1
        %v4223 = vmax.f32 %v4221, %v4222
        %v4224 = vmax.f32 %v4030, %v4034
        %v4225 = vmax.f32 %v4032, %v4036
        %v4226 = vmax.f32 %v4224, %v4038
        %v4227 = vmax.f32 %v4225, %v4040
        %v4228 = vmax.f32 %v4226, %v4042
        %v4229 = vmax.f32 %v4227, %v4044
        %v4230 = vmax.f32 %v4228, %v4046
        %v4231 = vmax.f32 %v4229, %v4048
        %v4232 = vmax.f32 %v4230, %v4050
        %v4233 = vmax.f32 %v4231, %v4052
        %v4234 = vmax.f32 %v4232, %v4054
        %v4235 = vmax.f32 %v4233, %v4056
        %v4236 = vmax.f32 %v4234, %v4058
        %v4237 = vmax.f32 %v4235, %v4060
        %v4238 = vmax.f32 %v4236, %v4062
        %v4239 = vmax.f32 %v4237, %v4064
        %v4240 = vmax.f32 %v4238, %v4066
        %v4241 = vmax.f32 %v4239, %v4068
        %v4242 = vmax.f32 %v4240, %v4070
        %v4243 = vmax.f32 %v4241, %v4072
        %v4244 = vmax.f32 %v4242, %v4074
        %v4245 = vmax.f32 %v4243, %v4076
        %v4246 = vmax.f32 %v4244, %v4078
        %v4247 = vmax.f32 %v4245, %v4080
        %v4248 = vmax.f32 %v4246, %v4082
        %v4249 = vmax.f32 %v4247, %v4084
        %v4250 = vmax.f32 %v4248, %v4086
        %v4251 = vmax.f32 %v4249, %v4088
        %v4252 = vmax.f32 %v4250, %v4090
        %v4253 = vmax.f32 %v4251, %v4092
        %v4254 = vmax.f32 %v4252, %v4094
        %v4255 = vmax.f32 %v4253, %v4096
        %v4256 = vmax.f32 %v4254, %v4098
        %v4257 = vmax.f32 %v4255, %v4100
        %v4258 = vmax.f32 %v4256, %v4102
        %v4259 = vmax.f32 %v4257, %v4104
        %v4260 = vmax.f32 %v4258, %v4106
        %v4261 = vmax.f32 %v4259, %v4108
        %v4262 = vmax.f32 %v4260, %v4110
        %v4263 = vmax.f32 %v4261, %v4112
        %v4264 = vmax.f32 %v4262, %v4114
        %v4265 = vmax.f32 %v4263, %v4116
        %v4266 = vmax.f32 %v4264, %v4118
        %v4267 = vmax.f32 %v4265, %v4120
        %v4268 = vmax.f32 %v4266, %v4122
        %v4269 = vmax.f32 %v4267, %v4124
        %v4270 = vmax.f32 %v4268, %v4126
        %v4271 = vmax.f32 %v4269, %v4128
        %v4272 = vmax.f32 %v4270, %v4130
        %v4273 = vmax.f32 %v4271, %v4132
        %v4274 = vmax.f32 %v4272, %v4134
        %v4275 = vmax.f32 %v4273, %v4136
        %v4276 = vmax.f32 %v4274, %v4138
        %v4277 = vmax.f32 %v4275, %v4140
        %v4278 = vmax.f32 %v4276, %v4142
        %v4279 = vmax.f32 %v4277, %v4144
        %v4280 = vmax.f32 %v4278, %v4146
        %v4281 = vmax.f32 %v4279, %v4148
        %v4282 = vmax.f32 %v4280, %v4150
        %v4283 = vmax.f32 %v4281, %v4152
        %v4284 = vmax.f32 %v4282, %v4154
        %v4285 = vmax.f32 %v4284, %v4283
        %v4286 = vrot.slane %v4285, 4
        %v4287 = vmax.f32 %v4285, %v4286
        %v4288 = vrot.slane %v4287, 2
        %v4289 = vmax.f32 %v4287, %v4288
        %v4290 = vrot.slane %v4289, 1
        %v4291 = vmax.f32 %v4289, %v4290
        %v4294 = vrot.slane %v4291, 7
        %vm4295 = vcmask 1040384
        %v4296 = vsel %vm4295, %v4223, %v4294
        %v4298 = vmax.f32 %v4155, %v4296
        %v4299 = vlaneseq
        %vm4300 = vcmp.ge.s32.totalorder %v4299, 0
        %vm4301 = vcmp.lt.s32.totalorder %v4299, 256
        %vm4302 = vmand %vm4300, %vm4301
        %4303 = vst.msk [vmem:[#allocation2] sm:$0x3] %vm4302, %v4298
      $region48: #{tpu_custom_call.1} parent=39 // pred_fallthru
        _
      %p4304 = scmp.eq.s32.totalorder %s20, 1
      // Predicated region
      $region49: #{tpu_custom_call.1} parent=39 // pred_check
        %p4305 = pneg %p4304
      $region50: #{tpu_custom_call.1} parent=39 // pred_check_branch
        %4307 = sbr.rel (%p4305) target = $region52
      $region51: #{tpu_custom_call.1} parent=39 // pred_region
        %v4308 = vld [vmem:[#allocation2] sm:$0x3]
        %v4310 = vperm.slane %v4308, 0
        %v4311 = vperm.slane %v4308, 1
        %v4314 = vsel %vm756, %v4310, -1e+30
        %v4315 = vsel %vm757, %v4311, -1e+30
        %v4316 = vsel %vm758, %v4310, -1e+30
        %v4317 = vsel %vm759, %v4311, -1e+30
        %v4318 = vsel %vm760, %v4310, -1e+30
        %v4319 = vsel %vm761, %v4311, -1e+30
        %v4320 = vsel %vm762, %v4310, -1e+30
        %v4321 = vsel %vm763, %v4311, -1e+30
        %v4322 = vsel %vm764, %v4310, -1e+30
        %v4323 = vsel %vm765, %v4311, -1e+30
        %v4324 = vsel %vm766, %v4310, -1e+30
        %v4325 = vsel %vm767, %v4311, -1e+30
        %v4326 = vsel %vm768, %v4310, -1e+30
        %v4327 = vsel %vm769, %v4311, -1e+30
        %v4328 = vsel %vm770, %v4310, -1e+30
        %v4329 = vsel %vm771, %v4311, -1e+30
        %v4330 = vsel %vm772, %v4310, -1e+30
        %v4331 = vsel %vm773, %v4311, -1e+30
        %v4332 = vsel %vm774, %v4310, -1e+30
        %v4333 = vsel %vm775, %v4311, -1e+30
        %v4334 = vsel %vm776, %v4310, -1e+30
        %v4335 = vsel %vm777, %v4311, -1e+30
        %v4336 = vsel %vm778, %v4310, -1e+30
        %v4337 = vsel %vm779, %v4311, -1e+30
        %v4338 = vsel %vm780, %v4310, -1e+30
        %v4339 = vsel %vm781, %v4311, -1e+30
        %v4340 = vsel %vm782, %v4310, -1e+30
        %v4341 = vsel %vm783, %v4311, -1e+30
        %v4342 = vsel %vm784, %v4310, -1e+30
        %v4343 = vsel %vm785, %v4311, -1e+30
        %v4344 = vsel %vm786, %v4310, -1e+30
        %v4345 = vsel %vm787, %v4311, -1e+30
        %v4346 = vsel %vm788, %v4310, -1e+30
        %v4347 = vsel %vm789, %v4311, -1e+30
        %v4348 = vsel %vm790, %v4310, -1e+30
        %v4349 = vsel %vm791, %v4311, -1e+30
        %v4350 = vsel %vm792, %v4310, -1e+30
        %v4351 = vsel %vm793, %v4311, -1e+30
        %v4352 = vsel %vm794, %v4310, -1e+30
        %v4353 = vsel %vm795, %v4311, -1e+30
        %v4354 = vsel %vm796, %v4310, -1e+30
        %v4355 = vsel %vm797, %v4311, -1e+30
        %v4356 = vsel %vm798, %v4310, -1e+30
        %v4357 = vsel %vm799, %v4311, -1e+30
        %v4358 = vsel %vm800, %v4310, -1e+30
        %v4359 = vsel %vm801, %v4311, -1e+30
        %v4360 = vsel %vm802, %v4310, -1e+30
        %v4361 = vsel %vm803, %v4311, -1e+30
        %v4362 = vsel %vm804, %v4310, -1e+30
        %v4363 = vsel %vm805, %v4311, -1e+30
        %v4364 = vsel %vm806, %v4310, -1e+30
        %v4365 = vsel %vm807, %v4311, -1e+30
        %v4366 = vsel %vm808, %v4310, -1e+30
        %v4367 = vsel %vm809, %v4311, -1e+30
        %v4368 = vsel %vm810, %v4310, -1e+30
        %v4369 = vsel %vm811, %v4311, -1e+30
        %v4370 = vsel %vm812, %v4310, -1e+30
        %v4371 = vsel %vm813, %v4311, -1e+30
        %v4372 = vsel %vm814, %v4310, -1e+30
        %v4373 = vsel %vm815, %v4311, -1e+30
        %v4374 = vsel %vm816, %v4310, -1e+30
        %v4375 = vsel %vm817, %v4311, -1e+30
        %v4376 = vsel %vm818, %v4310, -1e+30
        %v4377 = vsel %vm819, %v4311, -1e+30
        %v4378 = vsel %vm820, %v4310, -1e+30
        %v4379 = vsel %vm821, %v4311, -1e+30
        %v4380 = vsel %vm822, %v4310, -1e+30
        %v4381 = vsel %vm823, %v4311, -1e+30
        %v4382 = vsel %vm824, %v4310, -1e+30
        %v4383 = vsel %vm825, %v4311, -1e+30
        %v4384 = vsel %vm826, %v4310, -1e+30
        %v4385 = vsel %vm827, %v4311, -1e+30
        %v4386 = vsel %vm828, %v4310, -1e+30
        %v4387 = vsel %vm829, %v4311, -1e+30
        %v4388 = vsel %vm830, %v4310, -1e+30
        %v4389 = vsel %vm831, %v4311, -1e+30
        %v4390 = vsel %vm832, %v4310, -1e+30
        %v4391 = vsel %vm833, %v4311, -1e+30
        %v4392 = vsel %vm834, %v4310, -1e+30
        %v4393 = vsel %vm835, %v4311, -1e+30
        %v4394 = vsel %vm836, %v4310, -1e+30
        %v4395 = vsel %vm837, %v4311, -1e+30
        %v4396 = vsel %vm838, %v4310, -1e+30
        %v4397 = vsel %vm839, %v4311, -1e+30
        %v4398 = vsel %vm840, %v4310, -1e+30
        %v4399 = vsel %vm841, %v4311, -1e+30
        %v4400 = vsel %vm842, %v4310, -1e+30
        %v4401 = vsel %vm843, %v4311, -1e+30
        %v4402 = vsel %vm844, %v4310, -1e+30
        %v4403 = vsel %vm845, %v4311, -1e+30
        %v4404 = vsel %vm846, %v4310, -1e+30
        %v4405 = vsel %vm847, %v4311, -1e+30
        %v4406 = vsel %vm848, %v4310, -1e+30
        %v4407 = vsel %vm849, %v4311, -1e+30
        %v4408 = vsel %vm850, %v4310, -1e+30
        %v4409 = vsel %vm851, %v4311, -1e+30
        %v4410 = vsel %vm852, %v4310, -1e+30
        %v4411 = vsel %vm853, %v4311, -1e+30
        %v4412 = vsel %vm854, %v4310, -1e+30
        %v4413 = vsel %vm855, %v4311, -1e+30
        %v4414 = vsel %vm856, %v4310, -1e+30
        %v4415 = vsel %vm857, %v4311, -1e+30
        %v4416 = vsel %vm858, %v4310, -1e+30
        %v4417 = vsel %vm859, %v4311, -1e+30
        %v4418 = vsel %vm860, %v4310, -1e+30
        %v4419 = vsel %vm861, %v4311, -1e+30
        %v4420 = vsel %vm862, %v4310, -1e+30
        %v4421 = vsel %vm863, %v4311, -1e+30
        %v4422 = vsel %vm864, %v4310, -1e+30
        %v4423 = vsel %vm865, %v4311, -1e+30
        %v4424 = vsel %vm866, %v4310, -1e+30
        %v4425 = vsel %vm867, %v4311, -1e+30
        %v4426 = vsel %vm868, %v4310, -1e+30
        %v4427 = vsel %vm869, %v4311, -1e+30
        %v4428 = vsel %vm870, %v4310, -1e+30
        %v4429 = vsel %vm871, %v4311, -1e+30
        %v4430 = vsel %vm872, %v4310, -1e+30
        %v4431 = vsel %vm873, %v4311, -1e+30
        %v4432 = vsel %vm874, %v4310, -1e+30
        %v4433 = vsel %vm875, %v4311, -1e+30
        %v4434 = vsel %vm876, %v4310, -1e+30
        %v4435 = vsel %vm877, %v4311, -1e+30
        %v4436 = vsel %vm878, %v4310, -1e+30
        %v4437 = vsel %vm879, %v4311, -1e+30
        %v4438 = vsel %vm880, %v4310, -1e+30
        %v4439 = vsel %vm881, %v4311, -1e+30
        %v4440 = vmax.f32 %v4314, %v4315
        %4441 = vmax.xlane.f32.xlu0 %v4440
        %v4442 = vpop.xlane.xlu0 %4441
        %v4443 = vmax.f32 %v4316, %v4317
        %4444 = vmax.xlane.f32.xlu0 %v4443
        %v4445 = vpop.xlane.xlu0 %4444
        %v4446 = vmax.f32 %v4318, %v4319
        %4447 = vmax.xlane.f32.xlu0 %v4446
        %v4448 = vpop.xlane.xlu0 %4447
        %v4449 = vmax.f32 %v4320, %v4321
        %4450 = vmax.xlane.f32.xlu0 %v4449
        %v4451 = vpop.xlane.xlu0 %4450
        %v4452 = vmax.f32 %v4322, %v4323
        %4453 = vmax.xlane.f32.xlu0 %v4452
        %v4454 = vpop.xlane.xlu0 %4453
        %v4455 = vmax.f32 %v4324, %v4325
        %4456 = vmax.xlane.f32.xlu0 %v4455
        %v4457 = vpop.xlane.xlu0 %4456
        %v4458 = vmax.f32 %v4326, %v4327
        %4459 = vmax.xlane.f32.xlu0 %v4458
        %v4460 = vpop.xlane.xlu0 %4459
        %v4461 = vmax.f32 %v4328, %v4329
        %4462 = vmax.xlane.f32.xlu0 %v4461
        %v4463 = vpop.xlane.xlu0 %4462
        %v4464 = vmax.f32 %v4330, %v4331
        %4465 = vmax.xlane.f32.xlu0 %v4464
        %v4466 = vpop.xlane.xlu0 %4465
        %v4467 = vmax.f32 %v4332, %v4333
        %4468 = vmax.xlane.f32.xlu0 %v4467
        %v4469 = vpop.xlane.xlu0 %4468
        %v4470 = vmax.f32 %v4334, %v4335
        %4471 = vmax.xlane.f32.xlu0 %v4470
        %v4472 = vpop.xlane.xlu0 %4471
        %v4473 = vmax.f32 %v4336, %v4337
        %4474 = vmax.xlane.f32.xlu0 %v4473
        %v4475 = vpop.xlane.xlu0 %4474
        %v4476 = vmax.f32 %v4338, %v4339
        %4477 = vmax.xlane.f32.xlu0 %v4476
        %v4478 = vpop.xlane.xlu0 %4477
        %v4479 = vmax.f32 %v4340, %v4341
        %4480 = vmax.xlane.f32.xlu0 %v4479
        %v4481 = vpop.xlane.xlu0 %4480
        %v4482 = vmax.f32 %v4342, %v4343
        %4483 = vmax.xlane.f32.xlu0 %v4482
        %v4484 = vpop.xlane.xlu0 %4483
        %v4485 = vmax.f32 %v4344, %v4345
        %4486 = vmax.xlane.f32.xlu0 %v4485
        %v4487 = vpop.xlane.xlu0 %4486
        %v4488 = vmax.f32 %v4346, %v4347
        %4489 = vmax.xlane.f32.xlu0 %v4488
        %v4490 = vpop.xlane.xlu0 %4489
        %v4491 = vmax.f32 %v4348, %v4349
        %4492 = vmax.xlane.f32.xlu0 %v4491
        %v4493 = vpop.xlane.xlu0 %4492
        %v4494 = vmax.f32 %v4350, %v4351
        %4495 = vmax.xlane.f32.xlu0 %v4494
        %v4496 = vpop.xlane.xlu0 %4495
        %v4497 = vmax.f32 %v4352, %v4353
        %4498 = vmax.xlane.f32.xlu0 %v4497
        %v4499 = vpop.xlane.xlu0 %4498
        %v4500 = vmax.f32 %v4354, %v4355
        %4501 = vmax.xlane.f32.xlu0 %v4500
        %v4502 = vpop.xlane.xlu0 %4501
        %v4503 = vmax.f32 %v4356, %v4357
        %4504 = vmax.xlane.f32.xlu0 %v4503
        %v4505 = vpop.xlane.xlu0 %4504
        %v4506 = vmax.f32 %v4358, %v4359
        %4507 = vmax.xlane.f32.xlu0 %v4506
        %v4508 = vpop.xlane.xlu0 %4507
        %v4509 = vmax.f32 %v4360, %v4361
        %4510 = vmax.xlane.f32.xlu0 %v4509
        %v4511 = vpop.xlane.xlu0 %4510
        %v4512 = vmax.f32 %v4362, %v4363
        %4513 = vmax.xlane.f32.xlu0 %v4512
        %v4514 = vpop.xlane.xlu0 %4513
        %v4515 = vmax.f32 %v4364, %v4365
        %4516 = vmax.xlane.f32.xlu0 %v4515
        %v4517 = vpop.xlane.xlu0 %4516
        %v4518 = vmax.f32 %v4366, %v4367
        %4519 = vmax.xlane.f32.xlu0 %v4518
        %v4520 = vpop.xlane.xlu0 %4519
        %v4521 = vmax.f32 %v4368, %v4369
        %4522 = vmax.xlane.f32.xlu0 %v4521
        %v4523 = vpop.xlane.xlu0 %4522
        %v4524 = vmax.f32 %v4370, %v4371
        %4525 = vmax.xlane.f32.xlu0 %v4524
        %v4526 = vpop.xlane.xlu0 %4525
        %v4527 = vmax.f32 %v4372, %v4373
        %4528 = vmax.xlane.f32.xlu0 %v4527
        %v4529 = vpop.xlane.xlu0 %4528
        %v4530 = vmax.f32 %v4374, %v4375
        %4531 = vmax.xlane.f32.xlu0 %v4530
        %v4532 = vpop.xlane.xlu0 %4531
        %v4533 = vmax.f32 %v4376, %v4377
        %4534 = vmax.xlane.f32.xlu0 %v4533
        %v4535 = vpop.xlane.xlu0 %4534
        %v4536 = vmax.f32 %v4378, %v4379
        %4537 = vmax.xlane.f32.xlu0 %v4536
        %v4538 = vpop.xlane.xlu0 %4537
        %v4539 = vmax.f32 %v4380, %v4381
        %4540 = vmax.xlane.f32.xlu0 %v4539
        %v4541 = vpop.xlane.xlu0 %4540
        %v4542 = vmax.f32 %v4382, %v4383
        %4543 = vmax.xlane.f32.xlu0 %v4542
        %v4544 = vpop.xlane.xlu0 %4543
        %v4545 = vmax.f32 %v4384, %v4385
        %4546 = vmax.xlane.f32.xlu0 %v4545
        %v4547 = vpop.xlane.xlu0 %4546
        %v4548 = vmax.f32 %v4386, %v4387
        %4549 = vmax.xlane.f32.xlu0 %v4548
        %v4550 = vpop.xlane.xlu0 %4549
        %v4551 = vmax.f32 %v4388, %v4389
        %4552 = vmax.xlane.f32.xlu0 %v4551
        %v4553 = vpop.xlane.xlu0 %4552
        %v4554 = vmax.f32 %v4390, %v4391
        %4555 = vmax.xlane.f32.xlu0 %v4554
        %v4556 = vpop.xlane.xlu0 %4555
        %v4557 = vmax.f32 %v4392, %v4393
        %4558 = vmax.xlane.f32.xlu0 %v4557
        %v4559 = vpop.xlane.xlu0 %4558
        %v4560 = vmax.f32 %v4394, %v4395
        %4561 = vmax.xlane.f32.xlu0 %v4560
        %v4562 = vpop.xlane.xlu0 %4561
        %v4563 = vmax.f32 %v4396, %v4397
        %4564 = vmax.xlane.f32.xlu0 %v4563
        %v4565 = vpop.xlane.xlu0 %4564
        %v4566 = vmax.f32 %v4398, %v4399
        %4567 = vmax.xlane.f32.xlu0 %v4566
        %v4568 = vpop.xlane.xlu0 %4567
        %v4569 = vmax.f32 %v4400, %v4401
        %4570 = vmax.xlane.f32.xlu0 %v4569
        %v4571 = vpop.xlane.xlu0 %4570
        %v4572 = vmax.f32 %v4402, %v4403
        %4573 = vmax.xlane.f32.xlu0 %v4572
        %v4574 = vpop.xlane.xlu0 %4573
        %v4575 = vmax.f32 %v4404, %v4405
        %4576 = vmax.xlane.f32.xlu0 %v4575
        %v4577 = vpop.xlane.xlu0 %4576
        %v4578 = vmax.f32 %v4406, %v4407
        %4579 = vmax.xlane.f32.xlu0 %v4578
        %v4580 = vpop.xlane.xlu0 %4579
        %v4581 = vmax.f32 %v4408, %v4409
        %4582 = vmax.xlane.f32.xlu0 %v4581
        %v4583 = vpop.xlane.xlu0 %4582
        %v4584 = vmax.f32 %v4410, %v4411
        %4585 = vmax.xlane.f32.xlu0 %v4584
        %v4586 = vpop.xlane.xlu0 %4585
        %v4587 = vmax.f32 %v4412, %v4413
        %4588 = vmax.xlane.f32.xlu0 %v4587
        %v4589 = vpop.xlane.xlu0 %4588
        %v4590 = vmax.f32 %v4414, %v4415
        %4591 = vmax.xlane.f32.xlu0 %v4590
        %v4592 = vpop.xlane.xlu0 %4591
        %v4593 = vmax.f32 %v4416, %v4417
        %4594 = vmax.xlane.f32.xlu0 %v4593
        %v4595 = vpop.xlane.xlu0 %4594
        %v4596 = vmax.f32 %v4418, %v4419
        %4597 = vmax.xlane.f32.xlu0 %v4596
        %v4598 = vpop.xlane.xlu0 %4597
        %v4599 = vmax.f32 %v4420, %v4421
        %4600 = vmax.xlane.f32.xlu0 %v4599
        %v4601 = vpop.xlane.xlu0 %4600
        %v4602 = vmax.f32 %v4422, %v4423
        %4603 = vmax.xlane.f32.xlu0 %v4602
        %v4604 = vpop.xlane.xlu0 %4603
        %v4605 = vmax.f32 %v4424, %v4425
        %4606 = vmax.xlane.f32.xlu0 %v4605
        %v4607 = vpop.xlane.xlu0 %4606
        %v4608 = vmax.f32 %v4426, %v4427
        %4609 = vmax.xlane.f32.xlu0 %v4608
        %v4610 = vpop.xlane.xlu0 %4609
        %v4611 = vmax.f32 %v4428, %v4429
        %4612 = vmax.xlane.f32.xlu0 %v4611
        %v4613 = vpop.xlane.xlu0 %4612
        %v4614 = vmax.f32 %v4430, %v4431
        %4615 = vmax.xlane.f32.xlu0 %v4614
        %v4616 = vpop.xlane.xlu0 %4615
        %v4617 = vmax.f32 %v4432, %v4433
        %4618 = vmax.xlane.f32.xlu0 %v4617
        %v4619 = vpop.xlane.xlu0 %4618
        %v4620 = vmax.f32 %v4434, %v4435
        %4621 = vmax.xlane.f32.xlu0 %v4620
        %v4622 = vpop.xlane.xlu0 %4621
        %v4623 = vmax.f32 %v4436, %v4437
        %4624 = vmax.xlane.f32.xlu0 %v4623
        %v4625 = vpop.xlane.xlu0 %4624
        %v4626 = vmax.f32 %v4438, %v4439
        %4627 = vmax.xlane.f32.xlu0 %v4626
        %v4628 = vpop.xlane.xlu0 %4627
        %vm4629 = vcmp.ge.s32.totalorder %v312, 0
        %vm4630 = vcmp.ge.s32.totalorder %v313, 0
        %vm4631 = vcmp.ge.s32.totalorder %v314, 0
        %vm4632 = vcmp.ge.s32.totalorder %v315, 0
        %vm4633 = vcmp.ge.s32.totalorder %v316, 0
        %vm4634 = vcmp.ge.s32.totalorder %v317, 0
        %vm4635 = vcmp.ge.s32.totalorder %v318, 0
        %vm4636 = vcmp.ge.s32.totalorder %v319, 0
        %vm4637 = vcmp.ge.s32.totalorder %v320, 0
        %vm4638 = vcmp.ge.s32.totalorder %v321, 0
        %vm4639 = vcmp.ge.s32.totalorder %v322, 0
        %vm4640 = vcmp.ge.s32.totalorder %v323, 0
        %vm4641 = vcmp.ge.s32.totalorder %v324, 0
        %vm4642 = vcmp.ge.s32.totalorder %v325, 0
        %vm4643 = vcmp.ge.s32.totalorder %v326, 0
        %vm4644 = vcmp.ge.s32.totalorder %v327, 0
        %vm4645 = vcmp.ge.s32.totalorder %v328, 0
        %vm4646 = vcmp.ge.s32.totalorder %v329, 0
        %vm4647 = vcmp.ge.s32.totalorder %v330, 0
        %vm4648 = vcmp.ge.s32.totalorder %v331, 0
        %vm4649 = vcmp.ge.s32.totalorder %v332, 0
        %vm4650 = vcmp.ge.s32.totalorder %v333, 0
        %vm4651 = vcmp.ge.s32.totalorder %v334, 0
        %vm4652 = vcmp.ge.s32.totalorder %v335, 0
        %vm4653 = vcmp.ge.s32.totalorder %v336, 0
        %vm4654 = vcmp.ge.s32.totalorder %v337, 0
        %vm4655 = vcmp.ge.s32.totalorder %v338, 0
        %vm4656 = vcmp.ge.s32.totalorder %v339, 0
        %vm4657 = vcmp.ge.s32.totalorder %v340, 0
        %vm4658 = vcmp.ge.s32.totalorder %v341, 0
        %vm4659 = vcmp.ge.s32.totalorder %v342, 0
        %vm4660 = vcmp.ge.s32.totalorder %v343, 0
        %vm4661 = vcmp.ge.s32.totalorder %v344, 0
        %vm4662 = vcmp.ge.s32.totalorder %v345, 0
        %vm4663 = vcmp.ge.s32.totalorder %v346, 0
        %vm4664 = vcmp.ge.s32.totalorder %v347, 0
        %vm4665 = vcmp.ge.s32.totalorder %v348, 0
        %vm4666 = vcmp.ge.s32.totalorder %v349, 0
        %vm4667 = vcmp.ge.s32.totalorder %v350, 0
        %vm4668 = vcmp.ge.s32.totalorder %v351, 0
        %vm4669 = vcmp.ge.s32.totalorder %v352, 0
        %vm4670 = vcmp.ge.s32.totalorder %v353, 0
        %vm4671 = vcmp.ge.s32.totalorder %v354, 0
        %vm4672 = vcmp.ge.s32.totalorder %v355, 0
        %vm4673 = vcmp.ge.s32.totalorder %v356, 0
        %vm4674 = vcmp.ge.s32.totalorder %v357, 0
        %vm4675 = vcmp.ge.s32.totalorder %v358, 0
        %vm4676 = vcmp.ge.s32.totalorder %v359, 0
        %vm4677 = vcmp.ge.s32.totalorder %v360, 0
        %vm4678 = vcmp.ge.s32.totalorder %v361, 0
        %vm4679 = vcmp.ge.s32.totalorder %v362, 0
        %vm4680 = vcmp.ge.s32.totalorder %v363, 0
        %vm4681 = vcmp.ge.s32.totalorder %v364, 0
        %vm4682 = vcmp.ge.s32.totalorder %v365, 0
        %vm4683 = vcmp.ge.s32.totalorder %v366, 0
        %vm4684 = vcmp.ge.s32.totalorder %v367, 0
        %vm4685 = vcmp.ge.s32.totalorder %v368, 0
        %vm4686 = vcmp.ge.s32.totalorder %v369, 0
        %vm4687 = vcmp.ge.s32.totalorder %v370, 0
        %vm4688 = vcmp.ge.s32.totalorder %v371, 0
        %vm4689 = vcmp.ge.s32.totalorder %v372, 0
        %vm4690 = vcmp.ge.s32.totalorder %v373, 0
        %vm4691 = vcmp.ge.s32.totalorder %v374, 0
        %v4692 = vsub.f32 %v3963, %v4442
        %v4693 = vsub.f32 %v3964, %v4445
        %v4694 = vsub.f32 %v3965, %v4448
        %v4695 = vsub.f32 %v3966, %v4451
        %v4696 = vsub.f32 %v3967, %v4454
        %v4697 = vsub.f32 %v3968, %v4457
        %v4698 = vsub.f32 %v3969, %v4460
        %v4699 = vsub.f32 %v3970, %v4463
        %v4700 = vsub.f32 %v3971, %v4466
        %v4701 = vsub.f32 %v3972, %v4469
        %v4702 = vsub.f32 %v3973, %v4472
        %v4703 = vsub.f32 %v3974, %v4475
        %v4704 = vsub.f32 %v3975, %v4478
        %v4705 = vsub.f32 %v3976, %v4481
        %v4706 = vsub.f32 %v3977, %v4484
        %v4707 = vsub.f32 %v3978, %v4487
        %v4708 = vsub.f32 %v3979, %v4490
        %v4709 = vsub.f32 %v3980, %v4493
        %v4710 = vsub.f32 %v3981, %v4496
        %v4711 = vsub.f32 %v3982, %v4499
        %v4712 = vsub.f32 %v3983, %v4502
        %v4713 = vsub.f32 %v3984, %v4505
        %v4714 = vsub.f32 %v3985, %v4508
        %v4715 = vsub.f32 %v3986, %v4511
        %v4716 = vsub.f32 %v3987, %v4514
        %v4717 = vsub.f32 %v3988, %v4517
        %v4718 = vsub.f32 %v3989, %v4520
        %v4719 = vsub.f32 %v3990, %v4523
        %v4720 = vsub.f32 %v3991, %v4526
        %v4721 = vsub.f32 %v3992, %v4529
        %v4722 = vsub.f32 %v3993, %v4532
        %v4723 = vsub.f32 %v3994, %v4535
        %v4724 = vsub.f32 %v3995, %v4538
        %v4725 = vsub.f32 %v3996, %v4541
        %v4726 = vsub.f32 %v3997, %v4544
        %v4727 = vsub.f32 %v3998, %v4547
        %v4728 = vsub.f32 %v3999, %v4550
        %v4729 = vsub.f32 %v4000, %v4553
        %v4730 = vsub.f32 %v4001, %v4556
        %v4731 = vsub.f32 %v4002, %v4559
        %v4732 = vsub.f32 %v4003, %v4562
        %v4733 = vsub.f32 %v4004, %v4565
        %v4734 = vsub.f32 %v4005, %v4568
        %v4735 = vsub.f32 %v4006, %v4571
        %v4736 = vsub.f32 %v4007, %v4574
        %v4737 = vsub.f32 %v4008, %v4577
        %v4738 = vsub.f32 %v4009, %v4580
        %v4739 = vsub.f32 %v4010, %v4583
        %v4740 = vsub.f32 %v4011, %v4586
        %v4741 = vsub.f32 %v4012, %v4589
        %v4742 = vsub.f32 %v4013, %v4592
        %v4743 = vsub.f32 %v4014, %v4595
        %v4744 = vsub.f32 %v4015, %v4598
        %v4745 = vsub.f32 %v4016, %v4601
        %v4746 = vsub.f32 %v4017, %v4604
        %v4747 = vsub.f32 %v4018, %v4607
        %v4748 = vsub.f32 %v4019, %v4610
        %v4749 = vsub.f32 %v4020, %v4613
        %v4750 = vsub.f32 %v4021, %v4616
        %v4751 = vsub.f32 %v4022, %v4619
        %v4752 = vsub.f32 %v4023, %v4622
        %v4753 = vsub.f32 %v4024, %v4625
        %v4754 = vsub.f32 %v4025, %v4628
        %v4755 = vsel %vm4629, %v4692, -1e+30
        %v4756 = vsel %vm4630, %v4693, -1e+30
        %v4757 = vsel %vm4631, %v4694, -1e+30
        %v4758 = vsel %vm4632, %v4695, -1e+30
        %v4759 = vsel %vm4633, %v4696, -1e+30
        %v4760 = vsel %vm4634, %v4697, -1e+30
        %v4761 = vsel %vm4635, %v4698, -1e+30
        %v4762 = vsel %vm4636, %v4699, -1e+30
        %v4763 = vsel %vm4637, %v4700, -1e+30
        %v4764 = vsel %vm4638, %v4701, -1e+30
        %v4765 = vsel %vm4639, %v4702, -1e+30
        %v4766 = vsel %vm4640, %v4703, -1e+30
        %v4767 = vsel %vm4641, %v4704, -1e+30
        %v4768 = vsel %vm4642, %v4705, -1e+30
        %v4769 = vsel %vm4643, %v4706, -1e+30
        %v4770 = vsel %vm4644, %v4707, -1e+30
        %v4771 = vsel %vm4645, %v4708, -1e+30
        %v4772 = vsel %vm4646, %v4709, -1e+30
        %v4773 = vsel %vm4647, %v4710, -1e+30
        %v4774 = vsel %vm4648, %v4711, -1e+30
        %v4775 = vsel %vm4649, %v4712, -1e+30
        %v4776 = vsel %vm4650, %v4713, -1e+30
        %v4777 = vsel %vm4651, %v4714, -1e+30
        %v4778 = vsel %vm4652, %v4715, -1e+30
        %v4779 = vsel %vm4653, %v4716, -1e+30
        %v4780 = vsel %vm4654, %v4717, -1e+30
        %v4781 = vsel %vm4655, %v4718, -1e+30
        %v4782 = vsel %vm4656, %v4719, -1e+30
        %v4783 = vsel %vm4657, %v4720, -1e+30
        %v4784 = vsel %vm4658, %v4721, -1e+30
        %v4785 = vsel %vm4659, %v4722, -1e+30
        %v4786 = vsel %vm4660, %v4723, -1e+30
        %v4787 = vsel %vm4661, %v4724, -1e+30
        %v4788 = vsel %vm4662, %v4725, -1e+30
        %v4789 = vsel %vm4663, %v4726, -1e+30
        %v4790 = vsel %vm4664, %v4727, -1e+30
        %v4791 = vsel %vm4665, %v4728, -1e+30
        %v4792 = vsel %vm4666, %v4729, -1e+30
        %v4793 = vsel %vm4667, %v4730, -1e+30
        %v4794 = vsel %vm4668, %v4731, -1e+30
        %v4795 = vsel %vm4669, %v4732, -1e+30
        %v4796 = vsel %vm4670, %v4733, -1e+30
        %v4797 = vsel %vm4671, %v4734, -1e+30
        %v4798 = vsel %vm4672, %v4735, -1e+30
        %v4799 = vsel %vm4673, %v4736, -1e+30
        %v4800 = vsel %vm4674, %v4737, -1e+30
        %v4801 = vsel %vm4675, %v4738, -1e+30
        %v4802 = vsel %vm4676, %v4739, -1e+30
        %v4803 = vsel %vm4677, %v4740, -1e+30
        %v4804 = vsel %vm4678, %v4741, -1e+30
        %v4805 = vsel %vm4679, %v4742, -1e+30
        %v4806 = vsel %vm4680, %v4743, -1e+30
        %v4807 = vsel %vm4681, %v4744, -1e+30
        %v4808 = vsel %vm4682, %v4745, -1e+30
        %v4809 = vsel %vm4683, %v4746, -1e+30
        %v4810 = vsel %vm4684, %v4747, -1e+30
        %v4811 = vsel %vm4685, %v4748, -1e+30
        %v4812 = vsel %vm4686, %v4749, -1e+30
        %v4813 = vsel %vm4687, %v4750, -1e+30
        %v4814 = vsel %vm4688, %v4751, -1e+30
        %v4815 = vsel %vm4689, %v4752, -1e+30
        %v4816 = vsel %vm4690, %v4753, -1e+30
        %v4817 = vsel %vm4691, %v4754, -1e+30
        %v4818 = vmul.f32 %v4755, 1.442695
        %v4819 = vpow.pop %v4818
        %v4820 = vmul.f32 %v4756, 1.442695
        %v4821 = vpow.pop %v4820
        %v4822 = vmul.f32 %v4757, 1.442695
        %v4823 = vpow.pop %v4822
        %v4824 = vmul.f32 %v4758, 1.442695
        %v4825 = vpow.pop %v4824
        %v4826 = vmul.f32 %v4759, 1.442695
        %v4827 = vpow.pop %v4826
        %v4828 = vmul.f32 %v4760, 1.442695
        %v4829 = vpow.pop %v4828
        %v4830 = vmul.f32 %v4761, 1.442695
        %v4831 = vpow.pop %v4830
        %v4832 = vmul.f32 %v4762, 1.442695
        %v4833 = vpow.pop %v4832
        %v4834 = vmul.f32 %v4763, 1.442695
        %v4835 = vpow.pop %v4834
        %v4836 = vmul.f32 %v4764, 1.442695
        %v4837 = vpow.pop %v4836
        %v4838 = vmul.f32 %v4765, 1.442695
        %v4839 = vpow.pop %v4838
        %v4840 = vmul.f32 %v4766, 1.442695
        %v4841 = vpow.pop %v4840
        %v4842 = vmul.f32 %v4767, 1.442695
        %v4843 = vpow.pop %v4842
        %v4844 = vmul.f32 %v4768, 1.442695
        %v4845 = vpow.pop %v4844
        %v4846 = vmul.f32 %v4769, 1.442695
        %v4847 = vpow.pop %v4846
        %v4848 = vmul.f32 %v4770, 1.442695
        %v4849 = vpow.pop %v4848
        %v4850 = vmul.f32 %v4771, 1.442695
        %v4851 = vpow.pop %v4850
        %v4852 = vmul.f32 %v4772, 1.442695
        %v4853 = vpow.pop %v4852
        %v4854 = vmul.f32 %v4773, 1.442695
        %v4855 = vpow.pop %v4854
        %v4856 = vmul.f32 %v4774, 1.442695
        %v4857 = vpow.pop %v4856
        %v4858 = vmul.f32 %v4775, 1.442695
        %v4859 = vpow.pop %v4858
        %v4860 = vmul.f32 %v4776, 1.442695
        %v4861 = vpow.pop %v4860
        %v4862 = vmul.f32 %v4777, 1.442695
        %v4863 = vpow.pop %v4862
        %v4864 = vmul.f32 %v4778, 1.442695
        %v4865 = vpow.pop %v4864
        %v4866 = vmul.f32 %v4779, 1.442695
        %v4867 = vpow.pop %v4866
        %v4868 = vmul.f32 %v4780, 1.442695
        %v4869 = vpow.pop %v4868
        %v4870 = vmul.f32 %v4781, 1.442695
        %v4871 = vpow.pop %v4870
        %v4872 = vmul.f32 %v4782, 1.442695
        %v4873 = vpow.pop %v4872
        %v4874 = vmul.f32 %v4783, 1.442695
        %v4875 = vpow.pop %v4874
        %v4876 = vmul.f32 %v4784, 1.442695
        %v4877 = vpow.pop %v4876
        %v4878 = vmul.f32 %v4785, 1.442695
        %v4879 = vpow.pop %v4878
        %v4880 = vmul.f32 %v4786, 1.442695
        %v4881 = vpow.pop %v4880
        %v4882 = vmul.f32 %v4787, 1.442695
        %v4883 = vpow.pop %v4882
        %v4884 = vmul.f32 %v4788, 1.442695
        %v4885 = vpow.pop %v4884
        %v4886 = vmul.f32 %v4789, 1.442695
        %v4887 = vpow.pop %v4886
        %v4888 = vmul.f32 %v4790, 1.442695
        %v4889 = vpow.pop %v4888
        %v4890 = vmul.f32 %v4791, 1.442695
        %v4891 = vpow.pop %v4890
        %v4892 = vmul.f32 %v4792, 1.442695
        %v4893 = vpow.pop %v4892
        %v4894 = vmul.f32 %v4793, 1.442695
        %v4895 = vpow.pop %v4894
        %v4896 = vmul.f32 %v4794, 1.442695
        %v4897 = vpow.pop %v4896
        %v4898 = vmul.f32 %v4795, 1.442695
        %v4899 = vpow.pop %v4898
        %v4900 = vmul.f32 %v4796, 1.442695
        %v4901 = vpow.pop %v4900
        %v4902 = vmul.f32 %v4797, 1.442695
        %v4903 = vpow.pop %v4902
        %v4904 = vmul.f32 %v4798, 1.442695
        %v4905 = vpow.pop %v4904
        %v4906 = vmul.f32 %v4799, 1.442695
        %v4907 = vpow.pop %v4906
        %v4908 = vmul.f32 %v4800, 1.442695
        %v4909 = vpow.pop %v4908
        %v4910 = vmul.f32 %v4801, 1.442695
        %v4911 = vpow.pop %v4910
        %v4912 = vmul.f32 %v4802, 1.442695
        %v4913 = vpow.pop %v4912
        %v4914 = vmul.f32 %v4803, 1.442695
        %v4915 = vpow.pop %v4914
        %v4916 = vmul.f32 %v4804, 1.442695
        %v4917 = vpow.pop %v4916
        %v4918 = vmul.f32 %v4805, 1.442695
        %v4919 = vpow.pop %v4918
        %v4920 = vmul.f32 %v4806, 1.442695
        %v4921 = vpow.pop %v4920
        %v4922 = vmul.f32 %v4807, 1.442695
        %v4923 = vpow.pop %v4922
        %v4924 = vmul.f32 %v4808, 1.442695
        %v4925 = vpow.pop %v4924
        %v4926 = vmul.f32 %v4809, 1.442695
        %v4927 = vpow.pop %v4926
        %v4928 = vmul.f32 %v4810, 1.442695
        %v4929 = vpow.pop %v4928
        %v4930 = vmul.f32 %v4811, 1.442695
        %v4931 = vpow.pop %v4930
        %v4932 = vmul.f32 %v4812, 1.442695
        %v4933 = vpow.pop %v4932
        %v4934 = vmul.f32 %v4813, 1.442695
        %v4935 = vpow.pop %v4934
        %v4936 = vmul.f32 %v4814, 1.442695
        %v4937 = vpow.pop %v4936
        %v4938 = vmul.f32 %v4815, 1.442695
        %v4939 = vpow.pop %v4938
        %v4940 = vmul.f32 %v4816, 1.442695
        %v4941 = vpow.pop %v4940
        %v4942 = vmul.f32 %v4817, 1.442695
        %v4943 = vpow.pop %v4942
        %4945 = vset.pattern.permute.xlu0 0
        %4946 = vperm.xlu0 %4945, %v4819
        %v4947 = vpop.permute.xlu0 %4946
        %4950 = vset.pattern.permute.xlu0 0
        %4951 = vperm.xlu0 %4950, %v4821
        %v4952 = vpop.permute.xlu0 %4951
        %4955 = vset.pattern.permute.xlu0 0
        %4956 = vperm.xlu0 %4955, %v4823
        %v4957 = vpop.permute.xlu0 %4956
        %4960 = vset.pattern.permute.xlu0 0
        %4961 = vperm.xlu0 %4960, %v4825
        %v4962 = vpop.permute.xlu0 %4961
        %4965 = vset.pattern.permute.xlu0 0
        %4966 = vperm.xlu0 %4965, %v4827
        %v4967 = vpop.permute.xlu0 %4966
        %4970 = vset.pattern.permute.xlu0 0
        %4971 = vperm.xlu0 %4970, %v4829
        %v4972 = vpop.permute.xlu0 %4971
        %4975 = vset.pattern.permute.xlu0 0
        %4976 = vperm.xlu0 %4975, %v4831
        %v4977 = vpop.permute.xlu0 %4976
        %4980 = vset.pattern.permute.xlu0 0
        %4981 = vperm.xlu0 %4980, %v4833
        %v4982 = vpop.permute.xlu0 %4981
        %4985 = vset.pattern.permute.xlu0 0
        %4986 = vperm.xlu0 %4985, %v4835
        %v4987 = vpop.permute.xlu0 %4986
        %4990 = vset.pattern.permute.xlu0 0
        %4991 = vperm.xlu0 %4990, %v4837
        %v4992 = vpop.permute.xlu0 %4991
        %4995 = vset.pattern.permute.xlu0 0
        %4996 = vperm.xlu0 %4995, %v4839
        %v4997 = vpop.permute.xlu0 %4996
        %5000 = vset.pattern.permute.xlu0 0
        %5001 = vperm.xlu0 %5000, %v4841
        %v5002 = vpop.permute.xlu0 %5001
        %5005 = vset.pattern.permute.xlu0 0
        %5006 = vperm.xlu0 %5005, %v4843
        %v5007 = vpop.permute.xlu0 %5006
        %5010 = vset.pattern.permute.xlu0 0
        %5011 = vperm.xlu0 %5010, %v4845
        %v5012 = vpop.permute.xlu0 %5011
        %5015 = vset.pattern.permute.xlu0 0
        %5016 = vperm.xlu0 %5015, %v4847
        %v5017 = vpop.permute.xlu0 %5016
        %5020 = vset.pattern.permute.xlu0 0
        %5021 = vperm.xlu0 %5020, %v4849
        %v5022 = vpop.permute.xlu0 %5021
        %5025 = vset.pattern.permute.xlu0 0
        %5026 = vperm.xlu0 %5025, %v4851
        %v5027 = vpop.permute.xlu0 %5026
        %5030 = vset.pattern.permute.xlu0 0
        %5031 = vperm.xlu0 %5030, %v4853
        %v5032 = vpop.permute.xlu0 %5031
        %5035 = vset.pattern.permute.xlu0 0
        %5036 = vperm.xlu0 %5035, %v4855
        %v5037 = vpop.permute.xlu0 %5036
        %5040 = vset.pattern.permute.xlu0 0
        %5041 = vperm.xlu0 %5040, %v4857
        %v5042 = vpop.permute.xlu0 %5041
        %5045 = vset.pattern.permute.xlu0 0
        %5046 = vperm.xlu0 %5045, %v4859
        %v5047 = vpop.permute.xlu0 %5046
        %5050 = vset.pattern.permute.xlu0 0
        %5051 = vperm.xlu0 %5050, %v4861
        %v5052 = vpop.permute.xlu0 %5051
        %5055 = vset.pattern.permute.xlu0 0
        %5056 = vperm.xlu0 %5055, %v4863
        %v5057 = vpop.permute.xlu0 %5056
        %5060 = vset.pattern.permute.xlu0 0
        %5061 = vperm.xlu0 %5060, %v4865
        %v5062 = vpop.permute.xlu0 %5061
        %5065 = vset.pattern.permute.xlu0 0
        %5066 = vperm.xlu0 %5065, %v4867
        %v5067 = vpop.permute.xlu0 %5066
        %5070 = vset.pattern.permute.xlu0 0
        %5071 = vperm.xlu0 %5070, %v4869
        %v5072 = vpop.permute.xlu0 %5071
        %5075 = vset.pattern.permute.xlu0 0
        %5076 = vperm.xlu0 %5075, %v4871
        %v5077 = vpop.permute.xlu0 %5076
        %5080 = vset.pattern.permute.xlu0 0
        %5081 = vperm.xlu0 %5080, %v4873
        %v5082 = vpop.permute.xlu0 %5081
        %5085 = vset.pattern.permute.xlu0 0
        %5086 = vperm.xlu0 %5085, %v4875
        %v5087 = vpop.permute.xlu0 %5086
        %5090 = vset.pattern.permute.xlu0 0
        %5091 = vperm.xlu0 %5090, %v4877
        %v5092 = vpop.permute.xlu0 %5091
        %5095 = vset.pattern.permute.xlu0 0
        %5096 = vperm.xlu0 %5095, %v4879
        %v5097 = vpop.permute.xlu0 %5096
        %5100 = vset.pattern.permute.xlu0 0
        %5101 = vperm.xlu0 %5100, %v4881
        %v5102 = vpop.permute.xlu0 %5101
        %5105 = vset.pattern.permute.xlu0 0
        %5106 = vperm.xlu0 %5105, %v4883
        %v5107 = vpop.permute.xlu0 %5106
        %5110 = vset.pattern.permute.xlu0 0
        %5111 = vperm.xlu0 %5110, %v4885
        %v5112 = vpop.permute.xlu0 %5111
        %5115 = vset.pattern.permute.xlu0 0
        %5116 = vperm.xlu0 %5115, %v4887
        %v5117 = vpop.permute.xlu0 %5116
        %5120 = vset.pattern.permute.xlu0 0
        %5121 = vperm.xlu0 %5120, %v4889
        %v5122 = vpop.permute.xlu0 %5121
        %5125 = vset.pattern.permute.xlu0 0
        %5126 = vperm.xlu0 %5125, %v4891
        %v5127 = vpop.permute.xlu0 %5126
        %5130 = vset.pattern.permute.xlu0 0
        %5131 = vperm.xlu0 %5130, %v4893
        %v5132 = vpop.permute.xlu0 %5131
        %5135 = vset.pattern.permute.xlu0 0
        %5136 = vperm.xlu0 %5135, %v4895
        %v5137 = vpop.permute.xlu0 %5136
        %5140 = vset.pattern.permute.xlu0 0
        %5141 = vperm.xlu0 %5140, %v4897
        %v5142 = vpop.permute.xlu0 %5141
        %5145 = vset.pattern.permute.xlu0 0
        %5146 = vperm.xlu0 %5145, %v4899
        %v5147 = vpop.permute.xlu0 %5146
        %5150 = vset.pattern.permute.xlu0 0
        %5151 = vperm.xlu0 %5150, %v4901
        %v5152 = vpop.permute.xlu0 %5151
        %5155 = vset.pattern.permute.xlu0 0
        %5156 = vperm.xlu0 %5155, %v4903
        %v5157 = vpop.permute.xlu0 %5156
        %5160 = vset.pattern.permute.xlu0 0
        %5161 = vperm.xlu0 %5160, %v4905
        %v5162 = vpop.permute.xlu0 %5161
        %5165 = vset.pattern.permute.xlu0 0
        %5166 = vperm.xlu0 %5165, %v4907
        %v5167 = vpop.permute.xlu0 %5166
        %5170 = vset.pattern.permute.xlu0 0
        %5171 = vperm.xlu0 %5170, %v4909
        %v5172 = vpop.permute.xlu0 %5171
        %5175 = vset.pattern.permute.xlu0 0
        %5176 = vperm.xlu0 %5175, %v4911
        %v5177 = vpop.permute.xlu0 %5176
        %5180 = vset.pattern.permute.xlu0 0
        %5181 = vperm.xlu0 %5180, %v4913
        %v5182 = vpop.permute.xlu0 %5181
        %5185 = vset.pattern.permute.xlu0 0
        %5186 = vperm.xlu0 %5185, %v4915
        %v5187 = vpop.permute.xlu0 %5186
        %5190 = vset.pattern.permute.xlu0 0
        %5191 = vperm.xlu0 %5190, %v4917
        %v5192 = vpop.permute.xlu0 %5191
        %5195 = vset.pattern.permute.xlu0 0
        %5196 = vperm.xlu0 %5195, %v4919
        %v5197 = vpop.permute.xlu0 %5196
        %5200 = vset.pattern.permute.xlu0 0
        %5201 = vperm.xlu0 %5200, %v4921
        %v5202 = vpop.permute.xlu0 %5201
        %5205 = vset.pattern.permute.xlu0 0
        %5206 = vperm.xlu0 %5205, %v4923
        %v5207 = vpop.permute.xlu0 %5206
        %5210 = vset.pattern.permute.xlu0 0
        %5211 = vperm.xlu0 %5210, %v4925
        %v5212 = vpop.permute.xlu0 %5211
        %5215 = vset.pattern.permute.xlu0 0
        %5216 = vperm.xlu0 %5215, %v4927
        %v5217 = vpop.permute.xlu0 %5216
        %5220 = vset.pattern.permute.xlu0 0
        %5221 = vperm.xlu0 %5220, %v4929
        %v5222 = vpop.permute.xlu0 %5221
        %5225 = vset.pattern.permute.xlu0 0
        %5226 = vperm.xlu0 %5225, %v4931
        %v5227 = vpop.permute.xlu0 %5226
        %5230 = vset.pattern.permute.xlu0 0
        %5231 = vperm.xlu0 %5230, %v4933
        %v5232 = vpop.permute.xlu0 %5231
        %5235 = vset.pattern.permute.xlu0 0
        %5236 = vperm.xlu0 %5235, %v4935
        %v5237 = vpop.permute.xlu0 %5236
        %5240 = vset.pattern.permute.xlu0 0
        %5241 = vperm.xlu0 %5240, %v4937
        %v5242 = vpop.permute.xlu0 %5241
        %5245 = vset.pattern.permute.xlu0 0
        %5246 = vperm.xlu0 %5245, %v4939
        %v5247 = vpop.permute.xlu0 %5246
        %5250 = vset.pattern.permute.xlu0 0
        %5251 = vperm.xlu0 %5250, %v4941
        %v5252 = vpop.permute.xlu0 %5251
        %5255 = vset.pattern.permute.xlu0 0
        %5256 = vperm.xlu0 %5255, %v4943
        %v5257 = vpop.permute.xlu0 %5256
        %v5259 = vmul.f32 %v4947, %v3395
        %v5260 = vmul.f32 %v4952, %v3396
        %v5261 = vmul.f32 %v4957, %v3397
        %v5262 = vmul.f32 %v4962, %v3398
        %v5263 = vmul.f32 %v4967, %v3399
        %v5264 = vmul.f32 %v4972, %v3400
        %v5265 = vmul.f32 %v4977, %v3401
        %v5266 = vmul.f32 %v4982, %v3402
        %v5267 = vmul.f32 %v4987, %v3403
        %v5268 = vmul.f32 %v4992, %v3404
        %v5269 = vmul.f32 %v4997, %v3405
        %v5270 = vmul.f32 %v5002, %v3406
        %v5271 = vmul.f32 %v5007, %v3407
        %v5272 = vmul.f32 %v5012, %v3408
        %v5273 = vmul.f32 %v5017, %v3409
        %v5274 = vmul.f32 %v5022, %v3410
        %v5275 = vmul.f32 %v5027, %v3411
        %v5276 = vmul.f32 %v5032, %v3412
        %v5277 = vmul.f32 %v5037, %v3413
        %v5278 = vmul.f32 %v5042, %v3414
        %v5279 = vmul.f32 %v5047, %v3415
        %v5280 = vmul.f32 %v5052, %v3416
        %v5281 = vmul.f32 %v5057, %v3417
        %v5282 = vmul.f32 %v5062, %v3418
        %v5283 = vmul.f32 %v5067, %v3419
        %v5284 = vmul.f32 %v5072, %v3420
        %v5285 = vmul.f32 %v5077, %v3421
        %v5286 = vmul.f32 %v5082, %v3422
        %v5287 = vmul.f32 %v5087, %v3423
        %v5288 = vmul.f32 %v5092, %v3424
        %v5289 = vmul.f32 %v5097, %v3425
        %v5290 = vmul.f32 %v5102, %v3426
        %v5291 = vmul.f32 %v5107, %v3427
        %v5292 = vmul.f32 %v5112, %v3428
        %v5293 = vmul.f32 %v5117, %v3429
        %v5294 = vmul.f32 %v5122, %v3430
        %v5295 = vmul.f32 %v5127, %v3431
        %v5296 = vmul.f32 %v5132, %v3432
        %v5297 = vmul.f32 %v5137, %v3433
        %v5298 = vmul.f32 %v5142, %v3434
        %v5299 = vmul.f32 %v5147, %v3435
        %v5300 = vmul.f32 %v5152, %v3436
        %v5301 = vmul.f32 %v5157, %v3437
        %v5302 = vmul.f32 %v5162, %v3438
        %v5303 = vmul.f32 %v5167, %v3439
        %v5304 = vmul.f32 %v5172, %v3440
        %v5305 = vmul.f32 %v5177, %v3441
        %v5306 = vmul.f32 %v5182, %v3442
        %v5307 = vmul.f32 %v5187, %v3443
        %v5308 = vmul.f32 %v5192, %v3444
        %v5309 = vmul.f32 %v5197, %v3445
        %v5310 = vmul.f32 %v5202, %v3446
        %v5311 = vmul.f32 %v5207, %v3447
        %v5312 = vmul.f32 %v5212, %v3448
        %v5313 = vmul.f32 %v5217, %v3449
        %v5314 = vmul.f32 %v5222, %v3450
        %v5315 = vmul.f32 %v5227, %v3451
        %v5316 = vmul.f32 %v5232, %v3452
        %v5317 = vmul.f32 %v5237, %v3453
        %v5318 = vmul.f32 %v5242, %v3454
        %v5319 = vmul.f32 %v5247, %v3455
        %v5320 = vmul.f32 %v5252, %v3456
        %v5321 = vmul.f32 %v5257, %v3457
        %5322 = vst.msk [vmem:[#allocation4] sm:$0xff] %vm3521, %v5259
        %5323 = vst.msk [vmem:[#allocation4 + $0x8] sm:$0xff] %vm3521, %v5260
        %5324 = vst.msk [vmem:[#allocation4 + $0x10] sm:$0xff] %vm3521, %v5261
        %5325 = vst.msk [vmem:[#allocation4 + $0x18] sm:$0xff] %vm3521, %v5262
        %5326 = vst.msk [vmem:[#allocation4 + $0x20] sm:$0xff] %vm3521, %v5263
        %5327 = vst.msk [vmem:[#allocation4 + $0x28] sm:$0xff] %vm3521, %v5264
        %5328 = vst.msk [vmem:[#allocation4 + $0x30] sm:$0xff] %vm3521, %v5265
        %5329 = vst.msk [vmem:[#allocation4 + $0x38] sm:$0xff] %vm3521, %v5266
        %5330 = vst.msk [vmem:[#allocation4 + $0x40] sm:$0xff] %vm3521, %v5267
        %5331 = vst.msk [vmem:[#allocation4 + $0x48] sm:$0xff] %vm3521, %v5268
        %5332 = vst.msk [vmem:[#allocation4 + $0x50] sm:$0xff] %vm3521, %v5269
        %5333 = vst.msk [vmem:[#allocation4 + $0x58] sm:$0xff] %vm3521, %v5270
        %5334 = vst.msk [vmem:[#allocation4 + $0x60] sm:$0xff] %vm3521, %v5271
        %5335 = vst.msk [vmem:[#allocation4 + $0x68] sm:$0xff] %vm3521, %v5272
        %5336 = vst.msk [vmem:[#allocation4 + $0x70] sm:$0xff] %vm3521, %v5273
        %5337 = vst.msk [vmem:[#allocation4 + $0x78] sm:$0xff] %vm3521, %v5274
        %5338 = vst.msk [vmem:[#allocation4 + $0x80] sm:$0xff] %vm3521, %v5275
        %5339 = vst.msk [vmem:[#allocation4 + $0x88] sm:$0xff] %vm3521, %v5276
        %5340 = vst.msk [vmem:[#allocation4 + $0x90] sm:$0xff] %vm3521, %v5277
        %5341 = vst.msk [vmem:[#allocation4 + $0x98] sm:$0xff] %vm3521, %v5278
        %5342 = vst.msk [vmem:[#allocation4 + $0xa0] sm:$0xff] %vm3521, %v5279
        %5343 = vst.msk [vmem:[#allocation4 + $0xa8] sm:$0xff] %vm3521, %v5280
        %5344 = vst.msk [vmem:[#allocation4 + $0xb0] sm:$0xff] %vm3521, %v5281
        %5345 = vst.msk [vmem:[#allocation4 + $0xb8] sm:$0xff] %vm3521, %v5282
        %5346 = vst.msk [vmem:[#allocation4 + $0xc0] sm:$0xff] %vm3521, %v5283
        %5347 = vst.msk [vmem:[#allocation4 + $0xc8] sm:$0xff] %vm3521, %v5284
        %5348 = vst.msk [vmem:[#allocation4 + $0xd0] sm:$0xff] %vm3521, %v5285
        %5349 = vst.msk [vmem:[#allocation4 + $0xd8] sm:$0xff] %vm3521, %v5286
        %5350 = vst.msk [vmem:[#allocation4 + $0xe0] sm:$0xff] %vm3521, %v5287
        %5351 = vst.msk [vmem:[#allocation4 + $0xe8] sm:$0xff] %vm3521, %v5288
        %5352 = vst.msk [vmem:[#allocation4 + $0xf0] sm:$0xff] %vm3521, %v5289
        %5353 = vst.msk [vmem:[#allocation4 + $0xf8] sm:$0xff] %vm3521, %v5290
        %5354 = vst.msk [vmem:[#allocation4 + $0x100] sm:$0xff] %vm3521, %v5291
        %5355 = vst.msk [vmem:[#allocation4 + $0x108] sm:$0xff] %vm3521, %v5292
        %5356 = vst.msk [vmem:[#allocation4 + $0x110] sm:$0xff] %vm3521, %v5293
        %5357 = vst.msk [vmem:[#allocation4 + $0x118] sm:$0xff] %vm3521, %v5294
        %5358 = vst.msk [vmem:[#allocation4 + $0x120] sm:$0xff] %vm3521, %v5295
        %5359 = vst.msk [vmem:[#allocation4 + $0x128] sm:$0xff] %vm3521, %v5296
        %5360 = vst.msk [vmem:[#allocation4 + $0x130] sm:$0xff] %vm3521, %v5297
        %5361 = vst.msk [vmem:[#allocation4 + $0x138] sm:$0xff] %vm3521, %v5298
        %5362 = vst.msk [vmem:[#allocation4 + $0x140] sm:$0xff] %vm3521, %v5299
        %5363 = vst.msk [vmem:[#allocation4 + $0x148] sm:$0xff] %vm3521, %v5300
        %5364 = vst.msk [vmem:[#allocation4 + $0x150] sm:$0xff] %vm3521, %v5301
        %5365 = vst.msk [vmem:[#allocation4 + $0x158] sm:$0xff] %vm3521, %v5302
        %5366 = vst.msk [vmem:[#allocation4 + $0x160] sm:$0xff] %vm3521, %v5303
        %5367 = vst.msk [vmem:[#allocation4 + $0x168] sm:$0xff] %vm3521, %v5304
        %5368 = vst.msk [vmem:[#allocation4 + $0x170] sm:$0xff] %vm3521, %v5305
        %5369 = vst.msk [vmem:[#allocation4 + $0x178] sm:$0xff] %vm3521, %v5306
        %5370 = vst.msk [vmem:[#allocation4 + $0x180] sm:$0xff] %vm3521, %v5307
        %5371 = vst.msk [vmem:[#allocation4 + $0x188] sm:$0xff] %vm3521, %v5308
        %5372 = vst.msk [vmem:[#allocation4 + $0x190] sm:$0xff] %vm3521, %v5309
        %5373 = vst.msk [vmem:[#allocation4 + $0x198] sm:$0xff] %vm3521, %v5310
        %5374 = vst.msk [vmem:[#allocation4 + $0x1a0] sm:$0xff] %vm3521, %v5311
        %5375 = vst.msk [vmem:[#allocation4 + $0x1a8] sm:$0xff] %vm3521, %v5312
        %5376 = vst.msk [vmem:[#allocation4 + $0x1b0] sm:$0xff] %vm3521, %v5313
        %5377 = vst.msk [vmem:[#allocation4 + $0x1b8] sm:$0xff] %vm3521, %v5314
        %5378 = vst.msk [vmem:[#allocation4 + $0x1c0] sm:$0xff] %vm3521, %v5315
        %5379 = vst.msk [vmem:[#allocation4 + $0x1c8] sm:$0xff] %vm3521, %v5316
        %5380 = vst.msk [vmem:[#allocation4 + $0x1d0] sm:$0xff] %vm3521, %v5317
        %5381 = vst.msk [vmem:[#allocation4 + $0x1d8] sm:$0xff] %vm3521, %v5318
        %5382 = vst.msk [vmem:[#allocation4 + $0x1e0] sm:$0xff] %vm3521, %v5319
        %5383 = vst.msk [vmem:[#allocation4 + $0x1e8] sm:$0xff] %vm3521, %v5320
        %5384 = vst.msk [vmem:[#allocation4 + $0x1f0] sm:$0xff] %vm3521, %v5321
        %5385 = vrot.lane.b32.xlu0 %v4819, 32
        %v5386 = vpop.permute.xlu0 %5385
        %5387 = vrot.lane.b32.xlu0 %v4821, 32
        %v5388 = vpop.permute.xlu0 %5387
        %5389 = vrot.lane.b32.xlu0 %v4823, 32
        %v5390 = vpop.permute.xlu0 %5389
        %5391 = vrot.lane.b32.xlu0 %v4825, 32
        %v5392 = vpop.permute.xlu0 %5391
        %5393 = vrot.lane.b32.xlu0 %v4827, 32
        %v5394 = vpop.permute.xlu0 %5393
        %5395 = vrot.lane.b32.xlu0 %v4829, 32
        %v5396 = vpop.permute.xlu0 %5395
        %5397 = vrot.lane.b32.xlu0 %v4831, 32
        %v5398 = vpop.permute.xlu0 %5397
        %5399 = vrot.lane.b32.xlu0 %v4833, 32
        %v5400 = vpop.permute.xlu0 %5399
        %5401 = vrot.lane.b32.xlu0 %v4835, 32
        %v5402 = vpop.permute.xlu0 %5401
        %5403 = vrot.lane.b32.xlu0 %v4837, 32
        %v5404 = vpop.permute.xlu0 %5403
        %5405 = vrot.lane.b32.xlu0 %v4839, 32
        %v5406 = vpop.permute.xlu0 %5405
        %5407 = vrot.lane.b32.xlu0 %v4841, 32
        %v5408 = vpop.permute.xlu0 %5407
        %5409 = vrot.lane.b32.xlu0 %v4843, 32
        %v5410 = vpop.permute.xlu0 %5409
        %5411 = vrot.lane.b32.xlu0 %v4845, 32
        %v5412 = vpop.permute.xlu0 %5411
        %5413 = vrot.lane.b32.xlu0 %v4847, 32
        %v5414 = vpop.permute.xlu0 %5413
        %5415 = vrot.lane.b32.xlu0 %v4849, 32
        %v5416 = vpop.permute.xlu0 %5415
        %5417 = vrot.lane.b32.xlu0 %v4851, 32
        %v5418 = vpop.permute.xlu0 %5417
        %5419 = vrot.lane.b32.xlu0 %v4853, 32
        %v5420 = vpop.permute.xlu0 %5419
        %5421 = vrot.lane.b32.xlu0 %v4855, 32
        %v5422 = vpop.permute.xlu0 %5421
        %5423 = vrot.lane.b32.xlu0 %v4857, 32
        %v5424 = vpop.permute.xlu0 %5423
        %5425 = vrot.lane.b32.xlu0 %v4859, 32
        %v5426 = vpop.permute.xlu0 %5425
        %5427 = vrot.lane.b32.xlu0 %v4861, 32
        %v5428 = vpop.permute.xlu0 %5427
        %5429 = vrot.lane.b32.xlu0 %v4863, 32
        %v5430 = vpop.permute.xlu0 %5429
        %5431 = vrot.lane.b32.xlu0 %v4865, 32
        %v5432 = vpop.permute.xlu0 %5431
        %5433 = vrot.lane.b32.xlu0 %v4867, 32
        %v5434 = vpop.permute.xlu0 %5433
        %5435 = vrot.lane.b32.xlu0 %v4869, 32
        %v5436 = vpop.permute.xlu0 %5435
        %5437 = vrot.lane.b32.xlu0 %v4871, 32
        %v5438 = vpop.permute.xlu0 %5437
        %5439 = vrot.lane.b32.xlu0 %v4873, 32
        %v5440 = vpop.permute.xlu0 %5439
        %5441 = vrot.lane.b32.xlu0 %v4875, 32
        %v5442 = vpop.permute.xlu0 %5441
        %5443 = vrot.lane.b32.xlu0 %v4877, 32
        %v5444 = vpop.permute.xlu0 %5443
        %5445 = vrot.lane.b32.xlu0 %v4879, 32
        %v5446 = vpop.permute.xlu0 %5445
        %5447 = vrot.lane.b32.xlu0 %v4881, 32
        %v5448 = vpop.permute.xlu0 %5447
        %5449 = vrot.lane.b32.xlu0 %v4883, 32
        %v5450 = vpop.permute.xlu0 %5449
        %5451 = vrot.lane.b32.xlu0 %v4885, 32
        %v5452 = vpop.permute.xlu0 %5451
        %5453 = vrot.lane.b32.xlu0 %v4887, 32
        %v5454 = vpop.permute.xlu0 %5453
        %5455 = vrot.lane.b32.xlu0 %v4889, 32
        %v5456 = vpop.permute.xlu0 %5455
        %5457 = vrot.lane.b32.xlu0 %v4891, 32
        %v5458 = vpop.permute.xlu0 %5457
        %5459 = vrot.lane.b32.xlu0 %v4893, 32
        %v5460 = vpop.permute.xlu0 %5459
        %5461 = vrot.lane.b32.xlu0 %v4895, 32
        %v5462 = vpop.permute.xlu0 %5461
        %5463 = vrot.lane.b32.xlu0 %v4897, 32
        %v5464 = vpop.permute.xlu0 %5463
        %5465 = vrot.lane.b32.xlu0 %v4899, 32
        %v5466 = vpop.permute.xlu0 %5465
        %5467 = vrot.lane.b32.xlu0 %v4901, 32
        %v5468 = vpop.permute.xlu0 %5467
        %5469 = vrot.lane.b32.xlu0 %v4903, 32
        %v5470 = vpop.permute.xlu0 %5469
        %5471 = vrot.lane.b32.xlu0 %v4905, 32
        %v5472 = vpop.permute.xlu0 %5471
        %5473 = vrot.lane.b32.xlu0 %v4907, 32
        %v5474 = vpop.permute.xlu0 %5473
        %5475 = vrot.lane.b32.xlu0 %v4909, 32
        %v5476 = vpop.permute.xlu0 %5475
        %5477 = vrot.lane.b32.xlu0 %v4911, 32
        %v5478 = vpop.permute.xlu0 %5477
        %5479 = vrot.lane.b32.xlu0 %v4913, 32
        %v5480 = vpop.permute.xlu0 %5479
        %5481 = vrot.lane.b32.xlu0 %v4915, 32
        %v5482 = vpop.permute.xlu0 %5481
        %5483 = vrot.lane.b32.xlu0 %v4917, 32
        %v5484 = vpop.permute.xlu0 %5483
        %5485 = vrot.lane.b32.xlu0 %v4919, 32
        %v5486 = vpop.permute.xlu0 %5485
        %5487 = vrot.lane.b32.xlu0 %v4921, 32
        %v5488 = vpop.permute.xlu0 %5487
        %5489 = vrot.lane.b32.xlu0 %v4923, 32
        %v5490 = vpop.permute.xlu0 %5489
        %5491 = vrot.lane.b32.xlu0 %v4925, 32
        %v5492 = vpop.permute.xlu0 %5491
        %5493 = vrot.lane.b32.xlu0 %v4927, 32
        %v5494 = vpop.permute.xlu0 %5493
        %5495 = vrot.lane.b32.xlu0 %v4929, 32
        %v5496 = vpop.permute.xlu0 %5495
        %5497 = vrot.lane.b32.xlu0 %v4931, 32
        %v5498 = vpop.permute.xlu0 %5497
        %5499 = vrot.lane.b32.xlu0 %v4933, 32
        %v5500 = vpop.permute.xlu0 %5499
        %5501 = vrot.lane.b32.xlu0 %v4935, 32
        %v5502 = vpop.permute.xlu0 %5501
        %5503 = vrot.lane.b32.xlu0 %v4937, 32
        %v5504 = vpop.permute.xlu0 %5503
        %5505 = vrot.lane.b32.xlu0 %v4939, 32
        %v5506 = vpop.permute.xlu0 %5505
        %5507 = vrot.lane.b32.xlu0 %v4941, 32
        %v5508 = vpop.permute.xlu0 %5507
        %5509 = vrot.lane.b32.xlu0 %v4943, 32
        %v5510 = vpop.permute.xlu0 %5509
        %vm5574 = vcmask 269568
        %5575 = vst.msk [vmem:[#allocation4] sm:$0xff] %vm5574, %v5386
        %5576 = vst.msk [vmem:[#allocation4 + $0x8] sm:$0xff] %vm5574, %v5388
        %5577 = vst.msk [vmem:[#allocation4 + $0x10] sm:$0xff] %vm5574, %v5390
        %5578 = vst.msk [vmem:[#allocation4 + $0x18] sm:$0xff] %vm5574, %v5392
        %5579 = vst.msk [vmem:[#allocation4 + $0x20] sm:$0xff] %vm5574, %v5394
        %5580 = vst.msk [vmem:[#allocation4 + $0x28] sm:$0xff] %vm5574, %v5396
        %5581 = vst.msk [vmem:[#allocation4 + $0x30] sm:$0xff] %vm5574, %v5398
        %5582 = vst.msk [vmem:[#allocation4 + $0x38] sm:$0xff] %vm5574, %v5400
        %5583 = vst.msk [vmem:[#allocation4 + $0x40] sm:$0xff] %vm5574, %v5402
        %5584 = vst.msk [vmem:[#allocation4 + $0x48] sm:$0xff] %vm5574, %v5404
        %5585 = vst.msk [vmem:[#allocation4 + $0x50] sm:$0xff] %vm5574, %v5406
        %5586 = vst.msk [vmem:[#allocation4 + $0x58] sm:$0xff] %vm5574, %v5408
        %5587 = vst.msk [vmem:[#allocation4 + $0x60] sm:$0xff] %vm5574, %v5410
        %5588 = vst.msk [vmem:[#allocation4 + $0x68] sm:$0xff] %vm5574, %v5412
        %5589 = vst.msk [vmem:[#allocation4 + $0x70] sm:$0xff] %vm5574, %v5414
        %5590 = vst.msk [vmem:[#allocation4 + $0x78] sm:$0xff] %vm5574, %v5416
        %5591 = vst.msk [vmem:[#allocation4 + $0x80] sm:$0xff] %vm5574, %v5418
        %5592 = vst.msk [vmem:[#allocation4 + $0x88] sm:$0xff] %vm5574, %v5420
        %5593 = vst.msk [vmem:[#allocation4 + $0x90] sm:$0xff] %vm5574, %v5422
        %5594 = vst.msk [vmem:[#allocation4 + $0x98] sm:$0xff] %vm5574, %v5424
        %5595 = vst.msk [vmem:[#allocation4 + $0xa0] sm:$0xff] %vm5574, %v5426
        %5596 = vst.msk [vmem:[#allocation4 + $0xa8] sm:$0xff] %vm5574, %v5428
        %5597 = vst.msk [vmem:[#allocation4 + $0xb0] sm:$0xff] %vm5574, %v5430
        %5598 = vst.msk [vmem:[#allocation4 + $0xb8] sm:$0xff] %vm5574, %v5432
        %5599 = vst.msk [vmem:[#allocation4 + $0xc0] sm:$0xff] %vm5574, %v5434
        %5600 = vst.msk [vmem:[#allocation4 + $0xc8] sm:$0xff] %vm5574, %v5436
        %5601 = vst.msk [vmem:[#allocation4 + $0xd0] sm:$0xff] %vm5574, %v5438
        %5602 = vst.msk [vmem:[#allocation4 + $0xd8] sm:$0xff] %vm5574, %v5440
        %5603 = vst.msk [vmem:[#allocation4 + $0xe0] sm:$0xff] %vm5574, %v5442
        %5604 = vst.msk [vmem:[#allocation4 + $0xe8] sm:$0xff] %vm5574, %v5444
        %5605 = vst.msk [vmem:[#allocation4 + $0xf0] sm:$0xff] %vm5574, %v5446
        %5606 = vst.msk [vmem:[#allocation4 + $0xf8] sm:$0xff] %vm5574, %v5448
        %5607 = vst.msk [vmem:[#allocation4 + $0x100] sm:$0xff] %vm5574, %v5450
        %5608 = vst.msk [vmem:[#allocation4 + $0x108] sm:$0xff] %vm5574, %v5452
        %5609 = vst.msk [vmem:[#allocation4 + $0x110] sm:$0xff] %vm5574, %v5454
        %5610 = vst.msk [vmem:[#allocation4 + $0x118] sm:$0xff] %vm5574, %v5456
        %5611 = vst.msk [vmem:[#allocation4 + $0x120] sm:$0xff] %vm5574, %v5458
        %5612 = vst.msk [vmem:[#allocation4 + $0x128] sm:$0xff] %vm5574, %v5460
        %5613 = vst.msk [vmem:[#allocation4 + $0x130] sm:$0xff] %vm5574, %v5462
        %5614 = vst.msk [vmem:[#allocation4 + $0x138] sm:$0xff] %vm5574, %v5464
        %5615 = vst.msk [vmem:[#allocation4 + $0x140] sm:$0xff] %vm5574, %v5466
        %5616 = vst.msk [vmem:[#allocation4 + $0x148] sm:$0xff] %vm5574, %v5468
        %5617 = vst.msk [vmem:[#allocation4 + $0x150] sm:$0xff] %vm5574, %v5470
        %5618 = vst.msk [vmem:[#allocation4 + $0x158] sm:$0xff] %vm5574, %v5472
        %5619 = vst.msk [vmem:[#allocation4 + $0x160] sm:$0xff] %vm5574, %v5474
        %5620 = vst.msk [vmem:[#allocation4 + $0x168] sm:$0xff] %vm5574, %v5476
        %5621 = vst.msk [vmem:[#allocation4 + $0x170] sm:$0xff] %vm5574, %v5478
        %5622 = vst.msk [vmem:[#allocation4 + $0x178] sm:$0xff] %vm5574, %v5480
        %5623 = vst.msk [vmem:[#allocation4 + $0x180] sm:$0xff] %vm5574, %v5482
        %5624 = vst.msk [vmem:[#allocation4 + $0x188] sm:$0xff] %vm5574, %v5484
        %5625 = vst.msk [vmem:[#allocation4 + $0x190] sm:$0xff] %vm5574, %v5486
        %5626 = vst.msk [vmem:[#allocation4 + $0x198] sm:$0xff] %vm5574, %v5488
        %5627 = vst.msk [vmem:[#allocation4 + $0x1a0] sm:$0xff] %vm5574, %v5490
        %5628 = vst.msk [vmem:[#allocation4 + $0x1a8] sm:$0xff] %vm5574, %v5492
        %5629 = vst.msk [vmem:[#allocation4 + $0x1b0] sm:$0xff] %vm5574, %v5494
        %5630 = vst.msk [vmem:[#allocation4 + $0x1b8] sm:$0xff] %vm5574, %v5496
        %5631 = vst.msk [vmem:[#allocation4 + $0x1c0] sm:$0xff] %vm5574, %v5498
        %5632 = vst.msk [vmem:[#allocation4 + $0x1c8] sm:$0xff] %vm5574, %v5500
        %5633 = vst.msk [vmem:[#allocation4 + $0x1d0] sm:$0xff] %vm5574, %v5502
        %5634 = vst.msk [vmem:[#allocation4 + $0x1d8] sm:$0xff] %vm5574, %v5504
        %5635 = vst.msk [vmem:[#allocation4 + $0x1e0] sm:$0xff] %vm5574, %v5506
        %5636 = vst.msk [vmem:[#allocation4 + $0x1e8] sm:$0xff] %vm5574, %v5508
        %5637 = vst.msk [vmem:[#allocation4 + $0x1f0] sm:$0xff] %vm5574, %v5510
        %v5638 = vld [vmem:[#allocation3] sm:$0xff]
        %v5639 = vld [vmem:[#allocation3 + $0x8] sm:$0xff]
        %v5640 = vld [vmem:[#allocation3 + $0x10] sm:$0xff]
        %v5641 = vld [vmem:[#allocation3 + $0x18] sm:$0xff]
        %v5642 = vld [vmem:[#allocation3 + $0x20] sm:$0xff]
        %v5643 = vld [vmem:[#allocation3 + $0x28] sm:$0xff]
        %v5644 = vld [vmem:[#allocation3 + $0x30] sm:$0xff]
        %v5645 = vld [vmem:[#allocation3 + $0x38] sm:$0xff]
        %v5646 = vld [vmem:[#allocation3 + $0x40] sm:$0xff]
        %v5647 = vld [vmem:[#allocation3 + $0x48] sm:$0xff]
        %v5648 = vld [vmem:[#allocation3 + $0x50] sm:$0xff]
        %v5649 = vld [vmem:[#allocation3 + $0x58] sm:$0xff]
        %v5650 = vld [vmem:[#allocation3 + $0x60] sm:$0xff]
        %v5651 = vld [vmem:[#allocation3 + $0x68] sm:$0xff]
        %v5652 = vld [vmem:[#allocation3 + $0x70] sm:$0xff]
        %v5653 = vld [vmem:[#allocation3 + $0x78] sm:$0xff]
        %v5654 = vld [vmem:[#allocation3 + $0x80] sm:$0xff]
        %v5655 = vld [vmem:[#allocation3 + $0x88] sm:$0xff]
        %v5656 = vld [vmem:[#allocation3 + $0x90] sm:$0xff]
        %v5657 = vld [vmem:[#allocation3 + $0x98] sm:$0xff]
        %v5658 = vld [vmem:[#allocation3 + $0xa0] sm:$0xff]
        %v5659 = vld [vmem:[#allocation3 + $0xa8] sm:$0xff]
        %v5660 = vld [vmem:[#allocation3 + $0xb0] sm:$0xff]
        %v5661 = vld [vmem:[#allocation3 + $0xb8] sm:$0xff]
        %v5662 = vld [vmem:[#allocation3 + $0xc0] sm:$0xff]
        %v5663 = vld [vmem:[#allocation3 + $0xc8] sm:$0xff]
        %v5664 = vld [vmem:[#allocation3 + $0xd0] sm:$0xff]
        %v5665 = vld [vmem:[#allocation3 + $0xd8] sm:$0xff]
        %v5666 = vld [vmem:[#allocation3 + $0xe0] sm:$0xff]
        %v5667 = vld [vmem:[#allocation3 + $0xe8] sm:$0xff]
        %v5668 = vld [vmem:[#allocation3 + $0xf0] sm:$0xff]
        %v5669 = vld [vmem:[#allocation3 + $0xf8] sm:$0xff]
        %v5670 = vld [vmem:[#allocation4] sm:$0xff]
        %v5671 = vld [vmem:[#allocation4 + $0x8] sm:$0xff]
        %v5672 = vld [vmem:[#allocation4 + $0x10] sm:$0xff]
        %v5673 = vld [vmem:[#allocation4 + $0x18] sm:$0xff]
        %v5674 = vld [vmem:[#allocation4 + $0x20] sm:$0xff]
        %v5675 = vld [vmem:[#allocation4 + $0x28] sm:$0xff]
        %v5676 = vld [vmem:[#allocation4 + $0x30] sm:$0xff]
        %v5677 = vld [vmem:[#allocation4 + $0x38] sm:$0xff]
        %v5678 = vld [vmem:[#allocation4 + $0x40] sm:$0xff]
        %v5679 = vld [vmem:[#allocation4 + $0x48] sm:$0xff]
        %v5680 = vld [vmem:[#allocation4 + $0x50] sm:$0xff]
        %v5681 = vld [vmem:[#allocation4 + $0x58] sm:$0xff]
        %v5682 = vld [vmem:[#allocation4 + $0x60] sm:$0xff]
        %v5683 = vld [vmem:[#allocation4 + $0x68] sm:$0xff]
        %v5684 = vld [vmem:[#allocation4 + $0x70] sm:$0xff]
        %v5685 = vld [vmem:[#allocation4 + $0x78] sm:$0xff]
        %v5686 = vld [vmem:[#allocation4 + $0x80] sm:$0xff]
        %v5687 = vld [vmem:[#allocation4 + $0x88] sm:$0xff]
        %v5688 = vld [vmem:[#allocation4 + $0x90] sm:$0xff]
        %v5689 = vld [vmem:[#allocation4 + $0x98] sm:$0xff]
        %v5690 = vld [vmem:[#allocation4 + $0xa0] sm:$0xff]
        %v5691 = vld [vmem:[#allocation4 + $0xa8] sm:$0xff]
        %v5692 = vld [vmem:[#allocation4 + $0xb0] sm:$0xff]
        %v5693 = vld [vmem:[#allocation4 + $0xb8] sm:$0xff]
        %v5694 = vld [vmem:[#allocation4 + $0xc0] sm:$0xff]
        %v5695 = vld [vmem:[#allocation4 + $0xc8] sm:$0xff]
        %v5696 = vld [vmem:[#allocation4 + $0xd0] sm:$0xff]
        %v5697 = vld [vmem:[#allocation4 + $0xd8] sm:$0xff]
        %v5698 = vld [vmem:[#allocation4 + $0xe0] sm:$0xff]
        %v5699 = vld [vmem:[#allocation4 + $0xe8] sm:$0xff]
        %v5700 = vld [vmem:[#allocation4 + $0xf0] sm:$0xff]
        %v5701 = vld [vmem:[#allocation4 + $0xf8] sm:$0xff]
        %v5702 = vld [vmem:[#allocation4 + $0x100] sm:$0xff]
        %v5703 = vld [vmem:[#allocation4 + $0x108] sm:$0xff]
        %v5704 = vld [vmem:[#allocation4 + $0x110] sm:$0xff]
        %v5705 = vld [vmem:[#allocation4 + $0x118] sm:$0xff]
        %v5706 = vld [vmem:[#allocation4 + $0x120] sm:$0xff]
        %v5707 = vld [vmem:[#allocation4 + $0x128] sm:$0xff]
        %v5708 = vld [vmem:[#allocation4 + $0x130] sm:$0xff]
        %v5709 = vld [vmem:[#allocation4 + $0x138] sm:$0xff]
        %v5710 = vld [vmem:[#allocation4 + $0x140] sm:$0xff]
        %v5711 = vld [vmem:[#allocation4 + $0x148] sm:$0xff]
        %v5712 = vld [vmem:[#allocation4 + $0x150] sm:$0xff]
        %v5713 = vld [vmem:[#allocation4 + $0x158] sm:$0xff]
        %v5714 = vld [vmem:[#allocation4 + $0x160] sm:$0xff]
        %v5715 = vld [vmem:[#allocation4 + $0x168] sm:$0xff]
        %v5716 = vld [vmem:[#allocation4 + $0x170] sm:$0xff]
        %v5717 = vld [vmem:[#allocation4 + $0x178] sm:$0xff]
        %v5718 = vld [vmem:[#allocation4 + $0x180] sm:$0xff]
        %v5719 = vld [vmem:[#allocation4 + $0x188] sm:$0xff]
        %v5720 = vld [vmem:[#allocation4 + $0x190] sm:$0xff]
        %v5721 = vld [vmem:[#allocation4 + $0x198] sm:$0xff]
        %v5722 = vld [vmem:[#allocation4 + $0x1a0] sm:$0xff]
        %v5723 = vld [vmem:[#allocation4 + $0x1a8] sm:$0xff]
        %v5724 = vld [vmem:[#allocation4 + $0x1b0] sm:$0xff]
        %v5725 = vld [vmem:[#allocation4 + $0x1b8] sm:$0xff]
        %v5726 = vld [vmem:[#allocation4 + $0x1c0] sm:$0xff]
        %v5727 = vld [vmem:[#allocation4 + $0x1c8] sm:$0xff]
        %v5728 = vld [vmem:[#allocation4 + $0x1d0] sm:$0xff]
        %v5729 = vld [vmem:[#allocation4 + $0x1d8] sm:$0xff]
        %v5730 = vld [vmem:[#allocation4 + $0x1e0] sm:$0xff]
        %v5731 = vld [vmem:[#allocation4 + $0x1e8] sm:$0xff]
        %v5732 = vld [vmem:[#allocation4 + $0x1f0] sm:$0xff]
        %5733 = vxpose.xlu0.b32.start [1/16] %v1008, 128
        %5734 = vxpose.xlu0.b32.cont [2/16] %v1010, 128
        %5735 = vxpose.xlu0.b32.cont [3/16] %v1012, 128
        %5736 = vxpose.xlu0.b32.cont [4/16] %v1014, 128
        %5737 = vxpose.xlu0.b32.cont [5/16] %v1016, 128
        %5738 = vxpose.xlu0.b32.cont [6/16] %v1018, 128
        %5739 = vxpose.xlu0.b32.cont [7/16] %v1020, 128
        %5740 = vxpose.xlu0.b32.cont [8/16] %v1022, 128
        %5741 = vxpose.xlu0.b32.cont [9/16] %v1024, 128
        %5742 = vxpose.xlu0.b32.cont [10/16] %v1026, 128
        %5743 = vxpose.xlu0.b32.cont [11/16] %v1028, 128
        %5744 = vxpose.xlu0.b32.cont [12/16] %v1030, 128
        %5745 = vxpose.xlu0.b32.cont [13/16] %v1032, 128
        %5746 = vxpose.xlu0.b32.cont [14/16] %v1034, 128
        %5747 = vxpose.xlu0.b32.cont [15/16] %v1036, 128
        %5748 = vxpose.xlu0.b32.end [16/16] %v1038, 128
        %v5749 = vpop.trf.xlu0
        %v5750 = vpop.trf.xlu0
        %v5751 = vpop.trf.xlu0
        %v5752 = vpop.trf.xlu0
        %v5753 = vpop.trf.xlu0
        %v5754 = vpop.trf.xlu0
        %v5755 = vpop.trf.xlu0
        %v5756 = vpop.trf.xlu0
        %v5757 = vpop.trf.xlu0
        %v5758 = vpop.trf.xlu0
        %v5759 = vpop.trf.xlu0
        %v5760 = vpop.trf.xlu0
        %v5761 = vpop.trf.xlu0
        %v5762 = vpop.trf.xlu0
        %v5763 = vpop.trf.xlu0
        %v5764 = vpop.trf.xlu0
        %5765 = vxpose.xlu0.b32.start [1/16] %v1009, 128
        %5766 = vxpose.xlu0.b32.cont [2/16] %v1011, 128
        %5767 = vxpose.xlu0.b32.cont [3/16] %v1013, 128
        %5768 = vxpose.xlu0.b32.cont [4/16] %v1015, 128
        %5769 = vxpose.xlu0.b32.cont [5/16] %v1017, 128
        %5770 = vxpose.xlu0.b32.cont [6/16] %v1019, 128
        %5771 = vxpose.xlu0.b32.cont [7/16] %v1021, 128
        %5772 = vxpose.xlu0.b32.cont [8/16] %v1023, 128
        %5773 = vxpose.xlu0.b32.cont [9/16] %v1025, 128
        %5774 = vxpose.xlu0.b32.cont [10/16] %v1027, 128
        %5775 = vxpose.xlu0.b32.cont [11/16] %v1029, 128
        %5776 = vxpose.xlu0.b32.cont [12/16] %v1031, 128
        %5777 = vxpose.xlu0.b32.cont [13/16] %v1033, 128
        %5778 = vxpose.xlu0.b32.cont [14/16] %v1035, 128
        %5779 = vxpose.xlu0.b32.cont [15/16] %v1037, 128
        %5780 = vxpose.xlu0.b32.end [16/16] %v1039, 128
        %v5781 = vpop.trf.xlu0
        %v5782 = vpop.trf.xlu0
        %v5783 = vpop.trf.xlu0
        %v5784 = vpop.trf.xlu0
        %v5785 = vpop.trf.xlu0
        %v5786 = vpop.trf.xlu0
        %v5787 = vpop.trf.xlu0
        %v5788 = vpop.trf.xlu0
        %v5789 = vpop.trf.xlu0
        %v5790 = vpop.trf.xlu0
        %v5791 = vpop.trf.xlu0
        %v5792 = vpop.trf.xlu0
        %v5793 = vpop.trf.xlu0
        %v5794 = vpop.trf.xlu0
        %v5795 = vpop.trf.xlu0
        %v5796 = vpop.trf.xlu0
        %5797 = vxpose.xlu0.b32.start [1/16] %v1040, 128
        %5798 = vxpose.xlu0.b32.cont [2/16] %v1042, 128
        %5799 = vxpose.xlu0.b32.cont [3/16] %v1044, 128
        %5800 = vxpose.xlu0.b32.cont [4/16] %v1046, 128
        %5801 = vxpose.xlu0.b32.cont [5/16] %v1048, 128
        %5802 = vxpose.xlu0.b32.cont [6/16] %v1050, 128
        %5803 = vxpose.xlu0.b32.cont [7/16] %v1052, 128
        %5804 = vxpose.xlu0.b32.cont [8/16] %v1054, 128
        %5805 = vxpose.xlu0.b32.cont [9/16] %v1056, 128
        %5806 = vxpose.xlu0.b32.cont [10/16] %v1058, 128
        %5807 = vxpose.xlu0.b32.cont [11/16] %v1060, 128
        %5808 = vxpose.xlu0.b32.cont [12/16] %v1062, 128
        %5809 = vxpose.xlu0.b32.cont [13/16] %v1064, 128
        %5810 = vxpose.xlu0.b32.cont [14/16] %v1066, 128
        %5811 = vxpose.xlu0.b32.cont [15/16] %v1068, 128
        %5812 = vxpose.xlu0.b32.end [16/16] %v1070, 128
        %v5813 = vpop.trf.xlu0
        %v5814 = vpop.trf.xlu0
        %v5815 = vpop.trf.xlu0
        %v5816 = vpop.trf.xlu0
        %v5817 = vpop.trf.xlu0
        %v5818 = vpop.trf.xlu0
        %v5819 = vpop.trf.xlu0
        %v5820 = vpop.trf.xlu0
        %v5821 = vpop.trf.xlu0
        %v5822 = vpop.trf.xlu0
        %v5823 = vpop.trf.xlu0
        %v5824 = vpop.trf.xlu0
        %v5825 = vpop.trf.xlu0
        %v5826 = vpop.trf.xlu0
        %v5827 = vpop.trf.xlu0
        %v5828 = vpop.trf.xlu0
        %5829 = vxpose.xlu0.b32.start [1/16] %v1041, 128
        %5830 = vxpose.xlu0.b32.cont [2/16] %v1043, 128
        %5831 = vxpose.xlu0.b32.cont [3/16] %v1045, 128
        %5832 = vxpose.xlu0.b32.cont [4/16] %v1047, 128
        %5833 = vxpose.xlu0.b32.cont [5/16] %v1049, 128
        %5834 = vxpose.xlu0.b32.cont [6/16] %v1051, 128
        %5835 = vxpose.xlu0.b32.cont [7/16] %v1053, 128
        %5836 = vxpose.xlu0.b32.cont [8/16] %v1055, 128
        %5837 = vxpose.xlu0.b32.cont [9/16] %v1057, 128
        %5838 = vxpose.xlu0.b32.cont [10/16] %v1059, 128
        %5839 = vxpose.xlu0.b32.cont [11/16] %v1061, 128
        %5840 = vxpose.xlu0.b32.cont [12/16] %v1063, 128
        %5841 = vxpose.xlu0.b32.cont [13/16] %v1065, 128
        %5842 = vxpose.xlu0.b32.cont [14/16] %v1067, 128
        %5843 = vxpose.xlu0.b32.cont [15/16] %v1069, 128
        %5844 = vxpose.xlu0.b32.end [16/16] %v1071, 128
        %v5845 = vpop.trf.xlu0
        %v5846 = vpop.trf.xlu0
        %v5847 = vpop.trf.xlu0
        %v5848 = vpop.trf.xlu0
        %v5849 = vpop.trf.xlu0
        %v5850 = vpop.trf.xlu0
        %v5851 = vpop.trf.xlu0
        %v5852 = vpop.trf.xlu0
        %v5853 = vpop.trf.xlu0
        %v5854 = vpop.trf.xlu0
        %v5855 = vpop.trf.xlu0
        %v5856 = vpop.trf.xlu0
        %v5857 = vpop.trf.xlu0
        %v5858 = vpop.trf.xlu0
        %v5859 = vpop.trf.xlu0
        %v5860 = vpop.trf.xlu0
        %5861 = vxpose.xlu0.b32.start [1/16] %v1072, 128
        %5862 = vxpose.xlu0.b32.cont [2/16] %v1074, 128
        %5863 = vxpose.xlu0.b32.cont [3/16] %v1076, 128
        %5864 = vxpose.xlu0.b32.cont [4/16] %v1078, 128
        %5865 = vxpose.xlu0.b32.cont [5/16] %v1080, 128
        %5866 = vxpose.xlu0.b32.cont [6/16] %v1082, 128
        %5867 = vxpose.xlu0.b32.cont [7/16] %v1084, 128
        %5868 = vxpose.xlu0.b32.cont [8/16] %v1086, 128
        %5869 = vxpose.xlu0.b32.cont [9/16] %v1088, 128
        %5870 = vxpose.xlu0.b32.cont [10/16] %v1090, 128
        %5871 = vxpose.xlu0.b32.cont [11/16] %v1092, 128
        %5872 = vxpose.xlu0.b32.cont [12/16] %v1094, 128
        %5873 = vxpose.xlu0.b32.cont [13/16] %v1096, 128
        %5874 = vxpose.xlu0.b32.cont [14/16] %v1098, 128
        %5875 = vxpose.xlu0.b32.cont [15/16] %v1100, 128
        %5876 = vxpose.xlu0.b32.end [16/16] %v1102, 128
        %v5877 = vpop.trf.xlu0
        %v5878 = vpop.trf.xlu0
        %v5879 = vpop.trf.xlu0
        %v5880 = vpop.trf.xlu0
        %v5881 = vpop.trf.xlu0
        %v5882 = vpop.trf.xlu0
        %v5883 = vpop.trf.xlu0
        %v5884 = vpop.trf.xlu0
        %v5885 = vpop.trf.xlu0
        %v5886 = vpop.trf.xlu0
        %v5887 = vpop.trf.xlu0
        %v5888 = vpop.trf.xlu0
        %v5889 = vpop.trf.xlu0
        %v5890 = vpop.trf.xlu0
        %v5891 = vpop.trf.xlu0
        %v5892 = vpop.trf.xlu0
        %5893 = vxpose.xlu0.b32.start [1/16] %v1073, 128
        %5894 = vxpose.xlu0.b32.cont [2/16] %v1075, 128
        %5895 = vxpose.xlu0.b32.cont [3/16] %v1077, 128
        %5896 = vxpose.xlu0.b32.cont [4/16] %v1079, 128
        %5897 = vxpose.xlu0.b32.cont [5/16] %v1081, 128
        %5898 = vxpose.xlu0.b32.cont [6/16] %v1083, 128
        %5899 = vxpose.xlu0.b32.cont [7/16] %v1085, 128
        %5900 = vxpose.xlu0.b32.cont [8/16] %v1087, 128
        %5901 = vxpose.xlu0.b32.cont [9/16] %v1089, 128
        %5902 = vxpose.xlu0.b32.cont [10/16] %v1091, 128
        %5903 = vxpose.xlu0.b32.cont [11/16] %v1093, 128
        %5904 = vxpose.xlu0.b32.cont [12/16] %v1095, 128
        %5905 = vxpose.xlu0.b32.cont [13/16] %v1097, 128
        %5906 = vxpose.xlu0.b32.cont [14/16] %v1099, 128
        %5907 = vxpose.xlu0.b32.cont [15/16] %v1101, 128
        %5908 = vxpose.xlu0.b32.end [16/16] %v1103, 128
        %v5909 = vpop.trf.xlu0
        %v5910 = vpop.trf.xlu0
        %v5911 = vpop.trf.xlu0
        %v5912 = vpop.trf.xlu0
        %v5913 = vpop.trf.xlu0
        %v5914 = vpop.trf.xlu0
        %v5915 = vpop.trf.xlu0
        %v5916 = vpop.trf.xlu0
        %v5917 = vpop.trf.xlu0
        %v5918 = vpop.trf.xlu0
        %v5919 = vpop.trf.xlu0
        %v5920 = vpop.trf.xlu0
        %v5921 = vpop.trf.xlu0
        %v5922 = vpop.trf.xlu0
        %v5923 = vpop.trf.xlu0
        %v5924 = vpop.trf.xlu0
        %5925 = vxpose.xlu0.b32.start [1/16] %v1104, 128
        %5926 = vxpose.xlu0.b32.cont [2/16] %v1106, 128
        %5927 = vxpose.xlu0.b32.cont [3/16] %v1108, 128
        %5928 = vxpose.xlu0.b32.cont [4/16] %v1110, 128
        %5929 = vxpose.xlu0.b32.cont [5/16] %v1112, 128
        %5930 = vxpose.xlu0.b32.cont [6/16] %v1114, 128
        %5931 = vxpose.xlu0.b32.cont [7/16] %v1116, 128
        %5932 = vxpose.xlu0.b32.cont [8/16] %v1118, 128
        %5933 = vxpose.xlu0.b32.cont [9/16] %v1120, 128
        %5934 = vxpose.xlu0.b32.cont [10/16] %v1122, 128
        %5935 = vxpose.xlu0.b32.cont [11/16] %v1124, 128
        %5936 = vxpose.xlu0.b32.cont [12/16] %v1126, 128
        %5937 = vxpose.xlu0.b32.cont [13/16] %v1128, 128
        %5938 = vxpose.xlu0.b32.cont [14/16] %v1130, 128
        %5939 = vxpose.xlu0.b32.cont [15/16] %v1132, 128
        %5940 = vxpose.xlu0.b32.end [16/16] 0.0, 128
        %v5941 = vpop.trf.xlu0
        %v5942 = vpop.trf.xlu0
        %v5943 = vpop.trf.xlu0
        %v5944 = vpop.trf.xlu0
        %v5945 = vpop.trf.xlu0
        %v5946 = vpop.trf.xlu0
        %v5947 = vpop.trf.xlu0
        %v5948 = vpop.trf.xlu0
        %v5949 = vpop.trf.xlu0
        %v5950 = vpop.trf.xlu0
        %v5951 = vpop.trf.xlu0
        %v5952 = vpop.trf.xlu0
        %v5953 = vpop.trf.xlu0
        %v5954 = vpop.trf.xlu0
        %v5955 = vpop.trf.xlu0
        %v5956 = vpop.trf.xlu0
        %5957 = vxpose.xlu0.b32.start [1/16] %v1105, 128
        %5958 = vxpose.xlu0.b32.cont [2/16] %v1107, 128
        %5959 = vxpose.xlu0.b32.cont [3/16] %v1109, 128
        %5960 = vxpose.xlu0.b32.cont [4/16] %v1111, 128
        %5961 = vxpose.xlu0.b32.cont [5/16] %v1113, 128
        %5962 = vxpose.xlu0.b32.cont [6/16] %v1115, 128
        %5963 = vxpose.xlu0.b32.cont [7/16] %v1117, 128
        %5964 = vxpose.xlu0.b32.cont [8/16] %v1119, 128
        %5965 = vxpose.xlu0.b32.cont [9/16] %v1121, 128
        %5966 = vxpose.xlu0.b32.cont [10/16] %v1123, 128
        %5967 = vxpose.xlu0.b32.cont [11/16] %v1125, 128
        %5968 = vxpose.xlu0.b32.cont [12/16] %v1127, 128
        %5969 = vxpose.xlu0.b32.cont [13/16] %v1129, 128
        %5970 = vxpose.xlu0.b32.cont [14/16] %v1131, 128
        %5971 = vxpose.xlu0.b32.cont [15/16] %v1133, 128
        %5972 = vxpose.xlu0.b32.end [16/16] 0.0, 128
        %v5973 = vpop.trf.xlu0
        %v5974 = vpop.trf.xlu0
        %v5975 = vpop.trf.xlu0
        %v5976 = vpop.trf.xlu0
        %v5977 = vpop.trf.xlu0
        %v5978 = vpop.trf.xlu0
        %v5979 = vpop.trf.xlu0
        %v5980 = vpop.trf.xlu0
        %v5981 = vpop.trf.xlu0
        %v5982 = vpop.trf.xlu0
        %v5983 = vpop.trf.xlu0
        %v5984 = vpop.trf.xlu0
        %v5985 = vpop.trf.xlu0
        %v5986 = vpop.trf.xlu0
        %v5987 = vpop.trf.xlu0
        %v5988 = vpop.trf.xlu0
        %vm5989 = vcmask 982016
        %v5991 = vsel %vm5989, %v5941, 0
        %v5994 = vsel %vm5989, %v5942, 0
        %v5997 = vsel %vm5989, %v5943, 0
        %v6000 = vsel %vm5989, %v5944, 0
        %v6003 = vsel %vm5989, %v5945, 0
        %v6006 = vsel %vm5989, %v5946, 0
        %v6009 = vsel %vm5989, %v5947, 0
        %v6012 = vsel %vm5989, %v5948, 0
        %v6015 = vsel %vm5989, %v5949, 0
        %v6018 = vsel %vm5989, %v5950, 0
        %v6021 = vsel %vm5989, %v5951, 0
        %v6024 = vsel %vm5989, %v5952, 0
        %v6027 = vsel %vm5989, %v5953, 0
        %v6030 = vsel %vm5989, %v5954, 0
        %v6033 = vsel %vm5989, %v5955, 0
        %v6036 = vsel %vm5989, %v5956, 0
        %v6039 = vsel %vm5989, %v5973, 0
        %v6042 = vsel %vm5989, %v5974, 0
        %v6045 = vsel %vm5989, %v5975, 0
        %v6048 = vsel %vm5989, %v5976, 0
        %v6051 = vsel %vm5989, %v5977, 0
        %v6054 = vsel %vm5989, %v5978, 0
        %v6057 = vsel %vm5989, %v5979, 0
        %v6060 = vsel %vm5989, %v5980, 0
        %v6063 = vsel %vm5989, %v5981, 0
        %v6066 = vsel %vm5989, %v5982, 0
        %v6069 = vsel %vm5989, %v5983, 0
        %v6072 = vsel %vm5989, %v5984, 0
        %v6075 = vsel %vm5989, %v5985, 0
        %v6078 = vsel %vm5989, %v5986, 0
        %v6081 = vsel %vm5989, %v5987, 0
        %v6084 = vsel %vm5989, %v5988, 0
        %6086 = vmatpush.msra.mxu0 %v5685
        %6087 = vmatpush.msra.mxu0 %v5684
        %6088 = vmatpush.msra.mxu0 %v5683
        %6089 = vmatpush.msra.mxu0 %v5682
        %6090 = vmatpush.msra.mxu0 %v5681
        %6091 = vmatpush.msra.mxu0 %v5680
        %6092 = vmatpush.msra.mxu0 %v5679
        %6093 = vmatpush.msra.mxu0 %v5678
        %6094 = vmatpush.msra.mxu0 %v5677
        %6095 = vmatpush.msra.mxu0 %v5676
        %6096 = vmatpush.msra.mxu0 %v5675
        %6097 = vmatpush.msra.mxu0 %v5674
        %6098 = vmatpush.msra.mxu0 %v5673
        %6099 = vmatpush.msra.mxu0 %v5672
        %6100 = vmatpush.msra.mxu0 %v5671
        %6101 = vmatpush.msra.mxu0 %v5670
        %6102 = vmatmul.f32.gmra.mxu0 %v5749
        %v6103 = vpop.f32.mrf.mxu0
        %v6104 = vadd.f32 0.0, %v6103
        %6105 = vmatmul.f32.gmra.mxu0 %v5750
        %v6106 = vpop.f32.mrf.mxu0
        %v6107 = vadd.f32 0.0, %v6106
        %6108 = vmatmul.f32.gmra.mxu0 %v5751
        %v6109 = vpop.f32.mrf.mxu0
        %v6110 = vadd.f32 0.0, %v6109
        %6111 = vmatmul.f32.gmra.mxu0 %v5752
        %v6112 = vpop.f32.mrf.mxu0
        %v6113 = vadd.f32 0.0, %v6112
        %6114 = vmatmul.f32.gmra.mxu0 %v5753
        %v6115 = vpop.f32.mrf.mxu0
        %v6116 = vadd.f32 0.0, %v6115
        %6117 = vmatmul.f32.gmra.mxu0 %v5754
        %v6118 = vpop.f32.mrf.mxu0
        %v6119 = vadd.f32 0.0, %v6118
        %6120 = vmatmul.f32.gmra.mxu0 %v5755
        %v6121 = vpop.f32.mrf.mxu0
        %v6122 = vadd.f32 0.0, %v6121
        %6123 = vmatmul.f32.gmra.mxu0 %v5756
        %v6124 = vpop.f32.mrf.mxu0
        %v6125 = vadd.f32 0.0, %v6124
        %6126 = vmatmul.f32.gmra.mxu0 %v5757
        %v6127 = vpop.f32.mrf.mxu0
        %v6128 = vadd.f32 0.0, %v6127
        %6129 = vmatmul.f32.gmra.mxu0 %v5758
        %v6130 = vpop.f32.mrf.mxu0
        %v6131 = vadd.f32 0.0, %v6130
        %6132 = vmatmul.f32.gmra.mxu0 %v5759
        %v6133 = vpop.f32.mrf.mxu0
        %v6134 = vadd.f32 0.0, %v6133
        %6135 = vmatmul.f32.gmra.mxu0 %v5760
        %v6136 = vpop.f32.mrf.mxu0
        %v6137 = vadd.f32 0.0, %v6136
        %6138 = vmatmul.f32.gmra.mxu0 %v5761
        %v6139 = vpop.f32.mrf.mxu0
        %v6140 = vadd.f32 0.0, %v6139
        %6141 = vmatmul.f32.gmra.mxu0 %v5762
        %v6142 = vpop.f32.mrf.mxu0
        %v6143 = vadd.f32 0.0, %v6142
        %6144 = vmatmul.f32.gmra.mxu0 %v5763
        %v6145 = vpop.f32.mrf.mxu0
        %v6146 = vadd.f32 0.0, %v6145
        %6147 = vmatmul.f32.gmra.mxu0 %v5764
        %v6148 = vpop.f32.mrf.mxu0
        %v6149 = vadd.f32 0.0, %v6148
        %6150 = vmatmul.f32.gmra.mxu0 %v5781
        %v6151 = vpop.f32.mrf.mxu0
        %v6152 = vadd.f32 0.0, %v6151
        %6153 = vmatmul.f32.gmra.mxu0 %v5782
        %v6154 = vpop.f32.mrf.mxu0
        %v6155 = vadd.f32 0.0, %v6154
        %6156 = vmatmul.f32.gmra.mxu0 %v5783
        %v6157 = vpop.f32.mrf.mxu0
        %v6158 = vadd.f32 0.0, %v6157
        %6159 = vmatmul.f32.gmra.mxu0 %v5784
        %v6160 = vpop.f32.mrf.mxu0
        %v6161 = vadd.f32 0.0, %v6160
        %6162 = vmatmul.f32.gmra.mxu0 %v5785
        %v6163 = vpop.f32.mrf.mxu0
        %v6164 = vadd.f32 0.0, %v6163
        %6165 = vmatmul.f32.gmra.mxu0 %v5786
        %v6166 = vpop.f32.mrf.mxu0
        %v6167 = vadd.f32 0.0, %v6166
        %6168 = vmatmul.f32.gmra.mxu0 %v5787
        %v6169 = vpop.f32.mrf.mxu0
        %v6170 = vadd.f32 0.0, %v6169
        %6171 = vmatmul.f32.gmra.mxu0 %v5788
        %v6172 = vpop.f32.mrf.mxu0
        %v6173 = vadd.f32 0.0, %v6172
        %6174 = vmatmul.f32.gmra.mxu0 %v5789
        %v6175 = vpop.f32.mrf.mxu0
        %v6176 = vadd.f32 0.0, %v6175
        %6177 = vmatmul.f32.gmra.mxu0 %v5790
        %v6178 = vpop.f32.mrf.mxu0
        %v6179 = vadd.f32 0.0, %v6178
        %6180 = vmatmul.f32.gmra.mxu0 %v5791
        %v6181 = vpop.f32.mrf.mxu0
        %v6182 = vadd.f32 0.0, %v6181
        %6183 = vmatmul.f32.gmra.mxu0 %v5792
        %v6184 = vpop.f32.mrf.mxu0
        %v6185 = vadd.f32 0.0, %v6184
        %6186 = vmatmul.f32.gmra.mxu0 %v5793
        %v6187 = vpop.f32.mrf.mxu0
        %v6188 = vadd.f32 0.0, %v6187
        %6189 = vmatmul.f32.gmra.mxu0 %v5794
        %v6190 = vpop.f32.mrf.mxu0
        %v6191 = vadd.f32 0.0, %v6190
        %6192 = vmatmul.f32.gmra.mxu0 %v5795
        %v6193 = vpop.f32.mrf.mxu0
        %v6194 = vadd.f32 0.0, %v6193
        %6195 = vmatmul.f32.gmra.mxu0 %v5796
        %v6196 = vpop.f32.mrf.mxu0
        %v6197 = vadd.f32 0.0, %v6196
        %6198 = vdwg.mxu0
        %6199 = vmatpush.msra.mxu0 %v5701
        %6200 = vmatpush.msra.mxu0 %v5700
        %6201 = vmatpush.msra.mxu0 %v5699
        %6202 = vmatpush.msra.mxu0 %v5698
        %6203 = vmatpush.msra.mxu0 %v5697
        %6204 = vmatpush.msra.mxu0 %v5696
        %6205 = vmatpush.msra.mxu0 %v5695
        %6206 = vmatpush.msra.mxu0 %v5694
        %6207 = vmatpush.msra.mxu0 %v5693
        %6208 = vmatpush.msra.mxu0 %v5692
        %6209 = vmatpush.msra.mxu0 %v5691
        %6210 = vmatpush.msra.mxu0 %v5690
        %6211 = vmatpush.msra.mxu0 %v5689
        %6212 = vmatpush.msra.mxu0 %v5688
        %6213 = vmatpush.msra.mxu0 %v5687
        %6214 = vmatpush.msra.mxu0 %v5686
        %6215 = vmatmul.f32.gmra.mxu0 %v5813
        %v6216 = vpop.f32.mrf.mxu0
        %v6217 = vadd.f32 %v6104, %v6216
        %6218 = vmatmul.f32.gmra.mxu0 %v5814
        %v6219 = vpop.f32.mrf.mxu0
        %v6220 = vadd.f32 %v6107, %v6219
        %6221 = vmatmul.f32.gmra.mxu0 %v5815
        %v6222 = vpop.f32.mrf.mxu0
        %v6223 = vadd.f32 %v6110, %v6222
        %6224 = vmatmul.f32.gmra.mxu0 %v5816
        %v6225 = vpop.f32.mrf.mxu0
        %v6226 = vadd.f32 %v6113, %v6225
        %6227 = vmatmul.f32.gmra.mxu0 %v5817
        %v6228 = vpop.f32.mrf.mxu0
        %v6229 = vadd.f32 %v6116, %v6228
        %6230 = vmatmul.f32.gmra.mxu0 %v5818
        %v6231 = vpop.f32.mrf.mxu0
        %v6232 = vadd.f32 %v6119, %v6231
        %6233 = vmatmul.f32.gmra.mxu0 %v5819
        %v6234 = vpop.f32.mrf.mxu0
        %v6235 = vadd.f32 %v6122, %v6234
        %6236 = vmatmul.f32.gmra.mxu0 %v5820
        %v6237 = vpop.f32.mrf.mxu0
        %v6238 = vadd.f32 %v6125, %v6237
        %6239 = vmatmul.f32.gmra.mxu0 %v5821
        %v6240 = vpop.f32.mrf.mxu0
        %v6241 = vadd.f32 %v6128, %v6240
        %6242 = vmatmul.f32.gmra.mxu0 %v5822
        %v6243 = vpop.f32.mrf.mxu0
        %v6244 = vadd.f32 %v6131, %v6243
        %6245 = vmatmul.f32.gmra.mxu0 %v5823
        %v6246 = vpop.f32.mrf.mxu0
        %v6247 = vadd.f32 %v6134, %v6246
        %6248 = vmatmul.f32.gmra.mxu0 %v5824
        %v6249 = vpop.f32.mrf.mxu0
        %v6250 = vadd.f32 %v6137, %v6249
        %6251 = vmatmul.f32.gmra.mxu0 %v5825
        %v6252 = vpop.f32.mrf.mxu0
        %v6253 = vadd.f32 %v6140, %v6252
        %6254 = vmatmul.f32.gmra.mxu0 %v5826
        %v6255 = vpop.f32.mrf.mxu0
        %v6256 = vadd.f32 %v6143, %v6255
        %6257 = vmatmul.f32.gmra.mxu0 %v5827
        %v6258 = vpop.f32.mrf.mxu0
        %v6259 = vadd.f32 %v6146, %v6258
        %6260 = vmatmul.f32.gmra.mxu0 %v5828
        %v6261 = vpop.f32.mrf.mxu0
        %v6262 = vadd.f32 %v6149, %v6261
        %6263 = vmatmul.f32.gmra.mxu0 %v5845
        %v6264 = vpop.f32.mrf.mxu0
        %v6265 = vadd.f32 %v6152, %v6264
        %6266 = vmatmul.f32.gmra.mxu0 %v5846
        %v6267 = vpop.f32.mrf.mxu0
        %v6268 = vadd.f32 %v6155, %v6267
        %6269 = vmatmul.f32.gmra.mxu0 %v5847
        %v6270 = vpop.f32.mrf.mxu0
        %v6271 = vadd.f32 %v6158, %v6270
        %6272 = vmatmul.f32.gmra.mxu0 %v5848
        %v6273 = vpop.f32.mrf.mxu0
        %v6274 = vadd.f32 %v6161, %v6273
        %6275 = vmatmul.f32.gmra.mxu0 %v5849
        %v6276 = vpop.f32.mrf.mxu0
        %v6277 = vadd.f32 %v6164, %v6276
        %6278 = vmatmul.f32.gmra.mxu0 %v5850
        %v6279 = vpop.f32.mrf.mxu0
        %v6280 = vadd.f32 %v6167, %v6279
        %6281 = vmatmul.f32.gmra.mxu0 %v5851
        %v6282 = vpop.f32.mrf.mxu0
        %v6283 = vadd.f32 %v6170, %v6282
        %6284 = vmatmul.f32.gmra.mxu0 %v5852
        %v6285 = vpop.f32.mrf.mxu0
        %v6286 = vadd.f32 %v6173, %v6285
        %6287 = vmatmul.f32.gmra.mxu0 %v5853
        %v6288 = vpop.f32.mrf.mxu0
        %v6289 = vadd.f32 %v6176, %v6288
        %6290 = vmatmul.f32.gmra.mxu0 %v5854
        %v6291 = vpop.f32.mrf.mxu0
        %v6292 = vadd.f32 %v6179, %v6291
        %6293 = vmatmul.f32.gmra.mxu0 %v5855
        %v6294 = vpop.f32.mrf.mxu0
        %v6295 = vadd.f32 %v6182, %v6294
        %6296 = vmatmul.f32.gmra.mxu0 %v5856
        %v6297 = vpop.f32.mrf.mxu0
        %v6298 = vadd.f32 %v6185, %v6297
        %6299 = vmatmul.f32.gmra.mxu0 %v5857
        %v6300 = vpop.f32.mrf.mxu0
        %v6301 = vadd.f32 %v6188, %v6300
        %6302 = vmatmul.f32.gmra.mxu0 %v5858
        %v6303 = vpop.f32.mrf.mxu0
        %v6304 = vadd.f32 %v6191, %v6303
        %6305 = vmatmul.f32.gmra.mxu0 %v5859
        %v6306 = vpop.f32.mrf.mxu0
        %v6307 = vadd.f32 %v6194, %v6306
        %6308 = vmatmul.f32.gmra.mxu0 %v5860
        %v6309 = vpop.f32.mrf.mxu0
        %v6310 = vadd.f32 %v6197, %v6309
        %6311 = vdwg.mxu0
        %6312 = vmatpush.msra.mxu0 %v5717
        %6313 = vmatpush.msra.mxu0 %v5716
        %6314 = vmatpush.msra.mxu0 %v5715
        %6315 = vmatpush.msra.mxu0 %v5714
        %6316 = vmatpush.msra.mxu0 %v5713
        %6317 = vmatpush.msra.mxu0 %v5712
        %6318 = vmatpush.msra.mxu0 %v5711
        %6319 = vmatpush.msra.mxu0 %v5710
        %6320 = vmatpush.msra.mxu0 %v5709
        %6321 = vmatpush.msra.mxu0 %v5708
        %6322 = vmatpush.msra.mxu0 %v5707
        %6323 = vmatpush.msra.mxu0 %v5706
        %6324 = vmatpush.msra.mxu0 %v5705
        %6325 = vmatpush.msra.mxu0 %v5704
        %6326 = vmatpush.msra.mxu0 %v5703
        %6327 = vmatpush.msra.mxu0 %v5702
        %6328 = vmatmul.f32.gmra.mxu0 %v5877
        %v6329 = vpop.f32.mrf.mxu0
        %v6330 = vadd.f32 %v6217, %v6329
        %6331 = vmatmul.f32.gmra.mxu0 %v5878
        %v6332 = vpop.f32.mrf.mxu0
        %v6333 = vadd.f32 %v6220, %v6332
        %6334 = vmatmul.f32.gmra.mxu0 %v5879
        %v6335 = vpop.f32.mrf.mxu0
        %v6336 = vadd.f32 %v6223, %v6335
        %6337 = vmatmul.f32.gmra.mxu0 %v5880
        %v6338 = vpop.f32.mrf.mxu0
        %v6339 = vadd.f32 %v6226, %v6338
        %6340 = vmatmul.f32.gmra.mxu0 %v5881
        %v6341 = vpop.f32.mrf.mxu0
        %v6342 = vadd.f32 %v6229, %v6341
        %6343 = vmatmul.f32.gmra.mxu0 %v5882
        %v6344 = vpop.f32.mrf.mxu0
        %v6345 = vadd.f32 %v6232, %v6344
        %6346 = vmatmul.f32.gmra.mxu0 %v5883
        %v6347 = vpop.f32.mrf.mxu0
        %v6348 = vadd.f32 %v6235, %v6347
        %6349 = vmatmul.f32.gmra.mxu0 %v5884
        %v6350 = vpop.f32.mrf.mxu0
        %v6351 = vadd.f32 %v6238, %v6350
        %6352 = vmatmul.f32.gmra.mxu0 %v5885
        %v6353 = vpop.f32.mrf.mxu0
        %v6354 = vadd.f32 %v6241, %v6353
        %6355 = vmatmul.f32.gmra.mxu0 %v5886
        %v6356 = vpop.f32.mrf.mxu0
        %v6357 = vadd.f32 %v6244, %v6356
        %6358 = vmatmul.f32.gmra.mxu0 %v5887
        %v6359 = vpop.f32.mrf.mxu0
        %v6360 = vadd.f32 %v6247, %v6359
        %6361 = vmatmul.f32.gmra.mxu0 %v5888
        %v6362 = vpop.f32.mrf.mxu0
        %v6363 = vadd.f32 %v6250, %v6362
        %6364 = vmatmul.f32.gmra.mxu0 %v5889
        %v6365 = vpop.f32.mrf.mxu0
        %v6366 = vadd.f32 %v6253, %v6365
        %6367 = vmatmul.f32.gmra.mxu0 %v5890
        %v6368 = vpop.f32.mrf.mxu0
        %v6369 = vadd.f32 %v6256, %v6368
        %6370 = vmatmul.f32.gmra.mxu0 %v5891
        %v6371 = vpop.f32.mrf.mxu0
        %v6372 = vadd.f32 %v6259, %v6371
        %6373 = vmatmul.f32.gmra.mxu0 %v5892
        %v6374 = vpop.f32.mrf.mxu0
        %v6375 = vadd.f32 %v6262, %v6374
        %6376 = vmatmul.f32.gmra.mxu0 %v5909
        %v6377 = vpop.f32.mrf.mxu0
        %v6378 = vadd.f32 %v6265, %v6377
        %6379 = vmatmul.f32.gmra.mxu0 %v5910
        %v6380 = vpop.f32.mrf.mxu0
        %v6381 = vadd.f32 %v6268, %v6380
        %6382 = vmatmul.f32.gmra.mxu0 %v5911
        %v6383 = vpop.f32.mrf.mxu0
        %v6384 = vadd.f32 %v6271, %v6383
        %6385 = vmatmul.f32.gmra.mxu0 %v5912
        %v6386 = vpop.f32.mrf.mxu0
        %v6387 = vadd.f32 %v6274, %v6386
        %6388 = vmatmul.f32.gmra.mxu0 %v5913
        %v6389 = vpop.f32.mrf.mxu0
        %v6390 = vadd.f32 %v6277, %v6389
        %6391 = vmatmul.f32.gmra.mxu0 %v5914
        %v6392 = vpop.f32.mrf.mxu0
        %v6393 = vadd.f32 %v6280, %v6392
        %6394 = vmatmul.f32.gmra.mxu0 %v5915
        %v6395 = vpop.f32.mrf.mxu0
        %v6396 = vadd.f32 %v6283, %v6395
        %6397 = vmatmul.f32.gmra.mxu0 %v5916
        %v6398 = vpop.f32.mrf.mxu0
        %v6399 = vadd.f32 %v6286, %v6398
        %6400 = vmatmul.f32.gmra.mxu0 %v5917
        %v6401 = vpop.f32.mrf.mxu0
        %v6402 = vadd.f32 %v6289, %v6401
        %6403 = vmatmul.f32.gmra.mxu0 %v5918
        %v6404 = vpop.f32.mrf.mxu0
        %v6405 = vadd.f32 %v6292, %v6404
        %6406 = vmatmul.f32.gmra.mxu0 %v5919
        %v6407 = vpop.f32.mrf.mxu0
        %v6408 = vadd.f32 %v6295, %v6407
        %6409 = vmatmul.f32.gmra.mxu0 %v5920
        %v6410 = vpop.f32.mrf.mxu0
        %v6411 = vadd.f32 %v6298, %v6410
        %6412 = vmatmul.f32.gmra.mxu0 %v5921
        %v6413 = vpop.f32.mrf.mxu0
        %v6414 = vadd.f32 %v6301, %v6413
        %6415 = vmatmul.f32.gmra.mxu0 %v5922
        %v6416 = vpop.f32.mrf.mxu0
        %v6417 = vadd.f32 %v6304, %v6416
        %6418 = vmatmul.f32.gmra.mxu0 %v5923
        %v6419 = vpop.f32.mrf.mxu0
        %v6420 = vadd.f32 %v6307, %v6419
        %6421 = vmatmul.f32.gmra.mxu0 %v5924
        %v6422 = vpop.f32.mrf.mxu0
        %v6423 = vadd.f32 %v6310, %v6422
        %6424 = vdwg.mxu0
        %6425 = vmatpush.msra.mxu0 0.0
        %6426 = vmatpush.msra.mxu0 %v5732
        %6427 = vmatpush.msra.mxu0 %v5731
        %6428 = vmatpush.msra.mxu0 %v5730
        %6429 = vmatpush.msra.mxu0 %v5729
        %6430 = vmatpush.msra.mxu0 %v5728
        %6431 = vmatpush.msra.mxu0 %v5727
        %6432 = vmatpush.msra.mxu0 %v5726
        %6433 = vmatpush.msra.mxu0 %v5725
        %6434 = vmatpush.msra.mxu0 %v5724
        %6435 = vmatpush.msra.mxu0 %v5723
        %6436 = vmatpush.msra.mxu0 %v5722
        %6437 = vmatpush.msra.mxu0 %v5721
        %6438 = vmatpush.msra.mxu0 %v5720
        %6439 = vmatpush.msra.mxu0 %v5719
        %6440 = vmatpush.msra.mxu0 %v5718
        %6441 = vmatmul.f32.gmra.mxu0 %v5991
        %v6442 = vpop.f32.mrf.mxu0
        %v6443 = vadd.f32 %v6330, %v6442
        %6444 = vmatmul.f32.gmra.mxu0 %v5994
        %v6445 = vpop.f32.mrf.mxu0
        %v6446 = vadd.f32 %v6333, %v6445
        %6447 = vmatmul.f32.gmra.mxu0 %v5997
        %v6448 = vpop.f32.mrf.mxu0
        %v6449 = vadd.f32 %v6336, %v6448
        %6450 = vmatmul.f32.gmra.mxu0 %v6000
        %v6451 = vpop.f32.mrf.mxu0
        %v6452 = vadd.f32 %v6339, %v6451
        %6453 = vmatmul.f32.gmra.mxu0 %v6003
        %v6454 = vpop.f32.mrf.mxu0
        %v6455 = vadd.f32 %v6342, %v6454
        %6456 = vmatmul.f32.gmra.mxu0 %v6006
        %v6457 = vpop.f32.mrf.mxu0
        %v6458 = vadd.f32 %v6345, %v6457
        %6459 = vmatmul.f32.gmra.mxu0 %v6009
        %v6460 = vpop.f32.mrf.mxu0
        %v6461 = vadd.f32 %v6348, %v6460
        %6462 = vmatmul.f32.gmra.mxu0 %v6012
        %v6463 = vpop.f32.mrf.mxu0
        %v6464 = vadd.f32 %v6351, %v6463
        %6465 = vmatmul.f32.gmra.mxu0 %v6015
        %v6466 = vpop.f32.mrf.mxu0
        %v6467 = vadd.f32 %v6354, %v6466
        %6468 = vmatmul.f32.gmra.mxu0 %v6018
        %v6469 = vpop.f32.mrf.mxu0
        %v6470 = vadd.f32 %v6357, %v6469
        %6471 = vmatmul.f32.gmra.mxu0 %v6021
        %v6472 = vpop.f32.mrf.mxu0
        %v6473 = vadd.f32 %v6360, %v6472
        %6474 = vmatmul.f32.gmra.mxu0 %v6024
        %v6475 = vpop.f32.mrf.mxu0
        %v6476 = vadd.f32 %v6363, %v6475
        %6477 = vmatmul.f32.gmra.mxu0 %v6027
        %v6478 = vpop.f32.mrf.mxu0
        %v6479 = vadd.f32 %v6366, %v6478
        %6480 = vmatmul.f32.gmra.mxu0 %v6030
        %v6481 = vpop.f32.mrf.mxu0
        %v6482 = vadd.f32 %v6369, %v6481
        %6483 = vmatmul.f32.gmra.mxu0 %v6033
        %v6484 = vpop.f32.mrf.mxu0
        %v6485 = vadd.f32 %v6372, %v6484
        %6486 = vmatmul.f32.gmra.mxu0 %v6036
        %v6487 = vpop.f32.mrf.mxu0
        %v6488 = vadd.f32 %v6375, %v6487
        %6489 = vmatmul.f32.gmra.mxu0 %v6039
        %v6490 = vpop.f32.mrf.mxu0
        %v6491 = vadd.f32 %v6378, %v6490
        %6492 = vmatmul.f32.gmra.mxu0 %v6042
        %v6493 = vpop.f32.mrf.mxu0
        %v6494 = vadd.f32 %v6381, %v6493
        %6495 = vmatmul.f32.gmra.mxu0 %v6045
        %v6496 = vpop.f32.mrf.mxu0
        %v6497 = vadd.f32 %v6384, %v6496
        %6498 = vmatmul.f32.gmra.mxu0 %v6048
        %v6499 = vpop.f32.mrf.mxu0
        %v6500 = vadd.f32 %v6387, %v6499
        %6501 = vmatmul.f32.gmra.mxu0 %v6051
        %v6502 = vpop.f32.mrf.mxu0
        %v6503 = vadd.f32 %v6390, %v6502
        %6504 = vmatmul.f32.gmra.mxu0 %v6054
        %v6505 = vpop.f32.mrf.mxu0
        %v6506 = vadd.f32 %v6393, %v6505
        %6507 = vmatmul.f32.gmra.mxu0 %v6057
        %v6508 = vpop.f32.mrf.mxu0
        %v6509 = vadd.f32 %v6396, %v6508
        %6510 = vmatmul.f32.gmra.mxu0 %v6060
        %v6511 = vpop.f32.mrf.mxu0
        %v6512 = vadd.f32 %v6399, %v6511
        %6513 = vmatmul.f32.gmra.mxu0 %v6063
        %v6514 = vpop.f32.mrf.mxu0
        %v6515 = vadd.f32 %v6402, %v6514
        %6516 = vmatmul.f32.gmra.mxu0 %v6066
        %v6517 = vpop.f32.mrf.mxu0
        %v6518 = vadd.f32 %v6405, %v6517
        %6519 = vmatmul.f32.gmra.mxu0 %v6069
        %v6520 = vpop.f32.mrf.mxu0
        %v6521 = vadd.f32 %v6408, %v6520
        %6522 = vmatmul.f32.gmra.mxu0 %v6072
        %v6523 = vpop.f32.mrf.mxu0
        %v6524 = vadd.f32 %v6411, %v6523
        %6525 = vmatmul.f32.gmra.mxu0 %v6075
        %v6526 = vpop.f32.mrf.mxu0
        %v6527 = vadd.f32 %v6414, %v6526
        %6528 = vmatmul.f32.gmra.mxu0 %v6078
        %v6529 = vpop.f32.mrf.mxu0
        %v6530 = vadd.f32 %v6417, %v6529
        %6531 = vmatmul.f32.gmra.mxu0 %v6081
        %v6532 = vpop.f32.mrf.mxu0
        %v6533 = vadd.f32 %v6420, %v6532
        %6534 = vmatmul.f32.gmra.mxu0 %v6084
        %v6535 = vpop.f32.mrf.mxu0
        %v6536 = vadd.f32 %v6423, %v6535
        %6537 = vdwg.mxu0
        %v6538 = vadd.f32 %v5638, %v6443
        %v6539 = vadd.f32 %v5639, %v6446
        %v6540 = vadd.f32 %v5640, %v6449
        %v6541 = vadd.f32 %v5641, %v6452
        %v6542 = vadd.f32 %v5642, %v6455
        %v6543 = vadd.f32 %v5643, %v6458
        %v6544 = vadd.f32 %v5644, %v6461
        %v6545 = vadd.f32 %v5645, %v6464
        %v6546 = vadd.f32 %v5646, %v6467
        %v6547 = vadd.f32 %v5647, %v6470
        %v6548 = vadd.f32 %v5648, %v6473
        %v6549 = vadd.f32 %v5649, %v6476
        %v6550 = vadd.f32 %v5650, %v6479
        %v6551 = vadd.f32 %v5651, %v6482
        %v6552 = vadd.f32 %v5652, %v6485
        %v6553 = vadd.f32 %v5653, %v6488
        %v6554 = vadd.f32 %v5654, %v6491
        %v6555 = vadd.f32 %v5655, %v6494
        %v6556 = vadd.f32 %v5656, %v6497
        %v6557 = vadd.f32 %v5657, %v6500
        %v6558 = vadd.f32 %v5658, %v6503
        %v6559 = vadd.f32 %v5659, %v6506
        %v6560 = vadd.f32 %v5660, %v6509
        %v6561 = vadd.f32 %v5661, %v6512
        %v6562 = vadd.f32 %v5662, %v6515
        %v6563 = vadd.f32 %v5663, %v6518
        %v6564 = vadd.f32 %v5664, %v6521
        %v6565 = vadd.f32 %v5665, %v6524
        %v6566 = vadd.f32 %v5666, %v6527
        %v6567 = vadd.f32 %v5667, %v6530
        %v6568 = vadd.f32 %v5668, %v6533
        %v6569 = vadd.f32 %v5669, %v6536
        %vm6570 = vcmask 269312
        %6571 = vst.msk [vmem:[#allocation3] sm:$0xff] %vm6570, %v6538
        %6572 = vst.msk [vmem:[#allocation3 + $0x8] sm:$0xff] %vm6570, %v6539
        %6573 = vst.msk [vmem:[#allocation3 + $0x10] sm:$0xff] %vm6570, %v6540
        %6574 = vst.msk [vmem:[#allocation3 + $0x18] sm:$0xff] %vm6570, %v6541
        %6575 = vst.msk [vmem:[#allocation3 + $0x20] sm:$0xff] %vm6570, %v6542
        %6576 = vst.msk [vmem:[#allocation3 + $0x28] sm:$0xff] %vm6570, %v6543
        %6577 = vst.msk [vmem:[#allocation3 + $0x30] sm:$0xff] %vm6570, %v6544
        %6578 = vst.msk [vmem:[#allocation3 + $0x38] sm:$0xff] %vm6570, %v6545
        %6579 = vst.msk [vmem:[#allocation3 + $0x40] sm:$0xff] %vm6570, %v6546
        %6580 = vst.msk [vmem:[#allocation3 + $0x48] sm:$0xff] %vm6570, %v6547
        %6581 = vst.msk [vmem:[#allocation3 + $0x50] sm:$0xff] %vm6570, %v6548
        %6582 = vst.msk [vmem:[#allocation3 + $0x58] sm:$0xff] %vm6570, %v6549
        %6583 = vst.msk [vmem:[#allocation3 + $0x60] sm:$0xff] %vm6570, %v6550
        %6584 = vst.msk [vmem:[#allocation3 + $0x68] sm:$0xff] %vm6570, %v6551
        %6585 = vst.msk [vmem:[#allocation3 + $0x70] sm:$0xff] %vm6570, %v6552
        %6586 = vst.msk [vmem:[#allocation3 + $0x78] sm:$0xff] %vm6570, %v6553
        %6587 = vst.msk [vmem:[#allocation3 + $0x80] sm:$0xff] %vm6570, %v6554
        %6588 = vst.msk [vmem:[#allocation3 + $0x88] sm:$0xff] %vm6570, %v6555
        %6589 = vst.msk [vmem:[#allocation3 + $0x90] sm:$0xff] %vm6570, %v6556
        %6590 = vst.msk [vmem:[#allocation3 + $0x98] sm:$0xff] %vm6570, %v6557
        %6591 = vst.msk [vmem:[#allocation3 + $0xa0] sm:$0xff] %vm6570, %v6558
        %6592 = vst.msk [vmem:[#allocation3 + $0xa8] sm:$0xff] %vm6570, %v6559
        %6593 = vst.msk [vmem:[#allocation3 + $0xb0] sm:$0xff] %vm6570, %v6560
        %6594 = vst.msk [vmem:[#allocation3 + $0xb8] sm:$0xff] %vm6570, %v6561
        %6595 = vst.msk [vmem:[#allocation3 + $0xc0] sm:$0xff] %vm6570, %v6562
        %6596 = vst.msk [vmem:[#allocation3 + $0xc8] sm:$0xff] %vm6570, %v6563
        %6597 = vst.msk [vmem:[#allocation3 + $0xd0] sm:$0xff] %vm6570, %v6564
        %6598 = vst.msk [vmem:[#allocation3 + $0xd8] sm:$0xff] %vm6570, %v6565
        %6599 = vst.msk [vmem:[#allocation3 + $0xe0] sm:$0xff] %vm6570, %v6566
        %6600 = vst.msk [vmem:[#allocation3 + $0xe8] sm:$0xff] %vm6570, %v6567
        %6601 = vst.msk [vmem:[#allocation3 + $0xf0] sm:$0xff] %vm6570, %v6568
        %6602 = vst.msk [vmem:[#allocation3 + $0xf8] sm:$0xff] %vm6570, %v6569
      $region52: #{tpu_custom_call.1} parent=39 // pred_fallthru
        _
      %p6603 = pnand %p4304, %p269
      %p6604 = pneg %p6603
      // Predicated region
      $region53: #{tpu_custom_call.1} parent=39 // pred_check
        _
      $region54: #{tpu_custom_call.1} parent=39 // pred_check_branch
        %6606 = sbr.rel (%p6603) target = $region56
      $region55: #{tpu_custom_call.1} parent=39 // pred_region
        %v6607 = vld [vmem:[#allocation3] sm:$0xff]
        %v6608 = vld [vmem:[#allocation3 + $0x8] sm:$0xff]
        %v6609 = vld [vmem:[#allocation3 + $0x10] sm:$0xff]
        %v6610 = vld [vmem:[#allocation3 + $0x18] sm:$0xff]
        %v6611 = vld [vmem:[#allocation3 + $0x20] sm:$0xff]
        %v6612 = vld [vmem:[#allocation3 + $0x28] sm:$0xff]
        %v6613 = vld [vmem:[#allocation3 + $0x30] sm:$0xff]
        %v6614 = vld [vmem:[#allocation3 + $0x38] sm:$0xff]
        %v6615 = vld [vmem:[#allocation3 + $0x40] sm:$0xff]
        %v6616 = vld [vmem:[#allocation3 + $0x48] sm:$0xff]
        %v6617 = vld [vmem:[#allocation3 + $0x50] sm:$0xff]
        %v6618 = vld [vmem:[#allocation3 + $0x58] sm:$0xff]
        %v6619 = vld [vmem:[#allocation3 + $0x60] sm:$0xff]
        %v6620 = vld [vmem:[#allocation3 + $0x68] sm:$0xff]
        %v6621 = vld [vmem:[#allocation3 + $0x70] sm:$0xff]
        %v6622 = vld [vmem:[#allocation3 + $0x78] sm:$0xff]
        %v6623 = vld [vmem:[#allocation3 + $0x80] sm:$0xff]
        %v6624 = vld [vmem:[#allocation3 + $0x88] sm:$0xff]
        %v6625 = vld [vmem:[#allocation3 + $0x90] sm:$0xff]
        %v6626 = vld [vmem:[#allocation3 + $0x98] sm:$0xff]
        %v6627 = vld [vmem:[#allocation3 + $0xa0] sm:$0xff]
        %v6628 = vld [vmem:[#allocation3 + $0xa8] sm:$0xff]
        %v6629 = vld [vmem:[#allocation3 + $0xb0] sm:$0xff]
        %v6630 = vld [vmem:[#allocation3 + $0xb8] sm:$0xff]
        %v6631 = vld [vmem:[#allocation3 + $0xc0] sm:$0xff]
        %v6632 = vld [vmem:[#allocation3 + $0xc8] sm:$0xff]
        %v6633 = vld [vmem:[#allocation3 + $0xd0] sm:$0xff]
        %v6634 = vld [vmem:[#allocation3 + $0xd8] sm:$0xff]
        %v6635 = vld [vmem:[#allocation3 + $0xe0] sm:$0xff]
        %v6636 = vld [vmem:[#allocation3 + $0xe8] sm:$0xff]
        %v6637 = vld [vmem:[#allocation3 + $0xf0] sm:$0xff]
        %v6638 = vld [vmem:[#allocation3 + $0xf8] sm:$0xff]
        %vm6639 = vcmp.gt.f32.partialorder %v6607, 0.0
        %vm6640 = vcmp.gt.f32.partialorder %v6608, 0.0
        %vm6641 = vcmp.gt.f32.partialorder %v6609, 0.0
        %vm6642 = vcmp.gt.f32.partialorder %v6610, 0.0
        %vm6643 = vcmp.gt.f32.partialorder %v6611, 0.0
        %vm6644 = vcmp.gt.f32.partialorder %v6612, 0.0
        %vm6645 = vcmp.gt.f32.partialorder %v6613, 0.0
        %vm6646 = vcmp.gt.f32.partialorder %v6614, 0.0
        %vm6647 = vcmp.gt.f32.partialorder %v6615, 0.0
        %vm6648 = vcmp.gt.f32.partialorder %v6616, 0.0
        %vm6649 = vcmp.gt.f32.partialorder %v6617, 0.0
        %vm6650 = vcmp.gt.f32.partialorder %v6618, 0.0
        %vm6651 = vcmp.gt.f32.partialorder %v6619, 0.0
        %vm6652 = vcmp.gt.f32.partialorder %v6620, 0.0
        %vm6653 = vcmp.gt.f32.partialorder %v6621, 0.0
        %vm6654 = vcmp.gt.f32.partialorder %v6622, 0.0
        %vm6655 = vcmp.gt.f32.partialorder %v6623, 0.0
        %vm6656 = vcmp.gt.f32.partialorder %v6624, 0.0
        %vm6657 = vcmp.gt.f32.partialorder %v6625, 0.0
        %vm6658 = vcmp.gt.f32.partialorder %v6626, 0.0
        %vm6659 = vcmp.gt.f32.partialorder %v6627, 0.0
        %vm6660 = vcmp.gt.f32.partialorder %v6628, 0.0
        %vm6661 = vcmp.gt.f32.partialorder %v6629, 0.0
        %vm6662 = vcmp.gt.f32.partialorder %v6630, 0.0
        %vm6663 = vcmp.gt.f32.partialorder %v6631, 0.0
        %vm6664 = vcmp.gt.f32.partialorder %v6632, 0.0
        %vm6665 = vcmp.gt.f32.partialorder %v6633, 0.0
        %vm6666 = vcmp.gt.f32.partialorder %v6634, 0.0
        %vm6667 = vcmp.gt.f32.partialorder %v6635, 0.0
        %vm6668 = vcmp.gt.f32.partialorder %v6636, 0.0
        %vm6669 = vcmp.gt.f32.partialorder %v6637, 0.0
        %vm6670 = vcmp.gt.f32.partialorder %v6638, 0.0
        %v6671 = vmax.f32 %v6607, 1e-30
        %v6672 = vmax.f32 %v6608, 1e-30
        %v6673 = vmax.f32 %v6609, 1e-30
        %v6674 = vmax.f32 %v6610, 1e-30
        %v6675 = vmax.f32 %v6611, 1e-30
        %v6676 = vmax.f32 %v6612, 1e-30
        %v6677 = vmax.f32 %v6613, 1e-30
        %v6678 = vmax.f32 %v6614, 1e-30
        %v6679 = vmax.f32 %v6615, 1e-30
        %v6680 = vmax.f32 %v6616, 1e-30
        %v6681 = vmax.f32 %v6617, 1e-30
        %v6682 = vmax.f32 %v6618, 1e-30
        %v6683 = vmax.f32 %v6619, 1e-30
        %v6684 = vmax.f32 %v6620, 1e-30
        %v6685 = vmax.f32 %v6621, 1e-30
        %v6686 = vmax.f32 %v6622, 1e-30
        %v6687 = vmax.f32 %v6623, 1e-30
        %v6688 = vmax.f32 %v6624, 1e-30
        %v6689 = vmax.f32 %v6625, 1e-30
        %v6690 = vmax.f32 %v6626, 1e-30
        %v6691 = vmax.f32 %v6627, 1e-30
        %v6692 = vmax.f32 %v6628, 1e-30
        %v6693 = vmax.f32 %v6629, 1e-30
        %v6694 = vmax.f32 %v6630, 1e-30
        %v6695 = vmax.f32 %v6631, 1e-30
        %v6696 = vmax.f32 %v6632, 1e-30
        %v6697 = vmax.f32 %v6633, 1e-30
        %v6698 = vmax.f32 %v6634, 1e-30
        %v6699 = vmax.f32 %v6635, 1e-30
        %v6700 = vmax.f32 %v6636, 1e-30
        %v6701 = vmax.f32 %v6637, 1e-30
        %v6702 = vmax.f32 %v6638, 1e-30
        %6704 = vset.pattern.permute.xlu0 32
        %6705 = vperm.xlu0 %6704, %v6671
        %v6706 = vpop.permute.xlu0 %6705
        %6709 = vset.pattern.permute.xlu0 32
        %6710 = vperm.xlu0 %6709, %v6672
        %v6711 = vpop.permute.xlu0 %6710
        %6714 = vset.pattern.permute.xlu0 32
        %6715 = vperm.xlu0 %6714, %v6673
        %v6716 = vpop.permute.xlu0 %6715
        %6719 = vset.pattern.permute.xlu0 32
        %6720 = vperm.xlu0 %6719, %v6674
        %v6721 = vpop.permute.xlu0 %6720
        %6724 = vset.pattern.permute.xlu0 32
        %6725 = vperm.xlu0 %6724, %v6675
        %v6726 = vpop.permute.xlu0 %6725
        %6729 = vset.pattern.permute.xlu0 32
        %6730 = vperm.xlu0 %6729, %v6676
        %v6731 = vpop.permute.xlu0 %6730
        %6734 = vset.pattern.permute.xlu0 32
        %6735 = vperm.xlu0 %6734, %v6677
        %v6736 = vpop.permute.xlu0 %6735
        %6739 = vset.pattern.permute.xlu0 32
        %6740 = vperm.xlu0 %6739, %v6678
        %v6741 = vpop.permute.xlu0 %6740
        %6744 = vset.pattern.permute.xlu0 32
        %6745 = vperm.xlu0 %6744, %v6679
        %v6746 = vpop.permute.xlu0 %6745
        %6749 = vset.pattern.permute.xlu0 32
        %6750 = vperm.xlu0 %6749, %v6680
        %v6751 = vpop.permute.xlu0 %6750
        %6754 = vset.pattern.permute.xlu0 32
        %6755 = vperm.xlu0 %6754, %v6681
        %v6756 = vpop.permute.xlu0 %6755
        %6759 = vset.pattern.permute.xlu0 32
        %6760 = vperm.xlu0 %6759, %v6682
        %v6761 = vpop.permute.xlu0 %6760
        %6764 = vset.pattern.permute.xlu0 32
        %6765 = vperm.xlu0 %6764, %v6683
        %v6766 = vpop.permute.xlu0 %6765
        %6769 = vset.pattern.permute.xlu0 32
        %6770 = vperm.xlu0 %6769, %v6684
        %v6771 = vpop.permute.xlu0 %6770
        %6774 = vset.pattern.permute.xlu0 32
        %6775 = vperm.xlu0 %6774, %v6685
        %v6776 = vpop.permute.xlu0 %6775
        %6779 = vset.pattern.permute.xlu0 32
        %6780 = vperm.xlu0 %6779, %v6686
        %v6781 = vpop.permute.xlu0 %6780
        %6784 = vset.pattern.permute.xlu0 32
        %6785 = vperm.xlu0 %6784, %v6687
        %v6786 = vpop.permute.xlu0 %6785
        %6789 = vset.pattern.permute.xlu0 32
        %6790 = vperm.xlu0 %6789, %v6688
        %v6791 = vpop.permute.xlu0 %6790
        %6794 = vset.pattern.permute.xlu0 32
        %6795 = vperm.xlu0 %6794, %v6689
        %v6796 = vpop.permute.xlu0 %6795
        %6799 = vset.pattern.permute.xlu0 32
        %6800 = vperm.xlu0 %6799, %v6690
        %v6801 = vpop.permute.xlu0 %6800
        %6804 = vset.pattern.permute.xlu0 32
        %6805 = vperm.xlu0 %6804, %v6691
        %v6806 = vpop.permute.xlu0 %6805
        %6809 = vset.pattern.permute.xlu0 32
        %6810 = vperm.xlu0 %6809, %v6692
        %v6811 = vpop.permute.xlu0 %6810
        %6814 = vset.pattern.permute.xlu0 32
        %6815 = vperm.xlu0 %6814, %v6693
        %v6816 = vpop.permute.xlu0 %6815
        %6819 = vset.pattern.permute.xlu0 32
        %6820 = vperm.xlu0 %6819, %v6694
        %v6821 = vpop.permute.xlu0 %6820
        %6824 = vset.pattern.permute.xlu0 32
        %6825 = vperm.xlu0 %6824, %v6695
        %v6826 = vpop.permute.xlu0 %6825
        %6829 = vset.pattern.permute.xlu0 32
        %6830 = vperm.xlu0 %6829, %v6696
        %v6831 = vpop.permute.xlu0 %6830
        %6834 = vset.pattern.permute.xlu0 32
        %6835 = vperm.xlu0 %6834, %v6697
        %v6836 = vpop.permute.xlu0 %6835
        %6839 = vset.pattern.permute.xlu0 32
        %6840 = vperm.xlu0 %6839, %v6698
        %v6841 = vpop.permute.xlu0 %6840
        %6844 = vset.pattern.permute.xlu0 32
        %6845 = vperm.xlu0 %6844, %v6699
        %v6846 = vpop.permute.xlu0 %6845
        %6849 = vset.pattern.permute.xlu0 32
        %6850 = vperm.xlu0 %6849, %v6700
        %v6851 = vpop.permute.xlu0 %6850
        %6854 = vset.pattern.permute.xlu0 32
        %6855 = vperm.xlu0 %6854, %v6701
        %v6856 = vpop.permute.xlu0 %6855
        %6859 = vset.pattern.permute.xlu0 32
        %6860 = vperm.xlu0 %6859, %v6702
        %v6861 = vpop.permute.xlu0 %6860
        %v6863 = vrcp.pop %v6706
        %v6864 = vmul.f32 %v6706, %v6863
        %v6865 = vsub.f32 1.0, %v6864
        %v6866 = vmul.f32 %v6863, %v6865
        %v6867 = vadd.f32 %v6863, %v6866
        %vm6868 = vweird.f32 %v6706
        %vm6869 = vweird.f32 %v6863
        %vm6870 = vmor %vm6868, %vm6869
        %v6871 = vsel %vm6870, %v6863, %v6867
        %v6872 = vand.u32 2147483647, %v6706
        %vm6873 = vcmp.eq.f32.partialorder %v6872, 8.507059e+37
        %v6874 = vand.u32 %v6706, 2147483648
        %v6875 = vor.u32 1.1754944e-38, %v6874
        %v6876 = vsel %vm6873, %v6875, %v6871
        %v6877 = vmul.f32 %v6607, %v6876
        %v6878 = vrcp.pop %v6711
        %v6879 = vmul.f32 %v6711, %v6878
        %v6880 = vsub.f32 1.0, %v6879
        %v6881 = vmul.f32 %v6878, %v6880
        %v6882 = vadd.f32 %v6878, %v6881
        %vm6883 = vweird.f32 %v6711
        %vm6884 = vweird.f32 %v6878
        %vm6885 = vmor %vm6883, %vm6884
        %v6886 = vsel %vm6885, %v6878, %v6882
        %v6887 = vand.u32 2147483647, %v6711
        %vm6888 = vcmp.eq.f32.partialorder %v6887, 8.507059e+37
        %v6889 = vand.u32 %v6711, 2147483648
        %v6890 = vor.u32 1.1754944e-38, %v6889
        %v6891 = vsel %vm6888, %v6890, %v6886
        %v6892 = vmul.f32 %v6608, %v6891
        %v6893 = vrcp.pop %v6716
        %v6894 = vmul.f32 %v6716, %v6893
        %v6895 = vsub.f32 1.0, %v6894
        %v6896 = vmul.f32 %v6893, %v6895
        %v6897 = vadd.f32 %v6893, %v6896
        %vm6898 = vweird.f32 %v6716
        %vm6899 = vweird.f32 %v6893
        %vm6900 = vmor %vm6898, %vm6899
        %v6901 = vsel %vm6900, %v6893, %v6897
        %v6902 = vand.u32 2147483647, %v6716
        %vm6903 = vcmp.eq.f32.partialorder %v6902, 8.507059e+37
        %v6904 = vand.u32 %v6716, 2147483648
        %v6905 = vor.u32 1.1754944e-38, %v6904
        %v6906 = vsel %vm6903, %v6905, %v6901
        %v6907 = vmul.f32 %v6609, %v6906
        %v6908 = vrcp.pop %v6721
        %v6909 = vmul.f32 %v6721, %v6908
        %v6910 = vsub.f32 1.0, %v6909
        %v6911 = vmul.f32 %v6908, %v6910
        %v6912 = vadd.f32 %v6908, %v6911
        %vm6913 = vweird.f32 %v6721
        %vm6914 = vweird.f32 %v6908
        %vm6915 = vmor %vm6913, %vm6914
        %v6916 = vsel %vm6915, %v6908, %v6912
        %v6917 = vand.u32 2147483647, %v6721
        %vm6918 = vcmp.eq.f32.partialorder %v6917, 8.507059e+37
        %v6919 = vand.u32 %v6721, 2147483648
        %v6920 = vor.u32 1.1754944e-38, %v6919
        %v6921 = vsel %vm6918, %v6920, %v6916
        %v6922 = vmul.f32 %v6610, %v6921
        %v6923 = vrcp.pop %v6726
        %v6924 = vmul.f32 %v6726, %v6923
        %v6925 = vsub.f32 1.0, %v6924
        %v6926 = vmul.f32 %v6923, %v6925
        %v6927 = vadd.f32 %v6923, %v6926
        %vm6928 = vweird.f32 %v6726
        %vm6929 = vweird.f32 %v6923
        %vm6930 = vmor %vm6928, %vm6929
        %v6931 = vsel %vm6930, %v6923, %v6927
        %v6932 = vand.u32 2147483647, %v6726
        %vm6933 = vcmp.eq.f32.partialorder %v6932, 8.507059e+37
        %v6934 = vand.u32 %v6726, 2147483648
        %v6935 = vor.u32 1.1754944e-38, %v6934
        %v6936 = vsel %vm6933, %v6935, %v6931
        %v6937 = vmul.f32 %v6611, %v6936
        %v6938 = vrcp.pop %v6731
        %v6939 = vmul.f32 %v6731, %v6938
        %v6940 = vsub.f32 1.0, %v6939
        %v6941 = vmul.f32 %v6938, %v6940
        %v6942 = vadd.f32 %v6938, %v6941
        %vm6943 = vweird.f32 %v6731
        %vm6944 = vweird.f32 %v6938
        %vm6945 = vmor %vm6943, %vm6944
        %v6946 = vsel %vm6945, %v6938, %v6942
        %v6947 = vand.u32 2147483647, %v6731
        %vm6948 = vcmp.eq.f32.partialorder %v6947, 8.507059e+37
        %v6949 = vand.u32 %v6731, 2147483648
        %v6950 = vor.u32 1.1754944e-38, %v6949
        %v6951 = vsel %vm6948, %v6950, %v6946
        %v6952 = vmul.f32 %v6612, %v6951
        %v6953 = vrcp.pop %v6736
        %v6954 = vmul.f32 %v6736, %v6953
        %v6955 = vsub.f32 1.0, %v6954
        %v6956 = vmul.f32 %v6953, %v6955
        %v6957 = vadd.f32 %v6953, %v6956
        %vm6958 = vweird.f32 %v6736
        %vm6959 = vweird.f32 %v6953
        %vm6960 = vmor %vm6958, %vm6959
        %v6961 = vsel %vm6960, %v6953, %v6957
        %v6962 = vand.u32 2147483647, %v6736
        %vm6963 = vcmp.eq.f32.partialorder %v6962, 8.507059e+37
        %v6964 = vand.u32 %v6736, 2147483648
        %v6965 = vor.u32 1.1754944e-38, %v6964
        %v6966 = vsel %vm6963, %v6965, %v6961
        %v6967 = vmul.f32 %v6613, %v6966
        %v6968 = vrcp.pop %v6741
        %v6969 = vmul.f32 %v6741, %v6968
        %v6970 = vsub.f32 1.0, %v6969
        %v6971 = vmul.f32 %v6968, %v6970
        %v6972 = vadd.f32 %v6968, %v6971
        %vm6973 = vweird.f32 %v6741
        %vm6974 = vweird.f32 %v6968
        %vm6975 = vmor %vm6973, %vm6974
        %v6976 = vsel %vm6975, %v6968, %v6972
        %v6977 = vand.u32 2147483647, %v6741
        %vm6978 = vcmp.eq.f32.partialorder %v6977, 8.507059e+37
        %v6979 = vand.u32 %v6741, 2147483648
        %v6980 = vor.u32 1.1754944e-38, %v6979
        %v6981 = vsel %vm6978, %v6980, %v6976
        %v6982 = vmul.f32 %v6614, %v6981
        %v6983 = vrcp.pop %v6746
        %v6984 = vmul.f32 %v6746, %v6983
        %v6985 = vsub.f32 1.0, %v6984
        %v6986 = vmul.f32 %v6983, %v6985
        %v6987 = vadd.f32 %v6983, %v6986
        %vm6988 = vweird.f32 %v6746
        %vm6989 = vweird.f32 %v6983
        %vm6990 = vmor %vm6988, %vm6989
        %v6991 = vsel %vm6990, %v6983, %v6987
        %v6992 = vand.u32 2147483647, %v6746
        %vm6993 = vcmp.eq.f32.partialorder %v6992, 8.507059e+37
        %v6994 = vand.u32 %v6746, 2147483648
        %v6995 = vor.u32 1.1754944e-38, %v6994
        %v6996 = vsel %vm6993, %v6995, %v6991
        %v6997 = vmul.f32 %v6615, %v6996
        %v6998 = vrcp.pop %v6751
        %v6999 = vmul.f32 %v6751, %v6998
        %v7000 = vsub.f32 1.0, %v6999
        %v7001 = vmul.f32 %v6998, %v7000
        %v7002 = vadd.f32 %v6998, %v7001
        %vm7003 = vweird.f32 %v6751
        %vm7004 = vweird.f32 %v6998
        %vm7005 = vmor %vm7003, %vm7004
        %v7006 = vsel %vm7005, %v6998, %v7002
        %v7007 = vand.u32 2147483647, %v6751
        %vm7008 = vcmp.eq.f32.partialorder %v7007, 8.507059e+37
        %v7009 = vand.u32 %v6751, 2147483648
        %v7010 = vor.u32 1.1754944e-38, %v7009
        %v7011 = vsel %vm7008, %v7010, %v7006
        %v7012 = vmul.f32 %v6616, %v7011
        %v7013 = vrcp.pop %v6756
        %v7014 = vmul.f32 %v6756, %v7013
        %v7015 = vsub.f32 1.0, %v7014
        %v7016 = vmul.f32 %v7013, %v7015
        %v7017 = vadd.f32 %v7013, %v7016
        %vm7018 = vweird.f32 %v6756
        %vm7019 = vweird.f32 %v7013
        %vm7020 = vmor %vm7018, %vm7019
        %v7021 = vsel %vm7020, %v7013, %v7017
        %v7022 = vand.u32 2147483647, %v6756
        %vm7023 = vcmp.eq.f32.partialorder %v7022, 8.507059e+37
        %v7024 = vand.u32 %v6756, 2147483648
        %v7025 = vor.u32 1.1754944e-38, %v7024
        %v7026 = vsel %vm7023, %v7025, %v7021
        %v7027 = vmul.f32 %v6617, %v7026
        %v7028 = vrcp.pop %v6761
        %v7029 = vmul.f32 %v6761, %v7028
        %v7030 = vsub.f32 1.0, %v7029
        %v7031 = vmul.f32 %v7028, %v7030
        %v7032 = vadd.f32 %v7028, %v7031
        %vm7033 = vweird.f32 %v6761
        %vm7034 = vweird.f32 %v7028
        %vm7035 = vmor %vm7033, %vm7034
        %v7036 = vsel %vm7035, %v7028, %v7032
        %v7037 = vand.u32 2147483647, %v6761
        %vm7038 = vcmp.eq.f32.partialorder %v7037, 8.507059e+37
        %v7039 = vand.u32 %v6761, 2147483648
        %v7040 = vor.u32 1.1754944e-38, %v7039
        %v7041 = vsel %vm7038, %v7040, %v7036
        %v7042 = vmul.f32 %v6618, %v7041
        %v7043 = vrcp.pop %v6766
        %v7044 = vmul.f32 %v6766, %v7043
        %v7045 = vsub.f32 1.0, %v7044
        %v7046 = vmul.f32 %v7043, %v7045
        %v7047 = vadd.f32 %v7043, %v7046
        %vm7048 = vweird.f32 %v6766
        %vm7049 = vweird.f32 %v7043
        %vm7050 = vmor %vm7048, %vm7049
        %v7051 = vsel %vm7050, %v7043, %v7047
        %v7052 = vand.u32 2147483647, %v6766
        %vm7053 = vcmp.eq.f32.partialorder %v7052, 8.507059e+37
        %v7054 = vand.u32 %v6766, 2147483648
        %v7055 = vor.u32 1.1754944e-38, %v7054
        %v7056 = vsel %vm7053, %v7055, %v7051
        %v7057 = vmul.f32 %v6619, %v7056
        %v7058 = vrcp.pop %v6771
        %v7059 = vmul.f32 %v6771, %v7058
        %v7060 = vsub.f32 1.0, %v7059
        %v7061 = vmul.f32 %v7058, %v7060
        %v7062 = vadd.f32 %v7058, %v7061
        %vm7063 = vweird.f32 %v6771
        %vm7064 = vweird.f32 %v7058
        %vm7065 = vmor %vm7063, %vm7064
        %v7066 = vsel %vm7065, %v7058, %v7062
        %v7067 = vand.u32 2147483647, %v6771
        %vm7068 = vcmp.eq.f32.partialorder %v7067, 8.507059e+37
        %v7069 = vand.u32 %v6771, 2147483648
        %v7070 = vor.u32 1.1754944e-38, %v7069
        %v7071 = vsel %vm7068, %v7070, %v7066
        %v7072 = vmul.f32 %v6620, %v7071
        %v7073 = vrcp.pop %v6776
        %v7074 = vmul.f32 %v6776, %v7073
        %v7075 = vsub.f32 1.0, %v7074
        %v7076 = vmul.f32 %v7073, %v7075
        %v7077 = vadd.f32 %v7073, %v7076
        %vm7078 = vweird.f32 %v6776
        %vm7079 = vweird.f32 %v7073
        %vm7080 = vmor %vm7078, %vm7079
        %v7081 = vsel %vm7080, %v7073, %v7077
        %v7082 = vand.u32 2147483647, %v6776
        %vm7083 = vcmp.eq.f32.partialorder %v7082, 8.507059e+37
        %v7084 = vand.u32 %v6776, 2147483648
        %v7085 = vor.u32 1.1754944e-38, %v7084
        %v7086 = vsel %vm7083, %v7085, %v7081
        %v7087 = vmul.f32 %v6621, %v7086
        %v7088 = vrcp.pop %v6781
        %v7089 = vmul.f32 %v6781, %v7088
        %v7090 = vsub.f32 1.0, %v7089
        %v7091 = vmul.f32 %v7088, %v7090
        %v7092 = vadd.f32 %v7088, %v7091
        %vm7093 = vweird.f32 %v6781
        %vm7094 = vweird.f32 %v7088
        %vm7095 = vmor %vm7093, %vm7094
        %v7096 = vsel %vm7095, %v7088, %v7092
        %v7097 = vand.u32 2147483647, %v6781
        %vm7098 = vcmp.eq.f32.partialorder %v7097, 8.507059e+37
        %v7099 = vand.u32 %v6781, 2147483648
        %v7100 = vor.u32 1.1754944e-38, %v7099
        %v7101 = vsel %vm7098, %v7100, %v7096
        %v7102 = vmul.f32 %v6622, %v7101
        %v7103 = vrcp.pop %v6786
        %v7104 = vmul.f32 %v6786, %v7103
        %v7105 = vsub.f32 1.0, %v7104
        %v7106 = vmul.f32 %v7103, %v7105
        %v7107 = vadd.f32 %v7103, %v7106
        %vm7108 = vweird.f32 %v6786
        %vm7109 = vweird.f32 %v7103
        %vm7110 = vmor %vm7108, %vm7109
        %v7111 = vsel %vm7110, %v7103, %v7107
        %v7112 = vand.u32 2147483647, %v6786
        %vm7113 = vcmp.eq.f32.partialorder %v7112, 8.507059e+37
        %v7114 = vand.u32 %v6786, 2147483648
        %v7115 = vor.u32 1.1754944e-38, %v7114
        %v7116 = vsel %vm7113, %v7115, %v7111
        %v7117 = vmul.f32 %v6623, %v7116
        %v7118 = vrcp.pop %v6791
        %v7119 = vmul.f32 %v6791, %v7118
        %v7120 = vsub.f32 1.0, %v7119
        %v7121 = vmul.f32 %v7118, %v7120
        %v7122 = vadd.f32 %v7118, %v7121
        %vm7123 = vweird.f32 %v6791
        %vm7124 = vweird.f32 %v7118
        %vm7125 = vmor %vm7123, %vm7124
        %v7126 = vsel %vm7125, %v7118, %v7122
        %v7127 = vand.u32 2147483647, %v6791
        %vm7128 = vcmp.eq.f32.partialorder %v7127, 8.507059e+37
        %v7129 = vand.u32 %v6791, 2147483648
        %v7130 = vor.u32 1.1754944e-38, %v7129
        %v7131 = vsel %vm7128, %v7130, %v7126
        %v7132 = vmul.f32 %v6624, %v7131
        %v7133 = vrcp.pop %v6796
        %v7134 = vmul.f32 %v6796, %v7133
        %v7135 = vsub.f32 1.0, %v7134
        %v7136 = vmul.f32 %v7133, %v7135
        %v7137 = vadd.f32 %v7133, %v7136
        %vm7138 = vweird.f32 %v6796
        %vm7139 = vweird.f32 %v7133
        %vm7140 = vmor %vm7138, %vm7139
        %v7141 = vsel %vm7140, %v7133, %v7137
        %v7142 = vand.u32 2147483647, %v6796
        %vm7143 = vcmp.eq.f32.partialorder %v7142, 8.507059e+37
        %v7144 = vand.u32 %v6796, 2147483648
        %v7145 = vor.u32 1.1754944e-38, %v7144
        %v7146 = vsel %vm7143, %v7145, %v7141
        %v7147 = vmul.f32 %v6625, %v7146
        %v7148 = vrcp.pop %v6801
        %v7149 = vmul.f32 %v6801, %v7148
        %v7150 = vsub.f32 1.0, %v7149
        %v7151 = vmul.f32 %v7148, %v7150
        %v7152 = vadd.f32 %v7148, %v7151
        %vm7153 = vweird.f32 %v6801
        %vm7154 = vweird.f32 %v7148
        %vm7155 = vmor %vm7153, %vm7154
        %v7156 = vsel %vm7155, %v7148, %v7152
        %v7157 = vand.u32 2147483647, %v6801
        %vm7158 = vcmp.eq.f32.partialorder %v7157, 8.507059e+37
        %v7159 = vand.u32 %v6801, 2147483648
        %v7160 = vor.u32 1.1754944e-38, %v7159
        %v7161 = vsel %vm7158, %v7160, %v7156
        %v7162 = vmul.f32 %v6626, %v7161
        %v7163 = vrcp.pop %v6806
        %v7164 = vmul.f32 %v6806, %v7163
        %v7165 = vsub.f32 1.0, %v7164
        %v7166 = vmul.f32 %v7163, %v7165
        %v7167 = vadd.f32 %v7163, %v7166
        %vm7168 = vweird.f32 %v6806
        %vm7169 = vweird.f32 %v7163
        %vm7170 = vmor %vm7168, %vm7169
        %v7171 = vsel %vm7170, %v7163, %v7167
        %v7172 = vand.u32 2147483647, %v6806
        %vm7173 = vcmp.eq.f32.partialorder %v7172, 8.507059e+37
        %v7174 = vand.u32 %v6806, 2147483648
        %v7175 = vor.u32 1.1754944e-38, %v7174
        %v7176 = vsel %vm7173, %v7175, %v7171
        %v7177 = vmul.f32 %v6627, %v7176
        %v7178 = vrcp.pop %v6811
        %v7179 = vmul.f32 %v6811, %v7178
        %v7180 = vsub.f32 1.0, %v7179
        %v7181 = vmul.f32 %v7178, %v7180
        %v7182 = vadd.f32 %v7178, %v7181
        %vm7183 = vweird.f32 %v6811
        %vm7184 = vweird.f32 %v7178
        %vm7185 = vmor %vm7183, %vm7184
        %v7186 = vsel %vm7185, %v7178, %v7182
        %v7187 = vand.u32 2147483647, %v6811
        %vm7188 = vcmp.eq.f32.partialorder %v7187, 8.507059e+37
        %v7189 = vand.u32 %v6811, 2147483648
        %v7190 = vor.u32 1.1754944e-38, %v7189
        %v7191 = vsel %vm7188, %v7190, %v7186
        %v7192 = vmul.f32 %v6628, %v7191
        %v7193 = vrcp.pop %v6816
        %v7194 = vmul.f32 %v6816, %v7193
        %v7195 = vsub.f32 1.0, %v7194
        %v7196 = vmul.f32 %v7193, %v7195
        %v7197 = vadd.f32 %v7193, %v7196
        %vm7198 = vweird.f32 %v6816
        %vm7199 = vweird.f32 %v7193
        %vm7200 = vmor %vm7198, %vm7199
        %v7201 = vsel %vm7200, %v7193, %v7197
        %v7202 = vand.u32 2147483647, %v6816
        %vm7203 = vcmp.eq.f32.partialorder %v7202, 8.507059e+37
        %v7204 = vand.u32 %v6816, 2147483648
        %v7205 = vor.u32 1.1754944e-38, %v7204
        %v7206 = vsel %vm7203, %v7205, %v7201
        %v7207 = vmul.f32 %v6629, %v7206
        %v7208 = vrcp.pop %v6821
        %v7209 = vmul.f32 %v6821, %v7208
        %v7210 = vsub.f32 1.0, %v7209
        %v7211 = vmul.f32 %v7208, %v7210
        %v7212 = vadd.f32 %v7208, %v7211
        %vm7213 = vweird.f32 %v6821
        %vm7214 = vweird.f32 %v7208
        %vm7215 = vmor %vm7213, %vm7214
        %v7216 = vsel %vm7215, %v7208, %v7212
        %v7217 = vand.u32 2147483647, %v6821
        %vm7218 = vcmp.eq.f32.partialorder %v7217, 8.507059e+37
        %v7219 = vand.u32 %v6821, 2147483648
        %v7220 = vor.u32 1.1754944e-38, %v7219
        %v7221 = vsel %vm7218, %v7220, %v7216
        %v7222 = vmul.f32 %v6630, %v7221
        %v7223 = vrcp.pop %v6826
        %v7224 = vmul.f32 %v6826, %v7223
        %v7225 = vsub.f32 1.0, %v7224
        %v7226 = vmul.f32 %v7223, %v7225
        %v7227 = vadd.f32 %v7223, %v7226
        %vm7228 = vweird.f32 %v6826
        %vm7229 = vweird.f32 %v7223
        %vm7230 = vmor %vm7228, %vm7229
        %v7231 = vsel %vm7230, %v7223, %v7227
        %v7232 = vand.u32 2147483647, %v6826
        %vm7233 = vcmp.eq.f32.partialorder %v7232, 8.507059e+37
        %v7234 = vand.u32 %v6826, 2147483648
        %v7235 = vor.u32 1.1754944e-38, %v7234
        %v7236 = vsel %vm7233, %v7235, %v7231
        %v7237 = vmul.f32 %v6631, %v7236
        %v7238 = vrcp.pop %v6831
        %v7239 = vmul.f32 %v6831, %v7238
        %v7240 = vsub.f32 1.0, %v7239
        %v7241 = vmul.f32 %v7238, %v7240
        %v7242 = vadd.f32 %v7238, %v7241
        %vm7243 = vweird.f32 %v6831
        %vm7244 = vweird.f32 %v7238
        %vm7245 = vmor %vm7243, %vm7244
        %v7246 = vsel %vm7245, %v7238, %v7242
        %v7247 = vand.u32 2147483647, %v6831
        %vm7248 = vcmp.eq.f32.partialorder %v7247, 8.507059e+37
        %v7249 = vand.u32 %v6831, 2147483648
        %v7250 = vor.u32 1.1754944e-38, %v7249
        %v7251 = vsel %vm7248, %v7250, %v7246
        %v7252 = vmul.f32 %v6632, %v7251
        %v7253 = vrcp.pop %v6836
        %v7254 = vmul.f32 %v6836, %v7253
        %v7255 = vsub.f32 1.0, %v7254
        %v7256 = vmul.f32 %v7253, %v7255
        %v7257 = vadd.f32 %v7253, %v7256
        %vm7258 = vweird.f32 %v6836
        %vm7259 = vweird.f32 %v7253
        %vm7260 = vmor %vm7258, %vm7259
        %v7261 = vsel %vm7260, %v7253, %v7257
        %v7262 = vand.u32 2147483647, %v6836
        %vm7263 = vcmp.eq.f32.partialorder %v7262, 8.507059e+37
        %v7264 = vand.u32 %v6836, 2147483648
        %v7265 = vor.u32 1.1754944e-38, %v7264
        %v7266 = vsel %vm7263, %v7265, %v7261
        %v7267 = vmul.f32 %v6633, %v7266
        %v7268 = vrcp.pop %v6841
        %v7269 = vmul.f32 %v6841, %v7268
        %v7270 = vsub.f32 1.0, %v7269
        %v7271 = vmul.f32 %v7268, %v7270
        %v7272 = vadd.f32 %v7268, %v7271
        %vm7273 = vweird.f32 %v6841
        %vm7274 = vweird.f32 %v7268
        %vm7275 = vmor %vm7273, %vm7274
        %v7276 = vsel %vm7275, %v7268, %v7272
        %v7277 = vand.u32 2147483647, %v6841
        %vm7278 = vcmp.eq.f32.partialorder %v7277, 8.507059e+37
        %v7279 = vand.u32 %v6841, 2147483648
        %v7280 = vor.u32 1.1754944e-38, %v7279
        %v7281 = vsel %vm7278, %v7280, %v7276
        %v7282 = vmul.f32 %v6634, %v7281
        %v7283 = vrcp.pop %v6846
        %v7284 = vmul.f32 %v6846, %v7283
        %v7285 = vsub.f32 1.0, %v7284
        %v7286 = vmul.f32 %v7283, %v7285
        %v7287 = vadd.f32 %v7283, %v7286
        %vm7288 = vweird.f32 %v6846
        %vm7289 = vweird.f32 %v7283
        %vm7290 = vmor %vm7288, %vm7289
        %v7291 = vsel %vm7290, %v7283, %v7287
        %v7292 = vand.u32 2147483647, %v6846
        %vm7293 = vcmp.eq.f32.partialorder %v7292, 8.507059e+37
        %v7294 = vand.u32 %v6846, 2147483648
        %v7295 = vor.u32 1.1754944e-38, %v7294
        %v7296 = vsel %vm7293, %v7295, %v7291
        %v7297 = vmul.f32 %v6635, %v7296
        %v7298 = vrcp.pop %v6851
        %v7299 = vmul.f32 %v6851, %v7298
        %v7300 = vsub.f32 1.0, %v7299
        %v7301 = vmul.f32 %v7298, %v7300
        %v7302 = vadd.f32 %v7298, %v7301
        %vm7303 = vweird.f32 %v6851
        %vm7304 = vweird.f32 %v7298
        %vm7305 = vmor %vm7303, %vm7304
        %v7306 = vsel %vm7305, %v7298, %v7302
        %v7307 = vand.u32 2147483647, %v6851
        %vm7308 = vcmp.eq.f32.partialorder %v7307, 8.507059e+37
        %v7309 = vand.u32 %v6851, 2147483648
        %v7310 = vor.u32 1.1754944e-38, %v7309
        %v7311 = vsel %vm7308, %v7310, %v7306
        %v7312 = vmul.f32 %v6636, %v7311
        %v7313 = vrcp.pop %v6856
        %v7314 = vmul.f32 %v6856, %v7313
        %v7315 = vsub.f32 1.0, %v7314
        %v7316 = vmul.f32 %v7313, %v7315
        %v7317 = vadd.f32 %v7313, %v7316
        %vm7318 = vweird.f32 %v6856
        %vm7319 = vweird.f32 %v7313
        %vm7320 = vmor %vm7318, %vm7319
        %v7321 = vsel %vm7320, %v7313, %v7317
        %v7322 = vand.u32 2147483647, %v6856
        %vm7323 = vcmp.eq.f32.partialorder %v7322, 8.507059e+37
        %v7324 = vand.u32 %v6856, 2147483648
        %v7325 = vor.u32 1.1754944e-38, %v7324
        %v7326 = vsel %vm7323, %v7325, %v7321
        %v7327 = vmul.f32 %v6637, %v7326
        %v7328 = vrcp.pop %v6861
        %v7329 = vmul.f32 %v6861, %v7328
        %v7330 = vsub.f32 1.0, %v7329
        %v7331 = vmul.f32 %v7328, %v7330
        %v7332 = vadd.f32 %v7328, %v7331
        %vm7333 = vweird.f32 %v6861
        %vm7334 = vweird.f32 %v7328
        %vm7335 = vmor %vm7333, %vm7334
        %v7336 = vsel %vm7335, %v7328, %v7332
        %v7337 = vand.u32 2147483647, %v6861
        %vm7338 = vcmp.eq.f32.partialorder %v7337, 8.507059e+37
        %v7339 = vand.u32 %v6861, 2147483648
        %v7340 = vor.u32 1.1754944e-38, %v7339
        %v7341 = vsel %vm7338, %v7340, %v7336
        %v7342 = vmul.f32 %v6638, %v7341
        %v7343 = vsel %vm6639, 1, 0
        %v7344 = vsel %vm6640, 1, 0
        %v7345 = vsel %vm6641, 1, 0
        %v7346 = vsel %vm6642, 1, 0
        %v7347 = vsel %vm6643, 1, 0
        %v7348 = vsel %vm6644, 1, 0
        %v7349 = vsel %vm6645, 1, 0
        %v7350 = vsel %vm6646, 1, 0
        %v7351 = vsel %vm6647, 1, 0
        %v7352 = vsel %vm6648, 1, 0
        %v7353 = vsel %vm6649, 1, 0
        %v7354 = vsel %vm6650, 1, 0
        %v7355 = vsel %vm6651, 1, 0
        %v7356 = vsel %vm6652, 1, 0
        %v7357 = vsel %vm6653, 1, 0
        %v7358 = vsel %vm6654, 1, 0
        %v7359 = vsel %vm6655, 1, 0
        %v7360 = vsel %vm6656, 1, 0
        %v7361 = vsel %vm6657, 1, 0
        %v7362 = vsel %vm6658, 1, 0
        %v7363 = vsel %vm6659, 1, 0
        %v7364 = vsel %vm6660, 1, 0
        %v7365 = vsel %vm6661, 1, 0
        %v7366 = vsel %vm6662, 1, 0
        %v7367 = vsel %vm6663, 1, 0
        %v7368 = vsel %vm6664, 1, 0
        %v7369 = vsel %vm6665, 1, 0
        %v7370 = vsel %vm6666, 1, 0
        %v7371 = vsel %vm6667, 1, 0
        %v7372 = vsel %vm6668, 1, 0
        %v7373 = vsel %vm6669, 1, 0
        %v7374 = vsel %vm6670, 1, 0
        %7375 = vset.pattern.permute.xlu0 32
        %7376 = vperm.xlu0 %7375, %v7343
        %v7377 = vpop.permute.xlu0 %7376
        %7378 = vset.pattern.permute.xlu0 32
        %7379 = vperm.xlu0 %7378, %v7344
        %v7380 = vpop.permute.xlu0 %7379
        %7381 = vset.pattern.permute.xlu0 32
        %7382 = vperm.xlu0 %7381, %v7345
        %v7383 = vpop.permute.xlu0 %7382
        %7384 = vset.pattern.permute.xlu0 32
        %7385 = vperm.xlu0 %7384, %v7346
        %v7386 = vpop.permute.xlu0 %7385
        %7387 = vset.pattern.permute.xlu0 32
        %7388 = vperm.xlu0 %7387, %v7347
        %v7389 = vpop.permute.xlu0 %7388
        %7390 = vset.pattern.permute.xlu0 32
        %7391 = vperm.xlu0 %7390, %v7348
        %v7392 = vpop.permute.xlu0 %7391
        %7393 = vset.pattern.permute.xlu0 32
        %7394 = vperm.xlu0 %7393, %v7349
        %v7395 = vpop.permute.xlu0 %7394
        %7396 = vset.pattern.permute.xlu0 32
        %7397 = vperm.xlu0 %7396, %v7350
        %v7398 = vpop.permute.xlu0 %7397
        %7399 = vset.pattern.permute.xlu0 32
        %7400 = vperm.xlu0 %7399, %v7351
        %v7401 = vpop.permute.xlu0 %7400
        %7402 = vset.pattern.permute.xlu0 32
        %7403 = vperm.xlu0 %7402, %v7352
        %v7404 = vpop.permute.xlu0 %7403
        %7405 = vset.pattern.permute.xlu0 32
        %7406 = vperm.xlu0 %7405, %v7353
        %v7407 = vpop.permute.xlu0 %7406
        %7408 = vset.pattern.permute.xlu0 32
        %7409 = vperm.xlu0 %7408, %v7354
        %v7410 = vpop.permute.xlu0 %7409
        %7411 = vset.pattern.permute.xlu0 32
        %7412 = vperm.xlu0 %7411, %v7355
        %v7413 = vpop.permute.xlu0 %7412
        %7414 = vset.pattern.permute.xlu0 32
        %7415 = vperm.xlu0 %7414, %v7356
        %v7416 = vpop.permute.xlu0 %7415
        %7417 = vset.pattern.permute.xlu0 32
        %7418 = vperm.xlu0 %7417, %v7357
        %v7419 = vpop.permute.xlu0 %7418
        %7420 = vset.pattern.permute.xlu0 32
        %7421 = vperm.xlu0 %7420, %v7358
        %v7422 = vpop.permute.xlu0 %7421
        %7423 = vset.pattern.permute.xlu0 32
        %7424 = vperm.xlu0 %7423, %v7359
        %v7425 = vpop.permute.xlu0 %7424
        %7426 = vset.pattern.permute.xlu0 32
        %7427 = vperm.xlu0 %7426, %v7360
        %v7428 = vpop.permute.xlu0 %7427
        %7429 = vset.pattern.permute.xlu0 32
        %7430 = vperm.xlu0 %7429, %v7361
        %v7431 = vpop.permute.xlu0 %7430
        %7432 = vset.pattern.permute.xlu0 32
        %7433 = vperm.xlu0 %7432, %v7362
        %v7434 = vpop.permute.xlu0 %7433
        %7435 = vset.pattern.permute.xlu0 32
        %7436 = vperm.xlu0 %7435, %v7363
        %v7437 = vpop.permute.xlu0 %7436
        %7438 = vset.pattern.permute.xlu0 32
        %7439 = vperm.xlu0 %7438, %v7364
        %v7440 = vpop.permute.xlu0 %7439
        %7441 = vset.pattern.permute.xlu0 32
        %7442 = vperm.xlu0 %7441, %v7365
        %v7443 = vpop.permute.xlu0 %7442
        %7444 = vset.pattern.permute.xlu0 32
        %7445 = vperm.xlu0 %7444, %v7366
        %v7446 = vpop.permute.xlu0 %7445
        %7447 = vset.pattern.permute.xlu0 32
        %7448 = vperm.xlu0 %7447, %v7367
        %v7449 = vpop.permute.xlu0 %7448
        %7450 = vset.pattern.permute.xlu0 32
        %7451 = vperm.xlu0 %7450, %v7368
        %v7452 = vpop.permute.xlu0 %7451
        %7453 = vset.pattern.permute.xlu0 32
        %7454 = vperm.xlu0 %7453, %v7369
        %v7455 = vpop.permute.xlu0 %7454
        %7456 = vset.pattern.permute.xlu0 32
        %7457 = vperm.xlu0 %7456, %v7370
        %v7458 = vpop.permute.xlu0 %7457
        %7459 = vset.pattern.permute.xlu0 32
        %7460 = vperm.xlu0 %7459, %v7371
        %v7461 = vpop.permute.xlu0 %7460
        %7462 = vset.pattern.permute.xlu0 32
        %7463 = vperm.xlu0 %7462, %v7372
        %v7464 = vpop.permute.xlu0 %7463
        %7465 = vset.pattern.permute.xlu0 32
        %7466 = vperm.xlu0 %7465, %v7373
        %v7467 = vpop.permute.xlu0 %7466
        %7468 = vset.pattern.permute.xlu0 32
        %7469 = vperm.xlu0 %7468, %v7374
        %v7470 = vpop.permute.xlu0 %7469
        %vm7471 = vcmp.eq.s32.totalorder %v7377, 1
        %vm7472 = vcmp.eq.s32.totalorder %v7380, 1
        %vm7473 = vcmp.eq.s32.totalorder %v7383, 1
        %vm7474 = vcmp.eq.s32.totalorder %v7386, 1
        %vm7475 = vcmp.eq.s32.totalorder %v7389, 1
        %vm7476 = vcmp.eq.s32.totalorder %v7392, 1
        %vm7477 = vcmp.eq.s32.totalorder %v7395, 1
        %vm7478 = vcmp.eq.s32.totalorder %v7398, 1
        %vm7479 = vcmp.eq.s32.totalorder %v7401, 1
        %vm7480 = vcmp.eq.s32.totalorder %v7404, 1
        %vm7481 = vcmp.eq.s32.totalorder %v7407, 1
        %vm7482 = vcmp.eq.s32.totalorder %v7410, 1
        %vm7483 = vcmp.eq.s32.totalorder %v7413, 1
        %vm7484 = vcmp.eq.s32.totalorder %v7416, 1
        %vm7485 = vcmp.eq.s32.totalorder %v7419, 1
        %vm7486 = vcmp.eq.s32.totalorder %v7422, 1
        %vm7487 = vcmp.eq.s32.totalorder %v7425, 1
        %vm7488 = vcmp.eq.s32.totalorder %v7428, 1
        %vm7489 = vcmp.eq.s32.totalorder %v7431, 1
        %vm7490 = vcmp.eq.s32.totalorder %v7434, 1
        %vm7491 = vcmp.eq.s32.totalorder %v7437, 1
        %vm7492 = vcmp.eq.s32.totalorder %v7440, 1
        %vm7493 = vcmp.eq.s32.totalorder %v7443, 1
        %vm7494 = vcmp.eq.s32.totalorder %v7446, 1
        %vm7495 = vcmp.eq.s32.totalorder %v7449, 1
        %vm7496 = vcmp.eq.s32.totalorder %v7452, 1
        %vm7497 = vcmp.eq.s32.totalorder %v7455, 1
        %vm7498 = vcmp.eq.s32.totalorder %v7458, 1
        %vm7499 = vcmp.eq.s32.totalorder %v7461, 1
        %vm7500 = vcmp.eq.s32.totalorder %v7464, 1
        %vm7501 = vcmp.eq.s32.totalorder %v7467, 1
        %vm7502 = vcmp.eq.s32.totalorder %v7470, 1
        %v7503 = vsel %vm7471, %v6877, 0.0
        %v7504 = vsel %vm7472, %v6892, 0.0
        %v7505 = vsel %vm7473, %v6907, 0.0
        %v7506 = vsel %vm7474, %v6922, 0.0
        %v7507 = vsel %vm7475, %v6937, 0.0
        %v7508 = vsel %vm7476, %v6952, 0.0
        %v7509 = vsel %vm7477, %v6967, 0.0
        %v7510 = vsel %vm7478, %v6982, 0.0
        %v7511 = vsel %vm7479, %v6997, 0.0
        %v7512 = vsel %vm7480, %v7012, 0.0
        %v7513 = vsel %vm7481, %v7027, 0.0
        %v7514 = vsel %vm7482, %v7042, 0.0
        %v7515 = vsel %vm7483, %v7057, 0.0
        %v7516 = vsel %vm7484, %v7072, 0.0
        %v7517 = vsel %vm7485, %v7087, 0.0
        %v7518 = vsel %vm7486, %v7102, 0.0
        %v7519 = vsel %vm7487, %v7117, 0.0
        %v7520 = vsel %vm7488, %v7132, 0.0
        %v7521 = vsel %vm7489, %v7147, 0.0
        %v7522 = vsel %vm7490, %v7162, 0.0
        %v7523 = vsel %vm7491, %v7177, 0.0
        %v7524 = vsel %vm7492, %v7192, 0.0
        %v7525 = vsel %vm7493, %v7207, 0.0
        %v7526 = vsel %vm7494, %v7222, 0.0
        %v7527 = vsel %vm7495, %v7237, 0.0
        %v7528 = vsel %vm7496, %v7252, 0.0
        %v7529 = vsel %vm7497, %v7267, 0.0
        %v7530 = vsel %vm7498, %v7282, 0.0
        %v7531 = vsel %vm7499, %v7297, 0.0
        %v7532 = vsel %vm7500, %v7312, 0.0
        %v7533 = vsel %vm7501, %v7327, 0.0
        %v7534 = vsel %vm7502, %v7342, 0.0
        %7535 = vst.msk [vmem:[%s5] sm:$0xff] %vm3521, %v7503
        %7536 = vst.msk [vmem:[%s5 + $0x8] sm:$0xff] %vm3521, %v7504
        %7537 = vst.msk [vmem:[%s5 + $0x10] sm:$0xff] %vm3521, %v7505
        %7538 = vst.msk [vmem:[%s5 + $0x18] sm:$0xff] %vm3521, %v7506
        %7539 = vst.msk [vmem:[%s5 + $0x20] sm:$0xff] %vm3521, %v7507
        %7540 = vst.msk [vmem:[%s5 + $0x28] sm:$0xff] %vm3521, %v7508
        %7541 = vst.msk [vmem:[%s5 + $0x30] sm:$0xff] %vm3521, %v7509
        %7542 = vst.msk [vmem:[%s5 + $0x38] sm:$0xff] %vm3521, %v7510
        %7543 = vst.msk [vmem:[%s5 + $0x40] sm:$0xff] %vm3521, %v7511
        %7544 = vst.msk [vmem:[%s5 + $0x48] sm:$0xff] %vm3521, %v7512
        %7545 = vst.msk [vmem:[%s5 + $0x50] sm:$0xff] %vm3521, %v7513
        %7546 = vst.msk [vmem:[%s5 + $0x58] sm:$0xff] %vm3521, %v7514
        %7547 = vst.msk [vmem:[%s5 + $0x60] sm:$0xff] %vm3521, %v7515
        %7548 = vst.msk [vmem:[%s5 + $0x68] sm:$0xff] %vm3521, %v7516
        %7549 = vst.msk [vmem:[%s5 + $0x70] sm:$0xff] %vm3521, %v7517
        %7550 = vst.msk [vmem:[%s5 + $0x78] sm:$0xff] %vm3521, %v7518
        %7551 = vst.msk [vmem:[%s5 + $0x80] sm:$0xff] %vm3521, %v7519
        %7552 = vst.msk [vmem:[%s5 + $0x88] sm:$0xff] %vm3521, %v7520
        %7553 = vst.msk [vmem:[%s5 + $0x90] sm:$0xff] %vm3521, %v7521
        %7554 = vst.msk [vmem:[%s5 + $0x98] sm:$0xff] %vm3521, %v7522
        %7555 = vst.msk [vmem:[%s5 + $0xa0] sm:$0xff] %vm3521, %v7523
        %7556 = vst.msk [vmem:[%s5 + $0xa8] sm:$0xff] %vm3521, %v7524
        %7557 = vst.msk [vmem:[%s5 + $0xb0] sm:$0xff] %vm3521, %v7525
        %7558 = vst.msk [vmem:[%s5 + $0xb8] sm:$0xff] %vm3521, %v7526
        %7559 = vst.msk [vmem:[%s5 + $0xc0] sm:$0xff] %vm3521, %v7527
        %7560 = vst.msk [vmem:[%s5 + $0xc8] sm:$0xff] %vm3521, %v7528
        %7561 = vst.msk [vmem:[%s5 + $0xd0] sm:$0xff] %vm3521, %v7529
        %7562 = vst.msk [vmem:[%s5 + $0xd8] sm:$0xff] %vm3521, %v7530
        %7563 = vst.msk [vmem:[%s5 + $0xe0] sm:$0xff] %vm3521, %v7531
        %7564 = vst.msk [vmem:[%s5 + $0xe8] sm:$0xff] %vm3521, %v7532
        %7565 = vst.msk [vmem:[%s5 + $0xf0] sm:$0xff] %vm3521, %v7533
        %7566 = vst.msk [vmem:[%s5 + $0xf8] sm:$0xff] %vm3521, %v7534
      $region56: #{tpu_custom_call.1} parent=39 // pred_fallthru
        _
      // Predicated region
      $region57: #{tpu_custom_call.1} parent=39 // pred_check
        %p7567 = pneg %p161
      $region58: #{tpu_custom_call.1} parent=39 // pred_check_branch
        %7569 = sbr.rel (%p7567) target = $region60
      $region59: #{tpu_custom_call.1} parent=39 // pred_region
        _
      $region60: #{tpu_custom_call.1} parent=39 // pred_fallthru
        _
      // Predicated region
      $region61: #{tpu_custom_call.1} parent=39 // pred_check
        %p7570 = pneg %p161
      $region62: #{tpu_custom_call.1} parent=39 // pred_check_branch
        %7572 = sbr.rel (%p7570) target = $region64
      $region63: #{tpu_custom_call.1} parent=39 // pred_region
        _
      $region64: #{tpu_custom_call.1} parent=39 // pred_fallthru
        _
    $region40: #{tpu_custom_call.1} parent=5 // pred_fallthru
      _
    %p7573 = scmp.le.s32.totalorder 2, %s11
    // Predicated region
    $region65: #{tpu_custom_call.1} parent=5 // pred_check
      %p7574 = pneg %p7573
    $region66: #{tpu_custom_call.1} parent=5 // pred_check_branch
      %7576 = sbr.rel (%p7574) target = $region68
    $region67: #{tpu_custom_call.1} parent=5 // pred_region
      %s7577 = ssub.s32 %s11, 2
    $region68: #{tpu_custom_call.1} parent=5 // pred_fallthru
      _
  $region6: #{tpu_custom_call.1} parent=0 // loop_footer
    %s15 = sadd.s32 1, %s11
  $region7: #{tpu_custom_call.1} parent=0 // loop_footer_branch
    %10 = sbr.rel target = $region3
  $region8: #{tpu_custom_call.1} parent=0 // loop_exit
    _

</llo_original>
